<compile_context>
chip_gen: v7x
topology: tpu7x:2x2x1
jax: 0.10.0
libtpu: 0.0.40
codegen_flags: <defaults>
</compile_context>

<pallas_src>
import jax
import jax.numpy as jnp
from jax.experimental import pallas as pl
from jax.experimental.pallas import tpu as pltpu

EPS = 1e-5
H = W = 28
CIN = 1
COUT = 32
HIDDEN1 = 300
HIDDEN2 = 100
NUM_CLASSES = 10
FLAT = COUT * H * W          # 25088
WC = W * COUT                # 896 lanes = 7 * 128


# ---------------------------------------------------------------------------
# Kernel 1: conv2d(1->32, 3x3, pad=1) with BN folded in, + ReLU.
# One batch element per grid step; output is lane-dense HWC: [28, 896],
# lane index = w*32 + c.
# ---------------------------------------------------------------------------
def conv_bn_relu_kernel(xe_ref, w_ref, b_ref, o_ref):
    # xe_ref: [30, 960]  padded image, each pixel replicated 32x along lanes
    # w_ref:  [9, 896]   BN-folded conv weights, tap-major, tiled 28x over w
    # b_ref:  [1, 896]   BN-folded bias, tiled 28x over w
    # o_ref:  [28, 896]  HWC feature map (lane = w*32 + c)
    acc = jnp.zeros((H, WC), jnp.float32)
    for ky in range(3):
        for kx in range(3):
            tap = ky * 3 + kx
            patch = xe_ref[ky:ky + H, kx * COUT: kx * COUT + WC]   # [28, 896]
            acc = acc + patch * w_ref[tap:tap + 1, :]
    o_ref[...] = jnp.maximum(acc + b_ref[...], 0.0)


def conv_bn_relu(xe, w_tiled, b_tiled):
    B = xe.shape[0]
    return pl.pallas_call(
        conv_bn_relu_kernel,
        out_shape=jax.ShapeDtypeStruct((B, H, WC), jnp.float32),
        grid=(B,),
        in_specs=[
            pl.BlockSpec((pl.Squeezed(), H + 2, (W + 2) * COUT),
                         lambda b: (b, 0, 0)),
            pl.BlockSpec((9, WC), lambda b: (0, 0)),
            pl.BlockSpec((1, WC), lambda b: (0, 0)),
        ],
        out_specs=pl.BlockSpec((pl.Squeezed(), H, WC), lambda b: (b, 0, 0)),
        compiler_params=pltpu.CompilerParams(
            dimension_semantics=("parallel",)),
    )(xe, w_tiled, b_tiled)


# ---------------------------------------------------------------------------
# Kernel 2a: linear1 partial sums.  Grid = (2 halves [parallel], K tiles
# [arbitrary]); each half accumulates its share of the 25088-wide contraction
# into a VMEM f32 accumulator and writes one [B, 300] partial.
# ---------------------------------------------------------------------------
def mlp_partial_kernel(x_ref, w1_ref, part_ref, acc_ref):
    k = pl.program_id(1)

    @pl.when(k == 0)
    def _init():
        acc_ref[...] = jnp.zeros_like(acc_ref)

    acc_ref[...] += jnp.dot(x_ref[...].astype(jnp.bfloat16), w1_ref[...],
                            preferred_element_type=jnp.float32)

    @pl.when(k == pl.num_programs(1) - 1)
    def _store():
        part_ref[...] = acc_ref[...]


def mlp_layer1_partial(x_flat, w1_bf16, *, tk=6272):
    B, K = x_flat.shape
    assert K % (2 * tk) == 0
    nk = K // (2 * tk)          # K tiles per half
    grid_spec = pltpu.PrefetchScalarGridSpec(
        num_scalar_prefetch=0,
        grid=(2, nk),
        in_specs=[
            pl.BlockSpec((B, tk), lambda p, k: (0, p * nk + k)),
            pl.BlockSpec((tk, HIDDEN1), lambda p, k: (p * nk + k, 0)),
        ],
        out_specs=pl.BlockSpec((pl.Squeezed(), B, HIDDEN1),
                               lambda p, k: (p, 0, 0)),
        scratch_shapes=[pltpu.VMEM((B, HIDDEN1), jnp.float32)],
    )
    return pl.pallas_call(
        mlp_partial_kernel,
        out_shape=jax.ShapeDtypeStruct((2, B, HIDDEN1), jnp.float32),
        grid_spec=grid_spec,
        compiler_params=pltpu.CompilerParams(
            dimension_semantics=("parallel", "arbitrary"),
            vmem_limit_bytes=32 << 20),
    )(x_flat, w1_bf16)


# ---------------------------------------------------------------------------
# Kernel 2b: epilogue — sum the two partials, bias+ReLU, then the small
# 300->100->10 tail.  Everything fits in one VMEM block (no grid).
# ---------------------------------------------------------------------------
def mlp_epilogue_kernel(part_ref, b1_ref, w2_ref, b2_ref, w3_ref, b3_ref,
                        o_ref):
    h1 = jnp.maximum(part_ref[0] + part_ref[1] + b1_ref[...], 0.0)
    h2 = jnp.maximum(
        jnp.dot(h1, w2_ref[...], preferred_element_type=jnp.float32)
        + b2_ref[...], 0.0)
    o_ref[...] = (jnp.dot(h2, w3_ref[...], preferred_element_type=jnp.float32)
                  + b3_ref[...])


def mlp_epilogue(part, b1, w2, b2, w3, b3):
    B = part.shape[1]
    return pl.pallas_call(
        mlp_epilogue_kernel,
        out_shape=jax.ShapeDtypeStruct((B, NUM_CLASSES), jnp.float32),
    )(part, b1, w2, b2, w3, b3)


# ---------------------------------------------------------------------------
# One-time parameter preparation (outside jit, zero per-forward cost):
# BN folding, weight tiling for the lane-dense conv, w1 row permutation
# (c,h,w)->(h,w,c) and bf16 cast.
# ---------------------------------------------------------------------------
def prepare_params(params):
    (wc, bc, gamma, beta, mean, var, w1, b1, w2, b2, w3, b3) = params
    s = gamma / jnp.sqrt(var + EPS)                         # [32]
    w9 = wc.reshape(COUT, 9).T * s[None, :]                 # [9, 32] folded
    bf = (bc - mean) * s + beta                             # [32]  folded
    w_tiled = jnp.tile(w9, (1, W))                          # [9, 896]
    b_tiled = jnp.tile(bf, (W,)).reshape(1, WC)             # [1, 896]
    # linear1 rows permuted from (c,h,w) to (h,w,c) to match the HWC conv out.
    w1_hwc = (w1.reshape(COUT, H, W, HIDDEN1)
                .transpose(1, 2, 0, 3)
                .reshape(FLAT, HIDDEN1))
    w1_bf16 = w1_hwc.astype(jnp.bfloat16)
    return (w_tiled, b_tiled, w1_bf16, b1.reshape(1, -1), w2,
            b2.reshape(1, -1), w3, b3.reshape(1, -1))


# ---------------------------------------------------------------------------
# Full forward pass (glue in plain JAX).
# ---------------------------------------------------------------------------
@jax.jit
def fc1_forward(x, prep):
    w_tiled, b_tiled, w1_bf16, b1, w2, b2, w3, b3 = prep
    B = x.shape[0]
    # pad H/W by 1 (padding=1), squeeze the single input channel
    x_pad = jnp.pad(x[:, 0, :, :], ((0, 0), (1, 1), (1, 1)))      # [B, 30, 30]
    # replicate each pixel 32x along lanes so the conv kernel stays lane-dense
    xe = jnp.repeat(x_pad, COUT, axis=-1)                         # [B, 30, 960]
    feat = conv_bn_relu(xe, w_tiled, b_tiled)                     # [B, 28, 896]
    x_flat = feat.reshape(B, FLAT)                                # (h,w,c) order
    part = mlp_layer1_partial(x_flat, w1_bf16)                    # [2, B, 300]
    return mlp_epilogue(part, b1, w2, b2, w3, b3)                 # [B, 10]


# ---------------------------------------------------------------------------
# Pure-JAX reference (original torch layout / f32 throughout).
# ---------------------------------------------------------------------------
def reference_forward(x, params):
    (wc, bc, gamma, beta, mean, var, w1, b1, w2, b2, w3, b3) = params
    y = jax.lax.conv_general_dilated(
        x, wc, window_strides=(1, 1), padding=((1, 1), (1, 1)),
        dimension_numbers=("NCHW", "OIHW", "NCHW"))
    y = y + bc[None, :, None, None]
    y = (y - mean[None, :, None, None]) * (
        gamma[None, :, None, None] / jnp.sqrt(var[None, :, None, None] + EPS)
    ) + beta[None, :, None, None]
    y = jnp.maximum(y, 0.0)
    y = y.reshape(x.shape[0], -1)
    y = jnp.maximum(y @ w1 + b1, 0.0)
    y = jnp.maximum(y @ w2 + b2, 0.0)
    return y @ w3 + b3


def init_params(key):
    ks = jax.random.split(key, 8)
    wc = jax.random.normal(ks[0], (COUT, CIN, 3, 3), jnp.float32) * 0.2
    bc = jax.random.normal(ks[1], (COUT,), jnp.float32) * 0.05
    gamma = jnp.ones((COUT,), jnp.float32)
    beta = jnp.zeros((COUT,), jnp.float32)
    mean = jnp.zeros((COUT,), jnp.float32)
    var = jnp.ones((COUT,), jnp.float32)
    w1 = jax.random.normal(ks[2], (FLAT, HIDDEN1), jnp.float32) * 0.01
    b1 = jax.random.normal(ks[3], (HIDDEN1,), jnp.float32) * 0.01
    w2 = jax.random.normal(ks[4], (HIDDEN1, HIDDEN2), jnp.float32) * 0.05
    b2 = jax.random.normal(ks[5], (HIDDEN2,), jnp.float32) * 0.01
    w3 = jax.random.normal(ks[6], (HIDDEN2, NUM_CLASSES), jnp.float32) * 0.05
    b3 = jax.random.normal(ks[7], (NUM_CLASSES,), jnp.float32) * 0.01
    return (wc, bc, gamma, beta, mean, var, w1, b1, w2, b2, w3, b3)


if __name__ == "__main__":
    key = jax.random.PRNGKey(0)
    pkey, xkey = jax.random.split(key)
    params = init_params(pkey)
    prep = prepare_params(params)      # one-time, outside jit
    # MNIST-like input implied by linear1 (32*28*28): batch=2, 1x28x28
    x = jax.random.normal(xkey, (2, 1, 28, 28), jnp.float32)

    out = fc1_forward(x, prep)
    out = jax.block_until_ready(out)

    ref = reference_forward(x, params)
    err = float(jnp.max(jnp.abs(out - ref)))
    assert out.shape == (2, NUM_CLASSES)
    # bf16 weight streaming in linear1 bounds the error well below 2e-2 here.
    assert err < 2e-2, f"max abs error vs JAX reference too large: {err}"
    print("KERNEL_OK")
</pallas_src>

<mosaic_0001>
module attributes {stable_mosaic.version = 11 : i64} {
  func.func @conv_bn_relu_kernel(%arg0: i32, %arg1: memref<1x30x960xf32, #tpu.memory_space<vmem>>, %arg2: memref<9x896xf32, #tpu.memory_space<vmem>>, %arg3: memref<1x896xf32, #tpu.memory_space<vmem>>, %arg4: memref<1x28x896xf32, #tpu.memory_space<vmem>>) attributes {dimension_semantics = [#tpu.dimension_semantics<parallel>], iteration_bounds = array<i64: 2>, scalar_prefetch = 0 : i64, scratch_operands = 0 : i64, tpu.core_type = #tpu.core_type<tc>, window_params = [{transform_indices = @transform_0, window_bounds = array<i64: 1, 30, 960>}, {pipeline_mode = #tpu.pipeline_mode<synchronous>, transform_indices = @transform_1, window_bounds = array<i64: 9, 896>}, {pipeline_mode = #tpu.pipeline_mode<synchronous>, transform_indices = @transform_2, window_bounds = array<i64: 1, 896>}, {transform_indices = @transform_3, window_bounds = array<i64: 1, 28, 896>}]} {
    %cst = arith.constant 0.000000e+00 : f32
    %0 = vector.broadcast %cst : f32 to vector<28x896xf32>
    %c0 = arith.constant 0 : index
    %c0_0 = arith.constant 0 : index
    %c0_1 = arith.constant 0 : index
    %1 = vector.load %arg1[%c0, %c0_0, %c0_1] : memref<1x30x960xf32, #tpu.memory_space<vmem>>, vector<1x28x896xf32>
    %2 = vector.shape_cast %1 : vector<1x28x896xf32> to vector<28x896xf32>
    %c0_2 = arith.constant 0 : index
    %c0_3 = arith.constant 0 : index
    %3 = vector.load %arg2[%c0_2, %c0_3] : memref<9x896xf32, #tpu.memory_space<vmem>>, vector<1x896xf32>
    %4 = vector.broadcast %3 : vector<1x896xf32> to vector<28x896xf32>
    %5 = arith.mulf %2, %4 : vector<28x896xf32>
    %6 = arith.addf %0, %5 : vector<28x896xf32>
    %c0_4 = arith.constant 0 : index
    %c0_5 = arith.constant 0 : index
    %c32 = arith.constant 32 : index
    %7 = vector.load %arg1[%c0_4, %c0_5, %c32] : memref<1x30x960xf32, #tpu.memory_space<vmem>>, vector<1x28x896xf32>
    %8 = vector.shape_cast %7 : vector<1x28x896xf32> to vector<28x896xf32>
    %c1 = arith.constant 1 : index
    %c0_6 = arith.constant 0 : index
    %9 = vector.load %arg2[%c1, %c0_6] : memref<9x896xf32, #tpu.memory_space<vmem>>, vector<1x896xf32>
    %10 = vector.broadcast %9 : vector<1x896xf32> to vector<28x896xf32>
    %11 = arith.mulf %8, %10 : vector<28x896xf32>
    %12 = arith.addf %6, %11 : vector<28x896xf32>
    %c0_7 = arith.constant 0 : index
    %c0_8 = arith.constant 0 : index
    %c64 = arith.constant 64 : index
    %13 = vector.load %arg1[%c0_7, %c0_8, %c64] : memref<1x30x960xf32, #tpu.memory_space<vmem>>, vector<1x28x896xf32>
    %14 = vector.shape_cast %13 : vector<1x28x896xf32> to vector<28x896xf32>
    %c2 = arith.constant 2 : index
    %c0_9 = arith.constant 0 : index
    %15 = vector.load %arg2[%c2, %c0_9] : memref<9x896xf32, #tpu.memory_space<vmem>>, vector<1x896xf32>
    %16 = vector.broadcast %15 : vector<1x896xf32> to vector<28x896xf32>
    %17 = arith.mulf %14, %16 : vector<28x896xf32>
    %18 = arith.addf %12, %17 : vector<28x896xf32>
    %c0_10 = arith.constant 0 : index
    %c1_11 = arith.constant 1 : index
    %c0_12 = arith.constant 0 : index
    %19 = vector.load %arg1[%c0_10, %c1_11, %c0_12] : memref<1x30x960xf32, #tpu.memory_space<vmem>>, vector<1x28x896xf32>
    %20 = vector.shape_cast %19 : vector<1x28x896xf32> to vector<28x896xf32>
    %c3 = arith.constant 3 : index
    %c0_13 = arith.constant 0 : index
    %21 = vector.load %arg2[%c3, %c0_13] : memref<9x896xf32, #tpu.memory_space<vmem>>, vector<1x896xf32>
    %22 = vector.broadcast %21 : vector<1x896xf32> to vector<28x896xf32>
    %23 = arith.mulf %20, %22 : vector<28x896xf32>
    %24 = arith.addf %18, %23 : vector<28x896xf32>
    %c0_14 = arith.constant 0 : index
    %c1_15 = arith.constant 1 : index
    %c32_16 = arith.constant 32 : index
    %25 = vector.load %arg1[%c0_14, %c1_15, %c32_16] : memref<1x30x960xf32, #tpu.memory_space<vmem>>, vector<1x28x896xf32>
    %26 = vector.shape_cast %25 : vector<1x28x896xf32> to vector<28x896xf32>
    %c4 = arith.constant 4 : index
    %c0_17 = arith.constant 0 : index
    %27 = vector.load %arg2[%c4, %c0_17] : memref<9x896xf32, #tpu.memory_space<vmem>>, vector<1x896xf32>
    %28 = vector.broadcast %27 : vector<1x896xf32> to vector<28x896xf32>
    %29 = arith.mulf %26, %28 : vector<28x896xf32>
    %30 = arith.addf %24, %29 : vector<28x896xf32>
    %c0_18 = arith.constant 0 : index
    %c1_19 = arith.constant 1 : index
    %c64_20 = arith.constant 64 : index
    %31 = vector.load %arg1[%c0_18, %c1_19, %c64_20] : memref<1x30x960xf32, #tpu.memory_space<vmem>>, vector<1x28x896xf32>
    %32 = vector.shape_cast %31 : vector<1x28x896xf32> to vector<28x896xf32>
    %c5 = arith.constant 5 : index
    %c0_21 = arith.constant 0 : index
    %33 = vector.load %arg2[%c5, %c0_21] : memref<9x896xf32, #tpu.memory_space<vmem>>, vector<1x896xf32>
    %34 = vector.broadcast %33 : vector<1x896xf32> to vector<28x896xf32>
    %35 = arith.mulf %32, %34 : vector<28x896xf32>
    %36 = arith.addf %30, %35 : vector<28x896xf32>
    %c0_22 = arith.constant 0 : index
    %c2_23 = arith.constant 2 : index
    %c0_24 = arith.constant 0 : index
    %37 = vector.load %arg1[%c0_22, %c2_23, %c0_24] : memref<1x30x960xf32, #tpu.memory_space<vmem>>, vector<1x28x896xf32>
    %38 = vector.shape_cast %37 : vector<1x28x896xf32> to vector<28x896xf32>
    %c6 = arith.constant 6 : index
    %c0_25 = arith.constant 0 : index
    %39 = vector.load %arg2[%c6, %c0_25] : memref<9x896xf32, #tpu.memory_space<vmem>>, vector<1x896xf32>
    %40 = vector.broadcast %39 : vector<1x896xf32> to vector<28x896xf32>
    %41 = arith.mulf %38, %40 : vector<28x896xf32>
    %42 = arith.addf %36, %41 : vector<28x896xf32>
    %c0_26 = arith.constant 0 : index
    %c2_27 = arith.constant 2 : index
    %c32_28 = arith.constant 32 : index
    %43 = vector.load %arg1[%c0_26, %c2_27, %c32_28] : memref<1x30x960xf32, #tpu.memory_space<vmem>>, vector<1x28x896xf32>
    %44 = vector.shape_cast %43 : vector<1x28x896xf32> to vector<28x896xf32>
    %c7 = arith.constant 7 : index
    %c0_29 = arith.constant 0 : index
    %45 = vector.load %arg2[%c7, %c0_29] : memref<9x896xf32, #tpu.memory_space<vmem>>, vector<1x896xf32>
    %46 = vector.broadcast %45 : vector<1x896xf32> to vector<28x896xf32>
    %47 = arith.mulf %44, %46 : vector<28x896xf32>
    %48 = arith.addf %42, %47 : vector<28x896xf32>
    %c0_30 = arith.constant 0 : index
    %c2_31 = arith.constant 2 : index
    %c64_32 = arith.constant 64 : index
    %49 = vector.load %arg1[%c0_30, %c2_31, %c64_32] : memref<1x30x960xf32, #tpu.memory_space<vmem>>, vector<1x28x896xf32>
    %50 = vector.shape_cast %49 : vector<1x28x896xf32> to vector<28x896xf32>
    %c8 = arith.constant 8 : index
    %c0_33 = arith.constant 0 : index
    %51 = vector.load %arg2[%c8, %c0_33] : memref<9x896xf32, #tpu.memory_space<vmem>>, vector<1x896xf32>
    %52 = vector.broadcast %51 : vector<1x896xf32> to vector<28x896xf32>
    %53 = arith.mulf %50, %52 : vector<28x896xf32>
    %54 = arith.addf %48, %53 : vector<28x896xf32>
    %c0_34 = arith.constant 0 : index
    %c0_35 = arith.constant 0 : index
    %55 = vector.load %arg3[%c0_34, %c0_35] : memref<1x896xf32, #tpu.memory_space<vmem>>, vector<1x896xf32>
    %56 = vector.broadcast %55 : vector<1x896xf32> to vector<28x896xf32>
    %57 = arith.addf %54, %56 : vector<28x896xf32>
    %cst_36 = arith.constant 0.000000e+00 : f32
    %58 = vector.broadcast %cst_36 : f32 to vector<28x896xf32>
    %59 = arith.maximumf %57, %58 : vector<28x896xf32>
    %c0_37 = arith.constant 0 : index
    %c0_38 = arith.constant 0 : index
    %c0_39 = arith.constant 0 : index
    %60 = vector.load %arg4[%c0_37, %c0_38, %c0_39] : memref<1x28x896xf32, #tpu.memory_space<vmem>>, vector<1x28x896xf32>
    %61 = vector.shape_cast %60 : vector<1x28x896xf32> to vector<28x896xf32>
    %62 = vector.shape_cast %59 : vector<28x896xf32> to vector<1x28x896xf32>
    tpu.vector_store %arg4[%c0_37, %c0_38, %c0_39], %62 {strides = array<i32>} : memref<1x28x896xf32, #tpu.memory_space<vmem>>, vector<1x28x896xf32>,
    return
  }
  func.func @transform_0(%arg0: i32) -> (i32, i32, i32) {
    %c0_i32 = arith.constant 0 : i32
    %c0_i32_0 = arith.constant 0 : i32
    %c0_i32_1 = arith.constant 0 : i32
    return %arg0, %c0_i32, %c0_i32_0 : i32, i32, i32
  }
  func.func @transform_1(%arg0: i32) -> (i32, i32) {
    %c0_i32 = arith.constant 0 : i32
    %c0_i32_0 = arith.constant 0 : i32
    %c0_i32_1 = arith.constant 0 : i32
    return %c0_i32, %c0_i32_0 : i32, i32
  }
  func.func @transform_2(%arg0: i32) -> (i32, i32) {
    %c0_i32 = arith.constant 0 : i32
    %c0_i32_0 = arith.constant 0 : i32
    %c0_i32_1 = arith.constant 0 : i32
    return %c0_i32, %c0_i32_0 : i32, i32
  }
  func.func @transform_3(%arg0: i32) -> (i32, i32, i32) {
    %c0_i32 = arith.constant 0 : i32
    %c0_i32_0 = arith.constant 0 : i32
    %c0_i32_1 = arith.constant 0 : i32
    return %arg0, %c0_i32, %c0_i32_0 : i32, i32, i32
  }
}

module attributes {stable_mosaic.version = 11 : i64} {
  func.func @mlp_partial_kernel(%arg0: i32, %arg1: i32, %arg2: memref<2x6272xf32, #tpu.memory_space<vmem>>, %arg3: memref<6272x300xbf16, #tpu.memory_space<vmem>>, %arg4: memref<1x2x300xf32, #tpu.memory_space<vmem>>, %arg5: memref<2x300xf32, #tpu.memory_space<vmem>>) attributes {dimension_semantics = [#tpu.dimension_semantics<parallel>, #tpu.dimension_semantics<arbitrary>], iteration_bounds = array<i64: 2, 2>, scalar_prefetch = 0 : i64, scratch_operands = 1 : i64, tpu.core_type = #tpu.core_type<tc>, window_params = [{transform_indices = @transform_0, window_bounds = array<i64: 2, 6272>}, {transform_indices = @transform_1, window_bounds = array<i64: 6272, 300>}, {transform_indices = @transform_2, window_bounds = array<i64: 1, 2, 300>}]} {
    %c0_i32 = arith.constant 0 : i32
    %0 = arith.cmpi eq, %arg1, %c0_i32 : i32
    %1 = arith.extui %0 : i1 to i32
    %c0_i32_0 = arith.constant 0 : i32
    %2 = arith.cmpi ne, %1, %c0_i32_0 : i32
    scf.if %2 {
      %cst_9 = arith.constant 0.000000e+00 : f32
      %13 = vector.broadcast %cst_9 : f32 to vector<2x300xf32>
      %c0_10 = arith.constant 0 : index
      %c0_11 = arith.constant 0 : index
      %14 = vector.load %arg5[%c0_10, %c0_11] : memref<2x300xf32, #tpu.memory_space<vmem>>, vector<2x300xf32>
      tpu.vector_store %arg5[%c0_10, %c0_11], %13 {strides = array<i32>} : memref<2x300xf32, #tpu.memory_space<vmem>>, vector<2x300xf32>,
    } else {
    }
    %c0 = arith.constant 0 : index
    %c0_1 = arith.constant 0 : index
    %3 = vector.load %arg5[%c0, %c0_1] : memref<2x300xf32, #tpu.memory_space<vmem>>, vector<2x300xf32>
    %c0_2 = arith.constant 0 : index
    %c0_3 = arith.constant 0 : index
    %4 = vector.load %arg2[%c0_2, %c0_3] : memref<2x6272xf32, #tpu.memory_space<vmem>>, vector<2x6272xf32>
    %5 = arith.truncf %4 : vector<2x6272xf32> to vector<2x6272xbf16>
    %c0_4 = arith.constant 0 : index
    %c0_5 = arith.constant 0 : index
    %6 = vector.load %arg3[%c0_4, %c0_5] : memref<6272x300xbf16, #tpu.memory_space<vmem>>, vector<6272x300xbf16>
    %cst = arith.constant dense<0.000000e+00> : vector<2x300xf32>
    %7 = tpu.matmul %5, %6, %cst {dimension_numbers = #tpu.dot_dimension_numbers<[1], [0], [0], [1], [0, 0, 1, 1], [], []>} : vector<2x6272xbf16>, vector<6272x300xbf16>, vector<2x300xf32> -> vector<2x300xf32>
    %8 = arith.addf %3, %7 : vector<2x300xf32>
    %c0_6 = arith.constant 0 : index
    %c0_7 = arith.constant 0 : index
    %9 = vector.load %arg5[%c0_6, %c0_7] : memref<2x300xf32, #tpu.memory_space<vmem>>, vector<2x300xf32>
    tpu.vector_store %arg5[%c0_6, %c0_7], %8 {strides = array<i32>} : memref<2x300xf32, #tpu.memory_space<vmem>>, vector<2x300xf32>,
    %c1_i32 = arith.constant 1 : i32
    %10 = arith.cmpi eq, %arg1, %c1_i32 : i32
    %11 = arith.extui %10 : i1 to i32
    %c0_i32_8 = arith.constant 0 : i32
    %12 = arith.cmpi ne, %11, %c0_i32_8 : i32
    scf.if %12 {
      %c0_9 = arith.constant 0 : index
      %c0_10 = arith.constant 0 : index
      %13 = vector.load %arg5[%c0_9, %c0_10] : memref<2x300xf32, #tpu.memory_space<vmem>>, vector<2x300xf32>
      %c0_11 = arith.constant 0 : index
      %c0_12 = arith.constant 0 : index
      %c0_13 = arith.constant 0 : index
      %14 = vector.load %arg4[%c0_11, %c0_12, %c0_13] : memref<1x2x300xf32, #tpu.memory_space<vmem>>, vector<1x2x300xf32>
      %15 = vector.shape_cast %14 : vector<1x2x300xf32> to vector<2x300xf32>
      %16 = vector.shape_cast %13 : vector<2x300xf32> to vector<1x2x300xf32>
      tpu.vector_store %arg4[%c0_11, %c0_12, %c0_13], %16 {strides = array<i32>} : memref<1x2x300xf32, #tpu.memory_space<vmem>>, vector<1x2x300xf32>,
    } else {
    }
    return
  }
  func.func @transform_0(%arg0: i32, %arg1: i32) -> (i32, i32) {
    %c2_i32 = arith.constant 2 : i32
    %0 = arith.muli %arg0, %c2_i32 : i32
    %1 = arith.addi %0, %arg1 : i32
    %c0_i32 = arith.constant 0 : i32
    %c0_i32_0 = arith.constant 0 : i32
    return %c0_i32, %1 : i32, i32
  }
  func.func @transform_1(%arg0: i32, %arg1: i32) -> (i32, i32) {
    %c2_i32 = arith.constant 2 : i32
    %0 = arith.muli %arg0, %c2_i32 : i32
    %1 = arith.addi %0, %arg1 : i32
    %c0_i32 = arith.constant 0 : i32
    %c0_i32_0 = arith.constant 0 : i32
    return %1, %c0_i32 : i32, i32
  }
  func.func @transform_2(%arg0: i32, %arg1: i32) -> (i32, i32, i32) {
    %c0_i32 = arith.constant 0 : i32
    %c0_i32_0 = arith.constant 0 : i32
    %c0_i32_1 = arith.constant 0 : i32
    return %arg0, %c0_i32, %c0_i32_0 : i32, i32, i32
  }
}

module attributes {stable_mosaic.version = 11 : i64} {
  func.func @mlp_epilogue_kernel(%arg0: memref<2x2x300xf32, #tpu.memory_space<vmem>>, %arg1: memref<1x300xf32, #tpu.memory_space<vmem>>, %arg2: memref<300x100xf32, #tpu.memory_space<vmem>>, %arg3: memref<1x100xf32, #tpu.memory_space<vmem>>, %arg4: memref<100x10xf32, #tpu.memory_space<vmem>>, %arg5: memref<1x10xf32, #tpu.memory_space<vmem>>, %arg6: memref<2x10xf32, #tpu.memory_space<vmem>>) attributes {dimension_semantics = [], scalar_prefetch = 0 : i64, scratch_operands = 0 : i64, tpu.core_type = #tpu.core_type<tc>} {
    %c0 = arith.constant 0 : index
    %c0_0 = arith.constant 0 : index
    %c0_1 = arith.constant 0 : index
    %0 = vector.load %arg0[%c0, %c0_0, %c0_1] : memref<2x2x300xf32, #tpu.memory_space<vmem>>, vector<1x2x300xf32>
    %1 = vector.shape_cast %0 : vector<1x2x300xf32> to vector<2x300xf32>
    %c1 = arith.constant 1 : index
    %c0_2 = arith.constant 0 : index
    %c0_3 = arith.constant 0 : index
    %2 = vector.load %arg0[%c1, %c0_2, %c0_3] : memref<2x2x300xf32, #tpu.memory_space<vmem>>, vector<1x2x300xf32>
    %3 = vector.shape_cast %2 : vector<1x2x300xf32> to vector<2x300xf32>
    %4 = arith.addf %1, %3 : vector<2x300xf32>
    %c0_4 = arith.constant 0 : index
    %c0_5 = arith.constant 0 : index
    %5 = vector.load %arg1[%c0_4, %c0_5] : memref<1x300xf32, #tpu.memory_space<vmem>>, vector<1x300xf32>
    %6 = vector.broadcast %5 : vector<1x300xf32> to vector<2x300xf32>
    %7 = arith.addf %4, %6 : vector<2x300xf32>
    %cst = arith.constant 0.000000e+00 : f32
    %8 = vector.broadcast %cst : f32 to vector<2x300xf32>
    %9 = arith.maximumf %7, %8 : vector<2x300xf32>
    %c0_6 = arith.constant 0 : index
    %c0_7 = arith.constant 0 : index
    %10 = vector.load %arg2[%c0_6, %c0_7] : memref<300x100xf32, #tpu.memory_space<vmem>>, vector<300x100xf32>
    %cst_8 = arith.constant dense<0.000000e+00> : vector<2x100xf32>
    %11 = tpu.matmul %9, %10, %cst_8 {dimension_numbers = #tpu.dot_dimension_numbers<[1], [0], [0], [1], [0, 0, 1, 1], [], []>} : vector<2x300xf32>, vector<300x100xf32>, vector<2x100xf32> -> vector<2x100xf32>
    %c0_9 = arith.constant 0 : index
    %c0_10 = arith.constant 0 : index
    %12 = vector.load %arg3[%c0_9, %c0_10] : memref<1x100xf32, #tpu.memory_space<vmem>>, vector<1x100xf32>
    %13 = vector.broadcast %12 : vector<1x100xf32> to vector<2x100xf32>
    %14 = arith.addf %11, %13 : vector<2x100xf32>
    %cst_11 = arith.constant 0.000000e+00 : f32
    %15 = vector.broadcast %cst_11 : f32 to vector<2x100xf32>
    %16 = arith.maximumf %14, %15 : vector<2x100xf32>
    %c0_12 = arith.constant 0 : index
    %c0_13 = arith.constant 0 : index
    %17 = vector.load %arg4[%c0_12, %c0_13] : memref<100x10xf32, #tpu.memory_space<vmem>>, vector<100x10xf32>
    %cst_14 = arith.constant dense<0.000000e+00> : vector<2x10xf32>
    %18 = tpu.matmul %16, %17, %cst_14 {dimension_numbers = #tpu.dot_dimension_numbers<[1], [0], [0], [1], [0, 0, 1, 1], [], []>} : vector<2x100xf32>, vector<100x10xf32>, vector<2x10xf32> -> vector<2x10xf32>
    %c0_15 = arith.constant 0 : index
    %c0_16 = arith.constant 0 : index
    %19 = vector.load %arg5[%c0_15, %c0_16] : memref<1x10xf32, #tpu.memory_space<vmem>>, vector<1x10xf32>
    %20 = vector.broadcast %19 : vector<1x10xf32> to vector<2x10xf32>
    %21 = arith.addf %18, %20 : vector<2x10xf32>
    %c0_17 = arith.constant 0 : index
    %c0_18 = arith.constant 0 : index
    %22 = vector.load %arg6[%c0_17, %c0_18] : memref<2x10xf32, #tpu.memory_space<vmem>>, vector<2x10xf32>
    tpu.vector_store %arg6[%c0_17, %c0_18], %21 {strides = array<i32>} : memref<2x10xf32, #tpu.memory_space<vmem>>, vector<2x10xf32>,
    return
  }
}

</mosaic_0001>

<llo_original>
// kernel: fc1_forward.3
$region0: #{fc1_forward.3}
  #allocation0 [shape = 'u32[]', space=smem, size = 0x4, offset = 0x4, fixed_abs, tag = 'smem constant byte address 0x4 - core index']
  #allocation1 [shape = 'u32[144,128]{1,0:T(1,128)}', space=vmem, size = 0x12000, scoped, tag = 'internal scratch']
  %s0 = inlined_call_operand.vmem [shape: f32[2,30,960], index: 0, kind: input, shape index: {}]
  %s1 = inlined_call_operand.hbm [shape: f32[9,896], index: 1, kind: input, shape index: {}]
  %s2 = inlined_call_operand.hbm [shape: f32[1,896], index: 2, kind: input, shape index: {}]
  %s3 = inlined_call_operand.vmem [shape: f32[2,28,896], index: 3, kind: output, shape index: {}]
  %s4 = sld [smem:[#allocation0]]
  $region53: #{fc1_forward.3} parent=0
    _
  %s6 = ssub.s32 1, %s4
  %s7 = scalar_select 0, %s6, %s4
  $region1: #{fc1_forward.3} parent=0
    #allocation2 [shape = 'u8[57344]{0}', space=vmem, size = 0xe000, scoped, tag = 'input window, operand 1, single buffered']
    #allocation3 [shape = 's32[2]{0}', space=sflag, size = 0x8, scoped, tag = 'scoped memory for fc1_forward.3']
    #allocation4 [shape = 'u8[3584]{0}', space=vmem, size = 0x1000, scoped, tag = 'input window, operand 2, single buffered']
    #allocation5 [shape = 's32[1]{0}', space=sflag, size = 0x4, scoped, tag = 'scoped memory for fc1_forward.3']
    %8 = vsyncpa [#allocation3], 0
    %9 = vsyncpa [#allocation5], 0
    loop: start=0, step=1, limit=4
    $region2: #{fc1_forward.3} parent=1 // loop_pre_header
      _
    $region3: #{fc1_forward.3} parent=1 // loop_header
      %s11 = sphi 0, %s15
      %p12 = scmp.ge.s32.totalorder %s11, 4
      %s21 = sphi 0, %s23
      %s24 = sphi 0, %s21
      %s25 = sphi 0, %s24
      %s41 = sphi 0, %s25
      %s45 = sphi 0, %s45
      %s47 = sphi 0, %s45
      %s48 = sphi 0, %s47
      %s62 = sphi 0, %s48
      %s66 = sphi 0, %s66
      %s68 = sphi 0, %s66
      %s69 = sphi 0, %s68
      %s83 = sphi 0, %s69
      %s89 = sphi 0, %s91
      %s92 = sphi 0, %s89
      %s93 = sphi 0, %s92
      %s109 = sphi 0, %s93
    $region4: #{fc1_forward.3} parent=1 // loop_header_branch
      %14 = sbr.rel (%p12) target = $region8
    $region5: #{fc1_forward.3} parent=1 // loop_body
      %s16 = ssub.s32 %s11, 1
      %s17 = ssub.s32 %s11, 2
      %s18 = sadd.s32 %s11, 1
      %s19 = ssub.s32 %s11, %s18
      %p20 = scmp.eq.s32.totalorder %s19, 0
      %s22 = sadd.s32 %s21, 1
      %s23 = scalar_select %p20, %s21, %s22
      %p26 = pneg %p20
      %p27 = scmp.eq.s32.totalorder %s11, 1
      %p28 = por %p26, %p27
      %p29 = scmp.ne.s32.totalorder %s21, %s24
      %p30 = scmp.eq.s32.totalorder %s11, 0
      %p31 = por %p29, %p30
      %p32 = scmp.ne.s32.totalorder %s21, %s24
      %p33 = scmp.eq.s32.totalorder %s16, 1
      %p34 = por %p32, %p33
      %p35 = scmp.ne.s32.totalorder %s24, %s25
      %p36 = scmp.eq.s32.totalorder %s16, 0
      %p37 = por %p35, %p36
      %p38 = scmp.ne.s32.totalorder %s24, %s25
      %p39 = scmp.eq.s32.totalorder %s17, 1
      %p40 = por %p38, %p39
      %p42 = scmp.ne.s32.totalorder %s25, %s41
      %p43 = scmp.eq.s32.totalorder %s17, 0
      %p44 = por %p42, %p43
      %s46 = sadd.s32 %s45, 1
      %p49 = scmp.eq.s32.totalorder %s11, 1
      %p50 = scmp.ne.s32.totalorder %s45, %s47
      %p51 = scmp.eq.s32.totalorder %s11, 0
      %p52 = por %p50, %p51
      %p53 = scmp.ne.s32.totalorder %s45, %s47
      %p54 = scmp.eq.s32.totalorder %s16, 1
      %p55 = por %p53, %p54
      %p56 = scmp.ne.s32.totalorder %s47, %s48
      %p57 = scmp.eq.s32.totalorder %s16, 0
      %p58 = por %p56, %p57
      %p59 = scmp.ne.s32.totalorder %s47, %s48
      %p60 = scmp.eq.s32.totalorder %s17, 1
      %p61 = por %p59, %p60
      %p63 = scmp.ne.s32.totalorder %s48, %s62
      %p64 = scmp.eq.s32.totalorder %s17, 0
      %p65 = por %p63, %p64
      %s67 = sadd.s32 %s66, 1
      %p70 = scmp.eq.s32.totalorder %s11, 1
      %p71 = scmp.ne.s32.totalorder %s66, %s68
      %p72 = scmp.eq.s32.totalorder %s11, 0
      %p73 = por %p71, %p72
      %p74 = scmp.ne.s32.totalorder %s66, %s68
      %p75 = scmp.eq.s32.totalorder %s16, 1
      %p76 = por %p74, %p75
      %p77 = scmp.ne.s32.totalorder %s68, %s69
      %p78 = scmp.eq.s32.totalorder %s16, 0
      %p79 = por %p77, %p78
      %p80 = scmp.ne.s32.totalorder %s68, %s69
      %p81 = scmp.eq.s32.totalorder %s17, 1
      %p82 = por %p80, %p81
      %p84 = scmp.ne.s32.totalorder %s69, %s83
      %p85 = scmp.eq.s32.totalorder %s17, 0
      %p86 = por %p84, %p85
      %s87 = ssub.s32 %s11, %s18
      %p88 = scmp.eq.s32.totalorder %s87, 0
      %s90 = sadd.s32 %s89, 1
      %s91 = scalar_select %p88, %s89, %s90
      %p94 = pneg %p88
      %p95 = scmp.eq.s32.totalorder %s11, 1
      %p96 = por %p94, %p95
      %p97 = scmp.ne.s32.totalorder %s89, %s92
      %p98 = scmp.eq.s32.totalorder %s11, 0
      %p99 = por %p97, %p98
      %p100 = scmp.ne.s32.totalorder %s89, %s92
      %p101 = scmp.eq.s32.totalorder %s16, 1
      %p102 = por %p100, %p101
      %p103 = scmp.ne.s32.totalorder %s92, %s93
      %p104 = scmp.eq.s32.totalorder %s16, 0
      %p105 = por %p103, %p104
      %p106 = scmp.ne.s32.totalorder %s92, %s93
      %p107 = scmp.eq.s32.totalorder %s17, 1
      %p108 = por %p106, %p107
      %p110 = scmp.ne.s32.totalorder %s93, %s109
      %p111 = scmp.eq.s32.totalorder %s17, 0
      %p112 = por %p110, %p111
      %p113 = scmp.le.s32.totalorder 1, %s11
      %p114 = scmp.lt.s32.totalorder %s11, 3
      %p115 = pnand %p113, %p114
      %p116 = pneg %p115
      // Predicated region
      $region9: #{fc1_forward.3} parent=5 // pred_check
        _
      $region10: #{fc1_forward.3} parent=5 // pred_check_branch
        %118 = sbr.rel (%p115) target = $region12
      $region11: #{fc1_forward.3} parent=5 // pred_region
        %s119 = ssub.s32 %s11, 1
        // Predicated region
        $region13: #{fc1_forward.3} parent=11 // pred_check
          %p120 = pneg %p58
        $region14: #{fc1_forward.3} parent=11 // pred_check_branch
          %122 = sbr.rel (%p120) target = $region16
        $region15: #{fc1_forward.3} parent=11 // pred_region
          %s124 = ssub.s32 1792, 1792
          %125 = vsyncadd [#allocation3], %s124
          %s126 = sshll.u32 [#allocation2], 4
          %s127 = int_to_ptr.vmem [resolvable:$true] %s126
          %132 = dma.hbm_to_vmem [thread:$0]  %s1, 1792, %s127, [#allocation3], 896, 896, 56
        $region16: #{fc1_forward.3} parent=11 // pred_fallthru
          _
        // Predicated region
        $region17: #{fc1_forward.3} parent=11 // pred_check
          %p133 = pneg %p79
        $region18: #{fc1_forward.3} parent=11 // pred_check_branch
          %135 = sbr.rel (%p133) target = $region20
        $region19: #{fc1_forward.3} parent=11 // pred_region
          %s137 = ssub.s32 112, 112
          %138 = vsyncadd [#allocation5], %s137
          %s140 = sshll.u32 [#allocation4], 4
          %s141 = int_to_ptr.vmem [resolvable:$true] %s140
          %143 = dma.hbm_to_vmem [thread:$0]  %s2, 112, %s141, [#allocation5]
        $region20: #{fc1_forward.3} parent=11 // pred_fallthru
          _
      $region12: #{fc1_forward.3} parent=5 // pred_fallthru
        _
      %p144 = scmp.lt.s32.totalorder %s11, 2
      // Predicated region
      $region21: #{fc1_forward.3} parent=5 // pred_check
        %p145 = pneg %p144
      $region22: #{fc1_forward.3} parent=5 // pred_check_branch
        %147 = sbr.rel (%p145) target = $region24
      $region23: #{fc1_forward.3} parent=5 // pred_region
        // Predicated region
        $region25: #{fc1_forward.3} parent=23 // pred_check
          %p148 = pneg %p31
        $region26: #{fc1_forward.3} parent=23 // pred_check_branch
          %150 = sbr.rel (%p148) target = $region28
        $region27: #{fc1_forward.3} parent=23 // pred_region
          %p151 = scmp.lt.s32.totalorder %s11, 1
          %s152 = scalar_select %p151, %s11, 1
          %s153 = smul.addr %s152, 32
          %s154 = smul.addr %s153, 8
          %s155 = scalar_lea.vmem %s0, %s154
        $region28: #{fc1_forward.3} parent=23 // pred_fallthru
          _
      $region24: #{fc1_forward.3} parent=5 // pred_fallthru
        _
      %p156 = scmp.le.s32.totalorder 1, %s11
      %p157 = scmp.lt.s32.totalorder %s11, 3
      %p158 = pnand %p156, %p157
      %p159 = pneg %p158
      // Predicated region
      $region29: #{fc1_forward.3} parent=5 // pred_check
        _
      $region30: #{fc1_forward.3} parent=5 // pred_check_branch
        %161 = sbr.rel (%p158) target = $region32
      $region31: #{fc1_forward.3} parent=5 // pred_region
        %s162 = ssub.s32 %s11, 1
        // Predicated region
        $region33: #{fc1_forward.3} parent=31 // pred_check
          %p163 = pneg %p58
        $region34: #{fc1_forward.3} parent=31 // pred_check_branch
          %165 = sbr.rel (%p163) target = $region36
        $region35: #{fc1_forward.3} parent=31 // pred_region
          %166 = dma.done [#allocation3], 1792
        $region36: #{fc1_forward.3} parent=31 // pred_fallthru
          _
        // Predicated region
        $region37: #{fc1_forward.3} parent=31 // pred_check
          %p167 = pneg %p79
        $region38: #{fc1_forward.3} parent=31 // pred_check_branch
          %169 = sbr.rel (%p167) target = $region40
        $region39: #{fc1_forward.3} parent=31 // pred_region
          %170 = dma.done [#allocation5], 112
        $region40: #{fc1_forward.3} parent=31 // pred_fallthru
          _
        %p171 = scmp.lt.s32.totalorder %s16, 1
        %s172 = scalar_select %p171, %s16, 1
        %s173 = smul.addr %s172, 32
        %s174 = smul.addr %s173, 8
        %s175 = scalar_lea.vmem %s0, %s174
        %p176 = pneg %p37
        %p177 = pneg %p34
        %p178 = pneg %p58
        %p179 = pneg %p55
        %p180 = pneg %p79
        %p181 = pneg %p76
        %p182 = pneg %p105
        %p183 = pneg %p102
        %p184 = scmp.lt.s32.totalorder %s16, 1
        %s185 = scalar_select %p184, %s16, 1
        %s186 = smul.addr %s185, 28
        %s187 = smul.addr %s186, 8
        %s188 = scalar_lea.vmem %s3, %s187
        %p189 = scmp.lt.s32.totalorder %s16, 1
        %s190 = scalar_select %p189, %s16, 1
        %s191 = smul.addr %s190, 32
        %s192 = smul.addr %s191, 8
        %s193 = scalar_lea.vmem %s0, %s192
        %p194 = scmp.lt.s32.totalorder %s16, 1
        %s195 = scalar_select %p194, %s16, 1
        %s196 = smul.addr %s195, 28
        %s197 = smul.addr %s196, 8
        %s198 = scalar_lea.vmem %s3, %s197
        %v199 = vld [vmem:[%s193] sm:$0xff]
        %v200 = vld [vmem:[%s193 + $0x8] sm:$0xff]
        %v201 = vld [vmem:[%s193 + $0x10] sm:$0xff]
        %v202 = vld [vmem:[%s193 + $0x18] sm:$0xff]
        %v203 = vld [vmem:[%s193 + $0x20] sm:$0xff]
        %v204 = vld [vmem:[%s193 + $0x28] sm:$0xff]
        %v205 = vld [vmem:[%s193 + $0x30] sm:$0xff]
        %v206 = vld [vmem:[%s193 + $0x40] sm:$0xff]
        %v207 = vld [vmem:[%s193 + $0x48] sm:$0xff]
        %v208 = vld [vmem:[%s193 + $0x50] sm:$0xff]
        %v209 = vld [vmem:[%s193 + $0x58] sm:$0xff]
        %v210 = vld [vmem:[%s193 + $0x60] sm:$0xff]
        %v211 = vld [vmem:[%s193 + $0x68] sm:$0xff]
        %v212 = vld [vmem:[%s193 + $0x70] sm:$0xff]
        %v213 = vld [vmem:[%s193 + $0x80] sm:$0xff]
        %v214 = vld [vmem:[%s193 + $0x88] sm:$0xff]
        %v215 = vld [vmem:[%s193 + $0x90] sm:$0xff]
        %v216 = vld [vmem:[%s193 + $0x98] sm:$0xff]
        %v217 = vld [vmem:[%s193 + $0xa0] sm:$0xff]
        %v218 = vld [vmem:[%s193 + $0xa8] sm:$0xff]
        %v219 = vld [vmem:[%s193 + $0xb0] sm:$0xff]
        %v220 = vld [vmem:[%s193 + $0xc0] sm:$0xf]
        %v221 = vld [vmem:[%s193 + $0xc8] sm:$0xf]
        %v222 = vld [vmem:[%s193 + $0xd0] sm:$0xf]
        %v223 = vld [vmem:[%s193 + $0xd8] sm:$0xf]
        %v224 = vld [vmem:[%s193 + $0xe0] sm:$0xf]
        %v225 = vld [vmem:[%s193 + $0xe8] sm:$0xf]
        %v226 = vld [vmem:[%s193 + $0xf0] sm:$0xf]
        %v227 = vld [vmem:[#allocation2] ss:$8 sm:$0xf]
        %v228 = vld [vmem:[#allocation2] ss:$8 sm:$0xf0]
        %v229 = vor.u32 %v227, %v228
        %v231 = vlaneseq
        %v232 = vshrl.u32 %v231, 7
        %v233 = vsub.s32 0, %v232
        %v234 = vrot.slane %v229, %v233
        %v235 = vlaneseq
        %v236 = vshrl.u32 %v235, 7
        %v237 = vsub.s32 1, %v236
        %v238 = vrot.slane %v229, %v237
        %v239 = vlaneseq
        %v240 = vshrl.u32 %v239, 7
        %v241 = vsub.s32 2, %v240
        %v242 = vrot.slane %v229, %v241
        %v243 = vlaneseq
        %v244 = vshrl.u32 %v243, 7
        %v245 = vsub.s32 3, %v244
        %v246 = vrot.slane %v229, %v245
        %v247 = vlaneseq
        %v248 = vshrl.u32 %v247, 7
        %v249 = vsub.s32 4, %v248
        %v250 = vrot.slane %v229, %v249
        %v251 = vlaneseq
        %v252 = vshrl.u32 %v251, 7
        %v253 = vsub.s32 5, %v252
        %v254 = vrot.slane %v229, %v253
        %v255 = vlaneseq
        %v256 = vshrl.u32 %v255, 7
        %v257 = vsub.s32 6, %v256
        %v258 = vrot.slane %v229, %v257
        %v266 = vmul.f32 %v199, %v234
        %v267 = vmul.f32 %v200, %v238
        %v268 = vmul.f32 %v201, %v242
        %v269 = vmul.f32 %v202, %v246
        %v270 = vmul.f32 %v203, %v250
        %v271 = vmul.f32 %v204, %v254
        %v272 = vmul.f32 %v205, %v258
        %v273 = vmul.f32 %v206, %v234
        %v274 = vmul.f32 %v207, %v238
        %v275 = vmul.f32 %v208, %v242
        %v276 = vmul.f32 %v209, %v246
        %v277 = vmul.f32 %v210, %v250
        %v278 = vmul.f32 %v211, %v254
        %v279 = vmul.f32 %v212, %v258
        %v280 = vmul.f32 %v213, %v234
        %v281 = vmul.f32 %v214, %v238
        %v282 = vmul.f32 %v215, %v242
        %v283 = vmul.f32 %v216, %v246
        %v284 = vmul.f32 %v217, %v250
        %v285 = vmul.f32 %v218, %v254
        %v286 = vmul.f32 %v219, %v258
        %v287 = vmul.f32 %v220, %v234
        %v288 = vmul.f32 %v221, %v238
        %v289 = vmul.f32 %v222, %v242
        %v290 = vmul.f32 %v223, %v246
        %v291 = vmul.f32 %v224, %v250
        %v292 = vmul.f32 %v225, %v254
        %v293 = vmul.f32 %v226, %v258
        %v294 = vadd.f32 %v266, 0.0
        %v295 = vadd.f32 %v267, 0.0
        %v296 = vadd.f32 %v268, 0.0
        %v297 = vadd.f32 %v269, 0.0
        %v298 = vadd.f32 %v270, 0.0
        %v299 = vadd.f32 %v271, 0.0
        %v300 = vadd.f32 %v272, 0.0
        %v301 = vadd.f32 %v273, 0.0
        %v302 = vadd.f32 %v274, 0.0
        %v303 = vadd.f32 %v275, 0.0
        %v304 = vadd.f32 %v276, 0.0
        %v305 = vadd.f32 %v277, 0.0
        %v306 = vadd.f32 %v278, 0.0
        %v307 = vadd.f32 %v279, 0.0
        %v308 = vadd.f32 %v280, 0.0
        %v309 = vadd.f32 %v281, 0.0
        %v310 = vadd.f32 %v282, 0.0
        %v311 = vadd.f32 %v283, 0.0
        %v312 = vadd.f32 %v284, 0.0
        %v313 = vadd.f32 %v285, 0.0
        %v314 = vadd.f32 %v286, 0.0
        %v315 = vadd.f32 %v287, 0.0
        %v316 = vadd.f32 %v288, 0.0
        %v317 = vadd.f32 %v289, 0.0
        %v318 = vadd.f32 %v290, 0.0
        %v319 = vadd.f32 %v291, 0.0
        %v320 = vadd.f32 %v292, 0.0
        %v321 = vadd.f32 %v293, 0.0
        %v322 = vld [vmem:[%s193 + $0x38] sm:$0xff]
        %v323 = vld [vmem:[%s193 + $0x78] sm:$0xff]
        %v324 = vld [vmem:[%s193 + $0xb8] sm:$0xff]
        %v325 = vld [vmem:[%s193 + $0xf8] sm:$0xf]
        %s326 = scalar_lea.vmem [#allocation2], 1
        %v327 = vld [vmem:[%s326] ss:$8 sm:$0xf]
        %v328 = vld [vmem:[%s326] ss:$8 sm:$0xf0]
        %v329 = vor.u32 %v327, %v328
        %v331 = vlaneseq
        %v332 = vshrl.u32 %v331, 7
        %v333 = vsub.s32 0, %v332
        %v334 = vrot.slane %v329, %v333
        %v335 = vlaneseq
        %v336 = vshrl.u32 %v335, 7
        %v337 = vsub.s32 1, %v336
        %v338 = vrot.slane %v329, %v337
        %v339 = vlaneseq
        %v340 = vshrl.u32 %v339, 7
        %v341 = vsub.s32 2, %v340
        %v342 = vrot.slane %v329, %v341
        %v343 = vlaneseq
        %v344 = vshrl.u32 %v343, 7
        %v345 = vsub.s32 3, %v344
        %v346 = vrot.slane %v329, %v345
        %v347 = vlaneseq
        %v348 = vshrl.u32 %v347, 7
        %v349 = vsub.s32 4, %v348
        %v350 = vrot.slane %v329, %v349
        %v351 = vlaneseq
        %v352 = vshrl.u32 %v351, 7
        %v353 = vsub.s32 5, %v352
        %v354 = vrot.slane %v329, %v353
        %v355 = vlaneseq
        %v356 = vshrl.u32 %v355, 7
        %v357 = vsub.s32 6, %v356
        %v358 = vrot.slane %v329, %v357
        %359 = vrot.lane.b32.xlu0 %v334, 32
        %v360 = vpop.permute.xlu0 %359
        %361 = vrot.lane.b32.xlu0 %v338, 32
        %v362 = vpop.permute.xlu0 %361
        %363 = vrot.lane.b32.xlu0 %v342, 32
        %v364 = vpop.permute.xlu0 %363
        %365 = vrot.lane.b32.xlu0 %v346, 32
        %v366 = vpop.permute.xlu0 %365
        %367 = vrot.lane.b32.xlu0 %v350, 32
        %v368 = vpop.permute.xlu0 %367
        %369 = vrot.lane.b32.xlu0 %v354, 32
        %v370 = vpop.permute.xlu0 %369
        %371 = vrot.lane.b32.xlu0 %v358, 32
        %v372 = vpop.permute.xlu0 %371
        %vm373 = vcmask 261120
        %v374 = vsel %vm373, %v360, %v362
        %v375 = vsel %vm373, %v362, %v364
        %v376 = vsel %vm373, %v364, %v366
        %v377 = vsel %vm373, %v366, %v368
        %v378 = vsel %vm373, %v368, %v370
        %v379 = vsel %vm373, %v370, %v372
        %v388 = vmul.f32 %v199, %v360
        %v389 = vmul.f32 %v200, %v374
        %v390 = vmul.f32 %v201, %v375
        %v391 = vmul.f32 %v202, %v376
        %v392 = vmul.f32 %v203, %v377
        %v393 = vmul.f32 %v204, %v378
        %v394 = vmul.f32 %v205, %v379
        %v395 = vmul.f32 %v322, %v372
        %v396 = vmul.f32 %v206, %v360
        %v397 = vmul.f32 %v207, %v374
        %v398 = vmul.f32 %v208, %v375
        %v399 = vmul.f32 %v209, %v376
        %v400 = vmul.f32 %v210, %v377
        %v401 = vmul.f32 %v211, %v378
        %v402 = vmul.f32 %v212, %v379
        %v403 = vmul.f32 %v323, %v372
        %v404 = vmul.f32 %v213, %v360
        %v405 = vmul.f32 %v214, %v374
        %v406 = vmul.f32 %v215, %v375
        %v407 = vmul.f32 %v216, %v376
        %v408 = vmul.f32 %v217, %v377
        %v409 = vmul.f32 %v218, %v378
        %v410 = vmul.f32 %v219, %v379
        %v411 = vmul.f32 %v324, %v372
        %v412 = vmul.f32 %v220, %v360
        %v413 = vmul.f32 %v221, %v374
        %v414 = vmul.f32 %v222, %v375
        %v415 = vmul.f32 %v223, %v376
        %v416 = vmul.f32 %v224, %v377
        %v417 = vmul.f32 %v225, %v378
        %v418 = vmul.f32 %v226, %v379
        %v419 = vmul.f32 %v325, %v372
        %452 = vrot.lane.b32.xlu0 %v388, 96
        %v453 = vpop.permute.xlu0 %452
        %454 = vrot.lane.b32.xlu0 %v389, 96
        %v455 = vpop.permute.xlu0 %454
        %456 = vrot.lane.b32.xlu0 %v390, 96
        %v457 = vpop.permute.xlu0 %456
        %458 = vrot.lane.b32.xlu0 %v391, 96
        %v459 = vpop.permute.xlu0 %458
        %460 = vrot.lane.b32.xlu0 %v392, 96
        %v461 = vpop.permute.xlu0 %460
        %462 = vrot.lane.b32.xlu0 %v393, 96
        %v463 = vpop.permute.xlu0 %462
        %464 = vrot.lane.b32.xlu0 %v394, 96
        %v465 = vpop.permute.xlu0 %464
        %466 = vrot.lane.b32.xlu0 %v395, 96
        %v467 = vpop.permute.xlu0 %466
        %468 = vrot.lane.b32.xlu0 %v396, 96
        %v469 = vpop.permute.xlu0 %468
        %470 = vrot.lane.b32.xlu0 %v397, 96
        %v471 = vpop.permute.xlu0 %470
        %472 = vrot.lane.b32.xlu0 %v398, 96
        %v473 = vpop.permute.xlu0 %472
        %474 = vrot.lane.b32.xlu0 %v399, 96
        %v475 = vpop.permute.xlu0 %474
        %476 = vrot.lane.b32.xlu0 %v400, 96
        %v477 = vpop.permute.xlu0 %476
        %478 = vrot.lane.b32.xlu0 %v401, 96
        %v479 = vpop.permute.xlu0 %478
        %480 = vrot.lane.b32.xlu0 %v402, 96
        %v481 = vpop.permute.xlu0 %480
        %482 = vrot.lane.b32.xlu0 %v403, 96
        %v483 = vpop.permute.xlu0 %482
        %484 = vrot.lane.b32.xlu0 %v404, 96
        %v485 = vpop.permute.xlu0 %484
        %486 = vrot.lane.b32.xlu0 %v405, 96
        %v487 = vpop.permute.xlu0 %486
        %488 = vrot.lane.b32.xlu0 %v406, 96
        %v489 = vpop.permute.xlu0 %488
        %490 = vrot.lane.b32.xlu0 %v407, 96
        %v491 = vpop.permute.xlu0 %490
        %492 = vrot.lane.b32.xlu0 %v408, 96
        %v493 = vpop.permute.xlu0 %492
        %494 = vrot.lane.b32.xlu0 %v409, 96
        %v495 = vpop.permute.xlu0 %494
        %496 = vrot.lane.b32.xlu0 %v410, 96
        %v497 = vpop.permute.xlu0 %496
        %498 = vrot.lane.b32.xlu0 %v411, 96
        %v499 = vpop.permute.xlu0 %498
        %500 = vrot.lane.b32.xlu0 %v412, 96
        %v501 = vpop.permute.xlu0 %500
        %502 = vrot.lane.b32.xlu0 %v413, 96
        %v503 = vpop.permute.xlu0 %502
        %504 = vrot.lane.b32.xlu0 %v414, 96
        %v505 = vpop.permute.xlu0 %504
        %506 = vrot.lane.b32.xlu0 %v415, 96
        %v507 = vpop.permute.xlu0 %506
        %508 = vrot.lane.b32.xlu0 %v416, 96
        %v509 = vpop.permute.xlu0 %508
        %510 = vrot.lane.b32.xlu0 %v417, 96
        %v511 = vpop.permute.xlu0 %510
        %512 = vrot.lane.b32.xlu0 %v418, 96
        %v513 = vpop.permute.xlu0 %512
        %514 = vrot.lane.b32.xlu0 %v419, 96
        %v515 = vpop.permute.xlu0 %514
        %vm516 = vcmask 785408
        %v517 = vsel %vm516, %v453, %v455
        %v518 = vsel %vm516, %v455, %v457
        %v519 = vsel %vm516, %v457, %v459
        %v520 = vsel %vm516, %v459, %v461
        %v521 = vsel %vm516, %v461, %v463
        %v522 = vsel %vm516, %v463, %v465
        %v523 = vsel %vm516, %v465, %v467
        %v524 = vsel %vm516, %v469, %v471
        %v525 = vsel %vm516, %v471, %v473
        %v526 = vsel %vm516, %v473, %v475
        %v527 = vsel %vm516, %v475, %v477
        %v528 = vsel %vm516, %v477, %v479
        %v529 = vsel %vm516, %v479, %v481
        %v530 = vsel %vm516, %v481, %v483
        %v531 = vsel %vm516, %v485, %v487
        %v532 = vsel %vm516, %v487, %v489
        %v533 = vsel %vm516, %v489, %v491
        %v534 = vsel %vm516, %v491, %v493
        %v535 = vsel %vm516, %v493, %v495
        %v536 = vsel %vm516, %v495, %v497
        %v537 = vsel %vm516, %v497, %v499
        %v538 = vsel %vm516, %v501, %v503
        %v539 = vsel %vm516, %v503, %v505
        %v540 = vsel %vm516, %v505, %v507
        %v541 = vsel %vm516, %v507, %v509
        %v542 = vsel %vm516, %v509, %v511
        %v543 = vsel %vm516, %v511, %v513
        %v544 = vsel %vm516, %v513, %v515
        %v573 = vadd.f32 %v294, %v517
        %v574 = vadd.f32 %v295, %v518
        %v575 = vadd.f32 %v296, %v519
        %v576 = vadd.f32 %v297, %v520
        %v577 = vadd.f32 %v298, %v521
        %v578 = vadd.f32 %v299, %v522
        %v579 = vadd.f32 %v300, %v523
        %v580 = vadd.f32 %v301, %v524
        %v581 = vadd.f32 %v302, %v525
        %v582 = vadd.f32 %v303, %v526
        %v583 = vadd.f32 %v304, %v527
        %v584 = vadd.f32 %v305, %v528
        %v585 = vadd.f32 %v306, %v529
        %v586 = vadd.f32 %v307, %v530
        %v587 = vadd.f32 %v308, %v531
        %v588 = vadd.f32 %v309, %v532
        %v589 = vadd.f32 %v310, %v533
        %v590 = vadd.f32 %v311, %v534
        %v591 = vadd.f32 %v312, %v535
        %v592 = vadd.f32 %v313, %v536
        %v593 = vadd.f32 %v314, %v537
        %v594 = vadd.f32 %v315, %v538
        %v595 = vadd.f32 %v316, %v539
        %v596 = vadd.f32 %v317, %v540
        %v597 = vadd.f32 %v318, %v541
        %v598 = vadd.f32 %v319, %v542
        %v599 = vadd.f32 %v320, %v543
        %v600 = vadd.f32 %v321, %v544
        %s601 = scalar_lea.vmem [#allocation2], 2
        %v602 = vld [vmem:[%s601] ss:$8 sm:$0xf]
        %v603 = vld [vmem:[%s601] ss:$8 sm:$0xf0]
        %v604 = vor.u32 %v602, %v603
        %v606 = vlaneseq
        %v607 = vshrl.u32 %v606, 7
        %v608 = vsub.s32 0, %v607
        %v609 = vrot.slane %v604, %v608
        %v610 = vlaneseq
        %v611 = vshrl.u32 %v610, 7
        %v612 = vsub.s32 1, %v611
        %v613 = vrot.slane %v604, %v612
        %v614 = vlaneseq
        %v615 = vshrl.u32 %v614, 7
        %v616 = vsub.s32 2, %v615
        %v617 = vrot.slane %v604, %v616
        %v618 = vlaneseq
        %v619 = vshrl.u32 %v618, 7
        %v620 = vsub.s32 3, %v619
        %v621 = vrot.slane %v604, %v620
        %v622 = vlaneseq
        %v623 = vshrl.u32 %v622, 7
        %v624 = vsub.s32 4, %v623
        %v625 = vrot.slane %v604, %v624
        %v626 = vlaneseq
        %v627 = vshrl.u32 %v626, 7
        %v628 = vsub.s32 5, %v627
        %v629 = vrot.slane %v604, %v628
        %v630 = vlaneseq
        %v631 = vshrl.u32 %v630, 7
        %v632 = vsub.s32 6, %v631
        %v633 = vrot.slane %v604, %v632
        %634 = vrot.lane.b32.xlu0 %v609, 64
        %v635 = vpop.permute.xlu0 %634
        %636 = vrot.lane.b32.xlu0 %v613, 64
        %v637 = vpop.permute.xlu0 %636
        %638 = vrot.lane.b32.xlu0 %v617, 64
        %v639 = vpop.permute.xlu0 %638
        %640 = vrot.lane.b32.xlu0 %v621, 64
        %v641 = vpop.permute.xlu0 %640
        %642 = vrot.lane.b32.xlu0 %v625, 64
        %v643 = vpop.permute.xlu0 %642
        %644 = vrot.lane.b32.xlu0 %v629, 64
        %v645 = vpop.permute.xlu0 %644
        %646 = vrot.lane.b32.xlu0 %v633, 64
        %v647 = vpop.permute.xlu0 %646
        %vm648 = vcmask 523264
        %v649 = vsel %vm648, %v635, %v637
        %v650 = vsel %vm648, %v637, %v639
        %v651 = vsel %vm648, %v639, %v641
        %v652 = vsel %vm648, %v641, %v643
        %v653 = vsel %vm648, %v643, %v645
        %v654 = vsel %vm648, %v645, %v647
        %v663 = vmul.f32 %v199, %v635
        %v664 = vmul.f32 %v200, %v649
        %v665 = vmul.f32 %v201, %v650
        %v666 = vmul.f32 %v202, %v651
        %v667 = vmul.f32 %v203, %v652
        %v668 = vmul.f32 %v204, %v653
        %v669 = vmul.f32 %v205, %v654
        %v670 = vmul.f32 %v322, %v647
        %v671 = vmul.f32 %v206, %v635
        %v672 = vmul.f32 %v207, %v649
        %v673 = vmul.f32 %v208, %v650
        %v674 = vmul.f32 %v209, %v651
        %v675 = vmul.f32 %v210, %v652
        %v676 = vmul.f32 %v211, %v653
        %v677 = vmul.f32 %v212, %v654
        %v678 = vmul.f32 %v323, %v647
        %v679 = vmul.f32 %v213, %v635
        %v680 = vmul.f32 %v214, %v649
        %v681 = vmul.f32 %v215, %v650
        %v682 = vmul.f32 %v216, %v651
        %v683 = vmul.f32 %v217, %v652
        %v684 = vmul.f32 %v218, %v653
        %v685 = vmul.f32 %v219, %v654
        %v686 = vmul.f32 %v324, %v647
        %v687 = vmul.f32 %v220, %v635
        %v688 = vmul.f32 %v221, %v649
        %v689 = vmul.f32 %v222, %v650
        %v690 = vmul.f32 %v223, %v651
        %v691 = vmul.f32 %v224, %v652
        %v692 = vmul.f32 %v225, %v653
        %v693 = vmul.f32 %v226, %v654
        %v694 = vmul.f32 %v325, %v647
        %727 = vrot.lane.b32.xlu0 %v663, 64
        %v728 = vpop.permute.xlu0 %727
        %729 = vrot.lane.b32.xlu0 %v664, 64
        %v730 = vpop.permute.xlu0 %729
        %731 = vrot.lane.b32.xlu0 %v665, 64
        %v732 = vpop.permute.xlu0 %731
        %733 = vrot.lane.b32.xlu0 %v666, 64
        %v734 = vpop.permute.xlu0 %733
        %735 = vrot.lane.b32.xlu0 %v667, 64
        %v736 = vpop.permute.xlu0 %735
        %737 = vrot.lane.b32.xlu0 %v668, 64
        %v738 = vpop.permute.xlu0 %737
        %739 = vrot.lane.b32.xlu0 %v669, 64
        %v740 = vpop.permute.xlu0 %739
        %741 = vrot.lane.b32.xlu0 %v670, 64
        %v742 = vpop.permute.xlu0 %741
        %743 = vrot.lane.b32.xlu0 %v671, 64
        %v744 = vpop.permute.xlu0 %743
        %745 = vrot.lane.b32.xlu0 %v672, 64
        %v746 = vpop.permute.xlu0 %745
        %747 = vrot.lane.b32.xlu0 %v673, 64
        %v748 = vpop.permute.xlu0 %747
        %749 = vrot.lane.b32.xlu0 %v674, 64
        %v750 = vpop.permute.xlu0 %749
        %751 = vrot.lane.b32.xlu0 %v675, 64
        %v752 = vpop.permute.xlu0 %751
        %753 = vrot.lane.b32.xlu0 %v676, 64
        %v754 = vpop.permute.xlu0 %753
        %755 = vrot.lane.b32.xlu0 %v677, 64
        %v756 = vpop.permute.xlu0 %755
        %757 = vrot.lane.b32.xlu0 %v678, 64
        %v758 = vpop.permute.xlu0 %757
        %759 = vrot.lane.b32.xlu0 %v679, 64
        %v760 = vpop.permute.xlu0 %759
        %761 = vrot.lane.b32.xlu0 %v680, 64
        %v762 = vpop.permute.xlu0 %761
        %763 = vrot.lane.b32.xlu0 %v681, 64
        %v764 = vpop.permute.xlu0 %763
        %765 = vrot.lane.b32.xlu0 %v682, 64
        %v766 = vpop.permute.xlu0 %765
        %767 = vrot.lane.b32.xlu0 %v683, 64
        %v768 = vpop.permute.xlu0 %767
        %769 = vrot.lane.b32.xlu0 %v684, 64
        %v770 = vpop.permute.xlu0 %769
        %771 = vrot.lane.b32.xlu0 %v685, 64
        %v772 = vpop.permute.xlu0 %771
        %773 = vrot.lane.b32.xlu0 %v686, 64
        %v774 = vpop.permute.xlu0 %773
        %775 = vrot.lane.b32.xlu0 %v687, 64
        %v776 = vpop.permute.xlu0 %775
        %777 = vrot.lane.b32.xlu0 %v688, 64
        %v778 = vpop.permute.xlu0 %777
        %779 = vrot.lane.b32.xlu0 %v689, 64
        %v780 = vpop.permute.xlu0 %779
        %781 = vrot.lane.b32.xlu0 %v690, 64
        %v782 = vpop.permute.xlu0 %781
        %783 = vrot.lane.b32.xlu0 %v691, 64
        %v784 = vpop.permute.xlu0 %783
        %785 = vrot.lane.b32.xlu0 %v692, 64
        %v786 = vpop.permute.xlu0 %785
        %787 = vrot.lane.b32.xlu0 %v693, 64
        %v788 = vpop.permute.xlu0 %787
        %789 = vrot.lane.b32.xlu0 %v694, 64
        %v790 = vpop.permute.xlu0 %789
        %v791 = vsel %vm648, %v728, %v730
        %v792 = vsel %vm648, %v730, %v732
        %v793 = vsel %vm648, %v732, %v734
        %v794 = vsel %vm648, %v734, %v736
        %v795 = vsel %vm648, %v736, %v738
        %v796 = vsel %vm648, %v738, %v740
        %v797 = vsel %vm648, %v740, %v742
        %v798 = vsel %vm648, %v744, %v746
        %v799 = vsel %vm648, %v746, %v748
        %v800 = vsel %vm648, %v748, %v750
        %v801 = vsel %vm648, %v750, %v752
        %v802 = vsel %vm648, %v752, %v754
        %v803 = vsel %vm648, %v754, %v756
        %v804 = vsel %vm648, %v756, %v758
        %v805 = vsel %vm648, %v760, %v762
        %v806 = vsel %vm648, %v762, %v764
        %v807 = vsel %vm648, %v764, %v766
        %v808 = vsel %vm648, %v766, %v768
        %v809 = vsel %vm648, %v768, %v770
        %v810 = vsel %vm648, %v770, %v772
        %v811 = vsel %vm648, %v772, %v774
        %v812 = vsel %vm648, %v776, %v778
        %v813 = vsel %vm648, %v778, %v780
        %v814 = vsel %vm648, %v780, %v782
        %v815 = vsel %vm648, %v782, %v784
        %v816 = vsel %vm648, %v784, %v786
        %v817 = vsel %vm648, %v786, %v788
        %v818 = vsel %vm648, %v788, %v790
        %v847 = vadd.f32 %v573, %v791
        %v848 = vadd.f32 %v574, %v792
        %v849 = vadd.f32 %v575, %v793
        %v850 = vadd.f32 %v576, %v794
        %v851 = vadd.f32 %v577, %v795
        %v852 = vadd.f32 %v578, %v796
        %v853 = vadd.f32 %v579, %v797
        %v854 = vadd.f32 %v580, %v798
        %v855 = vadd.f32 %v581, %v799
        %v856 = vadd.f32 %v582, %v800
        %v857 = vadd.f32 %v583, %v801
        %v858 = vadd.f32 %v584, %v802
        %v859 = vadd.f32 %v585, %v803
        %v860 = vadd.f32 %v586, %v804
        %v861 = vadd.f32 %v587, %v805
        %v862 = vadd.f32 %v588, %v806
        %v863 = vadd.f32 %v589, %v807
        %v864 = vadd.f32 %v590, %v808
        %v865 = vadd.f32 %v591, %v809
        %v866 = vadd.f32 %v592, %v810
        %v867 = vadd.f32 %v593, %v811
        %v868 = vadd.f32 %v594, %v812
        %v869 = vadd.f32 %v595, %v813
        %v870 = vadd.f32 %v596, %v814
        %v871 = vadd.f32 %v597, %v815
        %v872 = vadd.f32 %v598, %v816
        %v873 = vadd.f32 %v599, %v817
        %v874 = vadd.f32 %v600, %v818
        %v875 = vld [vmem:[%s193] sm:$0xfe]
        %v876 = vld [vmem:[%s193 + $0x8] sm:$0xfe]
        %v877 = vld [vmem:[%s193 + $0x10] sm:$0xfe]
        %v878 = vld [vmem:[%s193 + $0x18] sm:$0xfe]
        %v879 = vld [vmem:[%s193 + $0x20] sm:$0xfe]
        %v880 = vld [vmem:[%s193 + $0x28] sm:$0xfe]
        %v881 = vld [vmem:[%s193 + $0x30] sm:$0xfe]
        %v882 = vld [vmem:[%s193 + $0xc0] sm:$0x1f]
        %v883 = vld [vmem:[%s193 + $0xc8] sm:$0x1f]
        %v884 = vld [vmem:[%s193 + $0xd0] sm:$0x1f]
        %v885 = vld [vmem:[%s193 + $0xd8] sm:$0x1f]
        %v886 = vld [vmem:[%s193 + $0xe0] sm:$0x1f]
        %v887 = vld [vmem:[%s193 + $0xe8] sm:$0x1f]
        %v888 = vld [vmem:[%s193 + $0xf0] sm:$0x1f]
        %s889 = scalar_lea.vmem [#allocation2], 3
        %v890 = vld [vmem:[%s889] ss:$8 sm:$0xf]
        %v891 = vld [vmem:[%s889] ss:$8 sm:$0xf0]
        %v892 = vor.u32 %v890, %v891
        %v894 = vlaneseq
        %v895 = vshrl.u32 %v894, 7
        %v896 = vsub.s32 0, %v895
        %v897 = vrot.slane %v892, %v896
        %v898 = vlaneseq
        %v899 = vshrl.u32 %v898, 7
        %v900 = vsub.s32 1, %v899
        %v901 = vrot.slane %v892, %v900
        %v902 = vlaneseq
        %v903 = vshrl.u32 %v902, 7
        %v904 = vsub.s32 2, %v903
        %v905 = vrot.slane %v892, %v904
        %v906 = vlaneseq
        %v907 = vshrl.u32 %v906, 7
        %v908 = vsub.s32 3, %v907
        %v909 = vrot.slane %v892, %v908
        %v910 = vlaneseq
        %v911 = vshrl.u32 %v910, 7
        %v912 = vsub.s32 4, %v911
        %v913 = vrot.slane %v892, %v912
        %v914 = vlaneseq
        %v915 = vshrl.u32 %v914, 7
        %v916 = vsub.s32 5, %v915
        %v917 = vrot.slane %v892, %v916
        %v918 = vlaneseq
        %v919 = vshrl.u32 %v918, 7
        %v920 = vsub.s32 6, %v919
        %v921 = vrot.slane %v892, %v920
        %v929 = vmul.f32 %v875, %v897
        %v930 = vmul.f32 %v876, %v901
        %v931 = vmul.f32 %v877, %v905
        %v932 = vmul.f32 %v878, %v909
        %v933 = vmul.f32 %v879, %v913
        %v934 = vmul.f32 %v880, %v917
        %v935 = vmul.f32 %v881, %v921
        %v936 = vmul.f32 %v206, %v897
        %v937 = vmul.f32 %v207, %v901
        %v938 = vmul.f32 %v208, %v905
        %v939 = vmul.f32 %v209, %v909
        %v940 = vmul.f32 %v210, %v913
        %v941 = vmul.f32 %v211, %v917
        %v942 = vmul.f32 %v212, %v921
        %v943 = vmul.f32 %v213, %v897
        %v944 = vmul.f32 %v214, %v901
        %v945 = vmul.f32 %v215, %v905
        %v946 = vmul.f32 %v216, %v909
        %v947 = vmul.f32 %v217, %v913
        %v948 = vmul.f32 %v218, %v917
        %v949 = vmul.f32 %v219, %v921
        %v950 = vmul.f32 %v882, %v897
        %v951 = vmul.f32 %v883, %v901
        %v952 = vmul.f32 %v884, %v905
        %v953 = vmul.f32 %v885, %v909
        %v954 = vmul.f32 %v886, %v913
        %v955 = vmul.f32 %v887, %v917
        %v956 = vmul.f32 %v888, %v921
        %vm985 = vcmask 1046528
        %v986 = vrot.slane %v929, 1
        %v987 = vrot.slane %v936, 1
        %v988 = vsel %vm985, %v986, %v987
        %v989 = vrot.slane %v930, 1
        %v990 = vrot.slane %v937, 1
        %v991 = vsel %vm985, %v989, %v990
        %v992 = vrot.slane %v931, 1
        %v993 = vrot.slane %v938, 1
        %v994 = vsel %vm985, %v992, %v993
        %v995 = vrot.slane %v932, 1
        %v996 = vrot.slane %v939, 1
        %v997 = vsel %vm985, %v995, %v996
        %v998 = vrot.slane %v933, 1
        %v999 = vrot.slane %v940, 1
        %v1000 = vsel %vm985, %v998, %v999
        %v1001 = vrot.slane %v934, 1
        %v1002 = vrot.slane %v941, 1
        %v1003 = vsel %vm985, %v1001, %v1002
        %v1004 = vrot.slane %v935, 1
        %v1005 = vrot.slane %v942, 1
        %v1006 = vsel %vm985, %v1004, %v1005
        %v1007 = vrot.slane %v943, 1
        %v1008 = vsel %vm985, %v987, %v1007
        %v1009 = vrot.slane %v944, 1
        %v1010 = vsel %vm985, %v990, %v1009
        %v1011 = vrot.slane %v945, 1
        %v1012 = vsel %vm985, %v993, %v1011
        %v1013 = vrot.slane %v946, 1
        %v1014 = vsel %vm985, %v996, %v1013
        %v1015 = vrot.slane %v947, 1
        %v1016 = vsel %vm985, %v999, %v1015
        %v1017 = vrot.slane %v948, 1
        %v1018 = vsel %vm985, %v1002, %v1017
        %v1019 = vrot.slane %v949, 1
        %v1020 = vsel %vm985, %v1005, %v1019
        %v1021 = vrot.slane %v950, 1
        %v1022 = vsel %vm985, %v1007, %v1021
        %v1023 = vrot.slane %v951, 1
        %v1024 = vsel %vm985, %v1009, %v1023
        %v1025 = vrot.slane %v952, 1
        %v1026 = vsel %vm985, %v1011, %v1025
        %v1027 = vrot.slane %v953, 1
        %v1028 = vsel %vm985, %v1013, %v1027
        %v1029 = vrot.slane %v954, 1
        %v1030 = vsel %vm985, %v1015, %v1029
        %v1031 = vrot.slane %v955, 1
        %v1032 = vsel %vm985, %v1017, %v1031
        %v1033 = vrot.slane %v956, 1
        %v1034 = vsel %vm985, %v1019, %v1033
        %v1063 = vadd.f32 %v847, %v988
        %v1064 = vadd.f32 %v848, %v991
        %v1065 = vadd.f32 %v849, %v994
        %v1066 = vadd.f32 %v850, %v997
        %v1067 = vadd.f32 %v851, %v1000
        %v1068 = vadd.f32 %v852, %v1003
        %v1069 = vadd.f32 %v853, %v1006
        %v1070 = vadd.f32 %v854, %v1008
        %v1071 = vadd.f32 %v855, %v1010
        %v1072 = vadd.f32 %v856, %v1012
        %v1073 = vadd.f32 %v857, %v1014
        %v1074 = vadd.f32 %v858, %v1016
        %v1075 = vadd.f32 %v859, %v1018
        %v1076 = vadd.f32 %v860, %v1020
        %v1077 = vadd.f32 %v861, %v1022
        %v1078 = vadd.f32 %v862, %v1024
        %v1079 = vadd.f32 %v863, %v1026
        %v1080 = vadd.f32 %v864, %v1028
        %v1081 = vadd.f32 %v865, %v1030
        %v1082 = vadd.f32 %v866, %v1032
        %v1083 = vadd.f32 %v867, %v1034
        %v1084 = vadd.f32 %v868, %v1021
        %v1085 = vadd.f32 %v869, %v1023
        %v1086 = vadd.f32 %v870, %v1025
        %v1087 = vadd.f32 %v871, %v1027
        %v1088 = vadd.f32 %v872, %v1029
        %v1089 = vadd.f32 %v873, %v1031
        %v1090 = vadd.f32 %v874, %v1033
        %v1091 = vld [vmem:[%s193 + $0x38] sm:$0xfe]
        %v1092 = vld [vmem:[%s193 + $0xf8] sm:$0x1f]
        %s1093 = scalar_lea.vmem [#allocation2], 4
        %v1094 = vld [vmem:[%s1093] ss:$8 sm:$0xf]
        %v1095 = vld [vmem:[%s1093] ss:$8 sm:$0xf0]
        %v1096 = vor.u32 %v1094, %v1095
        %v1098 = vlaneseq
        %v1099 = vshrl.u32 %v1098, 7
        %v1100 = vsub.s32 0, %v1099
        %v1101 = vrot.slane %v1096, %v1100
        %v1102 = vlaneseq
        %v1103 = vshrl.u32 %v1102, 7
        %v1104 = vsub.s32 1, %v1103
        %v1105 = vrot.slane %v1096, %v1104
        %v1106 = vlaneseq
        %v1107 = vshrl.u32 %v1106, 7
        %v1108 = vsub.s32 2, %v1107
        %v1109 = vrot.slane %v1096, %v1108
        %v1110 = vlaneseq
        %v1111 = vshrl.u32 %v1110, 7
        %v1112 = vsub.s32 3, %v1111
        %v1113 = vrot.slane %v1096, %v1112
        %v1114 = vlaneseq
        %v1115 = vshrl.u32 %v1114, 7
        %v1116 = vsub.s32 4, %v1115
        %v1117 = vrot.slane %v1096, %v1116
        %v1118 = vlaneseq
        %v1119 = vshrl.u32 %v1118, 7
        %v1120 = vsub.s32 5, %v1119
        %v1121 = vrot.slane %v1096, %v1120
        %v1122 = vlaneseq
        %v1123 = vshrl.u32 %v1122, 7
        %v1124 = vsub.s32 6, %v1123
        %v1125 = vrot.slane %v1096, %v1124
        %1126 = vrot.lane.b32.xlu0 %v1101, 32
        %v1127 = vpop.permute.xlu0 %1126
        %1128 = vrot.lane.b32.xlu0 %v1105, 32
        %v1129 = vpop.permute.xlu0 %1128
        %1130 = vrot.lane.b32.xlu0 %v1109, 32
        %v1131 = vpop.permute.xlu0 %1130
        %1132 = vrot.lane.b32.xlu0 %v1113, 32
        %v1133 = vpop.permute.xlu0 %1132
        %1134 = vrot.lane.b32.xlu0 %v1117, 32
        %v1135 = vpop.permute.xlu0 %1134
        %1136 = vrot.lane.b32.xlu0 %v1121, 32
        %v1137 = vpop.permute.xlu0 %1136
        %1138 = vrot.lane.b32.xlu0 %v1125, 32
        %v1139 = vpop.permute.xlu0 %1138
        %v1140 = vsel %vm373, %v1127, %v1129
        %v1141 = vsel %vm373, %v1129, %v1131
        %v1142 = vsel %vm373, %v1131, %v1133
        %v1143 = vsel %vm373, %v1133, %v1135
        %v1144 = vsel %vm373, %v1135, %v1137
        %v1145 = vsel %vm373, %v1137, %v1139
        %v1154 = vmul.f32 %v875, %v1127
        %v1155 = vmul.f32 %v876, %v1140
        %v1156 = vmul.f32 %v877, %v1141
        %v1157 = vmul.f32 %v878, %v1142
        %v1158 = vmul.f32 %v879, %v1143
        %v1159 = vmul.f32 %v880, %v1144
        %v1160 = vmul.f32 %v881, %v1145
        %v1161 = vmul.f32 %v1091, %v1139
        %v1162 = vmul.f32 %v206, %v1127
        %v1163 = vmul.f32 %v207, %v1140
        %v1164 = vmul.f32 %v208, %v1141
        %v1165 = vmul.f32 %v209, %v1142
        %v1166 = vmul.f32 %v210, %v1143
        %v1167 = vmul.f32 %v211, %v1144
        %v1168 = vmul.f32 %v212, %v1145
        %v1169 = vmul.f32 %v323, %v1139
        %v1170 = vmul.f32 %v213, %v1127
        %v1171 = vmul.f32 %v214, %v1140
        %v1172 = vmul.f32 %v215, %v1141
        %v1173 = vmul.f32 %v216, %v1142
        %v1174 = vmul.f32 %v217, %v1143
        %v1175 = vmul.f32 %v218, %v1144
        %v1176 = vmul.f32 %v219, %v1145
        %v1177 = vmul.f32 %v324, %v1139
        %v1178 = vmul.f32 %v882, %v1127
        %v1179 = vmul.f32 %v883, %v1140
        %v1180 = vmul.f32 %v884, %v1141
        %v1181 = vmul.f32 %v885, %v1142
        %v1182 = vmul.f32 %v886, %v1143
        %v1183 = vmul.f32 %v887, %v1144
        %v1184 = vmul.f32 %v888, %v1145
        %v1185 = vmul.f32 %v1092, %v1139
        %v1218 = vrot.slane %v1154, 1
        %v1219 = vrot.slane %v1162, 1
        %v1220 = vsel %vm985, %v1218, %v1219
        %v1221 = vrot.slane %v1155, 1
        %v1222 = vrot.slane %v1163, 1
        %v1223 = vsel %vm985, %v1221, %v1222
        %v1224 = vrot.slane %v1156, 1
        %v1225 = vrot.slane %v1164, 1
        %v1226 = vsel %vm985, %v1224, %v1225
        %v1227 = vrot.slane %v1157, 1
        %v1228 = vrot.slane %v1165, 1
        %v1229 = vsel %vm985, %v1227, %v1228
        %v1230 = vrot.slane %v1158, 1
        %v1231 = vrot.slane %v1166, 1
        %v1232 = vsel %vm985, %v1230, %v1231
        %v1233 = vrot.slane %v1159, 1
        %v1234 = vrot.slane %v1167, 1
        %v1235 = vsel %vm985, %v1233, %v1234
        %v1236 = vrot.slane %v1160, 1
        %v1237 = vrot.slane %v1168, 1
        %v1238 = vsel %vm985, %v1236, %v1237
        %v1239 = vrot.slane %v1161, 1
        %v1240 = vrot.slane %v1169, 1
        %v1241 = vsel %vm985, %v1239, %v1240
        %v1242 = vrot.slane %v1170, 1
        %v1243 = vsel %vm985, %v1219, %v1242
        %v1244 = vrot.slane %v1171, 1
        %v1245 = vsel %vm985, %v1222, %v1244
        %v1246 = vrot.slane %v1172, 1
        %v1247 = vsel %vm985, %v1225, %v1246
        %v1248 = vrot.slane %v1173, 1
        %v1249 = vsel %vm985, %v1228, %v1248
        %v1250 = vrot.slane %v1174, 1
        %v1251 = vsel %vm985, %v1231, %v1250
        %v1252 = vrot.slane %v1175, 1
        %v1253 = vsel %vm985, %v1234, %v1252
        %v1254 = vrot.slane %v1176, 1
        %v1255 = vsel %vm985, %v1237, %v1254
        %v1256 = vrot.slane %v1177, 1
        %v1257 = vsel %vm985, %v1240, %v1256
        %v1258 = vrot.slane %v1178, 1
        %v1259 = vsel %vm985, %v1242, %v1258
        %v1260 = vrot.slane %v1179, 1
        %v1261 = vsel %vm985, %v1244, %v1260
        %v1262 = vrot.slane %v1180, 1
        %v1263 = vsel %vm985, %v1246, %v1262
        %v1264 = vrot.slane %v1181, 1
        %v1265 = vsel %vm985, %v1248, %v1264
        %v1266 = vrot.slane %v1182, 1
        %v1267 = vsel %vm985, %v1250, %v1266
        %v1268 = vrot.slane %v1183, 1
        %v1269 = vsel %vm985, %v1252, %v1268
        %v1270 = vrot.slane %v1184, 1
        %v1271 = vsel %vm985, %v1254, %v1270
        %v1272 = vrot.slane %v1185, 1
        %v1273 = vsel %vm985, %v1256, %v1272
        %1274 = vrot.lane.b32.xlu0 %v1220, 96
        %v1275 = vpop.permute.xlu0 %1274
        %1276 = vrot.lane.b32.xlu0 %v1223, 96
        %v1277 = vpop.permute.xlu0 %1276
        %1278 = vrot.lane.b32.xlu0 %v1226, 96
        %v1279 = vpop.permute.xlu0 %1278
        %1280 = vrot.lane.b32.xlu0 %v1229, 96
        %v1281 = vpop.permute.xlu0 %1280
        %1282 = vrot.lane.b32.xlu0 %v1232, 96
        %v1283 = vpop.permute.xlu0 %1282
        %1284 = vrot.lane.b32.xlu0 %v1235, 96
        %v1285 = vpop.permute.xlu0 %1284
        %1286 = vrot.lane.b32.xlu0 %v1238, 96
        %v1287 = vpop.permute.xlu0 %1286
        %1288 = vrot.lane.b32.xlu0 %v1241, 96
        %v1289 = vpop.permute.xlu0 %1288
        %1290 = vrot.lane.b32.xlu0 %v1243, 96
        %v1291 = vpop.permute.xlu0 %1290
        %1292 = vrot.lane.b32.xlu0 %v1245, 96
        %v1293 = vpop.permute.xlu0 %1292
        %1294 = vrot.lane.b32.xlu0 %v1247, 96
        %v1295 = vpop.permute.xlu0 %1294
        %1296 = vrot.lane.b32.xlu0 %v1249, 96
        %v1297 = vpop.permute.xlu0 %1296
        %1298 = vrot.lane.b32.xlu0 %v1251, 96
        %v1299 = vpop.permute.xlu0 %1298
        %1300 = vrot.lane.b32.xlu0 %v1253, 96
        %v1301 = vpop.permute.xlu0 %1300
        %1302 = vrot.lane.b32.xlu0 %v1255, 96
        %v1303 = vpop.permute.xlu0 %1302
        %1304 = vrot.lane.b32.xlu0 %v1257, 96
        %v1305 = vpop.permute.xlu0 %1304
        %1306 = vrot.lane.b32.xlu0 %v1259, 96
        %v1307 = vpop.permute.xlu0 %1306
        %1308 = vrot.lane.b32.xlu0 %v1261, 96
        %v1309 = vpop.permute.xlu0 %1308
        %1310 = vrot.lane.b32.xlu0 %v1263, 96
        %v1311 = vpop.permute.xlu0 %1310
        %1312 = vrot.lane.b32.xlu0 %v1265, 96
        %v1313 = vpop.permute.xlu0 %1312
        %1314 = vrot.lane.b32.xlu0 %v1267, 96
        %v1315 = vpop.permute.xlu0 %1314
        %1316 = vrot.lane.b32.xlu0 %v1269, 96
        %v1317 = vpop.permute.xlu0 %1316
        %1318 = vrot.lane.b32.xlu0 %v1271, 96
        %v1319 = vpop.permute.xlu0 %1318
        %1320 = vrot.lane.b32.xlu0 %v1273, 96
        %v1321 = vpop.permute.xlu0 %1320
        %1322 = vrot.lane.b32.xlu0 %v1258, 96
        %v1323 = vpop.permute.xlu0 %1322
        %1324 = vrot.lane.b32.xlu0 %v1260, 96
        %v1325 = vpop.permute.xlu0 %1324
        %1326 = vrot.lane.b32.xlu0 %v1262, 96
        %v1327 = vpop.permute.xlu0 %1326
        %1328 = vrot.lane.b32.xlu0 %v1264, 96
        %v1329 = vpop.permute.xlu0 %1328
        %1330 = vrot.lane.b32.xlu0 %v1266, 96
        %v1331 = vpop.permute.xlu0 %1330
        %1332 = vrot.lane.b32.xlu0 %v1268, 96
        %v1333 = vpop.permute.xlu0 %1332
        %1334 = vrot.lane.b32.xlu0 %v1270, 96
        %v1335 = vpop.permute.xlu0 %1334
        %1336 = vrot.lane.b32.xlu0 %v1272, 96
        %v1337 = vpop.permute.xlu0 %1336
        %v1338 = vsel %vm516, %v1275, %v1277
        %v1339 = vsel %vm516, %v1277, %v1279
        %v1340 = vsel %vm516, %v1279, %v1281
        %v1341 = vsel %vm516, %v1281, %v1283
        %v1342 = vsel %vm516, %v1283, %v1285
        %v1343 = vsel %vm516, %v1285, %v1287
        %v1344 = vsel %vm516, %v1287, %v1289
        %v1345 = vsel %vm516, %v1291, %v1293
        %v1346 = vsel %vm516, %v1293, %v1295
        %v1347 = vsel %vm516, %v1295, %v1297
        %v1348 = vsel %vm516, %v1297, %v1299
        %v1349 = vsel %vm516, %v1299, %v1301
        %v1350 = vsel %vm516, %v1301, %v1303
        %v1351 = vsel %vm516, %v1303, %v1305
        %v1352 = vsel %vm516, %v1307, %v1309
        %v1353 = vsel %vm516, %v1309, %v1311
        %v1354 = vsel %vm516, %v1311, %v1313
        %v1355 = vsel %vm516, %v1313, %v1315
        %v1356 = vsel %vm516, %v1315, %v1317
        %v1357 = vsel %vm516, %v1317, %v1319
        %v1358 = vsel %vm516, %v1319, %v1321
        %v1359 = vsel %vm516, %v1323, %v1325
        %v1360 = vsel %vm516, %v1325, %v1327
        %v1361 = vsel %vm516, %v1327, %v1329
        %v1362 = vsel %vm516, %v1329, %v1331
        %v1363 = vsel %vm516, %v1331, %v1333
        %v1364 = vsel %vm516, %v1333, %v1335
        %v1365 = vsel %vm516, %v1335, %v1337
        %v1394 = vadd.f32 %v1063, %v1338
        %v1395 = vadd.f32 %v1064, %v1339
        %v1396 = vadd.f32 %v1065, %v1340
        %v1397 = vadd.f32 %v1066, %v1341
        %v1398 = vadd.f32 %v1067, %v1342
        %v1399 = vadd.f32 %v1068, %v1343
        %v1400 = vadd.f32 %v1069, %v1344
        %v1401 = vadd.f32 %v1070, %v1345
        %v1402 = vadd.f32 %v1071, %v1346
        %v1403 = vadd.f32 %v1072, %v1347
        %v1404 = vadd.f32 %v1073, %v1348
        %v1405 = vadd.f32 %v1074, %v1349
        %v1406 = vadd.f32 %v1075, %v1350
        %v1407 = vadd.f32 %v1076, %v1351
        %v1408 = vadd.f32 %v1077, %v1352
        %v1409 = vadd.f32 %v1078, %v1353
        %v1410 = vadd.f32 %v1079, %v1354
        %v1411 = vadd.f32 %v1080, %v1355
        %v1412 = vadd.f32 %v1081, %v1356
        %v1413 = vadd.f32 %v1082, %v1357
        %v1414 = vadd.f32 %v1083, %v1358
        %v1415 = vadd.f32 %v1084, %v1359
        %v1416 = vadd.f32 %v1085, %v1360
        %v1417 = vadd.f32 %v1086, %v1361
        %v1418 = vadd.f32 %v1087, %v1362
        %v1419 = vadd.f32 %v1088, %v1363
        %v1420 = vadd.f32 %v1089, %v1364
        %v1421 = vadd.f32 %v1090, %v1365
        %s1422 = scalar_lea.vmem [#allocation2], 5
        %v1423 = vld [vmem:[%s1422] ss:$8 sm:$0xf]
        %v1424 = vld [vmem:[%s1422] ss:$8 sm:$0xf0]
        %v1425 = vor.u32 %v1423, %v1424
        %v1427 = vlaneseq
        %v1428 = vshrl.u32 %v1427, 7
        %v1429 = vsub.s32 0, %v1428
        %v1430 = vrot.slane %v1425, %v1429
        %v1431 = vlaneseq
        %v1432 = vshrl.u32 %v1431, 7
        %v1433 = vsub.s32 1, %v1432
        %v1434 = vrot.slane %v1425, %v1433
        %v1435 = vlaneseq
        %v1436 = vshrl.u32 %v1435, 7
        %v1437 = vsub.s32 2, %v1436
        %v1438 = vrot.slane %v1425, %v1437
        %v1439 = vlaneseq
        %v1440 = vshrl.u32 %v1439, 7
        %v1441 = vsub.s32 3, %v1440
        %v1442 = vrot.slane %v1425, %v1441
        %v1443 = vlaneseq
        %v1444 = vshrl.u32 %v1443, 7
        %v1445 = vsub.s32 4, %v1444
        %v1446 = vrot.slane %v1425, %v1445
        %v1447 = vlaneseq
        %v1448 = vshrl.u32 %v1447, 7
        %v1449 = vsub.s32 5, %v1448
        %v1450 = vrot.slane %v1425, %v1449
        %v1451 = vlaneseq
        %v1452 = vshrl.u32 %v1451, 7
        %v1453 = vsub.s32 6, %v1452
        %v1454 = vrot.slane %v1425, %v1453
        %1455 = vrot.lane.b32.xlu0 %v1430, 64
        %v1456 = vpop.permute.xlu0 %1455
        %1457 = vrot.lane.b32.xlu0 %v1434, 64
        %v1458 = vpop.permute.xlu0 %1457
        %1459 = vrot.lane.b32.xlu0 %v1438, 64
        %v1460 = vpop.permute.xlu0 %1459
        %1461 = vrot.lane.b32.xlu0 %v1442, 64
        %v1462 = vpop.permute.xlu0 %1461
        %1463 = vrot.lane.b32.xlu0 %v1446, 64
        %v1464 = vpop.permute.xlu0 %1463
        %1465 = vrot.lane.b32.xlu0 %v1450, 64
        %v1466 = vpop.permute.xlu0 %1465
        %1467 = vrot.lane.b32.xlu0 %v1454, 64
        %v1468 = vpop.permute.xlu0 %1467
        %v1469 = vsel %vm648, %v1456, %v1458
        %v1470 = vsel %vm648, %v1458, %v1460
        %v1471 = vsel %vm648, %v1460, %v1462
        %v1472 = vsel %vm648, %v1462, %v1464
        %v1473 = vsel %vm648, %v1464, %v1466
        %v1474 = vsel %vm648, %v1466, %v1468
        %v1483 = vmul.f32 %v875, %v1456
        %v1484 = vmul.f32 %v876, %v1469
        %v1485 = vmul.f32 %v877, %v1470
        %v1486 = vmul.f32 %v878, %v1471
        %v1487 = vmul.f32 %v879, %v1472
        %v1488 = vmul.f32 %v880, %v1473
        %v1489 = vmul.f32 %v881, %v1474
        %v1490 = vmul.f32 %v1091, %v1468
        %v1491 = vmul.f32 %v206, %v1456
        %v1492 = vmul.f32 %v207, %v1469
        %v1493 = vmul.f32 %v208, %v1470
        %v1494 = vmul.f32 %v209, %v1471
        %v1495 = vmul.f32 %v210, %v1472
        %v1496 = vmul.f32 %v211, %v1473
        %v1497 = vmul.f32 %v212, %v1474
        %v1498 = vmul.f32 %v323, %v1468
        %v1499 = vmul.f32 %v213, %v1456
        %v1500 = vmul.f32 %v214, %v1469
        %v1501 = vmul.f32 %v215, %v1470
        %v1502 = vmul.f32 %v216, %v1471
        %v1503 = vmul.f32 %v217, %v1472
        %v1504 = vmul.f32 %v218, %v1473
        %v1505 = vmul.f32 %v219, %v1474
        %v1506 = vmul.f32 %v324, %v1468
        %v1507 = vmul.f32 %v882, %v1456
        %v1508 = vmul.f32 %v883, %v1469
        %v1509 = vmul.f32 %v884, %v1470
        %v1510 = vmul.f32 %v885, %v1471
        %v1511 = vmul.f32 %v886, %v1472
        %v1512 = vmul.f32 %v887, %v1473
        %v1513 = vmul.f32 %v888, %v1474
        %v1514 = vmul.f32 %v1092, %v1468
        %v1547 = vrot.slane %v1483, 1
        %v1548 = vrot.slane %v1491, 1
        %v1549 = vsel %vm985, %v1547, %v1548
        %v1550 = vrot.slane %v1484, 1
        %v1551 = vrot.slane %v1492, 1
        %v1552 = vsel %vm985, %v1550, %v1551
        %v1553 = vrot.slane %v1485, 1
        %v1554 = vrot.slane %v1493, 1
        %v1555 = vsel %vm985, %v1553, %v1554
        %v1556 = vrot.slane %v1486, 1
        %v1557 = vrot.slane %v1494, 1
        %v1558 = vsel %vm985, %v1556, %v1557
        %v1559 = vrot.slane %v1487, 1
        %v1560 = vrot.slane %v1495, 1
        %v1561 = vsel %vm985, %v1559, %v1560
        %v1562 = vrot.slane %v1488, 1
        %v1563 = vrot.slane %v1496, 1
        %v1564 = vsel %vm985, %v1562, %v1563
        %v1565 = vrot.slane %v1489, 1
        %v1566 = vrot.slane %v1497, 1
        %v1567 = vsel %vm985, %v1565, %v1566
        %v1568 = vrot.slane %v1490, 1
        %v1569 = vrot.slane %v1498, 1
        %v1570 = vsel %vm985, %v1568, %v1569
        %v1571 = vrot.slane %v1499, 1
        %v1572 = vsel %vm985, %v1548, %v1571
        %v1573 = vrot.slane %v1500, 1
        %v1574 = vsel %vm985, %v1551, %v1573
        %v1575 = vrot.slane %v1501, 1
        %v1576 = vsel %vm985, %v1554, %v1575
        %v1577 = vrot.slane %v1502, 1
        %v1578 = vsel %vm985, %v1557, %v1577
        %v1579 = vrot.slane %v1503, 1
        %v1580 = vsel %vm985, %v1560, %v1579
        %v1581 = vrot.slane %v1504, 1
        %v1582 = vsel %vm985, %v1563, %v1581
        %v1583 = vrot.slane %v1505, 1
        %v1584 = vsel %vm985, %v1566, %v1583
        %v1585 = vrot.slane %v1506, 1
        %v1586 = vsel %vm985, %v1569, %v1585
        %v1587 = vrot.slane %v1507, 1
        %v1588 = vsel %vm985, %v1571, %v1587
        %v1589 = vrot.slane %v1508, 1
        %v1590 = vsel %vm985, %v1573, %v1589
        %v1591 = vrot.slane %v1509, 1
        %v1592 = vsel %vm985, %v1575, %v1591
        %v1593 = vrot.slane %v1510, 1
        %v1594 = vsel %vm985, %v1577, %v1593
        %v1595 = vrot.slane %v1511, 1
        %v1596 = vsel %vm985, %v1579, %v1595
        %v1597 = vrot.slane %v1512, 1
        %v1598 = vsel %vm985, %v1581, %v1597
        %v1599 = vrot.slane %v1513, 1
        %v1600 = vsel %vm985, %v1583, %v1599
        %v1601 = vrot.slane %v1514, 1
        %v1602 = vsel %vm985, %v1585, %v1601
        %1603 = vrot.lane.b32.xlu0 %v1549, 64
        %v1604 = vpop.permute.xlu0 %1603
        %1605 = vrot.lane.b32.xlu0 %v1552, 64
        %v1606 = vpop.permute.xlu0 %1605
        %1607 = vrot.lane.b32.xlu0 %v1555, 64
        %v1608 = vpop.permute.xlu0 %1607
        %1609 = vrot.lane.b32.xlu0 %v1558, 64
        %v1610 = vpop.permute.xlu0 %1609
        %1611 = vrot.lane.b32.xlu0 %v1561, 64
        %v1612 = vpop.permute.xlu0 %1611
        %1613 = vrot.lane.b32.xlu0 %v1564, 64
        %v1614 = vpop.permute.xlu0 %1613
        %1615 = vrot.lane.b32.xlu0 %v1567, 64
        %v1616 = vpop.permute.xlu0 %1615
        %1617 = vrot.lane.b32.xlu0 %v1570, 64
        %v1618 = vpop.permute.xlu0 %1617
        %1619 = vrot.lane.b32.xlu0 %v1572, 64
        %v1620 = vpop.permute.xlu0 %1619
        %1621 = vrot.lane.b32.xlu0 %v1574, 64
        %v1622 = vpop.permute.xlu0 %1621
        %1623 = vrot.lane.b32.xlu0 %v1576, 64
        %v1624 = vpop.permute.xlu0 %1623
        %1625 = vrot.lane.b32.xlu0 %v1578, 64
        %v1626 = vpop.permute.xlu0 %1625
        %1627 = vrot.lane.b32.xlu0 %v1580, 64
        %v1628 = vpop.permute.xlu0 %1627
        %1629 = vrot.lane.b32.xlu0 %v1582, 64
        %v1630 = vpop.permute.xlu0 %1629
        %1631 = vrot.lane.b32.xlu0 %v1584, 64
        %v1632 = vpop.permute.xlu0 %1631
        %1633 = vrot.lane.b32.xlu0 %v1586, 64
        %v1634 = vpop.permute.xlu0 %1633
        %1635 = vrot.lane.b32.xlu0 %v1588, 64
        %v1636 = vpop.permute.xlu0 %1635
        %1637 = vrot.lane.b32.xlu0 %v1590, 64
        %v1638 = vpop.permute.xlu0 %1637
        %1639 = vrot.lane.b32.xlu0 %v1592, 64
        %v1640 = vpop.permute.xlu0 %1639
        %1641 = vrot.lane.b32.xlu0 %v1594, 64
        %v1642 = vpop.permute.xlu0 %1641
        %1643 = vrot.lane.b32.xlu0 %v1596, 64
        %v1644 = vpop.permute.xlu0 %1643
        %1645 = vrot.lane.b32.xlu0 %v1598, 64
        %v1646 = vpop.permute.xlu0 %1645
        %1647 = vrot.lane.b32.xlu0 %v1600, 64
        %v1648 = vpop.permute.xlu0 %1647
        %1649 = vrot.lane.b32.xlu0 %v1602, 64
        %v1650 = vpop.permute.xlu0 %1649
        %1651 = vrot.lane.b32.xlu0 %v1587, 64
        %v1652 = vpop.permute.xlu0 %1651
        %1653 = vrot.lane.b32.xlu0 %v1589, 64
        %v1654 = vpop.permute.xlu0 %1653
        %1655 = vrot.lane.b32.xlu0 %v1591, 64
        %v1656 = vpop.permute.xlu0 %1655
        %1657 = vrot.lane.b32.xlu0 %v1593, 64
        %v1658 = vpop.permute.xlu0 %1657
        %1659 = vrot.lane.b32.xlu0 %v1595, 64
        %v1660 = vpop.permute.xlu0 %1659
        %1661 = vrot.lane.b32.xlu0 %v1597, 64
        %v1662 = vpop.permute.xlu0 %1661
        %1663 = vrot.lane.b32.xlu0 %v1599, 64
        %v1664 = vpop.permute.xlu0 %1663
        %1665 = vrot.lane.b32.xlu0 %v1601, 64
        %v1666 = vpop.permute.xlu0 %1665
        %v1667 = vsel %vm648, %v1604, %v1606
        %v1668 = vsel %vm648, %v1606, %v1608
        %v1669 = vsel %vm648, %v1608, %v1610
        %v1670 = vsel %vm648, %v1610, %v1612
        %v1671 = vsel %vm648, %v1612, %v1614
        %v1672 = vsel %vm648, %v1614, %v1616
        %v1673 = vsel %vm648, %v1616, %v1618
        %v1674 = vsel %vm648, %v1620, %v1622
        %v1675 = vsel %vm648, %v1622, %v1624
        %v1676 = vsel %vm648, %v1624, %v1626
        %v1677 = vsel %vm648, %v1626, %v1628
        %v1678 = vsel %vm648, %v1628, %v1630
        %v1679 = vsel %vm648, %v1630, %v1632
        %v1680 = vsel %vm648, %v1632, %v1634
        %v1681 = vsel %vm648, %v1636, %v1638
        %v1682 = vsel %vm648, %v1638, %v1640
        %v1683 = vsel %vm648, %v1640, %v1642
        %v1684 = vsel %vm648, %v1642, %v1644
        %v1685 = vsel %vm648, %v1644, %v1646
        %v1686 = vsel %vm648, %v1646, %v1648
        %v1687 = vsel %vm648, %v1648, %v1650
        %v1688 = vsel %vm648, %v1652, %v1654
        %v1689 = vsel %vm648, %v1654, %v1656
        %v1690 = vsel %vm648, %v1656, %v1658
        %v1691 = vsel %vm648, %v1658, %v1660
        %v1692 = vsel %vm648, %v1660, %v1662
        %v1693 = vsel %vm648, %v1662, %v1664
        %v1694 = vsel %vm648, %v1664, %v1666
        %v1723 = vadd.f32 %v1394, %v1667
        %v1724 = vadd.f32 %v1395, %v1668
        %v1725 = vadd.f32 %v1396, %v1669
        %v1726 = vadd.f32 %v1397, %v1670
        %v1727 = vadd.f32 %v1398, %v1671
        %v1728 = vadd.f32 %v1399, %v1672
        %v1729 = vadd.f32 %v1400, %v1673
        %v1730 = vadd.f32 %v1401, %v1674
        %v1731 = vadd.f32 %v1402, %v1675
        %v1732 = vadd.f32 %v1403, %v1676
        %v1733 = vadd.f32 %v1404, %v1677
        %v1734 = vadd.f32 %v1405, %v1678
        %v1735 = vadd.f32 %v1406, %v1679
        %v1736 = vadd.f32 %v1407, %v1680
        %v1737 = vadd.f32 %v1408, %v1681
        %v1738 = vadd.f32 %v1409, %v1682
        %v1739 = vadd.f32 %v1410, %v1683
        %v1740 = vadd.f32 %v1411, %v1684
        %v1741 = vadd.f32 %v1412, %v1685
        %v1742 = vadd.f32 %v1413, %v1686
        %v1743 = vadd.f32 %v1414, %v1687
        %v1744 = vadd.f32 %v1415, %v1688
        %v1745 = vadd.f32 %v1416, %v1689
        %v1746 = vadd.f32 %v1417, %v1690
        %v1747 = vadd.f32 %v1418, %v1691
        %v1748 = vadd.f32 %v1419, %v1692
        %v1749 = vadd.f32 %v1420, %v1693
        %v1750 = vadd.f32 %v1421, %v1694
        %v1751 = vld [vmem:[%s193] sm:$0xfc]
        %v1752 = vld [vmem:[%s193 + $0x8] sm:$0xfc]
        %v1753 = vld [vmem:[%s193 + $0x10] sm:$0xfc]
        %v1754 = vld [vmem:[%s193 + $0x18] sm:$0xfc]
        %v1755 = vld [vmem:[%s193 + $0x20] sm:$0xfc]
        %v1756 = vld [vmem:[%s193 + $0x28] sm:$0xfc]
        %v1757 = vld [vmem:[%s193 + $0x30] sm:$0xfc]
        %v1758 = vld [vmem:[%s193 + $0xc0] sm:$0x3f]
        %v1759 = vld [vmem:[%s193 + $0xc8] sm:$0x3f]
        %v1760 = vld [vmem:[%s193 + $0xd0] sm:$0x3f]
        %v1761 = vld [vmem:[%s193 + $0xd8] sm:$0x3f]
        %v1762 = vld [vmem:[%s193 + $0xe0] sm:$0x3f]
        %v1763 = vld [vmem:[%s193 + $0xe8] sm:$0x3f]
        %v1764 = vld [vmem:[%s193 + $0xf0] sm:$0x3f]
        %s1765 = scalar_lea.vmem [#allocation2], 6
        %v1766 = vld [vmem:[%s1765] ss:$8 sm:$0xf]
        %v1767 = vld [vmem:[%s1765] ss:$8 sm:$0xf0]
        %v1768 = vor.u32 %v1766, %v1767
        %v1770 = vlaneseq
        %v1771 = vshrl.u32 %v1770, 7
        %v1772 = vsub.s32 0, %v1771
        %v1773 = vrot.slane %v1768, %v1772
        %v1774 = vlaneseq
        %v1775 = vshrl.u32 %v1774, 7
        %v1776 = vsub.s32 1, %v1775
        %v1777 = vrot.slane %v1768, %v1776
        %v1778 = vlaneseq
        %v1779 = vshrl.u32 %v1778, 7
        %v1780 = vsub.s32 2, %v1779
        %v1781 = vrot.slane %v1768, %v1780
        %v1782 = vlaneseq
        %v1783 = vshrl.u32 %v1782, 7
        %v1784 = vsub.s32 3, %v1783
        %v1785 = vrot.slane %v1768, %v1784
        %v1786 = vlaneseq
        %v1787 = vshrl.u32 %v1786, 7
        %v1788 = vsub.s32 4, %v1787
        %v1789 = vrot.slane %v1768, %v1788
        %v1790 = vlaneseq
        %v1791 = vshrl.u32 %v1790, 7
        %v1792 = vsub.s32 5, %v1791
        %v1793 = vrot.slane %v1768, %v1792
        %v1794 = vlaneseq
        %v1795 = vshrl.u32 %v1794, 7
        %v1796 = vsub.s32 6, %v1795
        %v1797 = vrot.slane %v1768, %v1796
        %v1805 = vmul.f32 %v1751, %v1773
        %v1806 = vmul.f32 %v1752, %v1777
        %v1807 = vmul.f32 %v1753, %v1781
        %v1808 = vmul.f32 %v1754, %v1785
        %v1809 = vmul.f32 %v1755, %v1789
        %v1810 = vmul.f32 %v1756, %v1793
        %v1811 = vmul.f32 %v1757, %v1797
        %v1812 = vmul.f32 %v206, %v1773
        %v1813 = vmul.f32 %v207, %v1777
        %v1814 = vmul.f32 %v208, %v1781
        %v1815 = vmul.f32 %v209, %v1785
        %v1816 = vmul.f32 %v210, %v1789
        %v1817 = vmul.f32 %v211, %v1793
        %v1818 = vmul.f32 %v212, %v1797
        %v1819 = vmul.f32 %v213, %v1773
        %v1820 = vmul.f32 %v214, %v1777
        %v1821 = vmul.f32 %v215, %v1781
        %v1822 = vmul.f32 %v216, %v1785
        %v1823 = vmul.f32 %v217, %v1789
        %v1824 = vmul.f32 %v218, %v1793
        %v1825 = vmul.f32 %v219, %v1797
        %v1826 = vmul.f32 %v1758, %v1773
        %v1827 = vmul.f32 %v1759, %v1777
        %v1828 = vmul.f32 %v1760, %v1781
        %v1829 = vmul.f32 %v1761, %v1785
        %v1830 = vmul.f32 %v1762, %v1789
        %v1831 = vmul.f32 %v1763, %v1793
        %v1832 = vmul.f32 %v1764, %v1797
        %vm1861 = vcmask 1045504
        %v1862 = vrot.slane %v1805, 2
        %v1863 = vrot.slane %v1812, 2
        %v1864 = vsel %vm1861, %v1862, %v1863
        %v1865 = vrot.slane %v1806, 2
        %v1866 = vrot.slane %v1813, 2
        %v1867 = vsel %vm1861, %v1865, %v1866
        %v1868 = vrot.slane %v1807, 2
        %v1869 = vrot.slane %v1814, 2
        %v1870 = vsel %vm1861, %v1868, %v1869
        %v1871 = vrot.slane %v1808, 2
        %v1872 = vrot.slane %v1815, 2
        %v1873 = vsel %vm1861, %v1871, %v1872
        %v1874 = vrot.slane %v1809, 2
        %v1875 = vrot.slane %v1816, 2
        %v1876 = vsel %vm1861, %v1874, %v1875
        %v1877 = vrot.slane %v1810, 2
        %v1878 = vrot.slane %v1817, 2
        %v1879 = vsel %vm1861, %v1877, %v1878
        %v1880 = vrot.slane %v1811, 2
        %v1881 = vrot.slane %v1818, 2
        %v1882 = vsel %vm1861, %v1880, %v1881
        %v1883 = vrot.slane %v1819, 2
        %v1884 = vsel %vm1861, %v1863, %v1883
        %v1885 = vrot.slane %v1820, 2
        %v1886 = vsel %vm1861, %v1866, %v1885
        %v1887 = vrot.slane %v1821, 2
        %v1888 = vsel %vm1861, %v1869, %v1887
        %v1889 = vrot.slane %v1822, 2
        %v1890 = vsel %vm1861, %v1872, %v1889
        %v1891 = vrot.slane %v1823, 2
        %v1892 = vsel %vm1861, %v1875, %v1891
        %v1893 = vrot.slane %v1824, 2
        %v1894 = vsel %vm1861, %v1878, %v1893
        %v1895 = vrot.slane %v1825, 2
        %v1896 = vsel %vm1861, %v1881, %v1895
        %v1897 = vrot.slane %v1826, 2
        %v1898 = vsel %vm1861, %v1883, %v1897
        %v1899 = vrot.slane %v1827, 2
        %v1900 = vsel %vm1861, %v1885, %v1899
        %v1901 = vrot.slane %v1828, 2
        %v1902 = vsel %vm1861, %v1887, %v1901
        %v1903 = vrot.slane %v1829, 2
        %v1904 = vsel %vm1861, %v1889, %v1903
        %v1905 = vrot.slane %v1830, 2
        %v1906 = vsel %vm1861, %v1891, %v1905
        %v1907 = vrot.slane %v1831, 2
        %v1908 = vsel %vm1861, %v1893, %v1907
        %v1909 = vrot.slane %v1832, 2
        %v1910 = vsel %vm1861, %v1895, %v1909
        %v1939 = vadd.f32 %v1723, %v1864
        %v1940 = vadd.f32 %v1724, %v1867
        %v1941 = vadd.f32 %v1725, %v1870
        %v1942 = vadd.f32 %v1726, %v1873
        %v1943 = vadd.f32 %v1727, %v1876
        %v1944 = vadd.f32 %v1728, %v1879
        %v1945 = vadd.f32 %v1729, %v1882
        %v1946 = vadd.f32 %v1730, %v1884
        %v1947 = vadd.f32 %v1731, %v1886
        %v1948 = vadd.f32 %v1732, %v1888
        %v1949 = vadd.f32 %v1733, %v1890
        %v1950 = vadd.f32 %v1734, %v1892
        %v1951 = vadd.f32 %v1735, %v1894
        %v1952 = vadd.f32 %v1736, %v1896
        %v1953 = vadd.f32 %v1737, %v1898
        %v1954 = vadd.f32 %v1738, %v1900
        %v1955 = vadd.f32 %v1739, %v1902
        %v1956 = vadd.f32 %v1740, %v1904
        %v1957 = vadd.f32 %v1741, %v1906
        %v1958 = vadd.f32 %v1742, %v1908
        %v1959 = vadd.f32 %v1743, %v1910
        %v1960 = vadd.f32 %v1744, %v1897
        %v1961 = vadd.f32 %v1745, %v1899
        %v1962 = vadd.f32 %v1746, %v1901
        %v1963 = vadd.f32 %v1747, %v1903
        %v1964 = vadd.f32 %v1748, %v1905
        %v1965 = vadd.f32 %v1749, %v1907
        %v1966 = vadd.f32 %v1750, %v1909
        %v1967 = vld [vmem:[%s193 + $0x38] sm:$0xfc]
        %v1968 = vld [vmem:[%s193 + $0xf8] sm:$0x3f]
        %s1969 = scalar_lea.vmem [#allocation2], 7
        %v1970 = vld [vmem:[%s1969] ss:$8 sm:$0xf]
        %v1971 = vld [vmem:[%s1969] ss:$8 sm:$0xf0]
        %v1972 = vor.u32 %v1970, %v1971
        %v1974 = vlaneseq
        %v1975 = vshrl.u32 %v1974, 7
        %v1976 = vsub.s32 0, %v1975
        %v1977 = vrot.slane %v1972, %v1976
        %v1978 = vlaneseq
        %v1979 = vshrl.u32 %v1978, 7
        %v1980 = vsub.s32 1, %v1979
        %v1981 = vrot.slane %v1972, %v1980
        %v1982 = vlaneseq
        %v1983 = vshrl.u32 %v1982, 7
        %v1984 = vsub.s32 2, %v1983
        %v1985 = vrot.slane %v1972, %v1984
        %v1986 = vlaneseq
        %v1987 = vshrl.u32 %v1986, 7
        %v1988 = vsub.s32 3, %v1987
        %v1989 = vrot.slane %v1972, %v1988
        %v1990 = vlaneseq
        %v1991 = vshrl.u32 %v1990, 7
        %v1992 = vsub.s32 4, %v1991
        %v1993 = vrot.slane %v1972, %v1992
        %v1994 = vlaneseq
        %v1995 = vshrl.u32 %v1994, 7
        %v1996 = vsub.s32 5, %v1995
        %v1997 = vrot.slane %v1972, %v1996
        %v1998 = vlaneseq
        %v1999 = vshrl.u32 %v1998, 7
        %v2000 = vsub.s32 6, %v1999
        %v2001 = vrot.slane %v1972, %v2000
        %2002 = vrot.lane.b32.xlu0 %v1977, 32
        %v2003 = vpop.permute.xlu0 %2002
        %2004 = vrot.lane.b32.xlu0 %v1981, 32
        %v2005 = vpop.permute.xlu0 %2004
        %2006 = vrot.lane.b32.xlu0 %v1985, 32
        %v2007 = vpop.permute.xlu0 %2006
        %2008 = vrot.lane.b32.xlu0 %v1989, 32
        %v2009 = vpop.permute.xlu0 %2008
        %2010 = vrot.lane.b32.xlu0 %v1993, 32
        %v2011 = vpop.permute.xlu0 %2010
        %2012 = vrot.lane.b32.xlu0 %v1997, 32
        %v2013 = vpop.permute.xlu0 %2012
        %2014 = vrot.lane.b32.xlu0 %v2001, 32
        %v2015 = vpop.permute.xlu0 %2014
        %v2016 = vsel %vm373, %v2003, %v2005
        %v2017 = vsel %vm373, %v2005, %v2007
        %v2018 = vsel %vm373, %v2007, %v2009
        %v2019 = vsel %vm373, %v2009, %v2011
        %v2020 = vsel %vm373, %v2011, %v2013
        %v2021 = vsel %vm373, %v2013, %v2015
        %v2030 = vmul.f32 %v1751, %v2003
        %v2031 = vmul.f32 %v1752, %v2016
        %v2032 = vmul.f32 %v1753, %v2017
        %v2033 = vmul.f32 %v1754, %v2018
        %v2034 = vmul.f32 %v1755, %v2019
        %v2035 = vmul.f32 %v1756, %v2020
        %v2036 = vmul.f32 %v1757, %v2021
        %v2037 = vmul.f32 %v1967, %v2015
        %v2038 = vmul.f32 %v206, %v2003
        %v2039 = vmul.f32 %v207, %v2016
        %v2040 = vmul.f32 %v208, %v2017
        %v2041 = vmul.f32 %v209, %v2018
        %v2042 = vmul.f32 %v210, %v2019
        %v2043 = vmul.f32 %v211, %v2020
        %v2044 = vmul.f32 %v212, %v2021
        %v2045 = vmul.f32 %v323, %v2015
        %v2046 = vmul.f32 %v213, %v2003
        %v2047 = vmul.f32 %v214, %v2016
        %v2048 = vmul.f32 %v215, %v2017
        %v2049 = vmul.f32 %v216, %v2018
        %v2050 = vmul.f32 %v217, %v2019
        %v2051 = vmul.f32 %v218, %v2020
        %v2052 = vmul.f32 %v219, %v2021
        %v2053 = vmul.f32 %v324, %v2015
        %v2054 = vmul.f32 %v1758, %v2003
        %v2055 = vmul.f32 %v1759, %v2016
        %v2056 = vmul.f32 %v1760, %v2017
        %v2057 = vmul.f32 %v1761, %v2018
        %v2058 = vmul.f32 %v1762, %v2019
        %v2059 = vmul.f32 %v1763, %v2020
        %v2060 = vmul.f32 %v1764, %v2021
        %v2061 = vmul.f32 %v1968, %v2015
        %v2094 = vrot.slane %v2030, 2
        %v2095 = vrot.slane %v2038, 2
        %v2096 = vsel %vm1861, %v2094, %v2095
        %v2097 = vrot.slane %v2031, 2
        %v2098 = vrot.slane %v2039, 2
        %v2099 = vsel %vm1861, %v2097, %v2098
        %v2100 = vrot.slane %v2032, 2
        %v2101 = vrot.slane %v2040, 2
        %v2102 = vsel %vm1861, %v2100, %v2101
        %v2103 = vrot.slane %v2033, 2
        %v2104 = vrot.slane %v2041, 2
        %v2105 = vsel %vm1861, %v2103, %v2104
        %v2106 = vrot.slane %v2034, 2
        %v2107 = vrot.slane %v2042, 2
        %v2108 = vsel %vm1861, %v2106, %v2107
        %v2109 = vrot.slane %v2035, 2
        %v2110 = vrot.slane %v2043, 2
        %v2111 = vsel %vm1861, %v2109, %v2110
        %v2112 = vrot.slane %v2036, 2
        %v2113 = vrot.slane %v2044, 2
        %v2114 = vsel %vm1861, %v2112, %v2113
        %v2115 = vrot.slane %v2037, 2
        %v2116 = vrot.slane %v2045, 2
        %v2117 = vsel %vm1861, %v2115, %v2116
        %v2118 = vrot.slane %v2046, 2
        %v2119 = vsel %vm1861, %v2095, %v2118
        %v2120 = vrot.slane %v2047, 2
        %v2121 = vsel %vm1861, %v2098, %v2120
        %v2122 = vrot.slane %v2048, 2
        %v2123 = vsel %vm1861, %v2101, %v2122
        %v2124 = vrot.slane %v2049, 2
        %v2125 = vsel %vm1861, %v2104, %v2124
        %v2126 = vrot.slane %v2050, 2
        %v2127 = vsel %vm1861, %v2107, %v2126
        %v2128 = vrot.slane %v2051, 2
        %v2129 = vsel %vm1861, %v2110, %v2128
        %v2130 = vrot.slane %v2052, 2
        %v2131 = vsel %vm1861, %v2113, %v2130
        %v2132 = vrot.slane %v2053, 2
        %v2133 = vsel %vm1861, %v2116, %v2132
        %v2134 = vrot.slane %v2054, 2
        %v2135 = vsel %vm1861, %v2118, %v2134
        %v2136 = vrot.slane %v2055, 2
        %v2137 = vsel %vm1861, %v2120, %v2136
        %v2138 = vrot.slane %v2056, 2
        %v2139 = vsel %vm1861, %v2122, %v2138
        %v2140 = vrot.slane %v2057, 2
        %v2141 = vsel %vm1861, %v2124, %v2140
        %v2142 = vrot.slane %v2058, 2
        %v2143 = vsel %vm1861, %v2126, %v2142
        %v2144 = vrot.slane %v2059, 2
        %v2145 = vsel %vm1861, %v2128, %v2144
        %v2146 = vrot.slane %v2060, 2
        %v2147 = vsel %vm1861, %v2130, %v2146
        %v2148 = vrot.slane %v2061, 2
        %v2149 = vsel %vm1861, %v2132, %v2148
        %2150 = vrot.lane.b32.xlu0 %v2096, 96
        %v2151 = vpop.permute.xlu0 %2150
        %2152 = vrot.lane.b32.xlu0 %v2099, 96
        %v2153 = vpop.permute.xlu0 %2152
        %2154 = vrot.lane.b32.xlu0 %v2102, 96
        %v2155 = vpop.permute.xlu0 %2154
        %2156 = vrot.lane.b32.xlu0 %v2105, 96
        %v2157 = vpop.permute.xlu0 %2156
        %2158 = vrot.lane.b32.xlu0 %v2108, 96
        %v2159 = vpop.permute.xlu0 %2158
        %2160 = vrot.lane.b32.xlu0 %v2111, 96
        %v2161 = vpop.permute.xlu0 %2160
        %2162 = vrot.lane.b32.xlu0 %v2114, 96
        %v2163 = vpop.permute.xlu0 %2162
        %2164 = vrot.lane.b32.xlu0 %v2117, 96
        %v2165 = vpop.permute.xlu0 %2164
        %2166 = vrot.lane.b32.xlu0 %v2119, 96
        %v2167 = vpop.permute.xlu0 %2166
        %2168 = vrot.lane.b32.xlu0 %v2121, 96
        %v2169 = vpop.permute.xlu0 %2168
        %2170 = vrot.lane.b32.xlu0 %v2123, 96
        %v2171 = vpop.permute.xlu0 %2170
        %2172 = vrot.lane.b32.xlu0 %v2125, 96
        %v2173 = vpop.permute.xlu0 %2172
        %2174 = vrot.lane.b32.xlu0 %v2127, 96
        %v2175 = vpop.permute.xlu0 %2174
        %2176 = vrot.lane.b32.xlu0 %v2129, 96
        %v2177 = vpop.permute.xlu0 %2176
        %2178 = vrot.lane.b32.xlu0 %v2131, 96
        %v2179 = vpop.permute.xlu0 %2178
        %2180 = vrot.lane.b32.xlu0 %v2133, 96
        %v2181 = vpop.permute.xlu0 %2180
        %2182 = vrot.lane.b32.xlu0 %v2135, 96
        %v2183 = vpop.permute.xlu0 %2182
        %2184 = vrot.lane.b32.xlu0 %v2137, 96
        %v2185 = vpop.permute.xlu0 %2184
        %2186 = vrot.lane.b32.xlu0 %v2139, 96
        %v2187 = vpop.permute.xlu0 %2186
        %2188 = vrot.lane.b32.xlu0 %v2141, 96
        %v2189 = vpop.permute.xlu0 %2188
        %2190 = vrot.lane.b32.xlu0 %v2143, 96
        %v2191 = vpop.permute.xlu0 %2190
        %2192 = vrot.lane.b32.xlu0 %v2145, 96
        %v2193 = vpop.permute.xlu0 %2192
        %2194 = vrot.lane.b32.xlu0 %v2147, 96
        %v2195 = vpop.permute.xlu0 %2194
        %2196 = vrot.lane.b32.xlu0 %v2149, 96
        %v2197 = vpop.permute.xlu0 %2196
        %2198 = vrot.lane.b32.xlu0 %v2134, 96
        %v2199 = vpop.permute.xlu0 %2198
        %2200 = vrot.lane.b32.xlu0 %v2136, 96
        %v2201 = vpop.permute.xlu0 %2200
        %2202 = vrot.lane.b32.xlu0 %v2138, 96
        %v2203 = vpop.permute.xlu0 %2202
        %2204 = vrot.lane.b32.xlu0 %v2140, 96
        %v2205 = vpop.permute.xlu0 %2204
        %2206 = vrot.lane.b32.xlu0 %v2142, 96
        %v2207 = vpop.permute.xlu0 %2206
        %2208 = vrot.lane.b32.xlu0 %v2144, 96
        %v2209 = vpop.permute.xlu0 %2208
        %2210 = vrot.lane.b32.xlu0 %v2146, 96
        %v2211 = vpop.permute.xlu0 %2210
        %2212 = vrot.lane.b32.xlu0 %v2148, 96
        %v2213 = vpop.permute.xlu0 %2212
        %v2214 = vsel %vm516, %v2151, %v2153
        %v2215 = vsel %vm516, %v2153, %v2155
        %v2216 = vsel %vm516, %v2155, %v2157
        %v2217 = vsel %vm516, %v2157, %v2159
        %v2218 = vsel %vm516, %v2159, %v2161
        %v2219 = vsel %vm516, %v2161, %v2163
        %v2220 = vsel %vm516, %v2163, %v2165
        %v2221 = vsel %vm516, %v2167, %v2169
        %v2222 = vsel %vm516, %v2169, %v2171
        %v2223 = vsel %vm516, %v2171, %v2173
        %v2224 = vsel %vm516, %v2173, %v2175
        %v2225 = vsel %vm516, %v2175, %v2177
        %v2226 = vsel %vm516, %v2177, %v2179
        %v2227 = vsel %vm516, %v2179, %v2181
        %v2228 = vsel %vm516, %v2183, %v2185
        %v2229 = vsel %vm516, %v2185, %v2187
        %v2230 = vsel %vm516, %v2187, %v2189
        %v2231 = vsel %vm516, %v2189, %v2191
        %v2232 = vsel %vm516, %v2191, %v2193
        %v2233 = vsel %vm516, %v2193, %v2195
        %v2234 = vsel %vm516, %v2195, %v2197
        %v2235 = vsel %vm516, %v2199, %v2201
        %v2236 = vsel %vm516, %v2201, %v2203
        %v2237 = vsel %vm516, %v2203, %v2205
        %v2238 = vsel %vm516, %v2205, %v2207
        %v2239 = vsel %vm516, %v2207, %v2209
        %v2240 = vsel %vm516, %v2209, %v2211
        %v2241 = vsel %vm516, %v2211, %v2213
        %v2270 = vadd.f32 %v1939, %v2214
        %v2271 = vadd.f32 %v1940, %v2215
        %v2272 = vadd.f32 %v1941, %v2216
        %v2273 = vadd.f32 %v1942, %v2217
        %v2274 = vadd.f32 %v1943, %v2218
        %v2275 = vadd.f32 %v1944, %v2219
        %v2276 = vadd.f32 %v1945, %v2220
        %v2277 = vadd.f32 %v1946, %v2221
        %v2278 = vadd.f32 %v1947, %v2222
        %v2279 = vadd.f32 %v1948, %v2223
        %v2280 = vadd.f32 %v1949, %v2224
        %v2281 = vadd.f32 %v1950, %v2225
        %v2282 = vadd.f32 %v1951, %v2226
        %v2283 = vadd.f32 %v1952, %v2227
        %v2284 = vadd.f32 %v1953, %v2228
        %v2285 = vadd.f32 %v1954, %v2229
        %v2286 = vadd.f32 %v1955, %v2230
        %v2287 = vadd.f32 %v1956, %v2231
        %v2288 = vadd.f32 %v1957, %v2232
        %v2289 = vadd.f32 %v1958, %v2233
        %v2290 = vadd.f32 %v1959, %v2234
        %v2291 = vadd.f32 %v1960, %v2235
        %v2292 = vadd.f32 %v1961, %v2236
        %v2293 = vadd.f32 %v1962, %v2237
        %v2294 = vadd.f32 %v1963, %v2238
        %v2295 = vadd.f32 %v1964, %v2239
        %v2296 = vadd.f32 %v1965, %v2240
        %v2297 = vadd.f32 %v1966, %v2241
        %s2298 = scalar_lea.vmem [#allocation2], 56
        %v2299 = vld [vmem:[%s2298] ss:$8 sm:$0xf]
        %v2300 = vld [vmem:[%s2298] ss:$8 sm:$0xf0]
        %v2301 = vor.u32 %v2299, %v2300
        %v2303 = vlaneseq
        %v2304 = vshrl.u32 %v2303, 7
        %v2305 = vsub.s32 0, %v2304
        %v2306 = vrot.slane %v2301, %v2305
        %v2307 = vlaneseq
        %v2308 = vshrl.u32 %v2307, 7
        %v2309 = vsub.s32 1, %v2308
        %v2310 = vrot.slane %v2301, %v2309
        %v2311 = vlaneseq
        %v2312 = vshrl.u32 %v2311, 7
        %v2313 = vsub.s32 2, %v2312
        %v2314 = vrot.slane %v2301, %v2313
        %v2315 = vlaneseq
        %v2316 = vshrl.u32 %v2315, 7
        %v2317 = vsub.s32 3, %v2316
        %v2318 = vrot.slane %v2301, %v2317
        %v2319 = vlaneseq
        %v2320 = vshrl.u32 %v2319, 7
        %v2321 = vsub.s32 4, %v2320
        %v2322 = vrot.slane %v2301, %v2321
        %v2323 = vlaneseq
        %v2324 = vshrl.u32 %v2323, 7
        %v2325 = vsub.s32 5, %v2324
        %v2326 = vrot.slane %v2301, %v2325
        %v2327 = vlaneseq
        %v2328 = vshrl.u32 %v2327, 7
        %v2329 = vsub.s32 6, %v2328
        %v2330 = vrot.slane %v2301, %v2329
        %2331 = vrot.lane.b32.xlu0 %v2306, 64
        %v2332 = vpop.permute.xlu0 %2331
        %2333 = vrot.lane.b32.xlu0 %v2310, 64
        %v2334 = vpop.permute.xlu0 %2333
        %2335 = vrot.lane.b32.xlu0 %v2314, 64
        %v2336 = vpop.permute.xlu0 %2335
        %2337 = vrot.lane.b32.xlu0 %v2318, 64
        %v2338 = vpop.permute.xlu0 %2337
        %2339 = vrot.lane.b32.xlu0 %v2322, 64
        %v2340 = vpop.permute.xlu0 %2339
        %2341 = vrot.lane.b32.xlu0 %v2326, 64
        %v2342 = vpop.permute.xlu0 %2341
        %2343 = vrot.lane.b32.xlu0 %v2330, 64
        %v2344 = vpop.permute.xlu0 %2343
        %v2345 = vsel %vm648, %v2332, %v2334
        %v2346 = vsel %vm648, %v2334, %v2336
        %v2347 = vsel %vm648, %v2336, %v2338
        %v2348 = vsel %vm648, %v2338, %v2340
        %v2349 = vsel %vm648, %v2340, %v2342
        %v2350 = vsel %vm648, %v2342, %v2344
        %v2359 = vmul.f32 %v1751, %v2332
        %v2360 = vmul.f32 %v1752, %v2345
        %v2361 = vmul.f32 %v1753, %v2346
        %v2362 = vmul.f32 %v1754, %v2347
        %v2363 = vmul.f32 %v1755, %v2348
        %v2364 = vmul.f32 %v1756, %v2349
        %v2365 = vmul.f32 %v1757, %v2350
        %v2366 = vmul.f32 %v1967, %v2344
        %v2367 = vmul.f32 %v206, %v2332
        %v2368 = vmul.f32 %v207, %v2345
        %v2369 = vmul.f32 %v208, %v2346
        %v2370 = vmul.f32 %v209, %v2347
        %v2371 = vmul.f32 %v210, %v2348
        %v2372 = vmul.f32 %v211, %v2349
        %v2373 = vmul.f32 %v212, %v2350
        %v2374 = vmul.f32 %v323, %v2344
        %v2375 = vmul.f32 %v213, %v2332
        %v2376 = vmul.f32 %v214, %v2345
        %v2377 = vmul.f32 %v215, %v2346
        %v2378 = vmul.f32 %v216, %v2347
        %v2379 = vmul.f32 %v217, %v2348
        %v2380 = vmul.f32 %v218, %v2349
        %v2381 = vmul.f32 %v219, %v2350
        %v2382 = vmul.f32 %v324, %v2344
        %v2383 = vmul.f32 %v1758, %v2332
        %v2384 = vmul.f32 %v1759, %v2345
        %v2385 = vmul.f32 %v1760, %v2346
        %v2386 = vmul.f32 %v1761, %v2347
        %v2387 = vmul.f32 %v1762, %v2348
        %v2388 = vmul.f32 %v1763, %v2349
        %v2389 = vmul.f32 %v1764, %v2350
        %v2390 = vmul.f32 %v1968, %v2344
        %v2423 = vrot.slane %v2359, 2
        %v2424 = vrot.slane %v2367, 2
        %v2425 = vsel %vm1861, %v2423, %v2424
        %v2426 = vrot.slane %v2360, 2
        %v2427 = vrot.slane %v2368, 2
        %v2428 = vsel %vm1861, %v2426, %v2427
        %v2429 = vrot.slane %v2361, 2
        %v2430 = vrot.slane %v2369, 2
        %v2431 = vsel %vm1861, %v2429, %v2430
        %v2432 = vrot.slane %v2362, 2
        %v2433 = vrot.slane %v2370, 2
        %v2434 = vsel %vm1861, %v2432, %v2433
        %v2435 = vrot.slane %v2363, 2
        %v2436 = vrot.slane %v2371, 2
        %v2437 = vsel %vm1861, %v2435, %v2436
        %v2438 = vrot.slane %v2364, 2
        %v2439 = vrot.slane %v2372, 2
        %v2440 = vsel %vm1861, %v2438, %v2439
        %v2441 = vrot.slane %v2365, 2
        %v2442 = vrot.slane %v2373, 2
        %v2443 = vsel %vm1861, %v2441, %v2442
        %v2444 = vrot.slane %v2366, 2
        %v2445 = vrot.slane %v2374, 2
        %v2446 = vsel %vm1861, %v2444, %v2445
        %v2447 = vrot.slane %v2375, 2
        %v2448 = vsel %vm1861, %v2424, %v2447
        %v2449 = vrot.slane %v2376, 2
        %v2450 = vsel %vm1861, %v2427, %v2449
        %v2451 = vrot.slane %v2377, 2
        %v2452 = vsel %vm1861, %v2430, %v2451
        %v2453 = vrot.slane %v2378, 2
        %v2454 = vsel %vm1861, %v2433, %v2453
        %v2455 = vrot.slane %v2379, 2
        %v2456 = vsel %vm1861, %v2436, %v2455
        %v2457 = vrot.slane %v2380, 2
        %v2458 = vsel %vm1861, %v2439, %v2457
        %v2459 = vrot.slane %v2381, 2
        %v2460 = vsel %vm1861, %v2442, %v2459
        %v2461 = vrot.slane %v2382, 2
        %v2462 = vsel %vm1861, %v2445, %v2461
        %v2463 = vrot.slane %v2383, 2
        %v2464 = vsel %vm1861, %v2447, %v2463
        %v2465 = vrot.slane %v2384, 2
        %v2466 = vsel %vm1861, %v2449, %v2465
        %v2467 = vrot.slane %v2385, 2
        %v2468 = vsel %vm1861, %v2451, %v2467
        %v2469 = vrot.slane %v2386, 2
        %v2470 = vsel %vm1861, %v2453, %v2469
        %v2471 = vrot.slane %v2387, 2
        %v2472 = vsel %vm1861, %v2455, %v2471
        %v2473 = vrot.slane %v2388, 2
        %v2474 = vsel %vm1861, %v2457, %v2473
        %v2475 = vrot.slane %v2389, 2
        %v2476 = vsel %vm1861, %v2459, %v2475
        %v2477 = vrot.slane %v2390, 2
        %v2478 = vsel %vm1861, %v2461, %v2477
        %2479 = vrot.lane.b32.xlu0 %v2425, 64
        %v2480 = vpop.permute.xlu0 %2479
        %2481 = vrot.lane.b32.xlu0 %v2428, 64
        %v2482 = vpop.permute.xlu0 %2481
        %2483 = vrot.lane.b32.xlu0 %v2431, 64
        %v2484 = vpop.permute.xlu0 %2483
        %2485 = vrot.lane.b32.xlu0 %v2434, 64
        %v2486 = vpop.permute.xlu0 %2485
        %2487 = vrot.lane.b32.xlu0 %v2437, 64
        %v2488 = vpop.permute.xlu0 %2487
        %2489 = vrot.lane.b32.xlu0 %v2440, 64
        %v2490 = vpop.permute.xlu0 %2489
        %2491 = vrot.lane.b32.xlu0 %v2443, 64
        %v2492 = vpop.permute.xlu0 %2491
        %2493 = vrot.lane.b32.xlu0 %v2446, 64
        %v2494 = vpop.permute.xlu0 %2493
        %2495 = vrot.lane.b32.xlu0 %v2448, 64
        %v2496 = vpop.permute.xlu0 %2495
        %2497 = vrot.lane.b32.xlu0 %v2450, 64
        %v2498 = vpop.permute.xlu0 %2497
        %2499 = vrot.lane.b32.xlu0 %v2452, 64
        %v2500 = vpop.permute.xlu0 %2499
        %2501 = vrot.lane.b32.xlu0 %v2454, 64
        %v2502 = vpop.permute.xlu0 %2501
        %2503 = vrot.lane.b32.xlu0 %v2456, 64
        %v2504 = vpop.permute.xlu0 %2503
        %2505 = vrot.lane.b32.xlu0 %v2458, 64
        %v2506 = vpop.permute.xlu0 %2505
        %2507 = vrot.lane.b32.xlu0 %v2460, 64
        %v2508 = vpop.permute.xlu0 %2507
        %2509 = vrot.lane.b32.xlu0 %v2462, 64
        %v2510 = vpop.permute.xlu0 %2509
        %2511 = vrot.lane.b32.xlu0 %v2464, 64
        %v2512 = vpop.permute.xlu0 %2511
        %2513 = vrot.lane.b32.xlu0 %v2466, 64
        %v2514 = vpop.permute.xlu0 %2513
        %2515 = vrot.lane.b32.xlu0 %v2468, 64
        %v2516 = vpop.permute.xlu0 %2515
        %2517 = vrot.lane.b32.xlu0 %v2470, 64
        %v2518 = vpop.permute.xlu0 %2517
        %2519 = vrot.lane.b32.xlu0 %v2472, 64
        %v2520 = vpop.permute.xlu0 %2519
        %2521 = vrot.lane.b32.xlu0 %v2474, 64
        %v2522 = vpop.permute.xlu0 %2521
        %2523 = vrot.lane.b32.xlu0 %v2476, 64
        %v2524 = vpop.permute.xlu0 %2523
        %2525 = vrot.lane.b32.xlu0 %v2478, 64
        %v2526 = vpop.permute.xlu0 %2525
        %2527 = vrot.lane.b32.xlu0 %v2463, 64
        %v2528 = vpop.permute.xlu0 %2527
        %2529 = vrot.lane.b32.xlu0 %v2465, 64
        %v2530 = vpop.permute.xlu0 %2529
        %2531 = vrot.lane.b32.xlu0 %v2467, 64
        %v2532 = vpop.permute.xlu0 %2531
        %2533 = vrot.lane.b32.xlu0 %v2469, 64
        %v2534 = vpop.permute.xlu0 %2533
        %2535 = vrot.lane.b32.xlu0 %v2471, 64
        %v2536 = vpop.permute.xlu0 %2535
        %2537 = vrot.lane.b32.xlu0 %v2473, 64
        %v2538 = vpop.permute.xlu0 %2537
        %2539 = vrot.lane.b32.xlu0 %v2475, 64
        %v2540 = vpop.permute.xlu0 %2539
        %2541 = vrot.lane.b32.xlu0 %v2477, 64
        %v2542 = vpop.permute.xlu0 %2541
        %v2543 = vsel %vm648, %v2480, %v2482
        %v2544 = vsel %vm648, %v2482, %v2484
        %v2545 = vsel %vm648, %v2484, %v2486
        %v2546 = vsel %vm648, %v2486, %v2488
        %v2547 = vsel %vm648, %v2488, %v2490
        %v2548 = vsel %vm648, %v2490, %v2492
        %v2549 = vsel %vm648, %v2492, %v2494
        %v2550 = vsel %vm648, %v2496, %v2498
        %v2551 = vsel %vm648, %v2498, %v2500
        %v2552 = vsel %vm648, %v2500, %v2502
        %v2553 = vsel %vm648, %v2502, %v2504
        %v2554 = vsel %vm648, %v2504, %v2506
        %v2555 = vsel %vm648, %v2506, %v2508
        %v2556 = vsel %vm648, %v2508, %v2510
        %v2557 = vsel %vm648, %v2512, %v2514
        %v2558 = vsel %vm648, %v2514, %v2516
        %v2559 = vsel %vm648, %v2516, %v2518
        %v2560 = vsel %vm648, %v2518, %v2520
        %v2561 = vsel %vm648, %v2520, %v2522
        %v2562 = vsel %vm648, %v2522, %v2524
        %v2563 = vsel %vm648, %v2524, %v2526
        %v2564 = vsel %vm648, %v2528, %v2530
        %v2565 = vsel %vm648, %v2530, %v2532
        %v2566 = vsel %vm648, %v2532, %v2534
        %v2567 = vsel %vm648, %v2534, %v2536
        %v2568 = vsel %vm648, %v2536, %v2538
        %v2569 = vsel %vm648, %v2538, %v2540
        %v2570 = vsel %vm648, %v2540, %v2542
        %v2599 = vadd.f32 %v2270, %v2543
        %v2600 = vadd.f32 %v2271, %v2544
        %v2601 = vadd.f32 %v2272, %v2545
        %v2602 = vadd.f32 %v2273, %v2546
        %v2603 = vadd.f32 %v2274, %v2547
        %v2604 = vadd.f32 %v2275, %v2548
        %v2605 = vadd.f32 %v2276, %v2549
        %v2606 = vadd.f32 %v2277, %v2550
        %v2607 = vadd.f32 %v2278, %v2551
        %v2608 = vadd.f32 %v2279, %v2552
        %v2609 = vadd.f32 %v2280, %v2553
        %v2610 = vadd.f32 %v2281, %v2554
        %v2611 = vadd.f32 %v2282, %v2555
        %v2612 = vadd.f32 %v2283, %v2556
        %v2613 = vadd.f32 %v2284, %v2557
        %v2614 = vadd.f32 %v2285, %v2558
        %v2615 = vadd.f32 %v2286, %v2559
        %v2616 = vadd.f32 %v2287, %v2560
        %v2617 = vadd.f32 %v2288, %v2561
        %v2618 = vadd.f32 %v2289, %v2562
        %v2619 = vadd.f32 %v2290, %v2563
        %v2620 = vadd.f32 %v2291, %v2564
        %v2621 = vadd.f32 %v2292, %v2565
        %v2622 = vadd.f32 %v2293, %v2566
        %v2623 = vadd.f32 %v2294, %v2567
        %v2624 = vadd.f32 %v2295, %v2568
        %v2625 = vadd.f32 %v2296, %v2569
        %v2626 = vadd.f32 %v2297, %v2570
        %v2627 = vld [vmem:[#allocation4] sm:$0xff]
        %v2629 = vlaneseq
        %v2630 = vshrl.u32 %v2629, 7
        %v2631 = vsub.s32 0, %v2630
        %v2632 = vrot.slane %v2627, %v2631
        %v2633 = vlaneseq
        %v2634 = vshrl.u32 %v2633, 7
        %v2635 = vsub.s32 1, %v2634
        %v2636 = vrot.slane %v2627, %v2635
        %v2637 = vlaneseq
        %v2638 = vshrl.u32 %v2637, 7
        %v2639 = vsub.s32 2, %v2638
        %v2640 = vrot.slane %v2627, %v2639
        %v2641 = vlaneseq
        %v2642 = vshrl.u32 %v2641, 7
        %v2643 = vsub.s32 3, %v2642
        %v2644 = vrot.slane %v2627, %v2643
        %v2645 = vlaneseq
        %v2646 = vshrl.u32 %v2645, 7
        %v2647 = vsub.s32 4, %v2646
        %v2648 = vrot.slane %v2627, %v2647
        %v2649 = vlaneseq
        %v2650 = vshrl.u32 %v2649, 7
        %v2651 = vsub.s32 5, %v2650
        %v2652 = vrot.slane %v2627, %v2651
        %v2653 = vlaneseq
        %v2654 = vshrl.u32 %v2653, 7
        %v2655 = vsub.s32 6, %v2654
        %v2656 = vrot.slane %v2627, %v2655
        %v2664 = vadd.f32 %v2599, %v2632
        %v2665 = vadd.f32 %v2600, %v2636
        %v2666 = vadd.f32 %v2601, %v2640
        %v2667 = vadd.f32 %v2602, %v2644
        %v2668 = vadd.f32 %v2603, %v2648
        %v2669 = vadd.f32 %v2604, %v2652
        %v2670 = vadd.f32 %v2605, %v2656
        %v2671 = vadd.f32 %v2606, %v2632
        %v2672 = vadd.f32 %v2607, %v2636
        %v2673 = vadd.f32 %v2608, %v2640
        %v2674 = vadd.f32 %v2609, %v2644
        %v2675 = vadd.f32 %v2610, %v2648
        %v2676 = vadd.f32 %v2611, %v2652
        %v2677 = vadd.f32 %v2612, %v2656
        %v2678 = vadd.f32 %v2613, %v2632
        %v2679 = vadd.f32 %v2614, %v2636
        %v2680 = vadd.f32 %v2615, %v2640
        %v2681 = vadd.f32 %v2616, %v2644
        %v2682 = vadd.f32 %v2617, %v2648
        %v2683 = vadd.f32 %v2618, %v2652
        %v2684 = vadd.f32 %v2619, %v2656
        %v2685 = vadd.f32 %v2620, %v2632
        %v2686 = vadd.f32 %v2621, %v2636
        %v2687 = vadd.f32 %v2622, %v2640
        %v2688 = vadd.f32 %v2623, %v2644
        %v2689 = vadd.f32 %v2624, %v2648
        %v2690 = vadd.f32 %v2625, %v2652
        %v2691 = vadd.f32 %v2626, %v2656
        %v2692 = vmax.f32 %v2664, 0.0
        %v2693 = vmax.f32 %v2665, 0.0
        %v2694 = vmax.f32 %v2666, 0.0
        %v2695 = vmax.f32 %v2667, 0.0
        %v2696 = vmax.f32 %v2668, 0.0
        %v2697 = vmax.f32 %v2669, 0.0
        %v2698 = vmax.f32 %v2670, 0.0
        %v2699 = vmax.f32 %v2671, 0.0
        %v2700 = vmax.f32 %v2672, 0.0
        %v2701 = vmax.f32 %v2673, 0.0
        %v2702 = vmax.f32 %v2674, 0.0
        %v2703 = vmax.f32 %v2675, 0.0
        %v2704 = vmax.f32 %v2676, 0.0
        %v2705 = vmax.f32 %v2677, 0.0
        %v2706 = vmax.f32 %v2678, 0.0
        %v2707 = vmax.f32 %v2679, 0.0
        %v2708 = vmax.f32 %v2680, 0.0
        %v2709 = vmax.f32 %v2681, 0.0
        %v2710 = vmax.f32 %v2682, 0.0
        %v2711 = vmax.f32 %v2683, 0.0
        %v2712 = vmax.f32 %v2684, 0.0
        %v2713 = vmax.f32 %v2685, 0.0
        %v2714 = vmax.f32 %v2686, 0.0
        %v2715 = vmax.f32 %v2687, 0.0
        %v2716 = vmax.f32 %v2688, 0.0
        %v2717 = vmax.f32 %v2689, 0.0
        %v2718 = vmax.f32 %v2690, 0.0
        %v2719 = vmax.f32 %v2691, 0.0
        %2720 = vst [vmem:[%s198] sm:$0xff] %v2692
        %2721 = vst [vmem:[%s198 + $0x8] sm:$0xff] %v2693
        %2722 = vst [vmem:[%s198 + $0x10] sm:$0xff] %v2694
        %2723 = vst [vmem:[%s198 + $0x18] sm:$0xff] %v2695
        %2724 = vst [vmem:[%s198 + $0x20] sm:$0xff] %v2696
        %2725 = vst [vmem:[%s198 + $0x28] sm:$0xff] %v2697
        %2726 = vst [vmem:[%s198 + $0x30] sm:$0xff] %v2698
        %2727 = vst [vmem:[%s198 + $0x38] sm:$0xff] %v2699
        %2728 = vst [vmem:[%s198 + $0x40] sm:$0xff] %v2700
        %2729 = vst [vmem:[%s198 + $0x48] sm:$0xff] %v2701
        %2730 = vst [vmem:[%s198 + $0x50] sm:$0xff] %v2702
        %2731 = vst [vmem:[%s198 + $0x58] sm:$0xff] %v2703
        %2732 = vst [vmem:[%s198 + $0x60] sm:$0xff] %v2704
        %2733 = vst [vmem:[%s198 + $0x68] sm:$0xff] %v2705
        %2734 = vst [vmem:[%s198 + $0x70] sm:$0xff] %v2706
        %2735 = vst [vmem:[%s198 + $0x78] sm:$0xff] %v2707
        %2736 = vst [vmem:[%s198 + $0x80] sm:$0xff] %v2708
        %2737 = vst [vmem:[%s198 + $0x88] sm:$0xff] %v2709
        %2738 = vst [vmem:[%s198 + $0x90] sm:$0xff] %v2710
        %2739 = vst [vmem:[%s198 + $0x98] sm:$0xff] %v2711
        %2740 = vst [vmem:[%s198 + $0xa0] sm:$0xff] %v2712
        %2741 = vst [vmem:[%s198 + $0xa8] sm:$0xf] %v2713
        %2742 = vst [vmem:[%s198 + $0xb0] sm:$0xf] %v2714
        %2743 = vst [vmem:[%s198 + $0xb8] sm:$0xf] %v2715
        %2744 = vst [vmem:[%s198 + $0xc0] sm:$0xf] %v2716
        %2745 = vst [vmem:[%s198 + $0xc8] sm:$0xf] %v2717
        %2746 = vst [vmem:[%s198 + $0xd0] sm:$0xf] %v2718
        %2747 = vst [vmem:[%s198 + $0xd8] sm:$0xf] %v2719
        %p2748 = scmp.lt.s32.totalorder %s16, 1
        %s2749 = scalar_select %p2748, %s16, 1
        %s2750 = smul.addr %s2749, 28
        %s2751 = smul.addr %s2750, 8
        %s2752 = scalar_lea.vmem %s3, %s2751
        // Predicated region
        $region41: #{fc1_forward.3} parent=31 // pred_check
          %p2753 = pneg %p102
        $region42: #{fc1_forward.3} parent=31 // pred_check_branch
          %2755 = sbr.rel (%p2753) target = $region44
        $region43: #{fc1_forward.3} parent=31 // pred_region
          _
        $region44: #{fc1_forward.3} parent=31 // pred_fallthru
          _
      $region32: #{fc1_forward.3} parent=5 // pred_fallthru
        _
      %p2756 = scmp.le.s32.totalorder 2, %s11
      // Predicated region
      $region45: #{fc1_forward.3} parent=5 // pred_check
        %p2757 = pneg %p2756
      $region46: #{fc1_forward.3} parent=5 // pred_check_branch
        %2759 = sbr.rel (%p2757) target = $region48
      $region47: #{fc1_forward.3} parent=5 // pred_region
        %s2760 = ssub.s32 %s11, 2
        // Predicated region
        $region49: #{fc1_forward.3} parent=47 // pred_check
          %p2761 = pneg %p108
        $region50: #{fc1_forward.3} parent=47 // pred_check_branch
          %2763 = sbr.rel (%p2761) target = $region52
        $region51: #{fc1_forward.3} parent=47 // pred_region
          %p2764 = scmp.lt.s32.totalorder %s17, 1
          %s2765 = scalar_select %p2764, %s17, 1
          %s2766 = smul.addr %s2765, 28
          %s2767 = smul.addr %s2766, 8
          %s2768 = scalar_lea.vmem %s3, %s2767
        $region52: #{fc1_forward.3} parent=47 // pred_fallthru
          _
      $region48: #{fc1_forward.3} parent=5 // pred_fallthru
        _
    $region6: #{fc1_forward.3} parent=1 // loop_footer
      %s15 = sadd.s32 1, %s11
    $region7: #{fc1_forward.3} parent=1 // loop_footer_branch
      %10 = sbr.rel target = $region3
    $region8: #{fc1_forward.3} parent=1 // loop_exit
      _
    %2769 = vsyncpa [#allocation3], 1
    %s2770 = scalar_lea.sflag [#allocation3], 1
    %2771 = vsyncpa %s2770, 1
    %2772 = vsyncpa [#allocation5], 1

// kernel: fc1_forward.5
$region0: #{fc1_forward.5}
  #allocation0 [shape = 'u32[]', space=smem, size = 0x4, offset = 0x4, fixed_abs, tag = 'smem constant byte address 0x4 - core index']
  #allocation1 [shape = 'u32[144,128]{1,0:T(1,128)}', space=vmem, size = 0x12000, scoped, tag = 'internal scratch']
  %s0 = inlined_call_operand.vmem [shape: f32[2,2,300], index: 0, kind: input, shape index: {}]
  %s1 = inlined_call_operand.vmem [shape: f32[1,300], index: 1, kind: input, shape index: {}]
  %s2 = inlined_call_operand.vmem [shape: f32[300,100], index: 2, kind: input, shape index: {}]
  %s3 = inlined_call_operand.vmem [shape: f32[1,100], index: 3, kind: input, shape index: {}]
  %s4 = inlined_call_operand.vmem [shape: f32[100,10], index: 4, kind: input, shape index: {}]
  %s5 = inlined_call_operand.vmem [shape: f32[1,10], index: 5, kind: input, shape index: {}]
  %s6 = inlined_call_operand.hbm [shape: f32[2,10], index: 6, kind: output, shape index: {}]
  %s7 = sld [smem:[#allocation0]]
  $region34: #{fc1_forward.5} parent=0
    _
  %s9 = ssub.s32 1, %s7
  %s10 = scalar_select 0, %s9, %s7
  $region1: #{fc1_forward.5} parent=0
    #allocation2 [shape = 'u8[1024]{0}', space=vmem, size = 0x400, scoped, tag = 'output window, operand 0, single buffered']
    #allocation3 [shape = 's32[1]{0}', space=sflag, size = 0x4, scoped, tag = 'scoped memory for fc1_forward.5']
    %11 = vsyncpa [#allocation3], 0
    // Predicated region
    $region2: #{fc1_forward.5} parent=1 // pred_check
      _
    $region3: #{fc1_forward.5} parent=1 // pred_check_branch
      %13 = sbr.rel (0) target = $region5
    $region4: #{fc1_forward.5} parent=1 // pred_region
      _
    $region5: #{fc1_forward.5} parent=1 // pred_fallthru
      _
    // Predicated region
    $region6: #{fc1_forward.5} parent=1 // pred_check
      _
    $region7: #{fc1_forward.5} parent=1 // pred_check_branch
      %15 = sbr.rel (0) target = $region9
    $region8: #{fc1_forward.5} parent=1 // pred_region
      _
    $region9: #{fc1_forward.5} parent=1 // pred_fallthru
      _
    // Predicated region
    $region10: #{fc1_forward.5} parent=1 // pred_check
      _
    $region11: #{fc1_forward.5} parent=1 // pred_check_branch
      %17 = sbr.rel (0) target = $region13
    $region12: #{fc1_forward.5} parent=1 // pred_region
      _
    $region13: #{fc1_forward.5} parent=1 // pred_fallthru
      _
    // Predicated region
    $region14: #{fc1_forward.5} parent=1 // pred_check
      _
    $region15: #{fc1_forward.5} parent=1 // pred_check_branch
      %19 = sbr.rel (0) target = $region17
    $region16: #{fc1_forward.5} parent=1 // pred_region
      _
    $region17: #{fc1_forward.5} parent=1 // pred_fallthru
      _
    // Predicated region
    $region18: #{fc1_forward.5} parent=1 // pred_check
      _
    $region19: #{fc1_forward.5} parent=1 // pred_check_branch
      %21 = sbr.rel (0) target = $region21
    $region20: #{fc1_forward.5} parent=1 // pred_region
      _
    $region21: #{fc1_forward.5} parent=1 // pred_fallthru
      _
    // Predicated region
    $region22: #{fc1_forward.5} parent=1 // pred_check
      _
    $region23: #{fc1_forward.5} parent=1 // pred_check_branch
      %23 = sbr.rel (0) target = $region25
    $region24: #{fc1_forward.5} parent=1 // pred_region
      _
    $region25: #{fc1_forward.5} parent=1 // pred_fallthru
      _
    %v24 = vld [vmem:[%s0] sm:$0x3f]
    %s25 = scalar_lea.vmem %s0, 6
    %v26 = vld [vmem:[%s25] sm:$0x3f]
    %v27 = vadd.f32 %v24, %v26
    %v28 = vld [vmem:[%s1] sm:$0x7]
    %v30 = vlaneseq
    %v31 = vshrl.u32 %v30, 7
    %v32 = vsub.s32 0, %v31
    %v33 = vrot.slane %v28, %v32
    %v34 = vlaneseq
    %v35 = vshrl.u32 %v34, 7
    %v36 = vsub.s32 1, %v35
    %v37 = vrot.slane %v28, %v36
    %v38 = vlaneseq
    %v39 = vshrl.u32 %v38, 7
    %v40 = vsub.s32 2, %v39
    %v41 = vrot.slane %v28, %v40
    %v42 = vcombine.low %v33, %v37
    %v44 = vunpack.c.l.s4 1983009808
    %v45 = vunpack.c.0.s8 %v44
    %v46 = vlaneseq
    %v47 = vshrl.u32 %v46, 7
    %v48 = vsub.s32 %v45, %v47
    %v49 = vrot.slane %v42, %v48
    %v51 = vunpack.c.l.s4 1983009808
    %v52 = vunpack.c.0.s8 %v51
    %v53 = vlaneseq
    %v54 = vshrl.u32 %v53, 7
    %v55 = vsub.s32 %v52, %v54
    %v56 = vrot.slane %v41, %v55
    %v57 = vcombine.low %v49, %v56
    %v59 = vadd.f32 %v27, %v57
    %v60 = vmax.f32 %v59, 0.0
    %v61 = vld [vmem:[%s2] sm:$0xff]
    %v62 = vld [vmem:[%s2 + $0x8] sm:$0xff]
    %v63 = vld [vmem:[%s2 + $0x10] sm:$0xff]
    %v64 = vld [vmem:[%s2 + $0x18] sm:$0xff]
    %v65 = vld [vmem:[%s2 + $0x20] sm:$0xff]
    %v66 = vld [vmem:[%s2 + $0x28] sm:$0xff]
    %v67 = vld [vmem:[%s2 + $0x30] sm:$0xff]
    %v68 = vld [vmem:[%s2 + $0x38] sm:$0xff]
    %v69 = vld [vmem:[%s2 + $0x40] sm:$0xff]
    %v70 = vld [vmem:[%s2 + $0x48] sm:$0xff]
    %v71 = vld [vmem:[%s2 + $0x50] sm:$0xff]
    %v72 = vld [vmem:[%s2 + $0x58] sm:$0xff]
    %v73 = vld [vmem:[%s2 + $0x60] sm:$0xff]
    %v74 = vld [vmem:[%s2 + $0x68] sm:$0xff]
    %v75 = vld [vmem:[%s2 + $0x70] sm:$0xff]
    %v76 = vld [vmem:[%s2 + $0x78] sm:$0xff]
    %v77 = vld [vmem:[%s2 + $0x80] sm:$0xff]
    %v78 = vld [vmem:[%s2 + $0x88] sm:$0xff]
    %v79 = vld [vmem:[%s2 + $0x90] sm:$0xff]
    %v80 = vld [vmem:[%s2 + $0x98] sm:$0xff]
    %v81 = vld [vmem:[%s2 + $0xa0] sm:$0xff]
    %v82 = vld [vmem:[%s2 + $0xa8] sm:$0xff]
    %v83 = vld [vmem:[%s2 + $0xb0] sm:$0xff]
    %v84 = vld [vmem:[%s2 + $0xb8] sm:$0xff]
    %v85 = vld [vmem:[%s2 + $0xc0] sm:$0xff]
    %v86 = vld [vmem:[%s2 + $0xc8] sm:$0xff]
    %v87 = vld [vmem:[%s2 + $0xd0] sm:$0xff]
    %v88 = vld [vmem:[%s2 + $0xd8] sm:$0xff]
    %v89 = vld [vmem:[%s2 + $0xe0] sm:$0xff]
    %v90 = vld [vmem:[%s2 + $0xe8] sm:$0xff]
    %v91 = vld [vmem:[%s2 + $0xf0] sm:$0xff]
    %v92 = vld [vmem:[%s2 + $0xf8] sm:$0xff]
    %v93 = vld [vmem:[%s2 + $0x100] sm:$0xff]
    %v94 = vld [vmem:[%s2 + $0x108] sm:$0xff]
    %v95 = vld [vmem:[%s2 + $0x110] sm:$0xff]
    %v96 = vld [vmem:[%s2 + $0x118] sm:$0xff]
    %v97 = vld [vmem:[%s2 + $0x120] sm:$0xff]
    %v98 = vld [vmem:[%s2 + $0x128] sm:$0xf]
    %v99 = vld [vmem:[%s3] sm:$0x1]
    %v101 = vlaneseq
    %v102 = vshrl.u32 %v101, 7
    %v103 = vsub.s32 0, %v102
    %v104 = vrot.slane %v99, %v103
    %v107 = vcombine.high %v60, %v60
    %v109 = vunpack.c.l.s4 1983009808
    %v110 = vunpack.c.0.s8 %v109
    %v111 = vlaneseq
    %v112 = vshrl.u32 %v111, 7
    %v113 = vsub.s32 %v110, %v112
    %v114 = vrot.slane %v60, %v113
    %v116 = vunpack.c.l.s4 1983009808
    %v117 = vunpack.c.0.s8 %v116
    %v118 = vlaneseq
    %v119 = vshrl.u32 %v118, 7
    %v120 = vsub.s32 %v117, %v119
    %v121 = vrot.slane %v107, %v120
    %v122 = vcombine.high %v114, %v114
    %vm125 = vcmask 359424
    %v126 = vsel %vm125, %v121, 0
    %vm128 = vcmask 1043456
    %v130 = vsel %vm128, %v98, 0
    %132 = vmatprep.subr.mxu0 0.0
    %133 = vmatpush1.msra.mxu0 %v61
    %134 = vmatprep.subr.mxu0 0.0
    %135 = vmatpush1.msra.mxu0 %v62
    %136 = vmatprep.subr.mxu0 0.0
    %137 = vmatpush1.msra.mxu0 %v63
    %138 = vmatprep.subr.mxu0 0.0
    %139 = vmatpush1.msra.mxu0 %v64
    %140 = vmatprep.subr.mxu0 0.0
    %141 = vmatpush1.msra.mxu0 %v65
    %142 = vmatprep.subr.mxu0 0.0
    %143 = vmatpush1.msra.mxu0 %v66
    %144 = vmatprep.subr.mxu0 0.0
    %145 = vmatpush1.msra.mxu0 %v67
    %146 = vmatprep.subr.mxu0 0.0
    %147 = vmatpush1.msra.mxu0 %v68
    %148 = vmatprep.subr.mxu0 0.0
    %149 = vmatpush1.msra.mxu0 %v69
    %150 = vmatprep.subr.mxu0 0.0
    %151 = vmatpush1.msra.mxu0 %v70
    %152 = vmatprep.subr.mxu0 0.0
    %153 = vmatpush1.msra.mxu0 %v71
    %154 = vmatprep.subr.mxu0 0.0
    %155 = vmatpush1.msra.mxu0 %v72
    %156 = vmatprep.subr.mxu0 0.0
    %157 = vmatpush1.msra.mxu0 %v73
    %158 = vmatprep.subr.mxu0 0.0
    %159 = vmatpush1.msra.mxu0 %v74
    %160 = vmatprep.subr.mxu0 0.0
    %161 = vmatpush1.msra.mxu0 %v75
    %162 = vmatprep.subr.mxu0 0.0
    %163 = vmatpush1.msra.mxu0 %v76
    %164 = vmatprep.subr.mxu0 0.0
    %165 = vmatpush1.msra.mxu0 %v77
    %166 = vmatprep.subr.mxu0 0.0
    %167 = vmatpush1.msra.mxu0 %v78
    %168 = vmatprep.subr.mxu0 0.0
    %169 = vmatpush1.msra.mxu0 %v79
    %170 = vmatprep.subr.mxu0 0.0
    %171 = vmatpush1.msra.mxu0 %v80
    %172 = vmatprep.subr.mxu0 0.0
    %173 = vmatpush1.msra.mxu0 %v81
    %174 = vmatprep.subr.mxu0 0.0
    %175 = vmatpush1.msra.mxu0 %v82
    %176 = vmatprep.subr.mxu0 0.0
    %177 = vmatpush1.msra.mxu0 %v83
    %178 = vmatprep.subr.mxu0 0.0
    %179 = vmatpush1.msra.mxu0 %v84
    %180 = vmatprep.subr.mxu0 0.0
    %181 = vmatpush1.msra.mxu0 %v85
    %182 = vmatprep.subr.mxu0 0.0
    %183 = vmatpush1.msra.mxu0 %v86
    %184 = vmatprep.subr.mxu0 0.0
    %185 = vmatpush1.msra.mxu0 %v87
    %186 = vmatprep.subr.mxu0 0.0
    %187 = vmatpush1.msra.mxu0 %v88
    %188 = vmatprep.subr.mxu0 0.0
    %189 = vmatpush1.msra.mxu0 %v89
    %190 = vmatprep.subr.mxu0 0.0
    %191 = vmatpush1.msra.mxu0 %v90
    %192 = vmatprep.subr.mxu0 0.0
    %193 = vmatpush1.msra.mxu0 %v91
    %194 = vmatprep.subr.mxu0 0.0
    %195 = vmatpush1.msra.mxu0 %v92
    %196 = vmatprep.mubr.f32.mxu0 %v122
    %197 = vmatmul.mubr.f32.gmra.mrb[0].mxu0 %v114
    %v198 = vpop.f32.mrb[0].mxu0
    %v199 = vadd.f32 %v104, %v198
    %v200 = vpop.f32.mrb[0].mxu0
    %201 = vdwg.mxu0
    %202 = vmatprep.subr.mxu0 0.0
    %203 = vmatpush1.msra.mxu0 %v93
    %204 = vmatprep.subr.mxu0 0.0
    %205 = vmatpush1.msra.mxu0 %v94
    %206 = vmatprep.subr.mxu0 0.0
    %207 = vmatpush1.msra.mxu0 %v95
    %208 = vmatprep.subr.mxu0 0.0
    %209 = vmatpush1.msra.mxu0 %v96
    %210 = vmatprep.subr.mxu0 0.0
    %211 = vmatpush1.msra.mxu0 %v97
    %212 = vmatprep.subr.mxu0 0.0
    %213 = vmatpush1.msra.mxu0 %v130
    %214 = vmatprep.subr.mxu0 0.0
    %215 = vmatpush1.msra.mxu0 0.0
    %216 = vmatprep.subr.mxu0 0.0
    %217 = vmatpush1.msra.mxu0 0.0
    %218 = vmatprep.subr.mxu0 0.0
    %219 = vmatpush1.msra.mxu0 0.0
    %220 = vmatprep.subr.mxu0 0.0
    %221 = vmatpush1.msra.mxu0 0.0
    %222 = vmatprep.subr.mxu0 0.0
    %223 = vmatpush1.msra.mxu0 0.0
    %224 = vmatprep.subr.mxu0 0.0
    %225 = vmatpush1.msra.mxu0 0.0
    %226 = vmatprep.subr.mxu0 0.0
    %227 = vmatpush1.msra.mxu0 0.0
    %228 = vmatprep.subr.mxu0 0.0
    %229 = vmatpush1.msra.mxu0 0.0
    %230 = vmatprep.subr.mxu0 0.0
    %231 = vmatpush1.msra.mxu0 0.0
    %232 = vmatprep.subr.mxu0 0.0
    %233 = vmatpush1.msra.mxu0 0.0
    %234 = vmatprep.subr.mxu0 0.0
    %235 = vmatpush1.msra.mxu0 0.0
    %236 = vmatprep.subr.mxu0 0.0
    %237 = vmatpush1.msra.mxu0 0.0
    %238 = vmatprep.subr.mxu0 0.0
    %239 = vmatpush1.msra.mxu0 0.0
    %240 = vmatprep.subr.mxu0 0.0
    %241 = vmatpush1.msra.mxu0 0.0
    %242 = vmatprep.subr.mxu0 0.0
    %243 = vmatpush1.msra.mxu0 0.0
    %244 = vmatprep.subr.mxu0 0.0
    %245 = vmatpush1.msra.mxu0 0.0
    %246 = vmatprep.subr.mxu0 0.0
    %247 = vmatpush1.msra.mxu0 0.0
    %248 = vmatprep.subr.mxu0 0.0
    %249 = vmatpush1.msra.mxu0 0.0
    %250 = vmatprep.subr.mxu0 0.0
    %251 = vmatpush1.msra.mxu0 0.0
    %252 = vmatprep.subr.mxu0 0.0
    %253 = vmatpush1.msra.mxu0 0.0
    %254 = vmatprep.subr.mxu0 0.0
    %255 = vmatpush1.msra.mxu0 0.0
    %256 = vmatprep.subr.mxu0 0.0
    %257 = vmatpush1.msra.mxu0 0.0
    %258 = vmatprep.subr.mxu0 0.0
    %259 = vmatpush1.msra.mxu0 0.0
    %260 = vmatprep.subr.mxu0 0.0
    %261 = vmatpush1.msra.mxu0 0.0
    %262 = vmatprep.subr.mxu0 0.0
    %263 = vmatpush1.msra.mxu0 0.0
    %264 = vmatprep.subr.mxu0 0.0
    %265 = vmatpush1.msra.mxu0 0.0
    %266 = vmatprep.mubr.f32.mxu0 0.0
    %267 = vmatmul.mubr.f32.gmra.mrb[0].mxu0 %v126
    %v268 = vpop.f32.mrb[0].mxu0
    %v269 = vadd.f32 %v199, %v268
    %v270 = vpop.f32.mrb[0].mxu0
    %271 = vdwg.mxu0
    %v272 = vmax.f32 %v269, 0.0
    %v273 = vld [vmem:[%s4] sm:$0xff]
    %v274 = vld [vmem:[%s4 + $0x8] sm:$0xff]
    %v275 = vld [vmem:[%s4 + $0x10] sm:$0xff]
    %v276 = vld [vmem:[%s4 + $0x18] sm:$0xff]
    %v277 = vld [vmem:[%s4 + $0x20] sm:$0xff]
    %v278 = vld [vmem:[%s4 + $0x28] sm:$0xff]
    %v279 = vld [vmem:[%s4 + $0x30] sm:$0xff]
    %v280 = vld [vmem:[%s4 + $0x38] sm:$0xff]
    %v281 = vld [vmem:[%s4 + $0x40] sm:$0xff]
    %v282 = vld [vmem:[%s4 + $0x48] sm:$0xff]
    %v283 = vld [vmem:[%s4 + $0x50] sm:$0xff]
    %v284 = vld [vmem:[%s4 + $0x58] sm:$0xff]
    %v285 = vld [vmem:[%s4 + $0x60] sm:$0xf]
    %v286 = vld [vmem:[%s5] sm:$0x1]
    %v288 = vlaneseq
    %v289 = vshrl.u32 %v288, 7
    %v290 = vsub.s32 0, %v289
    %v291 = vrot.slane %v286, %v290
    %vm293 = vcmask 818176
    %v295 = vsel %vm293, %v272, 0
    %v298 = vsel %vm128, %v285, 0
    %300 = vmatprep.subr.mxu0 0.0
    %301 = vmatpush1.msra.mxu0 %v273
    %302 = vmatprep.subr.mxu0 0.0
    %303 = vmatpush1.msra.mxu0 %v274
    %304 = vmatprep.subr.mxu0 0.0
    %305 = vmatpush1.msra.mxu0 %v275
    %306 = vmatprep.subr.mxu0 0.0
    %307 = vmatpush1.msra.mxu0 %v276
    %308 = vmatprep.subr.mxu0 0.0
    %309 = vmatpush1.msra.mxu0 %v277
    %310 = vmatprep.subr.mxu0 0.0
    %311 = vmatpush1.msra.mxu0 %v278
    %312 = vmatprep.subr.mxu0 0.0
    %313 = vmatpush1.msra.mxu0 %v279
    %314 = vmatprep.subr.mxu0 0.0
    %315 = vmatpush1.msra.mxu0 %v280
    %316 = vmatprep.subr.mxu0 0.0
    %317 = vmatpush1.msra.mxu0 %v281
    %318 = vmatprep.subr.mxu0 0.0
    %319 = vmatpush1.msra.mxu0 %v282
    %320 = vmatprep.subr.mxu0 0.0
    %321 = vmatpush1.msra.mxu0 %v283
    %322 = vmatprep.subr.mxu0 0.0
    %323 = vmatpush1.msra.mxu0 %v284
    %324 = vmatprep.subr.mxu0 0.0
    %325 = vmatpush1.msra.mxu0 %v298
    %326 = vmatprep.subr.mxu0 0.0
    %327 = vmatpush1.msra.mxu0 0.0
    %328 = vmatprep.subr.mxu0 0.0
    %329 = vmatpush1.msra.mxu0 0.0
    %330 = vmatprep.subr.mxu0 0.0
    %331 = vmatpush1.msra.mxu0 0.0
    %332 = vmatprep.subr.mxu0 0.0
    %333 = vmatpush1.msra.mxu0 0.0
    %334 = vmatprep.subr.mxu0 0.0
    %335 = vmatpush1.msra.mxu0 0.0
    %336 = vmatprep.subr.mxu0 0.0
    %337 = vmatpush1.msra.mxu0 0.0
    %338 = vmatprep.subr.mxu0 0.0
    %339 = vmatpush1.msra.mxu0 0.0
    %340 = vmatprep.subr.mxu0 0.0
    %341 = vmatpush1.msra.mxu0 0.0
    %342 = vmatprep.subr.mxu0 0.0
    %343 = vmatpush1.msra.mxu0 0.0
    %344 = vmatprep.subr.mxu0 0.0
    %345 = vmatpush1.msra.mxu0 0.0
    %346 = vmatprep.subr.mxu0 0.0
    %347 = vmatpush1.msra.mxu0 0.0
    %348 = vmatprep.subr.mxu0 0.0
    %349 = vmatpush1.msra.mxu0 0.0
    %350 = vmatprep.subr.mxu0 0.0
    %351 = vmatpush1.msra.mxu0 0.0
    %352 = vmatprep.subr.mxu0 0.0
    %353 = vmatpush1.msra.mxu0 0.0
    %354 = vmatprep.subr.mxu0 0.0
    %355 = vmatpush1.msra.mxu0 0.0
    %356 = vmatprep.subr.mxu0 0.0
    %357 = vmatpush1.msra.mxu0 0.0
    %358 = vmatprep.subr.mxu0 0.0
    %359 = vmatpush1.msra.mxu0 0.0
    %360 = vmatprep.subr.mxu0 0.0
    %361 = vmatpush1.msra.mxu0 0.0
    %362 = vmatprep.subr.mxu0 0.0
    %363 = vmatpush1.msra.mxu0 0.0
    %364 = vmatprep.mubr.f32.mxu0 0.0
    %365 = vmatmul.mubr.f32.gmra.mrb[0].mxu0 %v295
    %v366 = vpop.f32.mrb[0].mxu0
    %v367 = vadd.f32 %v291, %v366
    %v368 = vpop.f32.mrb[0].mxu0
    %369 = vdwg.mxu0
    %vm370 = vcmask 74752
    %371 = vst.msk [vmem:[#allocation2] sm:$0x3] %vm370, %v367
    // Predicated region
    $region26: #{fc1_forward.5} parent=1 // pred_check
      _
    $region27: #{fc1_forward.5} parent=1 // pred_check_branch
      %373 = sbr.rel (0) target = $region29
    $region28: #{fc1_forward.5} parent=1 // pred_region
      %s375 = ssub.s32 32, 32
      %376 = vsyncadd [#allocation3], %s375
      %s378 = sshll.u32 [#allocation2], 4
      %s379 = int_to_ptr.vmem [resolvable:$true] %s378
      %381 = dma.vmem_to_hbm [thread:$0]  %s379, 32, %s6, [#allocation3]
    $region29: #{fc1_forward.5} parent=1 // pred_fallthru
      _
    // Predicated region
    $region30: #{fc1_forward.5} parent=1 // pred_check
      _
    $region31: #{fc1_forward.5} parent=1 // pred_check_branch
      %383 = sbr.rel (0) target = $region33
    $region32: #{fc1_forward.5} parent=1 // pred_region
      %384 = dma.done [#allocation3], 32
    $region33: #{fc1_forward.5} parent=1 // pred_fallthru
      _
    %385 = vsyncpa [#allocation3], 1

// kernel: fc1_forward.4
$region0: #{fc1_forward.4}
  #allocation0 [shape = 'u32[]', space=smem, size = 0x4, offset = 0x4, fixed_abs, tag = 'smem constant byte address 0x4 - core index']
  #allocation1 [shape = 'u32[144,128]{1,0:T(1,128)}', space=vmem, size = 0x12000, scoped, tag = 'internal scratch']
  #allocation2 [shape = 'f32[2,300]{1,0:T(2,128)}', space=vmem, size = 0xc00, scoped, tag = 'scratch operand']
  %s0 = inlined_call_operand.vmem [shape: f32[2,25088], index: 0, kind: input, shape index: {}]
  %s1 = inlined_call_operand.vmem [shape: bf16[25088,300], index: 1, kind: input, shape index: {}]
  %s2 = inlined_call_operand.vmem [shape: f32[2,2,300], index: 2, kind: output, shape index: {}]
  %s3 = sld [smem:[#allocation0]]
  $region49: #{fc1_forward.4} parent=0
    _
  %s5 = ssub.s32 1, %s3
  %s6 = scalar_select 0, %s5, %s3
  loop: start=0, step=1, limit=6
  $region2: #{fc1_forward.4} parent=0 // loop_pre_header
    _
  $region3: #{fc1_forward.4} parent=0 // loop_header
    %s8 = sphi 0, %s12
    %p9 = scmp.ge.s32.totalorder %s8, 6
    %s15 = sphi 0, %s27
    %s16 = sphi 0, %s23
    %s17 = sphi 0, %s15
    %s18 = sphi 0, %s16
    %s19 = sphi 0, %s17
    %s20 = sphi 0, %s18
    %s34 = sphi 0, %s36
    %s37 = sphi 0, %s34
    %s38 = sphi 0, %s37
    %s54 = sphi 0, %s38
    %s64 = sphi 0, %s66
    %s67 = sphi 0, %s64
    %s68 = sphi 0, %s67
    %s84 = sphi 0, %s68
    %s90 = sphi 0, %s92
    %s93 = sphi 0, %s90
    %s94 = sphi 0, %s93
    %s110 = sphi 0, %s94
  $region4: #{fc1_forward.4} parent=0 // loop_header_branch
    %11 = sbr.rel (%p9) target = $region8
  $region5: #{fc1_forward.4} parent=0 // loop_body
    %s13 = ssub.s32 %s8, 1
    %s14 = ssub.s32 %s8, 2
    %s21 = sadd.s32 1, %s16
    %p22 = scmp.ge.s32.totalorder %s21, 2
    %s23 = scalar_select %p22, 0, %s21
    %s24 = sadd.s32 1, %s15
    %s25 = scalar_select %p22, %s24, %s15
    %p26 = scmp.ge.s32.totalorder %s25, 2
    %s27 = scalar_select %p26, 0, %s25
    %s28 = smul.u32 %s15, 2
    %s29 = sadd.s32 %s28, %s16
    %s30 = smul.u32 %s27, 2
    %s31 = sadd.s32 %s30, %s23
    %s32 = ssub.s32 %s29, %s31
    %p33 = scmp.eq.s32.totalorder %s32, 0
    %s35 = sadd.s32 %s34, 1
    %s36 = scalar_select %p33, %s34, %s35
    %p39 = pneg %p33
    %p40 = scmp.eq.s32.totalorder %s8, 3
    %p41 = por %p39, %p40
    %p42 = scmp.ne.s32.totalorder %s34, %s37
    %p43 = scmp.eq.s32.totalorder %s8, 0
    %p44 = por %p42, %p43
    %p45 = scmp.ne.s32.totalorder %s34, %s37
    %p46 = scmp.eq.s32.totalorder %s13, 3
    %p47 = por %p45, %p46
    %p48 = scmp.ne.s32.totalorder %s37, %s38
    %p49 = scmp.eq.s32.totalorder %s13, 0
    %p50 = por %p48, %p49
    %p51 = scmp.ne.s32.totalorder %s37, %s38
    %p52 = scmp.eq.s32.totalorder %s14, 3
    %p53 = por %p51, %p52
    %p55 = scmp.ne.s32.totalorder %s38, %s54
    %p56 = scmp.eq.s32.totalorder %s14, 0
    %p57 = por %p55, %p56
    %s58 = smul.u32 %s15, 2
    %s59 = sadd.s32 %s58, %s16
    %s60 = smul.u32 %s27, 2
    %s61 = sadd.s32 %s60, %s23
    %s62 = ssub.s32 %s59, %s61
    %p63 = scmp.eq.s32.totalorder %s62, 0
    %s65 = sadd.s32 %s64, 1
    %s66 = scalar_select %p63, %s64, %s65
    %p69 = pneg %p63
    %p70 = scmp.eq.s32.totalorder %s8, 3
    %p71 = por %p69, %p70
    %p72 = scmp.ne.s32.totalorder %s64, %s67
    %p73 = scmp.eq.s32.totalorder %s8, 0
    %p74 = por %p72, %p73
    %p75 = scmp.ne.s32.totalorder %s64, %s67
    %p76 = scmp.eq.s32.totalorder %s13, 3
    %p77 = por %p75, %p76
    %p78 = scmp.ne.s32.totalorder %s67, %s68
    %p79 = scmp.eq.s32.totalorder %s13, 0
    %p80 = por %p78, %p79
    %p81 = scmp.ne.s32.totalorder %s67, %s68
    %p82 = scmp.eq.s32.totalorder %s14, 3
    %p83 = por %p81, %p82
    %p85 = scmp.ne.s32.totalorder %s68, %s84
    %p86 = scmp.eq.s32.totalorder %s14, 0
    %p87 = por %p85, %p86
    %s88 = ssub.s32 %s15, %s27
    %p89 = scmp.eq.s32.totalorder %s88, 0
    %s91 = sadd.s32 %s90, 1
    %s92 = scalar_select %p89, %s90, %s91
    %p95 = pneg %p89
    %p96 = scmp.eq.s32.totalorder %s8, 3
    %p97 = por %p95, %p96
    %p98 = scmp.ne.s32.totalorder %s90, %s93
    %p99 = scmp.eq.s32.totalorder %s8, 0
    %p100 = por %p98, %p99
    %p101 = scmp.ne.s32.totalorder %s90, %s93
    %p102 = scmp.eq.s32.totalorder %s13, 3
    %p103 = por %p101, %p102
    %p104 = scmp.ne.s32.totalorder %s93, %s94
    %p105 = scmp.eq.s32.totalorder %s13, 0
    %p106 = por %p104, %p105
    %p107 = scmp.ne.s32.totalorder %s93, %s94
    %p108 = scmp.eq.s32.totalorder %s14, 3
    %p109 = por %p107, %p108
    %p111 = scmp.ne.s32.totalorder %s94, %s110
    %p112 = scmp.eq.s32.totalorder %s14, 0
    %p113 = por %p111, %p112
    %p114 = scmp.le.s32.totalorder 1, %s8
    %p115 = scmp.lt.s32.totalorder %s8, 5
    %p116 = pnand %p114, %p115
    %p117 = pneg %p116
    // Predicated region
    $region9: #{fc1_forward.4} parent=5 // pred_check
      _
    $region10: #{fc1_forward.4} parent=5 // pred_check_branch
      %119 = sbr.rel (%p116) target = $region12
    $region11: #{fc1_forward.4} parent=5 // pred_region
      %s120 = ssub.s32 %s8, 1
    $region12: #{fc1_forward.4} parent=5 // pred_fallthru
      _
    %p121 = scmp.lt.s32.totalorder %s8, 4
    // Predicated region
    $region13: #{fc1_forward.4} parent=5 // pred_check
      %p122 = pneg %p121
    $region14: #{fc1_forward.4} parent=5 // pred_check_branch
      %124 = sbr.rel (%p122) target = $region16
    $region15: #{fc1_forward.4} parent=5 // pred_region
      // Predicated region
      $region17: #{fc1_forward.4} parent=15 // pred_check
        %p125 = pneg %p44
      $region18: #{fc1_forward.4} parent=15 // pred_check_branch
        %127 = sbr.rel (%p125) target = $region20
      $region19: #{fc1_forward.4} parent=15 // pred_region
        %s128 = smul.u32 %s15, 2
        %s129 = sadd.s32 %s128, %s16
        %s130 = smul.u32 49, %s129
        %p131 = scmp.lt.s32.totalorder %s130, 195
        %s132 = scalar_select %p131, %s130, 195
        %s133 = smul.addr %s132, 2
        %s134 = scalar_lea.vmem %s0, %s133
        %s135 = smul.u32 %s15, 2
        %s136 = sadd.s32 %s135, %s16
        %s137 = smul.u32 49, %s136
      $region20: #{fc1_forward.4} parent=15 // pred_fallthru
        _
      // Predicated region
      $region21: #{fc1_forward.4} parent=15 // pred_check
        %p138 = pneg %p74
      $region22: #{fc1_forward.4} parent=15 // pred_check_branch
        %140 = sbr.rel (%p138) target = $region24
      $region23: #{fc1_forward.4} parent=15 // pred_region
        %s141 = smul.u32 %s15, 2
        %s142 = sadd.s32 %s141, %s16
        %s143 = smul.u32 784, %s142
        %p144 = scmp.lt.s32.totalorder %s143, 3135
        %s145 = scalar_select %p144, %s143, 3135
        %s146 = smul.addr %s145, 3
        %s147 = smul.addr %s146, 4
        %s148 = scalar_lea.vmem %s1, %s147
        %s149 = smul.u32 %s15, 2
        %s150 = sadd.s32 %s149, %s16
        %s151 = smul.u32 784, %s150
      $region24: #{fc1_forward.4} parent=15 // pred_fallthru
        _
    $region16: #{fc1_forward.4} parent=5 // pred_fallthru
      _
    %p152 = scmp.le.s32.totalorder 1, %s8
    %p153 = scmp.lt.s32.totalorder %s8, 5
    %p154 = pnand %p152, %p153
    %p155 = pneg %p154
    // Predicated region
    $region25: #{fc1_forward.4} parent=5 // pred_check
      _
    $region26: #{fc1_forward.4} parent=5 // pred_check_branch
      %157 = sbr.rel (%p154) target = $region28
    $region27: #{fc1_forward.4} parent=5 // pred_region
      %s158 = ssub.s32 %s8, 1
      %s159 = smul.u32 %s17, 2
      %s160 = sadd.s32 %s159, %s18
      %s161 = smul.u32 49, %s160
      %p162 = scmp.lt.s32.totalorder %s161, 195
      %s163 = scalar_select %p162, %s161, 195
      %s164 = smul.addr %s163, 2
      %s165 = scalar_lea.vmem %s0, %s164
      %p166 = pneg %p50
      %p167 = pneg %p47
      %s168 = smul.u32 %s17, 2
      %s169 = sadd.s32 %s168, %s18
      %s170 = smul.u32 784, %s169
      %p171 = scmp.lt.s32.totalorder %s170, 3135
      %s172 = scalar_select %p171, %s170, 3135
      %s173 = smul.addr %s172, 3
      %s174 = smul.addr %s173, 4
      %s175 = scalar_lea.vmem %s1, %s174
      %p176 = pneg %p80
      %p177 = pneg %p77
      %p178 = pneg %p106
      %p179 = pneg %p103
      %p180 = scmp.lt.s32.totalorder %s17, 1
      %s181 = scalar_select %p180, %s17, 1
      %s182 = smul.addr %s181, 3
      %s183 = smul.addr %s182, 2
      %s184 = scalar_lea.vmem %s2, %s183
      %s185 = smul.u32 %s17, 2
      %s186 = sadd.s32 %s185, %s18
      %s187 = smul.u32 49, %s186
      %p188 = scmp.lt.s32.totalorder %s187, 195
      %s189 = scalar_select %p188, %s187, 195
      %s190 = smul.addr %s189, 2
      %s191 = scalar_lea.vmem %s0, %s190
      %s192 = smul.u32 %s17, 2
      %s193 = sadd.s32 %s192, %s18
      %s194 = smul.u32 49, %s193
      %s195 = smul.u32 %s17, 2
      %s196 = sadd.s32 %s195, %s18
      %s197 = smul.u32 784, %s196
      %p198 = scmp.lt.s32.totalorder %s197, 3135
      %s199 = scalar_select %p198, %s197, 3135
      %s200 = smul.addr %s199, 3
      %s201 = smul.addr %s200, 4
      %s202 = scalar_lea.vmem %s1, %s201
      %s203 = smul.u32 %s17, 2
      %s204 = sadd.s32 %s203, %s18
      %s205 = smul.u32 784, %s204
      %p206 = scmp.lt.s32.totalorder %s17, 1
      %s207 = scalar_select %p206, %s17, 1
      %s208 = smul.addr %s207, 3
      %s209 = smul.addr %s208, 2
      %s210 = scalar_lea.vmem %s2, %s209
      %p212 = scmp.eq.s32.totalorder %s18, 0
      // Predicated region
      $region29: #{fc1_forward.4} parent=27 // pred_check
        %p213 = pneg %p212
      $region30: #{fc1_forward.4} parent=27 // pred_check_branch
        %215 = sbr.rel (%p213) target = $region32
      $region31: #{fc1_forward.4} parent=27 // pred_region
        %vm216 = vcmask 1041408
        %vm217 = vcmask 1043458
        %vm218 = vmor %vm217, %vm216
        %vm219 = vcmask 357380
        %vm220 = vmor %vm219, %vm218
        %221 = vst.msk [vmem:[#allocation2] sm:$0x3f] %vm220, 0.0
      $region32: #{fc1_forward.4} parent=27 // pred_fallthru
        _
      %v222 = vld [vmem:[#allocation2] sm:$0x3f]
      %v223 = vld [vmem:[%s191] sm:$0xff]
      %v224 = vld [vmem:[%s191 + $0x8] sm:$0xff]
      %v225 = vld [vmem:[%s191 + $0x10] sm:$0xff]
      %v226 = vld [vmem:[%s191 + $0x18] sm:$0xff]
      %v227 = vld [vmem:[%s191 + $0x20] sm:$0xff]
      %v228 = vld [vmem:[%s191 + $0x28] sm:$0xff]
      %v229 = vld [vmem:[%s191 + $0x30] sm:$0xff]
      %v230 = vld [vmem:[%s191 + $0x38] sm:$0xff]
      %v231 = vld [vmem:[%s191 + $0x40] sm:$0xff]
      %v232 = vld [vmem:[%s191 + $0x48] sm:$0xff]
      %v233 = vld [vmem:[%s191 + $0x50] sm:$0xff]
      %v234 = vld [vmem:[%s191 + $0x58] sm:$0xff]
      %v235 = vld [vmem:[%s191 + $0x60] sm:$0x3]
      %v249 = vcombine.high %v223, %v223
      %v251 = vunpack.c.l.s4 1983009808
      %v252 = vunpack.c.0.s8 %v251
      %v253 = vlaneseq
      %v254 = vshrl.u32 %v253, 7
      %v255 = vsub.s32 %v252, %v254
      %v256 = vrot.slane %v223, %v255
      %v258 = vunpack.c.l.s4 1983009808
      %v259 = vunpack.c.0.s8 %v258
      %v260 = vlaneseq
      %v261 = vshrl.u32 %v260, 7
      %v262 = vsub.s32 %v259, %v261
      %v263 = vrot.slane %v249, %v262
      %v264 = vcombine.high %v256, %v256
      %v265 = vcombine.high %v263, %v263
      %v266 = vcombine.high %v224, %v224
      %v268 = vunpack.c.l.s4 1983009808
      %v269 = vunpack.c.0.s8 %v268
      %v270 = vlaneseq
      %v271 = vshrl.u32 %v270, 7
      %v272 = vsub.s32 %v269, %v271
      %v273 = vrot.slane %v224, %v272
      %v275 = vunpack.c.l.s4 1983009808
      %v276 = vunpack.c.0.s8 %v275
      %v277 = vlaneseq
      %v278 = vshrl.u32 %v277, 7
      %v279 = vsub.s32 %v276, %v278
      %v280 = vrot.slane %v266, %v279
      %v281 = vcombine.high %v273, %v273
      %v282 = vcombine.high %v280, %v280
      %v283 = vcombine.high %v225, %v225
      %v285 = vunpack.c.l.s4 1983009808
      %v286 = vunpack.c.0.s8 %v285
      %v287 = vlaneseq
      %v288 = vshrl.u32 %v287, 7
      %v289 = vsub.s32 %v286, %v288
      %v290 = vrot.slane %v225, %v289
      %v292 = vunpack.c.l.s4 1983009808
      %v293 = vunpack.c.0.s8 %v292
      %v294 = vlaneseq
      %v295 = vshrl.u32 %v294, 7
      %v296 = vsub.s32 %v293, %v295
      %v297 = vrot.slane %v283, %v296
      %v298 = vcombine.high %v290, %v290
      %v299 = vcombine.high %v297, %v297
      %v300 = vcombine.high %v226, %v226
      %v302 = vunpack.c.l.s4 1983009808
      %v303 = vunpack.c.0.s8 %v302
      %v304 = vlaneseq
      %v305 = vshrl.u32 %v304, 7
      %v306 = vsub.s32 %v303, %v305
      %v307 = vrot.slane %v226, %v306
      %v309 = vunpack.c.l.s4 1983009808
      %v310 = vunpack.c.0.s8 %v309
      %v311 = vlaneseq
      %v312 = vshrl.u32 %v311, 7
      %v313 = vsub.s32 %v310, %v312
      %v314 = vrot.slane %v300, %v313
      %v315 = vcombine.high %v307, %v307
      %v316 = vcombine.high %v314, %v314
      %v317 = vcombine.high %v227, %v227
      %v319 = vunpack.c.l.s4 1983009808
      %v320 = vunpack.c.0.s8 %v319
      %v321 = vlaneseq
      %v322 = vshrl.u32 %v321, 7
      %v323 = vsub.s32 %v320, %v322
      %v324 = vrot.slane %v227, %v323
      %v326 = vunpack.c.l.s4 1983009808
      %v327 = vunpack.c.0.s8 %v326
      %v328 = vlaneseq
      %v329 = vshrl.u32 %v328, 7
      %v330 = vsub.s32 %v327, %v329
      %v331 = vrot.slane %v317, %v330
      %v332 = vcombine.high %v324, %v324
      %v333 = vcombine.high %v331, %v331
      %v334 = vcombine.high %v228, %v228
      %v336 = vunpack.c.l.s4 1983009808
      %v337 = vunpack.c.0.s8 %v336
      %v338 = vlaneseq
      %v339 = vshrl.u32 %v338, 7
      %v340 = vsub.s32 %v337, %v339
      %v341 = vrot.slane %v228, %v340
      %v343 = vunpack.c.l.s4 1983009808
      %v344 = vunpack.c.0.s8 %v343
      %v345 = vlaneseq
      %v346 = vshrl.u32 %v345, 7
      %v347 = vsub.s32 %v344, %v346
      %v348 = vrot.slane %v334, %v347
      %v349 = vcombine.high %v341, %v341
      %v350 = vcombine.high %v348, %v348
      %v351 = vcombine.high %v229, %v229
      %v353 = vunpack.c.l.s4 1983009808
      %v354 = vunpack.c.0.s8 %v353
      %v355 = vlaneseq
      %v356 = vshrl.u32 %v355, 7
      %v357 = vsub.s32 %v354, %v356
      %v358 = vrot.slane %v229, %v357
      %v360 = vunpack.c.l.s4 1983009808
      %v361 = vunpack.c.0.s8 %v360
      %v362 = vlaneseq
      %v363 = vshrl.u32 %v362, 7
      %v364 = vsub.s32 %v361, %v363
      %v365 = vrot.slane %v351, %v364
      %v366 = vcombine.high %v358, %v358
      %v367 = vcombine.high %v365, %v365
      %v368 = vcombine.high %v230, %v230
      %v370 = vunpack.c.l.s4 1983009808
      %v371 = vunpack.c.0.s8 %v370
      %v372 = vlaneseq
      %v373 = vshrl.u32 %v372, 7
      %v374 = vsub.s32 %v371, %v373
      %v375 = vrot.slane %v230, %v374
      %v377 = vunpack.c.l.s4 1983009808
      %v378 = vunpack.c.0.s8 %v377
      %v379 = vlaneseq
      %v380 = vshrl.u32 %v379, 7
      %v381 = vsub.s32 %v378, %v380
      %v382 = vrot.slane %v368, %v381
      %v383 = vcombine.high %v375, %v375
      %v384 = vcombine.high %v382, %v382
      %v385 = vcombine.high %v231, %v231
      %v387 = vunpack.c.l.s4 1983009808
      %v388 = vunpack.c.0.s8 %v387
      %v389 = vlaneseq
      %v390 = vshrl.u32 %v389, 7
      %v391 = vsub.s32 %v388, %v390
      %v392 = vrot.slane %v231, %v391
      %v394 = vunpack.c.l.s4 1983009808
      %v395 = vunpack.c.0.s8 %v394
      %v396 = vlaneseq
      %v397 = vshrl.u32 %v396, 7
      %v398 = vsub.s32 %v395, %v397
      %v399 = vrot.slane %v385, %v398
      %v400 = vcombine.high %v392, %v392
      %v401 = vcombine.high %v399, %v399
      %v402 = vcombine.high %v232, %v232
      %v404 = vunpack.c.l.s4 1983009808
      %v405 = vunpack.c.0.s8 %v404
      %v406 = vlaneseq
      %v407 = vshrl.u32 %v406, 7
      %v408 = vsub.s32 %v405, %v407
      %v409 = vrot.slane %v232, %v408
      %v411 = vunpack.c.l.s4 1983009808
      %v412 = vunpack.c.0.s8 %v411
      %v413 = vlaneseq
      %v414 = vshrl.u32 %v413, 7
      %v415 = vsub.s32 %v412, %v414
      %v416 = vrot.slane %v402, %v415
      %v417 = vcombine.high %v409, %v409
      %v418 = vcombine.high %v416, %v416
      %v419 = vcombine.high %v233, %v233
      %v421 = vunpack.c.l.s4 1983009808
      %v422 = vunpack.c.0.s8 %v421
      %v423 = vlaneseq
      %v424 = vshrl.u32 %v423, 7
      %v425 = vsub.s32 %v422, %v424
      %v426 = vrot.slane %v233, %v425
      %v428 = vunpack.c.l.s4 1983009808
      %v429 = vunpack.c.0.s8 %v428
      %v430 = vlaneseq
      %v431 = vshrl.u32 %v430, 7
      %v432 = vsub.s32 %v429, %v431
      %v433 = vrot.slane %v419, %v432
      %v434 = vcombine.high %v426, %v426
      %v435 = vcombine.high %v433, %v433
      %v436 = vcombine.high %v234, %v234
      %v438 = vunpack.c.l.s4 1983009808
      %v439 = vunpack.c.0.s8 %v438
      %v440 = vlaneseq
      %v441 = vshrl.u32 %v440, 7
      %v442 = vsub.s32 %v439, %v441
      %v443 = vrot.slane %v234, %v442
      %v445 = vunpack.c.l.s4 1983009808
      %v446 = vunpack.c.0.s8 %v445
      %v447 = vlaneseq
      %v448 = vshrl.u32 %v447, 7
      %v449 = vsub.s32 %v446, %v448
      %v450 = vrot.slane %v436, %v449
      %v451 = vcombine.high %v443, %v443
      %v452 = vcombine.high %v450, %v450
      %v454 = vunpack.c.l.s4 1983009808
      %v455 = vunpack.c.0.s8 %v454
      %v456 = vlaneseq
      %v457 = vshrl.u32 %v456, 7
      %v458 = vsub.s32 %v455, %v457
      %v459 = vrot.slane %v235, %v458
      %v509 = vpack.c.bf16 %v256, %v256
      %v510 = vpack.c.bf16 %v264, %v264
      %v511 = vpack.c.bf16 %v263, %v263
      %v512 = vpack.c.bf16 %v265, %v265
      %v513 = vpack.c.bf16 %v273, %v273
      %v514 = vpack.c.bf16 %v281, %v281
      %v515 = vpack.c.bf16 %v280, %v280
      %v516 = vpack.c.bf16 %v282, %v282
      %v517 = vpack.c.bf16 %v290, %v290
      %v518 = vpack.c.bf16 %v298, %v298
      %v519 = vpack.c.bf16 %v297, %v297
      %v520 = vpack.c.bf16 %v299, %v299
      %v521 = vpack.c.bf16 %v307, %v307
      %v522 = vpack.c.bf16 %v315, %v315
      %v523 = vpack.c.bf16 %v314, %v314
      %v524 = vpack.c.bf16 %v316, %v316
      %v525 = vpack.c.bf16 %v324, %v324
      %v526 = vpack.c.bf16 %v332, %v332
      %v527 = vpack.c.bf16 %v331, %v331
      %v528 = vpack.c.bf16 %v333, %v333
      %v529 = vpack.c.bf16 %v341, %v341
      %v530 = vpack.c.bf16 %v349, %v349
      %v531 = vpack.c.bf16 %v348, %v348
      %v532 = vpack.c.bf16 %v350, %v350
      %v533 = vpack.c.bf16 %v358, %v358
      %v534 = vpack.c.bf16 %v366, %v366
      %v535 = vpack.c.bf16 %v365, %v365
      %v536 = vpack.c.bf16 %v367, %v367
      %v537 = vpack.c.bf16 %v375, %v375
      %v538 = vpack.c.bf16 %v383, %v383
      %v539 = vpack.c.bf16 %v382, %v382
      %v540 = vpack.c.bf16 %v384, %v384
      %v541 = vpack.c.bf16 %v392, %v392
      %v542 = vpack.c.bf16 %v400, %v400
      %v543 = vpack.c.bf16 %v399, %v399
      %v544 = vpack.c.bf16 %v401, %v401
      %v545 = vpack.c.bf16 %v409, %v409
      %v546 = vpack.c.bf16 %v417, %v417
      %v547 = vpack.c.bf16 %v416, %v416
      %v548 = vpack.c.bf16 %v418, %v418
      %v549 = vpack.c.bf16 %v426, %v426
      %v550 = vpack.c.bf16 %v434, %v434
      %v551 = vpack.c.bf16 %v433, %v433
      %v552 = vpack.c.bf16 %v435, %v435
      %v553 = vpack.c.bf16 %v443, %v443
      %v554 = vpack.c.bf16 %v451, %v451
      %v555 = vpack.c.bf16 %v450, %v450
      %v556 = vpack.c.bf16 %v452, %v452
      %v557 = vpack.c.bf16 %v459, %v459
      %v558 = vld [vmem:[%s202] sm:$0xff]
      %v559 = vld [vmem:[%s202 + $0x8] sm:$0xf]
      %v560 = vld [vmem:[%s202 + $0xc] sm:$0xff]
      %v561 = vld [vmem:[%s202 + $0x14] sm:$0xf]
      %v562 = vld [vmem:[%s202 + $0x18] sm:$0xff]
      %v563 = vld [vmem:[%s202 + $0x20] sm:$0xf]
      %v564 = vld [vmem:[%s202 + $0x24] sm:$0xff]
      %v565 = vld [vmem:[%s202 + $0x2c] sm:$0xf]
      %v566 = vld [vmem:[%s202 + $0x30] sm:$0xff]
      %v567 = vld [vmem:[%s202 + $0x38] sm:$0xf]
      %v568 = vld [vmem:[%s202 + $0x3c] sm:$0xff]
      %v569 = vld [vmem:[%s202 + $0x44] sm:$0xf]
      %v570 = vld [vmem:[%s202 + $0x48] sm:$0xff]
      %v571 = vld [vmem:[%s202 + $0x50] sm:$0xf]
      %v572 = vld [vmem:[%s202 + $0x54] sm:$0xff]
      %v573 = vld [vmem:[%s202 + $0x5c] sm:$0xf]
      %v574 = vld [vmem:[%s202 + $0x60] sm:$0xff]
      %v575 = vld [vmem:[%s202 + $0x68] sm:$0xf]
      %v576 = vld [vmem:[%s202 + $0x6c] sm:$0xff]
      %v577 = vld [vmem:[%s202 + $0x74] sm:$0xf]
      %v578 = vld [vmem:[%s202 + $0x78] sm:$0xff]
      %v579 = vld [vmem:[%s202 + $0x80] sm:$0xf]
      %v580 = vld [vmem:[%s202 + $0x84] sm:$0xff]
      %v581 = vld [vmem:[%s202 + $0x8c] sm:$0xf]
      %v582 = vld [vmem:[%s202 + $0x90] sm:$0xff]
      %v583 = vld [vmem:[%s202 + $0x98] sm:$0xf]
      %v584 = vld [vmem:[%s202 + $0x9c] sm:$0xff]
      %v585 = vld [vmem:[%s202 + $0xa4] sm:$0xf]
      %v586 = vld [vmem:[%s202 + $0xa8] sm:$0xff]
      %v587 = vld [vmem:[%s202 + $0xb0] sm:$0xf]
      %v588 = vld [vmem:[%s202 + $0xb4] sm:$0xff]
      %v589 = vld [vmem:[%s202 + $0xbc] sm:$0xf]
      %v590 = vld [vmem:[%s202 + $0xc0] sm:$0xff]
      %v591 = vld [vmem:[%s202 + $0xc8] sm:$0xf]
      %v592 = vld [vmem:[%s202 + $0xcc] sm:$0xff]
      %v593 = vld [vmem:[%s202 + $0xd4] sm:$0xf]
      %v594 = vld [vmem:[%s202 + $0xd8] sm:$0xff]
      %v595 = vld [vmem:[%s202 + $0xe0] sm:$0xf]
      %v596 = vld [vmem:[%s202 + $0xe4] sm:$0xff]
      %v597 = vld [vmem:[%s202 + $0xec] sm:$0xf]
      %v598 = vld [vmem:[%s202 + $0xf0] sm:$0xff]
      %v599 = vld [vmem:[%s202 + $0xf8] sm:$0xf]
      %v600 = vld [vmem:[%s202 + $0xfc] sm:$0xff]
      %v601 = vld [vmem:[%s202 + $0x104] sm:$0xf]
      %v602 = vld [vmem:[%s202 + $0x108] sm:$0xff]
      %v603 = vld [vmem:[%s202 + $0x110] sm:$0xf]
      %v604 = vld [vmem:[%s202 + $0x114] sm:$0xff]
      %v605 = vld [vmem:[%s202 + $0x11c] sm:$0xf]
      %v606 = vld [vmem:[%s202 + $0x120] sm:$0xff]
      %v607 = vld [vmem:[%s202 + $0x128] sm:$0xf]
      %v608 = vld [vmem:[%s202 + $0x12c] sm:$0xff]
      %v609 = vld [vmem:[%s202 + $0x134] sm:$0xf]
      %v610 = vld [vmem:[%s202 + $0x138] sm:$0xff]
      %v611 = vld [vmem:[%s202 + $0x140] sm:$0xf]
      %v612 = vld [vmem:[%s202 + $0x144] sm:$0xff]
      %v613 = vld [vmem:[%s202 + $0x14c] sm:$0xf]
      %v614 = vld [vmem:[%s202 + $0x150] sm:$0xff]
      %v615 = vld [vmem:[%s202 + $0x158] sm:$0xf]
      %v616 = vld [vmem:[%s202 + $0x15c] sm:$0xff]
      %v617 = vld [vmem:[%s202 + $0x164] sm:$0xf]
      %v618 = vld [vmem:[%s202 + $0x168] sm:$0xff]
      %v619 = vld [vmem:[%s202 + $0x170] sm:$0xf]
      %v620 = vld [vmem:[%s202 + $0x174] sm:$0xff]
      %v621 = vld [vmem:[%s202 + $0x17c] sm:$0xf]
      %v622 = vld [vmem:[%s202 + $0x180] sm:$0xff]
      %v623 = vld [vmem:[%s202 + $0x188] sm:$0xf]
      %v624 = vld [vmem:[%s202 + $0x18c] sm:$0xff]
      %v625 = vld [vmem:[%s202 + $0x194] sm:$0xf]
      %v626 = vld [vmem:[%s202 + $0x198] sm:$0xff]
      %v627 = vld [vmem:[%s202 + $0x1a0] sm:$0xf]
      %v628 = vld [vmem:[%s202 + $0x1a4] sm:$0xff]
      %v629 = vld [vmem:[%s202 + $0x1ac] sm:$0xf]
      %v630 = vld [vmem:[%s202 + $0x1b0] sm:$0xff]
      %v631 = vld [vmem:[%s202 + $0x1b8] sm:$0xf]
      %v632 = vld [vmem:[%s202 + $0x1bc] sm:$0xff]
      %v633 = vld [vmem:[%s202 + $0x1c4] sm:$0xf]
      %v634 = vld [vmem:[%s202 + $0x1c8] sm:$0xff]
      %v635 = vld [vmem:[%s202 + $0x1d0] sm:$0xf]
      %v636 = vld [vmem:[%s202 + $0x1d4] sm:$0xff]
      %v637 = vld [vmem:[%s202 + $0x1dc] sm:$0xf]
      %v638 = vld [vmem:[%s202 + $0x1e0] sm:$0xff]
      %v639 = vld [vmem:[%s202 + $0x1e8] sm:$0xf]
      %v640 = vld [vmem:[%s202 + $0x1ec] sm:$0xff]
      %v641 = vld [vmem:[%s202 + $0x1f4] sm:$0xf]
      %v642 = vld [vmem:[%s202 + $0x1f8] sm:$0xff]
      %v643 = vld [vmem:[%s202 + $0x200] sm:$0xf]
      %v644 = vld [vmem:[%s202 + $0x204] sm:$0xff]
      %v645 = vld [vmem:[%s202 + $0x20c] sm:$0xf]
      %v646 = vld [vmem:[%s202 + $0x210] sm:$0xff]
      %v647 = vld [vmem:[%s202 + $0x218] sm:$0xf]
      %v648 = vld [vmem:[%s202 + $0x21c] sm:$0xff]
      %v649 = vld [vmem:[%s202 + $0x224] sm:$0xf]
      %v650 = vld [vmem:[%s202 + $0x228] sm:$0xff]
      %v651 = vld [vmem:[%s202 + $0x230] sm:$0xf]
      %v652 = vld [vmem:[%s202 + $0x234] sm:$0xff]
      %v653 = vld [vmem:[%s202 + $0x23c] sm:$0xf]
      %v654 = vld [vmem:[%s202 + $0x240] sm:$0xff]
      %v655 = vld [vmem:[%s202 + $0x248] sm:$0xf]
      %v656 = vld [vmem:[%s202 + $0x24c] sm:$0xff]
      %v657 = vld [vmem:[%s202 + $0x254] sm:$0xf]
      %v658 = vld [vmem:[%s202 + $0x258] sm:$0xff]
      %v659 = vld [vmem:[%s202 + $0x260] sm:$0xf]
      %v660 = vld [vmem:[%s202 + $0x264] sm:$0xff]
      %v661 = vld [vmem:[%s202 + $0x26c] sm:$0xf]
      %v662 = vld [vmem:[%s202 + $0x270] sm:$0xff]
      %v663 = vld [vmem:[%s202 + $0x278] sm:$0xf]
      %v664 = vld [vmem:[%s202 + $0x27c] sm:$0xff]
      %v665 = vld [vmem:[%s202 + $0x284] sm:$0xf]
      %v666 = vld [vmem:[%s202 + $0x288] sm:$0xff]
      %v667 = vld [vmem:[%s202 + $0x290] sm:$0xf]
      %v668 = vld [vmem:[%s202 + $0x294] sm:$0xff]
      %v669 = vld [vmem:[%s202 + $0x29c] sm:$0xf]
      %v670 = vld [vmem:[%s202 + $0x2a0] sm:$0xff]
      %v671 = vld [vmem:[%s202 + $0x2a8] sm:$0xf]
      %v672 = vld [vmem:[%s202 + $0x2ac] sm:$0xff]
      %v673 = vld [vmem:[%s202 + $0x2b4] sm:$0xf]
      %v674 = vld [vmem:[%s202 + $0x2b8] sm:$0xff]
      %v675 = vld [vmem:[%s202 + $0x2c0] sm:$0xf]
      %v676 = vld [vmem:[%s202 + $0x2c4] sm:$0xff]
      %v677 = vld [vmem:[%s202 + $0x2cc] sm:$0xf]
      %v678 = vld [vmem:[%s202 + $0x2d0] sm:$0xff]
      %v679 = vld [vmem:[%s202 + $0x2d8] sm:$0xf]
      %v680 = vld [vmem:[%s202 + $0x2dc] sm:$0xff]
      %v681 = vld [vmem:[%s202 + $0x2e4] sm:$0xf]
      %v682 = vld [vmem:[%s202 + $0x2e8] sm:$0xff]
      %v683 = vld [vmem:[%s202 + $0x2f0] sm:$0xf]
      %v684 = vld [vmem:[%s202 + $0x2f4] sm:$0xff]
      %v685 = vld [vmem:[%s202 + $0x2fc] sm:$0xf]
      %v686 = vld [vmem:[%s202 + $0x300] sm:$0xff]
      %v687 = vld [vmem:[%s202 + $0x308] sm:$0xf]
      %v688 = vld [vmem:[%s202 + $0x30c] sm:$0xff]
      %v689 = vld [vmem:[%s202 + $0x314] sm:$0xf]
      %v690 = vld [vmem:[%s202 + $0x318] sm:$0xff]
      %v691 = vld [vmem:[%s202 + $0x320] sm:$0xf]
      %v692 = vld [vmem:[%s202 + $0x324] sm:$0xff]
      %v693 = vld [vmem:[%s202 + $0x32c] sm:$0xf]
      %v694 = vld [vmem:[%s202 + $0x330] sm:$0xff]
      %v695 = vld [vmem:[%s202 + $0x338] sm:$0xf]
      %v696 = vld [vmem:[%s202 + $0x33c] sm:$0xff]
      %v697 = vld [vmem:[%s202 + $0x344] sm:$0xf]
      %v698 = vld [vmem:[%s202 + $0x348] sm:$0xff]
      %v699 = vld [vmem:[%s202 + $0x350] sm:$0xf]
      %v700 = vld [vmem:[%s202 + $0x354] sm:$0xff]
      %v701 = vld [vmem:[%s202 + $0x35c] sm:$0xf]
      %v702 = vld [vmem:[%s202 + $0x360] sm:$0xff]
      %v703 = vld [vmem:[%s202 + $0x368] sm:$0xf]
      %v704 = vld [vmem:[%s202 + $0x36c] sm:$0xff]
      %v705 = vld [vmem:[%s202 + $0x374] sm:$0xf]
      %v706 = vld [vmem:[%s202 + $0x378] sm:$0xff]
      %v707 = vld [vmem:[%s202 + $0x380] sm:$0xf]
      %v708 = vld [vmem:[%s202 + $0x384] sm:$0xff]
      %v709 = vld [vmem:[%s202 + $0x38c] sm:$0xf]
      %v710 = vld [vmem:[%s202 + $0x390] sm:$0xff]
      %v711 = vld [vmem:[%s202 + $0x398] sm:$0xf]
      %v712 = vld [vmem:[%s202 + $0x39c] sm:$0xff]
      %v713 = vld [vmem:[%s202 + $0x3a4] sm:$0xf]
      %v714 = vld [vmem:[%s202 + $0x3a8] sm:$0xff]
      %v715 = vld [vmem:[%s202 + $0x3b0] sm:$0xf]
      %v716 = vld [vmem:[%s202 + $0x3b4] sm:$0xff]
      %v717 = vld [vmem:[%s202 + $0x3bc] sm:$0xf]
      %v718 = vld [vmem:[%s202 + $0x3c0] sm:$0xff]
      %v719 = vld [vmem:[%s202 + $0x3c8] sm:$0xf]
      %v720 = vld [vmem:[%s202 + $0x3cc] sm:$0xff]
      %v721 = vld [vmem:[%s202 + $0x3d4] sm:$0xf]
      %v722 = vld [vmem:[%s202 + $0x3d8] sm:$0xff]
      %v723 = vld [vmem:[%s202 + $0x3e0] sm:$0xf]
      %v724 = vld [vmem:[%s202 + $0x3e4] sm:$0xff]
      %v725 = vld [vmem:[%s202 + $0x3ec] sm:$0xf]
      %v726 = vld [vmem:[%s202 + $0x3f0] sm:$0xff]
      %v727 = vld [vmem:[%s202 + $0x3f8] sm:$0xf]
      %v728 = vld [vmem:[%s202 + $0x3fc] sm:$0xff]
      %v729 = vld [vmem:[%s202 + $0x404] sm:$0xf]
      %v730 = vld [vmem:[%s202 + $0x408] sm:$0xff]
      %v731 = vld [vmem:[%s202 + $0x410] sm:$0xf]
      %v732 = vld [vmem:[%s202 + $0x414] sm:$0xff]
      %v733 = vld [vmem:[%s202 + $0x41c] sm:$0xf]
      %v734 = vld [vmem:[%s202 + $0x420] sm:$0xff]
      %v735 = vld [vmem:[%s202 + $0x428] sm:$0xf]
      %v736 = vld [vmem:[%s202 + $0x42c] sm:$0xff]
      %v737 = vld [vmem:[%s202 + $0x434] sm:$0xf]
      %v738 = vld [vmem:[%s202 + $0x438] sm:$0xff]
      %v739 = vld [vmem:[%s202 + $0x440] sm:$0xf]
      %v740 = vld [vmem:[%s202 + $0x444] sm:$0xff]
      %v741 = vld [vmem:[%s202 + $0x44c] sm:$0xf]
      %v742 = vld [vmem:[%s202 + $0x450] sm:$0xff]
      %v743 = vld [vmem:[%s202 + $0x458] sm:$0xf]
      %v744 = vld [vmem:[%s202 + $0x45c] sm:$0xff]
      %v745 = vld [vmem:[%s202 + $0x464] sm:$0xf]
      %v746 = vld [vmem:[%s202 + $0x468] sm:$0xff]
      %v747 = vld [vmem:[%s202 + $0x470] sm:$0xf]
      %v748 = vld [vmem:[%s202 + $0x474] sm:$0xff]
      %v749 = vld [vmem:[%s202 + $0x47c] sm:$0xf]
      %v750 = vld [vmem:[%s202 + $0x480] sm:$0xff]
      %v751 = vld [vmem:[%s202 + $0x488] sm:$0xf]
      %v752 = vld [vmem:[%s202 + $0x48c] sm:$0xff]
      %v753 = vld [vmem:[%s202 + $0x494] sm:$0xf]
      %v754 = vld [vmem:[%s202 + $0x498] sm:$0xff]
      %v755 = vld [vmem:[%s202 + $0x4a0] sm:$0xf]
      %v756 = vld [vmem:[%s202 + $0x4a4] sm:$0xff]
      %v757 = vld [vmem:[%s202 + $0x4ac] sm:$0xf]
      %v758 = vld [vmem:[%s202 + $0x4b0] sm:$0xff]
      %v759 = vld [vmem:[%s202 + $0x4b8] sm:$0xf]
      %v760 = vld [vmem:[%s202 + $0x4bc] sm:$0xff]
      %v761 = vld [vmem:[%s202 + $0x4c4] sm:$0xf]
      %v762 = vld [vmem:[%s202 + $0x4c8] sm:$0xff]
      %v763 = vld [vmem:[%s202 + $0x4d0] sm:$0xf]
      %v764 = vld [vmem:[%s202 + $0x4d4] sm:$0xff]
      %v765 = vld [vmem:[%s202 + $0x4dc] sm:$0xf]
      %v766 = vld [vmem:[%s202 + $0x4e0] sm:$0xff]
      %v767 = vld [vmem:[%s202 + $0x4e8] sm:$0xf]
      %v768 = vld [vmem:[%s202 + $0x4ec] sm:$0xff]
      %v769 = vld [vmem:[%s202 + $0x4f4] sm:$0xf]
      %v770 = vld [vmem:[%s202 + $0x4f8] sm:$0xff]
      %v771 = vld [vmem:[%s202 + $0x500] sm:$0xf]
      %v772 = vld [vmem:[%s202 + $0x504] sm:$0xff]
      %v773 = vld [vmem:[%s202 + $0x50c] sm:$0xf]
      %v774 = vld [vmem:[%s202 + $0x510] sm:$0xff]
      %v775 = vld [vmem:[%s202 + $0x518] sm:$0xf]
      %v776 = vld [vmem:[%s202 + $0x51c] sm:$0xff]
      %v777 = vld [vmem:[%s202 + $0x524] sm:$0xf]
      %v778 = vld [vmem:[%s202 + $0x528] sm:$0xff]
      %v779 = vld [vmem:[%s202 + $0x530] sm:$0xf]
      %v780 = vld [vmem:[%s202 + $0x534] sm:$0xff]
      %v781 = vld [vmem:[%s202 + $0x53c] sm:$0xf]
      %v782 = vld [vmem:[%s202 + $0x540] sm:$0xff]
      %v783 = vld [vmem:[%s202 + $0x548] sm:$0xf]
      %v784 = vld [vmem:[%s202 + $0x54c] sm:$0xff]
      %v785 = vld [vmem:[%s202 + $0x554] sm:$0xf]
      %v786 = vld [vmem:[%s202 + $0x558] sm:$0xff]
      %v787 = vld [vmem:[%s202 + $0x560] sm:$0xf]
      %v788 = vld [vmem:[%s202 + $0x564] sm:$0xff]
      %v789 = vld [vmem:[%s202 + $0x56c] sm:$0xf]
      %v790 = vld [vmem:[%s202 + $0x570] sm:$0xff]
      %v791 = vld [vmem:[%s202 + $0x578] sm:$0xf]
      %v792 = vld [vmem:[%s202 + $0x57c] sm:$0xff]
      %v793 = vld [vmem:[%s202 + $0x584] sm:$0xf]
      %v794 = vld [vmem:[%s202 + $0x588] sm:$0xff]
      %v795 = vld [vmem:[%s202 + $0x590] sm:$0xf]
      %v796 = vld [vmem:[%s202 + $0x594] sm:$0xff]
      %v797 = vld [vmem:[%s202 + $0x59c] sm:$0xf]
      %v798 = vld [vmem:[%s202 + $0x5a0] sm:$0xff]
      %v799 = vld [vmem:[%s202 + $0x5a8] sm:$0xf]
      %v800 = vld [vmem:[%s202 + $0x5ac] sm:$0xff]
      %v801 = vld [vmem:[%s202 + $0x5b4] sm:$0xf]
      %v802 = vld [vmem:[%s202 + $0x5b8] sm:$0xff]
      %v803 = vld [vmem:[%s202 + $0x5c0] sm:$0xf]
      %v804 = vld [vmem:[%s202 + $0x5c4] sm:$0xff]
      %v805 = vld [vmem:[%s202 + $0x5cc] sm:$0xf]
      %v806 = vld [vmem:[%s202 + $0x5d0] sm:$0xff]
      %v807 = vld [vmem:[%s202 + $0x5d8] sm:$0xf]
      %v808 = vld [vmem:[%s202 + $0x5dc] sm:$0xff]
      %v809 = vld [vmem:[%s202 + $0x5e4] sm:$0xf]
      %v810 = vld [vmem:[%s202 + $0x5e8] sm:$0xff]
      %v811 = vld [vmem:[%s202 + $0x5f0] sm:$0xf]
      %v812 = vld [vmem:[%s202 + $0x5f4] sm:$0xff]
      %v813 = vld [vmem:[%s202 + $0x5fc] sm:$0xf]
      %v814 = vld [vmem:[%s202 + $0x600] sm:$0xff]
      %v815 = vld [vmem:[%s202 + $0x608] sm:$0xf]
      %v816 = vld [vmem:[%s202 + $0x60c] sm:$0xff]
      %v817 = vld [vmem:[%s202 + $0x614] sm:$0xf]
      %v818 = vld [vmem:[%s202 + $0x618] sm:$0xff]
      %v819 = vld [vmem:[%s202 + $0x620] sm:$0xf]
      %v820 = vld [vmem:[%s202 + $0x624] sm:$0xff]
      %v821 = vld [vmem:[%s202 + $0x62c] sm:$0xf]
      %v822 = vld [vmem:[%s202 + $0x630] sm:$0xff]
      %v823 = vld [vmem:[%s202 + $0x638] sm:$0xf]
      %v824 = vld [vmem:[%s202 + $0x63c] sm:$0xff]
      %v825 = vld [vmem:[%s202 + $0x644] sm:$0xf]
      %v826 = vld [vmem:[%s202 + $0x648] sm:$0xff]
      %v827 = vld [vmem:[%s202 + $0x650] sm:$0xf]
      %v828 = vld [vmem:[%s202 + $0x654] sm:$0xff]
      %v829 = vld [vmem:[%s202 + $0x65c] sm:$0xf]
      %v830 = vld [vmem:[%s202 + $0x660] sm:$0xff]
      %v831 = vld [vmem:[%s202 + $0x668] sm:$0xf]
      %v832 = vld [vmem:[%s202 + $0x66c] sm:$0xff]
      %v833 = vld [vmem:[%s202 + $0x674] sm:$0xf]
      %v834 = vld [vmem:[%s202 + $0x678] sm:$0xff]
      %v835 = vld [vmem:[%s202 + $0x680] sm:$0xf]
      %v836 = vld [vmem:[%s202 + $0x684] sm:$0xff]
      %v837 = vld [vmem:[%s202 + $0x68c] sm:$0xf]
      %v838 = vld [vmem:[%s202 + $0x690] sm:$0xff]
      %v839 = vld [vmem:[%s202 + $0x698] sm:$0xf]
      %v840 = vld [vmem:[%s202 + $0x69c] sm:$0xff]
      %v841 = vld [vmem:[%s202 + $0x6a4] sm:$0xf]
      %v842 = vld [vmem:[%s202 + $0x6a8] sm:$0xff]
      %v843 = vld [vmem:[%s202 + $0x6b0] sm:$0xf]
      %v844 = vld [vmem:[%s202 + $0x6b4] sm:$0xff]
      %v845 = vld [vmem:[%s202 + $0x6bc] sm:$0xf]
      %v846 = vld [vmem:[%s202 + $0x6c0] sm:$0xff]
      %v847 = vld [vmem:[%s202 + $0x6c8] sm:$0xf]
      %v848 = vld [vmem:[%s202 + $0x6cc] sm:$0xff]
      %v849 = vld [vmem:[%s202 + $0x6d4] sm:$0xf]
      %v850 = vld [vmem:[%s202 + $0x6d8] sm:$0xff]
      %v851 = vld [vmem:[%s202 + $0x6e0] sm:$0xf]
      %v852 = vld [vmem:[%s202 + $0x6e4] sm:$0xff]
      %v853 = vld [vmem:[%s202 + $0x6ec] sm:$0xf]
      %v854 = vld [vmem:[%s202 + $0x6f0] sm:$0xff]
      %v855 = vld [vmem:[%s202 + $0x6f8] sm:$0xf]
      %v856 = vld [vmem:[%s202 + $0x6fc] sm:$0xff]
      %v857 = vld [vmem:[%s202 + $0x704] sm:$0xf]
      %v858 = vld [vmem:[%s202 + $0x708] sm:$0xff]
      %v859 = vld [vmem:[%s202 + $0x710] sm:$0xf]
      %v860 = vld [vmem:[%s202 + $0x714] sm:$0xff]
      %v861 = vld [vmem:[%s202 + $0x71c] sm:$0xf]
      %v862 = vld [vmem:[%s202 + $0x720] sm:$0xff]
      %v863 = vld [vmem:[%s202 + $0x728] sm:$0xf]
      %v864 = vld [vmem:[%s202 + $0x72c] sm:$0xff]
      %v865 = vld [vmem:[%s202 + $0x734] sm:$0xf]
      %v866 = vld [vmem:[%s202 + $0x738] sm:$0xff]
      %v867 = vld [vmem:[%s202 + $0x740] sm:$0xf]
      %v868 = vld [vmem:[%s202 + $0x744] sm:$0xff]
      %v869 = vld [vmem:[%s202 + $0x74c] sm:$0xf]
      %v870 = vld [vmem:[%s202 + $0x750] sm:$0xff]
      %v871 = vld [vmem:[%s202 + $0x758] sm:$0xf]
      %v872 = vld [vmem:[%s202 + $0x75c] sm:$0xff]
      %v873 = vld [vmem:[%s202 + $0x764] sm:$0xf]
      %v874 = vld [vmem:[%s202 + $0x768] sm:$0xff]
      %v875 = vld [vmem:[%s202 + $0x770] sm:$0xf]
      %v876 = vld [vmem:[%s202 + $0x774] sm:$0xff]
      %v877 = vld [vmem:[%s202 + $0x77c] sm:$0xf]
      %v878 = vld [vmem:[%s202 + $0x780] sm:$0xff]
      %v879 = vld [vmem:[%s202 + $0x788] sm:$0xf]
      %v880 = vld [vmem:[%s202 + $0x78c] sm:$0xff]
      %v881 = vld [vmem:[%s202 + $0x794] sm:$0xf]
      %v882 = vld [vmem:[%s202 + $0x798] sm:$0xff]
      %v883 = vld [vmem:[%s202 + $0x7a0] sm:$0xf]
      %v884 = vld [vmem:[%s202 + $0x7a4] sm:$0xff]
      %v885 = vld [vmem:[%s202 + $0x7ac] sm:$0xf]
      %v886 = vld [vmem:[%s202 + $0x7b0] sm:$0xff]
      %v887 = vld [vmem:[%s202 + $0x7b8] sm:$0xf]
      %v888 = vld [vmem:[%s202 + $0x7bc] sm:$0xff]
      %v889 = vld [vmem:[%s202 + $0x7c4] sm:$0xf]
      %v890 = vld [vmem:[%s202 + $0x7c8] sm:$0xff]
      %v891 = vld [vmem:[%s202 + $0x7d0] sm:$0xf]
      %v892 = vld [vmem:[%s202 + $0x7d4] sm:$0xff]
      %v893 = vld [vmem:[%s202 + $0x7dc] sm:$0xf]
      %v894 = vld [vmem:[%s202 + $0x7e0] sm:$0xff]
      %v895 = vld [vmem:[%s202 + $0x7e8] sm:$0xf]
      %v896 = vld [vmem:[%s202 + $0x7ec] sm:$0xff]
      %v897 = vld [vmem:[%s202 + $0x7f4] sm:$0xf]
      %v898 = vld [vmem:[%s202 + $0x7f8] sm:$0xff]
      %v899 = vld [vmem:[%s202 + $0x800] sm:$0xf]
      %v900 = vld [vmem:[%s202 + $0x804] sm:$0xff]
      %v901 = vld [vmem:[%s202 + $0x80c] sm:$0xf]
      %v902 = vld [vmem:[%s202 + $0x810] sm:$0xff]
      %v903 = vld [vmem:[%s202 + $0x818] sm:$0xf]
      %v904 = vld [vmem:[%s202 + $0x81c] sm:$0xff]
      %v905 = vld [vmem:[%s202 + $0x824] sm:$0xf]
      %v906 = vld [vmem:[%s202 + $0x828] sm:$0xff]
      %v907 = vld [vmem:[%s202 + $0x830] sm:$0xf]
      %v908 = vld [vmem:[%s202 + $0x834] sm:$0xff]
      %v909 = vld [vmem:[%s202 + $0x83c] sm:$0xf]
      %v910 = vld [vmem:[%s202 + $0x840] sm:$0xff]
      %v911 = vld [vmem:[%s202 + $0x848] sm:$0xf]
      %v912 = vld [vmem:[%s202 + $0x84c] sm:$0xff]
      %v913 = vld [vmem:[%s202 + $0x854] sm:$0xf]
      %v914 = vld [vmem:[%s202 + $0x858] sm:$0xff]
      %v915 = vld [vmem:[%s202 + $0x860] sm:$0xf]
      %v916 = vld [vmem:[%s202 + $0x864] sm:$0xff]
      %v917 = vld [vmem:[%s202 + $0x86c] sm:$0xf]
      %v918 = vld [vmem:[%s202 + $0x870] sm:$0xff]
      %v919 = vld [vmem:[%s202 + $0x878] sm:$0xf]
      %v920 = vld [vmem:[%s202 + $0x87c] sm:$0xff]
      %v921 = vld [vmem:[%s202 + $0x884] sm:$0xf]
      %v922 = vld [vmem:[%s202 + $0x888] sm:$0xff]
      %v923 = vld [vmem:[%s202 + $0x890] sm:$0xf]
      %v924 = vld [vmem:[%s202 + $0x894] sm:$0xff]
      %v925 = vld [vmem:[%s202 + $0x89c] sm:$0xf]
      %v926 = vld [vmem:[%s202 + $0x8a0] sm:$0xff]
      %v927 = vld [vmem:[%s202 + $0x8a8] sm:$0xf]
      %v928 = vld [vmem:[%s202 + $0x8ac] sm:$0xff]
      %v929 = vld [vmem:[%s202 + $0x8b4] sm:$0xf]
      %v930 = vld [vmem:[%s202 + $0x8b8] sm:$0xff]
      %v931 = vld [vmem:[%s202 + $0x8c0] sm:$0xf]
      %v932 = vld [vmem:[%s202 + $0x8c4] sm:$0xff]
      %v933 = vld [vmem:[%s202 + $0x8cc] sm:$0xf]
      %v934 = vld [vmem:[%s202 + $0x8d0] sm:$0xff]
      %v935 = vld [vmem:[%s202 + $0x8d8] sm:$0xf]
      %v936 = vld [vmem:[%s202 + $0x8dc] sm:$0xff]
      %v937 = vld [vmem:[%s202 + $0x8e4] sm:$0xf]
      %v938 = vld [vmem:[%s202 + $0x8e8] sm:$0xff]
      %v939 = vld [vmem:[%s202 + $0x8f0] sm:$0xf]
      %v940 = vld [vmem:[%s202 + $0x8f4] sm:$0xff]
      %v941 = vld [vmem:[%s202 + $0x8fc] sm:$0xf]
      %v942 = vld [vmem:[%s202 + $0x900] sm:$0xff]
      %v943 = vld [vmem:[%s202 + $0x908] sm:$0xf]
      %v944 = vld [vmem:[%s202 + $0x90c] sm:$0xff]
      %v945 = vld [vmem:[%s202 + $0x914] sm:$0xf]
      %v946 = vld [vmem:[%s202 + $0x918] sm:$0xff]
      %v947 = vld [vmem:[%s202 + $0x920] sm:$0xf]
      %v948 = vld [vmem:[%s202 + $0x924] sm:$0xff]
      %v949 = vld [vmem:[%s202 + $0x92c] sm:$0xf]
      %v950 = vld [vmem:[%s202 + $0x930] sm:$0xff]
      %v951 = vld [vmem:[%s202 + $0x938] sm:$0xf]
      %v952 = vld [vmem:[%s202 + $0x93c] sm:$0xff]
      %v953 = vld [vmem:[%s202 + $0x944] sm:$0xf]
      %v954 = vld [vmem:[%s202 + $0x948] sm:$0xff]
      %v955 = vld [vmem:[%s202 + $0x950] sm:$0xf]
      %v956 = vld [vmem:[%s202 + $0x954] sm:$0xff]
      %v957 = vld [vmem:[%s202 + $0x95c] sm:$0xf]
      %v958 = vld [vmem:[%s202 + $0x960] sm:$0xff]
      %v959 = vld [vmem:[%s202 + $0x968] sm:$0xf]
      %v960 = vld [vmem:[%s202 + $0x96c] sm:$0xff]
      %v961 = vld [vmem:[%s202 + $0x974] sm:$0xf]
      %v962 = vld [vmem:[%s202 + $0x978] sm:$0xff]
      %v963 = vld [vmem:[%s202 + $0x980] sm:$0xf]
      %v964 = vld [vmem:[%s202 + $0x984] sm:$0xff]
      %v965 = vld [vmem:[%s202 + $0x98c] sm:$0xf]
      %v966 = vld [vmem:[%s202 + $0x990] sm:$0xff]
      %v967 = vld [vmem:[%s202 + $0x998] sm:$0xf]
      %v968 = vld [vmem:[%s202 + $0x99c] sm:$0xff]
      %v969 = vld [vmem:[%s202 + $0x9a4] sm:$0xf]
      %v970 = vld [vmem:[%s202 + $0x9a8] sm:$0xff]
      %v971 = vld [vmem:[%s202 + $0x9b0] sm:$0xf]
      %v972 = vld [vmem:[%s202 + $0x9b4] sm:$0xff]
      %v973 = vld [vmem:[%s202 + $0x9bc] sm:$0xf]
      %v974 = vld [vmem:[%s202 + $0x9c0] sm:$0xff]
      %v975 = vld [vmem:[%s202 + $0x9c8] sm:$0xf]
      %v976 = vld [vmem:[%s202 + $0x9cc] sm:$0xff]
      %v977 = vld [vmem:[%s202 + $0x9d4] sm:$0xf]
      %v978 = vld [vmem:[%s202 + $0x9d8] sm:$0xff]
      %v979 = vld [vmem:[%s202 + $0x9e0] sm:$0xf]
      %v980 = vld [vmem:[%s202 + $0x9e4] sm:$0xff]
      %v981 = vld [vmem:[%s202 + $0x9ec] sm:$0xf]
      %v982 = vld [vmem:[%s202 + $0x9f0] sm:$0xff]
      %v983 = vld [vmem:[%s202 + $0x9f8] sm:$0xf]
      %v984 = vld [vmem:[%s202 + $0x9fc] sm:$0xff]
      %v985 = vld [vmem:[%s202 + $0xa04] sm:$0xf]
      %v986 = vld [vmem:[%s202 + $0xa08] sm:$0xff]
      %v987 = vld [vmem:[%s202 + $0xa10] sm:$0xf]
      %v988 = vld [vmem:[%s202 + $0xa14] sm:$0xff]
      %v989 = vld [vmem:[%s202 + $0xa1c] sm:$0xf]
      %v990 = vld [vmem:[%s202 + $0xa20] sm:$0xff]
      %v991 = vld [vmem:[%s202 + $0xa28] sm:$0xf]
      %v992 = vld [vmem:[%s202 + $0xa2c] sm:$0xff]
      %v993 = vld [vmem:[%s202 + $0xa34] sm:$0xf]
      %v994 = vld [vmem:[%s202 + $0xa38] sm:$0xff]
      %v995 = vld [vmem:[%s202 + $0xa40] sm:$0xf]
      %v996 = vld [vmem:[%s202 + $0xa44] sm:$0xff]
      %v997 = vld [vmem:[%s202 + $0xa4c] sm:$0xf]
      %v998 = vld [vmem:[%s202 + $0xa50] sm:$0xff]
      %v999 = vld [vmem:[%s202 + $0xa58] sm:$0xf]
      %v1000 = vld [vmem:[%s202 + $0xa5c] sm:$0xff]
      %v1001 = vld [vmem:[%s202 + $0xa64] sm:$0xf]
      %v1002 = vld [vmem:[%s202 + $0xa68] sm:$0xff]
      %v1003 = vld [vmem:[%s202 + $0xa70] sm:$0xf]
      %v1004 = vld [vmem:[%s202 + $0xa74] sm:$0xff]
      %v1005 = vld [vmem:[%s202 + $0xa7c] sm:$0xf]
      %v1006 = vld [vmem:[%s202 + $0xa80] sm:$0xff]
      %v1007 = vld [vmem:[%s202 + $0xa88] sm:$0xf]
      %v1008 = vld [vmem:[%s202 + $0xa8c] sm:$0xff]
      %v1009 = vld [vmem:[%s202 + $0xa94] sm:$0xf]
      %v1010 = vld [vmem:[%s202 + $0xa98] sm:$0xff]
      %v1011 = vld [vmem:[%s202 + $0xaa0] sm:$0xf]
      %v1012 = vld [vmem:[%s202 + $0xaa4] sm:$0xff]
      %v1013 = vld [vmem:[%s202 + $0xaac] sm:$0xf]
      %v1014 = vld [vmem:[%s202 + $0xab0] sm:$0xff]
      %v1015 = vld [vmem:[%s202 + $0xab8] sm:$0xf]
      %v1016 = vld [vmem:[%s202 + $0xabc] sm:$0xff]
      %v1017 = vld [vmem:[%s202 + $0xac4] sm:$0xf]
      %v1018 = vld [vmem:[%s202 + $0xac8] sm:$0xff]
      %v1019 = vld [vmem:[%s202 + $0xad0] sm:$0xf]
      %v1020 = vld [vmem:[%s202 + $0xad4] sm:$0xff]
      %v1021 = vld [vmem:[%s202 + $0xadc] sm:$0xf]
      %v1022 = vld [vmem:[%s202 + $0xae0] sm:$0xff]
      %v1023 = vld [vmem:[%s202 + $0xae8] sm:$0xf]
      %v1024 = vld [vmem:[%s202 + $0xaec] sm:$0xff]
      %v1025 = vld [vmem:[%s202 + $0xaf4] sm:$0xf]
      %v1026 = vld [vmem:[%s202 + $0xaf8] sm:$0xff]
      %v1027 = vld [vmem:[%s202 + $0xb00] sm:$0xf]
      %v1028 = vld [vmem:[%s202 + $0xb04] sm:$0xff]
      %v1029 = vld [vmem:[%s202 + $0xb0c] sm:$0xf]
      %v1030 = vld [vmem:[%s202 + $0xb10] sm:$0xff]
      %v1031 = vld [vmem:[%s202 + $0xb18] sm:$0xf]
      %v1032 = vld [vmem:[%s202 + $0xb1c] sm:$0xff]
      %v1033 = vld [vmem:[%s202 + $0xb24] sm:$0xf]
      %v1034 = vld [vmem:[%s202 + $0xb28] sm:$0xff]
      %v1035 = vld [vmem:[%s202 + $0xb30] sm:$0xf]
      %v1036 = vld [vmem:[%s202 + $0xb34] sm:$0xff]
      %v1037 = vld [vmem:[%s202 + $0xb3c] sm:$0xf]
      %v1038 = vld [vmem:[%s202 + $0xb40] sm:$0xff]
      %v1039 = vld [vmem:[%s202 + $0xb48] sm:$0xf]
      %v1040 = vld [vmem:[%s202 + $0xb4c] sm:$0xff]
      %v1041 = vld [vmem:[%s202 + $0xb54] sm:$0xf]
      %v1042 = vld [vmem:[%s202 + $0xb58] sm:$0xff]
      %v1043 = vld [vmem:[%s202 + $0xb60] sm:$0xf]
      %v1044 = vld [vmem:[%s202 + $0xb64] sm:$0xff]
      %v1045 = vld [vmem:[%s202 + $0xb6c] sm:$0xf]
      %v1046 = vld [vmem:[%s202 + $0xb70] sm:$0xff]
      %v1047 = vld [vmem:[%s202 + $0xb78] sm:$0xf]
      %v1048 = vld [vmem:[%s202 + $0xb7c] sm:$0xff]
      %v1049 = vld [vmem:[%s202 + $0xb84] sm:$0xf]
      %v1050 = vld [vmem:[%s202 + $0xb88] sm:$0xff]
      %v1051 = vld [vmem:[%s202 + $0xb90] sm:$0xf]
      %v1052 = vld [vmem:[%s202 + $0xb94] sm:$0xff]
      %v1053 = vld [vmem:[%s202 + $0xb9c] sm:$0xf]
      %v1054 = vld [vmem:[%s202 + $0xba0] sm:$0xff]
      %v1055 = vld [vmem:[%s202 + $0xba8] sm:$0xf]
      %v1056 = vld [vmem:[%s202 + $0xbac] sm:$0xff]
      %v1057 = vld [vmem:[%s202 + $0xbb4] sm:$0xf]
      %v1058 = vld [vmem:[%s202 + $0xbb8] sm:$0xff]
      %v1059 = vld [vmem:[%s202 + $0xbc0] sm:$0xf]
      %v1060 = vld [vmem:[%s202 + $0xbc4] sm:$0xff]
      %v1061 = vld [vmem:[%s202 + $0xbcc] sm:$0xf]
      %v1062 = vld [vmem:[%s202 + $0xbd0] sm:$0xff]
      %v1063 = vld [vmem:[%s202 + $0xbd8] sm:$0xf]
      %v1064 = vld [vmem:[%s202 + $0xbdc] sm:$0xff]
      %v1065 = vld [vmem:[%s202 + $0xbe4] sm:$0xf]
      %v1066 = vld [vmem:[%s202 + $0xbe8] sm:$0xff]
      %v1067 = vld [vmem:[%s202 + $0xbf0] sm:$0xf]
      %v1068 = vld [vmem:[%s202 + $0xbf4] sm:$0xff]
      %v1069 = vld [vmem:[%s202 + $0xbfc] sm:$0xf]
      %v1070 = vld [vmem:[%s202 + $0xc00] sm:$0xff]
      %v1071 = vld [vmem:[%s202 + $0xc08] sm:$0xf]
      %v1072 = vld [vmem:[%s202 + $0xc0c] sm:$0xff]
      %v1073 = vld [vmem:[%s202 + $0xc14] sm:$0xf]
      %v1074 = vld [vmem:[%s202 + $0xc18] sm:$0xff]
      %v1075 = vld [vmem:[%s202 + $0xc20] sm:$0xf]
      %v1076 = vld [vmem:[%s202 + $0xc24] sm:$0xff]
      %v1077 = vld [vmem:[%s202 + $0xc2c] sm:$0xf]
      %v1078 = vld [vmem:[%s202 + $0xc30] sm:$0xff]
      %v1079 = vld [vmem:[%s202 + $0xc38] sm:$0xf]
      %v1080 = vld [vmem:[%s202 + $0xc3c] sm:$0xff]
      %v1081 = vld [vmem:[%s202 + $0xc44] sm:$0xf]
      %v1082 = vld [vmem:[%s202 + $0xc48] sm:$0xff]
      %v1083 = vld [vmem:[%s202 + $0xc50] sm:$0xf]
      %v1084 = vld [vmem:[%s202 + $0xc54] sm:$0xff]
      %v1085 = vld [vmem:[%s202 + $0xc5c] sm:$0xf]
      %v1086 = vld [vmem:[%s202 + $0xc60] sm:$0xff]
      %v1087 = vld [vmem:[%s202 + $0xc68] sm:$0xf]
      %v1088 = vld [vmem:[%s202 + $0xc6c] sm:$0xff]
      %v1089 = vld [vmem:[%s202 + $0xc74] sm:$0xf]
      %v1090 = vld [vmem:[%s202 + $0xc78] sm:$0xff]
      %v1091 = vld [vmem:[%s202 + $0xc80] sm:$0xf]
      %v1092 = vld [vmem:[%s202 + $0xc84] sm:$0xff]
      %v1093 = vld [vmem:[%s202 + $0xc8c] sm:$0xf]
      %v1094 = vld [vmem:[%s202 + $0xc90] sm:$0xff]
      %v1095 = vld [vmem:[%s202 + $0xc98] sm:$0xf]
      %v1096 = vld [vmem:[%s202 + $0xc9c] sm:$0xff]
      %v1097 = vld [vmem:[%s202 + $0xca4] sm:$0xf]
      %v1098 = vld [vmem:[%s202 + $0xca8] sm:$0xff]
      %v1099 = vld [vmem:[%s202 + $0xcb0] sm:$0xf]
      %v1100 = vld [vmem:[%s202 + $0xcb4] sm:$0xff]
      %v1101 = vld [vmem:[%s202 + $0xcbc] sm:$0xf]
      %v1102 = vld [vmem:[%s202 + $0xcc0] sm:$0xff]
      %v1103 = vld [vmem:[%s202 + $0xcc8] sm:$0xf]
      %v1104 = vld [vmem:[%s202 + $0xccc] sm:$0xff]
      %v1105 = vld [vmem:[%s202 + $0xcd4] sm:$0xf]
      %v1106 = vld [vmem:[%s202 + $0xcd8] sm:$0xff]
      %v1107 = vld [vmem:[%s202 + $0xce0] sm:$0xf]
      %v1108 = vld [vmem:[%s202 + $0xce4] sm:$0xff]
      %v1109 = vld [vmem:[%s202 + $0xcec] sm:$0xf]
      %v1110 = vld [vmem:[%s202 + $0xcf0] sm:$0xff]
      %v1111 = vld [vmem:[%s202 + $0xcf8] sm:$0xf]
      %v1112 = vld [vmem:[%s202 + $0xcfc] sm:$0xff]
      %v1113 = vld [vmem:[%s202 + $0xd04] sm:$0xf]
      %v1114 = vld [vmem:[%s202 + $0xd08] sm:$0xff]
      %v1115 = vld [vmem:[%s202 + $0xd10] sm:$0xf]
      %v1116 = vld [vmem:[%s202 + $0xd14] sm:$0xff]
      %v1117 = vld [vmem:[%s202 + $0xd1c] sm:$0xf]
      %v1118 = vld [vmem:[%s202 + $0xd20] sm:$0xff]
      %v1119 = vld [vmem:[%s202 + $0xd28] sm:$0xf]
      %v1120 = vld [vmem:[%s202 + $0xd2c] sm:$0xff]
      %v1121 = vld [vmem:[%s202 + $0xd34] sm:$0xf]
      %v1122 = vld [vmem:[%s202 + $0xd38] sm:$0xff]
      %v1123 = vld [vmem:[%s202 + $0xd40] sm:$0xf]
      %v1124 = vld [vmem:[%s202 + $0xd44] sm:$0xff]
      %v1125 = vld [vmem:[%s202 + $0xd4c] sm:$0xf]
      %v1126 = vld [vmem:[%s202 + $0xd50] sm:$0xff]
      %v1127 = vld [vmem:[%s202 + $0xd58] sm:$0xf]
      %v1128 = vld [vmem:[%s202 + $0xd5c] sm:$0xff]
      %v1129 = vld [vmem:[%s202 + $0xd64] sm:$0xf]
      %v1130 = vld [vmem:[%s202 + $0xd68] sm:$0xff]
      %v1131 = vld [vmem:[%s202 + $0xd70] sm:$0xf]
      %v1132 = vld [vmem:[%s202 + $0xd74] sm:$0xff]
      %v1133 = vld [vmem:[%s202 + $0xd7c] sm:$0xf]
      %v1134 = vld [vmem:[%s202 + $0xd80] sm:$0xff]
      %v1135 = vld [vmem:[%s202 + $0xd88] sm:$0xf]
      %v1136 = vld [vmem:[%s202 + $0xd8c] sm:$0xff]
      %v1137 = vld [vmem:[%s202 + $0xd94] sm:$0xf]
      %v1138 = vld [vmem:[%s202 + $0xd98] sm:$0xff]
      %v1139 = vld [vmem:[%s202 + $0xda0] sm:$0xf]
      %v1140 = vld [vmem:[%s202 + $0xda4] sm:$0xff]
      %v1141 = vld [vmem:[%s202 + $0xdac] sm:$0xf]
      %v1142 = vld [vmem:[%s202 + $0xdb0] sm:$0xff]
      %v1143 = vld [vmem:[%s202 + $0xdb8] sm:$0xf]
      %v1144 = vld [vmem:[%s202 + $0xdbc] sm:$0xff]
      %v1145 = vld [vmem:[%s202 + $0xdc4] sm:$0xf]
      %v1146 = vld [vmem:[%s202 + $0xdc8] sm:$0xff]
      %v1147 = vld [vmem:[%s202 + $0xdd0] sm:$0xf]
      %v1148 = vld [vmem:[%s202 + $0xdd4] sm:$0xff]
      %v1149 = vld [vmem:[%s202 + $0xddc] sm:$0xf]
      %v1150 = vld [vmem:[%s202 + $0xde0] sm:$0xff]
      %v1151 = vld [vmem:[%s202 + $0xde8] sm:$0xf]
      %v1152 = vld [vmem:[%s202 + $0xdec] sm:$0xff]
      %v1153 = vld [vmem:[%s202 + $0xdf4] sm:$0xf]
      %v1154 = vld [vmem:[%s202 + $0xdf8] sm:$0xff]
      %v1155 = vld [vmem:[%s202 + $0xe00] sm:$0xf]
      %v1156 = vld [vmem:[%s202 + $0xe04] sm:$0xff]
      %v1157 = vld [vmem:[%s202 + $0xe0c] sm:$0xf]
      %v1158 = vld [vmem:[%s202 + $0xe10] sm:$0xff]
      %v1159 = vld [vmem:[%s202 + $0xe18] sm:$0xf]
      %v1160 = vld [vmem:[%s202 + $0xe1c] sm:$0xff]
      %v1161 = vld [vmem:[%s202 + $0xe24] sm:$0xf]
      %v1162 = vld [vmem:[%s202 + $0xe28] sm:$0xff]
      %v1163 = vld [vmem:[%s202 + $0xe30] sm:$0xf]
      %v1164 = vld [vmem:[%s202 + $0xe34] sm:$0xff]
      %v1165 = vld [vmem:[%s202 + $0xe3c] sm:$0xf]
      %v1166 = vld [vmem:[%s202 + $0xe40] sm:$0xff]
      %v1167 = vld [vmem:[%s202 + $0xe48] sm:$0xf]
      %v1168 = vld [vmem:[%s202 + $0xe4c] sm:$0xff]
      %v1169 = vld [vmem:[%s202 + $0xe54] sm:$0xf]
      %v1170 = vld [vmem:[%s202 + $0xe58] sm:$0xff]
      %v1171 = vld [vmem:[%s202 + $0xe60] sm:$0xf]
      %v1172 = vld [vmem:[%s202 + $0xe64] sm:$0xff]
      %v1173 = vld [vmem:[%s202 + $0xe6c] sm:$0xf]
      %v1174 = vld [vmem:[%s202 + $0xe70] sm:$0xff]
      %v1175 = vld [vmem:[%s202 + $0xe78] sm:$0xf]
      %v1176 = vld [vmem:[%s202 + $0xe7c] sm:$0xff]
      %v1177 = vld [vmem:[%s202 + $0xe84] sm:$0xf]
      %v1178 = vld [vmem:[%s202 + $0xe88] sm:$0xff]
      %v1179 = vld [vmem:[%s202 + $0xe90] sm:$0xf]
      %v1180 = vld [vmem:[%s202 + $0xe94] sm:$0xff]
      %v1181 = vld [vmem:[%s202 + $0xe9c] sm:$0xf]
      %v1182 = vld [vmem:[%s202 + $0xea0] sm:$0xff]
      %v1183 = vld [vmem:[%s202 + $0xea8] sm:$0xf]
      %v1184 = vld [vmem:[%s202 + $0xeac] sm:$0xff]
      %v1185 = vld [vmem:[%s202 + $0xeb4] sm:$0xf]
      %v1186 = vld [vmem:[%s202 + $0xeb8] sm:$0xff]
      %v1187 = vld [vmem:[%s202 + $0xec0] sm:$0xf]
      %v1188 = vld [vmem:[%s202 + $0xec4] sm:$0xff]
      %v1189 = vld [vmem:[%s202 + $0xecc] sm:$0xf]
      %v1190 = vld [vmem:[%s202 + $0xed0] sm:$0xff]
      %v1191 = vld [vmem:[%s202 + $0xed8] sm:$0xf]
      %v1192 = vld [vmem:[%s202 + $0xedc] sm:$0xff]
      %v1193 = vld [vmem:[%s202 + $0xee4] sm:$0xf]
      %v1194 = vld [vmem:[%s202 + $0xee8] sm:$0xff]
      %v1195 = vld [vmem:[%s202 + $0xef0] sm:$0xf]
      %v1196 = vld [vmem:[%s202 + $0xef4] sm:$0xff]
      %v1197 = vld [vmem:[%s202 + $0xefc] sm:$0xf]
      %v1198 = vld [vmem:[%s202 + $0xf00] sm:$0xff]
      %v1199 = vld [vmem:[%s202 + $0xf08] sm:$0xf]
      %v1200 = vld [vmem:[%s202 + $0xf0c] sm:$0xff]
      %v1201 = vld [vmem:[%s202 + $0xf14] sm:$0xf]
      %v1202 = vld [vmem:[%s202 + $0xf18] sm:$0xff]
      %v1203 = vld [vmem:[%s202 + $0xf20] sm:$0xf]
      %v1204 = vld [vmem:[%s202 + $0xf24] sm:$0xff]
      %v1205 = vld [vmem:[%s202 + $0xf2c] sm:$0xf]
      %v1206 = vld [vmem:[%s202 + $0xf30] sm:$0xff]
      %v1207 = vld [vmem:[%s202 + $0xf38] sm:$0xf]
      %v1208 = vld [vmem:[%s202 + $0xf3c] sm:$0xff]
      %v1209 = vld [vmem:[%s202 + $0xf44] sm:$0xf]
      %v1210 = vld [vmem:[%s202 + $0xf48] sm:$0xff]
      %v1211 = vld [vmem:[%s202 + $0xf50] sm:$0xf]
      %v1212 = vld [vmem:[%s202 + $0xf54] sm:$0xff]
      %v1213 = vld [vmem:[%s202 + $0xf5c] sm:$0xf]
      %v1214 = vld [vmem:[%s202 + $0xf60] sm:$0xff]
      %v1215 = vld [vmem:[%s202 + $0xf68] sm:$0xf]
      %v1216 = vld [vmem:[%s202 + $0xf6c] sm:$0xff]
      %v1217 = vld [vmem:[%s202 + $0xf74] sm:$0xf]
      %v1218 = vld [vmem:[%s202 + $0xf78] sm:$0xff]
      %v1219 = vld [vmem:[%s202 + $0xf80] sm:$0xf]
      %v1220 = vld [vmem:[%s202 + $0xf84] sm:$0xff]
      %v1221 = vld [vmem:[%s202 + $0xf8c] sm:$0xf]
      %v1222 = vld [vmem:[%s202 + $0xf90] sm:$0xff]
      %v1223 = vld [vmem:[%s202 + $0xf98] sm:$0xf]
      %v1224 = vld [vmem:[%s202 + $0xf9c] sm:$0xff]
      %v1225 = vld [vmem:[%s202 + $0xfa4] sm:$0xf]
      %v1226 = vld [vmem:[%s202 + $0xfa8] sm:$0xff]
      %v1227 = vld [vmem:[%s202 + $0xfb0] sm:$0xf]
      %v1228 = vld [vmem:[%s202 + $0xfb4] sm:$0xff]
      %v1229 = vld [vmem:[%s202 + $0xfbc] sm:$0xf]
      %v1230 = vld [vmem:[%s202 + $0xfc0] sm:$0xff]
      %v1231 = vld [vmem:[%s202 + $0xfc8] sm:$0xf]
      %v1232 = vld [vmem:[%s202 + $0xfcc] sm:$0xff]
      %v1233 = vld [vmem:[%s202 + $0xfd4] sm:$0xf]
      %v1234 = vld [vmem:[%s202 + $0xfd8] sm:$0xff]
      %v1235 = vld [vmem:[%s202 + $0xfe0] sm:$0xf]
      %v1236 = vld [vmem:[%s202 + $0xfe4] sm:$0xff]
      %v1237 = vld [vmem:[%s202 + $0xfec] sm:$0xf]
      %v1238 = vld [vmem:[%s202 + $0xff0] sm:$0xff]
      %v1239 = vld [vmem:[%s202 + $0xff8] sm:$0xf]
      %v1240 = vld [vmem:[%s202 + $0xffc] sm:$0xff]
      %v1241 = vld [vmem:[%s202 + $0x1004] sm:$0xf]
      %v1242 = vld [vmem:[%s202 + $0x1008] sm:$0xff]
      %v1243 = vld [vmem:[%s202 + $0x1010] sm:$0xf]
      %v1244 = vld [vmem:[%s202 + $0x1014] sm:$0xff]
      %v1245 = vld [vmem:[%s202 + $0x101c] sm:$0xf]
      %v1246 = vld [vmem:[%s202 + $0x1020] sm:$0xff]
      %v1247 = vld [vmem:[%s202 + $0x1028] sm:$0xf]
      %v1248 = vld [vmem:[%s202 + $0x102c] sm:$0xff]
      %v1249 = vld [vmem:[%s202 + $0x1034] sm:$0xf]
      %v1250 = vld [vmem:[%s202 + $0x1038] sm:$0xff]
      %v1251 = vld [vmem:[%s202 + $0x1040] sm:$0xf]
      %v1252 = vld [vmem:[%s202 + $0x1044] sm:$0xff]
      %v1253 = vld [vmem:[%s202 + $0x104c] sm:$0xf]
      %v1254 = vld [vmem:[%s202 + $0x1050] sm:$0xff]
      %v1255 = vld [vmem:[%s202 + $0x1058] sm:$0xf]
      %v1256 = vld [vmem:[%s202 + $0x105c] sm:$0xff]
      %v1257 = vld [vmem:[%s202 + $0x1064] sm:$0xf]
      %v1258 = vld [vmem:[%s202 + $0x1068] sm:$0xff]
      %v1259 = vld [vmem:[%s202 + $0x1070] sm:$0xf]
      %v1260 = vld [vmem:[%s202 + $0x1074] sm:$0xff]
      %v1261 = vld [vmem:[%s202 + $0x107c] sm:$0xf]
      %v1262 = vld [vmem:[%s202 + $0x1080] sm:$0xff]
      %v1263 = vld [vmem:[%s202 + $0x1088] sm:$0xf]
      %v1264 = vld [vmem:[%s202 + $0x108c] sm:$0xff]
      %v1265 = vld [vmem:[%s202 + $0x1094] sm:$0xf]
      %v1266 = vld [vmem:[%s202 + $0x1098] sm:$0xff]
      %v1267 = vld [vmem:[%s202 + $0x10a0] sm:$0xf]
      %v1268 = vld [vmem:[%s202 + $0x10a4] sm:$0xff]
      %v1269 = vld [vmem:[%s202 + $0x10ac] sm:$0xf]
      %v1270 = vld [vmem:[%s202 + $0x10b0] sm:$0xff]
      %v1271 = vld [vmem:[%s202 + $0x10b8] sm:$0xf]
      %v1272 = vld [vmem:[%s202 + $0x10bc] sm:$0xff]
      %v1273 = vld [vmem:[%s202 + $0x10c4] sm:$0xf]
      %v1274 = vld [vmem:[%s202 + $0x10c8] sm:$0xff]
      %v1275 = vld [vmem:[%s202 + $0x10d0] sm:$0xf]
      %v1276 = vld [vmem:[%s202 + $0x10d4] sm:$0xff]
      %v1277 = vld [vmem:[%s202 + $0x10dc] sm:$0xf]
      %v1278 = vld [vmem:[%s202 + $0x10e0] sm:$0xff]
      %v1279 = vld [vmem:[%s202 + $0x10e8] sm:$0xf]
      %v1280 = vld [vmem:[%s202 + $0x10ec] sm:$0xff]
      %v1281 = vld [vmem:[%s202 + $0x10f4] sm:$0xf]
      %v1282 = vld [vmem:[%s202 + $0x10f8] sm:$0xff]
      %v1283 = vld [vmem:[%s202 + $0x1100] sm:$0xf]
      %v1284 = vld [vmem:[%s202 + $0x1104] sm:$0xff]
      %v1285 = vld [vmem:[%s202 + $0x110c] sm:$0xf]
      %v1286 = vld [vmem:[%s202 + $0x1110] sm:$0xff]
      %v1287 = vld [vmem:[%s202 + $0x1118] sm:$0xf]
      %v1288 = vld [vmem:[%s202 + $0x111c] sm:$0xff]
      %v1289 = vld [vmem:[%s202 + $0x1124] sm:$0xf]
      %v1290 = vld [vmem:[%s202 + $0x1128] sm:$0xff]
      %v1291 = vld [vmem:[%s202 + $0x1130] sm:$0xf]
      %v1292 = vld [vmem:[%s202 + $0x1134] sm:$0xff]
      %v1293 = vld [vmem:[%s202 + $0x113c] sm:$0xf]
      %v1294 = vld [vmem:[%s202 + $0x1140] sm:$0xff]
      %v1295 = vld [vmem:[%s202 + $0x1148] sm:$0xf]
      %v1296 = vld [vmem:[%s202 + $0x114c] sm:$0xff]
      %v1297 = vld [vmem:[%s202 + $0x1154] sm:$0xf]
      %v1298 = vld [vmem:[%s202 + $0x1158] sm:$0xff]
      %v1299 = vld [vmem:[%s202 + $0x1160] sm:$0xf]
      %v1300 = vld [vmem:[%s202 + $0x1164] sm:$0xff]
      %v1301 = vld [vmem:[%s202 + $0x116c] sm:$0xf]
      %v1302 = vld [vmem:[%s202 + $0x1170] sm:$0xff]
      %v1303 = vld [vmem:[%s202 + $0x1178] sm:$0xf]
      %v1304 = vld [vmem:[%s202 + $0x117c] sm:$0xff]
      %v1305 = vld [vmem:[%s202 + $0x1184] sm:$0xf]
      %v1306 = vld [vmem:[%s202 + $0x1188] sm:$0xff]
      %v1307 = vld [vmem:[%s202 + $0x1190] sm:$0xf]
      %v1308 = vld [vmem:[%s202 + $0x1194] sm:$0xff]
      %v1309 = vld [vmem:[%s202 + $0x119c] sm:$0xf]
      %v1310 = vld [vmem:[%s202 + $0x11a0] sm:$0xff]
      %v1311 = vld [vmem:[%s202 + $0x11a8] sm:$0xf]
      %v1312 = vld [vmem:[%s202 + $0x11ac] sm:$0xff]
      %v1313 = vld [vmem:[%s202 + $0x11b4] sm:$0xf]
      %v1314 = vld [vmem:[%s202 + $0x11b8] sm:$0xff]
      %v1315 = vld [vmem:[%s202 + $0x11c0] sm:$0xf]
      %v1316 = vld [vmem:[%s202 + $0x11c4] sm:$0xff]
      %v1317 = vld [vmem:[%s202 + $0x11cc] sm:$0xf]
      %v1318 = vld [vmem:[%s202 + $0x11d0] sm:$0xff]
      %v1319 = vld [vmem:[%s202 + $0x11d8] sm:$0xf]
      %v1320 = vld [vmem:[%s202 + $0x11dc] sm:$0xff]
      %v1321 = vld [vmem:[%s202 + $0x11e4] sm:$0xf]
      %v1322 = vld [vmem:[%s202 + $0x11e8] sm:$0xff]
      %v1323 = vld [vmem:[%s202 + $0x11f0] sm:$0xf]
      %v1324 = vld [vmem:[%s202 + $0x11f4] sm:$0xff]
      %v1325 = vld [vmem:[%s202 + $0x11fc] sm:$0xf]
      %v1326 = vld [vmem:[%s202 + $0x1200] sm:$0xff]
      %v1327 = vld [vmem:[%s202 + $0x1208] sm:$0xf]
      %v1328 = vld [vmem:[%s202 + $0x120c] sm:$0xff]
      %v1329 = vld [vmem:[%s202 + $0x1214] sm:$0xf]
      %v1330 = vld [vmem:[%s202 + $0x1218] sm:$0xff]
      %v1331 = vld [vmem:[%s202 + $0x1220] sm:$0xf]
      %v1332 = vld [vmem:[%s202 + $0x1224] sm:$0xff]
      %v1333 = vld [vmem:[%s202 + $0x122c] sm:$0xf]
      %v1334 = vld [vmem:[%s202 + $0x1230] sm:$0xff]
      %v1335 = vld [vmem:[%s202 + $0x1238] sm:$0xf]
      %v1336 = vld [vmem:[%s202 + $0x123c] sm:$0xff]
      %v1337 = vld [vmem:[%s202 + $0x1244] sm:$0xf]
      %v1338 = vld [vmem:[%s202 + $0x1248] sm:$0xff]
      %v1339 = vld [vmem:[%s202 + $0x1250] sm:$0xf]
      %v1340 = vld [vmem:[%s202 + $0x1254] sm:$0xff]
      %v1341 = vld [vmem:[%s202 + $0x125c] sm:$0xf]
      %v1342 = vld [vmem:[%s202 + $0x1260] sm:$0xff]
      %v1343 = vld [vmem:[%s202 + $0x1268] sm:$0xf]
      %v1344 = vld [vmem:[%s202 + $0x126c] sm:$0xff]
      %v1345 = vld [vmem:[%s202 + $0x1274] sm:$0xf]
      %v1346 = vld [vmem:[%s202 + $0x1278] sm:$0xff]
      %v1347 = vld [vmem:[%s202 + $0x1280] sm:$0xf]
      %v1348 = vld [vmem:[%s202 + $0x1284] sm:$0xff]
      %v1349 = vld [vmem:[%s202 + $0x128c] sm:$0xf]
      %v1350 = vld [vmem:[%s202 + $0x1290] sm:$0xff]
      %v1351 = vld [vmem:[%s202 + $0x1298] sm:$0xf]
      %v1352 = vld [vmem:[%s202 + $0x129c] sm:$0xff]
      %v1353 = vld [vmem:[%s202 + $0x12a4] sm:$0xf]
      %v1354 = vld [vmem:[%s202 + $0x12a8] sm:$0xff]
      %v1355 = vld [vmem:[%s202 + $0x12b0] sm:$0xf]
      %v1356 = vld [vmem:[%s202 + $0x12b4] sm:$0xff]
      %v1357 = vld [vmem:[%s202 + $0x12bc] sm:$0xf]
      %v1358 = vld [vmem:[%s202 + $0x12c0] sm:$0xff]
      %v1359 = vld [vmem:[%s202 + $0x12c8] sm:$0xf]
      %v1360 = vld [vmem:[%s202 + $0x12cc] sm:$0xff]
      %v1361 = vld [vmem:[%s202 + $0x12d4] sm:$0xf]
      %v1362 = vld [vmem:[%s202 + $0x12d8] sm:$0xff]
      %v1363 = vld [vmem:[%s202 + $0x12e0] sm:$0xf]
      %v1364 = vld [vmem:[%s202 + $0x12e4] sm:$0xff]
      %v1365 = vld [vmem:[%s202 + $0x12ec] sm:$0xf]
      %v1366 = vld [vmem:[%s202 + $0x12f0] sm:$0xff]
      %v1367 = vld [vmem:[%s202 + $0x12f8] sm:$0xf]
      %v1368 = vld [vmem:[%s202 + $0x12fc] sm:$0xff]
      %v1369 = vld [vmem:[%s202 + $0x1304] sm:$0xf]
      %v1370 = vld [vmem:[%s202 + $0x1308] sm:$0xff]
      %v1371 = vld [vmem:[%s202 + $0x1310] sm:$0xf]
      %v1372 = vld [vmem:[%s202 + $0x1314] sm:$0xff]
      %v1373 = vld [vmem:[%s202 + $0x131c] sm:$0xf]
      %v1374 = vld [vmem:[%s202 + $0x1320] sm:$0xff]
      %v1375 = vld [vmem:[%s202 + $0x1328] sm:$0xf]
      %v1376 = vld [vmem:[%s202 + $0x132c] sm:$0xff]
      %v1377 = vld [vmem:[%s202 + $0x1334] sm:$0xf]
      %v1378 = vld [vmem:[%s202 + $0x1338] sm:$0xff]
      %v1379 = vld [vmem:[%s202 + $0x1340] sm:$0xf]
      %v1380 = vld [vmem:[%s202 + $0x1344] sm:$0xff]
      %v1381 = vld [vmem:[%s202 + $0x134c] sm:$0xf]
      %v1382 = vld [vmem:[%s202 + $0x1350] sm:$0xff]
      %v1383 = vld [vmem:[%s202 + $0x1358] sm:$0xf]
      %v1384 = vld [vmem:[%s202 + $0x135c] sm:$0xff]
      %v1385 = vld [vmem:[%s202 + $0x1364] sm:$0xf]
      %v1386 = vld [vmem:[%s202 + $0x1368] sm:$0xff]
      %v1387 = vld [vmem:[%s202 + $0x1370] sm:$0xf]
      %v1388 = vld [vmem:[%s202 + $0x1374] sm:$0xff]
      %v1389 = vld [vmem:[%s202 + $0x137c] sm:$0xf]
      %v1390 = vld [vmem:[%s202 + $0x1380] sm:$0xff]
      %v1391 = vld [vmem:[%s202 + $0x1388] sm:$0xf]
      %v1392 = vld [vmem:[%s202 + $0x138c] sm:$0xff]
      %v1393 = vld [vmem:[%s202 + $0x1394] sm:$0xf]
      %v1394 = vld [vmem:[%s202 + $0x1398] sm:$0xff]
      %v1395 = vld [vmem:[%s202 + $0x13a0] sm:$0xf]
      %v1396 = vld [vmem:[%s202 + $0x13a4] sm:$0xff]
      %v1397 = vld [vmem:[%s202 + $0x13ac] sm:$0xf]
      %v1398 = vld [vmem:[%s202 + $0x13b0] sm:$0xff]
      %v1399 = vld [vmem:[%s202 + $0x13b8] sm:$0xf]
      %v1400 = vld [vmem:[%s202 + $0x13bc] sm:$0xff]
      %v1401 = vld [vmem:[%s202 + $0x13c4] sm:$0xf]
      %v1402 = vld [vmem:[%s202 + $0x13c8] sm:$0xff]
      %v1403 = vld [vmem:[%s202 + $0x13d0] sm:$0xf]
      %v1404 = vld [vmem:[%s202 + $0x13d4] sm:$0xff]
      %v1405 = vld [vmem:[%s202 + $0x13dc] sm:$0xf]
      %v1406 = vld [vmem:[%s202 + $0x13e0] sm:$0xff]
      %v1407 = vld [vmem:[%s202 + $0x13e8] sm:$0xf]
      %v1408 = vld [vmem:[%s202 + $0x13ec] sm:$0xff]
      %v1409 = vld [vmem:[%s202 + $0x13f4] sm:$0xf]
      %v1410 = vld [vmem:[%s202 + $0x13f8] sm:$0xff]
      %v1411 = vld [vmem:[%s202 + $0x1400] sm:$0xf]
      %v1412 = vld [vmem:[%s202 + $0x1404] sm:$0xff]
      %v1413 = vld [vmem:[%s202 + $0x140c] sm:$0xf]
      %v1414 = vld [vmem:[%s202 + $0x1410] sm:$0xff]
      %v1415 = vld [vmem:[%s202 + $0x1418] sm:$0xf]
      %v1416 = vld [vmem:[%s202 + $0x141c] sm:$0xff]
      %v1417 = vld [vmem:[%s202 + $0x1424] sm:$0xf]
      %v1418 = vld [vmem:[%s202 + $0x1428] sm:$0xff]
      %v1419 = vld [vmem:[%s202 + $0x1430] sm:$0xf]
      %v1420 = vld [vmem:[%s202 + $0x1434] sm:$0xff]
      %v1421 = vld [vmem:[%s202 + $0x143c] sm:$0xf]
      %v1422 = vld [vmem:[%s202 + $0x1440] sm:$0xff]
      %v1423 = vld [vmem:[%s202 + $0x1448] sm:$0xf]
      %v1424 = vld [vmem:[%s202 + $0x144c] sm:$0xff]
      %v1425 = vld [vmem:[%s202 + $0x1454] sm:$0xf]
      %v1426 = vld [vmem:[%s202 + $0x1458] sm:$0xff]
      %v1427 = vld [vmem:[%s202 + $0x1460] sm:$0xf]
      %v1428 = vld [vmem:[%s202 + $0x1464] sm:$0xff]
      %v1429 = vld [vmem:[%s202 + $0x146c] sm:$0xf]
      %v1430 = vld [vmem:[%s202 + $0x1470] sm:$0xff]
      %v1431 = vld [vmem:[%s202 + $0x1478] sm:$0xf]
      %v1432 = vld [vmem:[%s202 + $0x147c] sm:$0xff]
      %v1433 = vld [vmem:[%s202 + $0x1484] sm:$0xf]
      %v1434 = vld [vmem:[%s202 + $0x1488] sm:$0xff]
      %v1435 = vld [vmem:[%s202 + $0x1490] sm:$0xf]
      %v1436 = vld [vmem:[%s202 + $0x1494] sm:$0xff]
      %v1437 = vld [vmem:[%s202 + $0x149c] sm:$0xf]
      %v1438 = vld [vmem:[%s202 + $0x14a0] sm:$0xff]
      %v1439 = vld [vmem:[%s202 + $0x14a8] sm:$0xf]
      %v1440 = vld [vmem:[%s202 + $0x14ac] sm:$0xff]
      %v1441 = vld [vmem:[%s202 + $0x14b4] sm:$0xf]
      %v1442 = vld [vmem:[%s202 + $0x14b8] sm:$0xff]
      %v1443 = vld [vmem:[%s202 + $0x14c0] sm:$0xf]
      %v1444 = vld [vmem:[%s202 + $0x14c4] sm:$0xff]
      %v1445 = vld [vmem:[%s202 + $0x14cc] sm:$0xf]
      %v1446 = vld [vmem:[%s202 + $0x14d0] sm:$0xff]
      %v1447 = vld [vmem:[%s202 + $0x14d8] sm:$0xf]
      %v1448 = vld [vmem:[%s202 + $0x14dc] sm:$0xff]
      %v1449 = vld [vmem:[%s202 + $0x14e4] sm:$0xf]
      %v1450 = vld [vmem:[%s202 + $0x14e8] sm:$0xff]
      %v1451 = vld [vmem:[%s202 + $0x14f0] sm:$0xf]
      %v1452 = vld [vmem:[%s202 + $0x14f4] sm:$0xff]
      %v1453 = vld [vmem:[%s202 + $0x14fc] sm:$0xf]
      %v1454 = vld [vmem:[%s202 + $0x1500] sm:$0xff]
      %v1455 = vld [vmem:[%s202 + $0x1508] sm:$0xf]
      %v1456 = vld [vmem:[%s202 + $0x150c] sm:$0xff]
      %v1457 = vld [vmem:[%s202 + $0x1514] sm:$0xf]
      %v1458 = vld [vmem:[%s202 + $0x1518] sm:$0xff]
      %v1459 = vld [vmem:[%s202 + $0x1520] sm:$0xf]
      %v1460 = vld [vmem:[%s202 + $0x1524] sm:$0xff]
      %v1461 = vld [vmem:[%s202 + $0x152c] sm:$0xf]
      %v1462 = vld [vmem:[%s202 + $0x1530] sm:$0xff]
      %v1463 = vld [vmem:[%s202 + $0x1538] sm:$0xf]
      %v1464 = vld [vmem:[%s202 + $0x153c] sm:$0xff]
      %v1465 = vld [vmem:[%s202 + $0x1544] sm:$0xf]
      %v1466 = vld [vmem:[%s202 + $0x1548] sm:$0xff]
      %v1467 = vld [vmem:[%s202 + $0x1550] sm:$0xf]
      %v1468 = vld [vmem:[%s202 + $0x1554] sm:$0xff]
      %v1469 = vld [vmem:[%s202 + $0x155c] sm:$0xf]
      %v1470 = vld [vmem:[%s202 + $0x1560] sm:$0xff]
      %v1471 = vld [vmem:[%s202 + $0x1568] sm:$0xf]
      %v1472 = vld [vmem:[%s202 + $0x156c] sm:$0xff]
      %v1473 = vld [vmem:[%s202 + $0x1574] sm:$0xf]
      %v1474 = vld [vmem:[%s202 + $0x1578] sm:$0xff]
      %v1475 = vld [vmem:[%s202 + $0x1580] sm:$0xf]
      %v1476 = vld [vmem:[%s202 + $0x1584] sm:$0xff]
      %v1477 = vld [vmem:[%s202 + $0x158c] sm:$0xf]
      %v1478 = vld [vmem:[%s202 + $0x1590] sm:$0xff]
      %v1479 = vld [vmem:[%s202 + $0x1598] sm:$0xf]
      %v1480 = vld [vmem:[%s202 + $0x159c] sm:$0xff]
      %v1481 = vld [vmem:[%s202 + $0x15a4] sm:$0xf]
      %v1482 = vld [vmem:[%s202 + $0x15a8] sm:$0xff]
      %v1483 = vld [vmem:[%s202 + $0x15b0] sm:$0xf]
      %v1484 = vld [vmem:[%s202 + $0x15b4] sm:$0xff]
      %v1485 = vld [vmem:[%s202 + $0x15bc] sm:$0xf]
      %v1486 = vld [vmem:[%s202 + $0x15c0] sm:$0xff]
      %v1487 = vld [vmem:[%s202 + $0x15c8] sm:$0xf]
      %v1488 = vld [vmem:[%s202 + $0x15cc] sm:$0xff]
      %v1489 = vld [vmem:[%s202 + $0x15d4] sm:$0xf]
      %v1490 = vld [vmem:[%s202 + $0x15d8] sm:$0xff]
      %v1491 = vld [vmem:[%s202 + $0x15e0] sm:$0xf]
      %v1492 = vld [vmem:[%s202 + $0x15e4] sm:$0xff]
      %v1493 = vld [vmem:[%s202 + $0x15ec] sm:$0xf]
      %v1494 = vld [vmem:[%s202 + $0x15f0] sm:$0xff]
      %v1495 = vld [vmem:[%s202 + $0x15f8] sm:$0xf]
      %v1496 = vld [vmem:[%s202 + $0x15fc] sm:$0xff]
      %v1497 = vld [vmem:[%s202 + $0x1604] sm:$0xf]
      %v1498 = vld [vmem:[%s202 + $0x1608] sm:$0xff]
      %v1499 = vld [vmem:[%s202 + $0x1610] sm:$0xf]
      %v1500 = vld [vmem:[%s202 + $0x1614] sm:$0xff]
      %v1501 = vld [vmem:[%s202 + $0x161c] sm:$0xf]
      %v1502 = vld [vmem:[%s202 + $0x1620] sm:$0xff]
      %v1503 = vld [vmem:[%s202 + $0x1628] sm:$0xf]
      %v1504 = vld [vmem:[%s202 + $0x162c] sm:$0xff]
      %v1505 = vld [vmem:[%s202 + $0x1634] sm:$0xf]
      %v1506 = vld [vmem:[%s202 + $0x1638] sm:$0xff]
      %v1507 = vld [vmem:[%s202 + $0x1640] sm:$0xf]
      %v1508 = vld [vmem:[%s202 + $0x1644] sm:$0xff]
      %v1509 = vld [vmem:[%s202 + $0x164c] sm:$0xf]
      %v1510 = vld [vmem:[%s202 + $0x1650] sm:$0xff]
      %v1511 = vld [vmem:[%s202 + $0x1658] sm:$0xf]
      %v1512 = vld [vmem:[%s202 + $0x165c] sm:$0xff]
      %v1513 = vld [vmem:[%s202 + $0x1664] sm:$0xf]
      %v1514 = vld [vmem:[%s202 + $0x1668] sm:$0xff]
      %v1515 = vld [vmem:[%s202 + $0x1670] sm:$0xf]
      %v1516 = vld [vmem:[%s202 + $0x1674] sm:$0xff]
      %v1517 = vld [vmem:[%s202 + $0x167c] sm:$0xf]
      %v1518 = vld [vmem:[%s202 + $0x1680] sm:$0xff]
      %v1519 = vld [vmem:[%s202 + $0x1688] sm:$0xf]
      %v1520 = vld [vmem:[%s202 + $0x168c] sm:$0xff]
      %v1521 = vld [vmem:[%s202 + $0x1694] sm:$0xf]
      %v1522 = vld [vmem:[%s202 + $0x1698] sm:$0xff]
      %v1523 = vld [vmem:[%s202 + $0x16a0] sm:$0xf]
      %v1524 = vld [vmem:[%s202 + $0x16a4] sm:$0xff]
      %v1525 = vld [vmem:[%s202 + $0x16ac] sm:$0xf]
      %v1526 = vld [vmem:[%s202 + $0x16b0] sm:$0xff]
      %v1527 = vld [vmem:[%s202 + $0x16b8] sm:$0xf]
      %v1528 = vld [vmem:[%s202 + $0x16bc] sm:$0xff]
      %v1529 = vld [vmem:[%s202 + $0x16c4] sm:$0xf]
      %v1530 = vld [vmem:[%s202 + $0x16c8] sm:$0xff]
      %v1531 = vld [vmem:[%s202 + $0x16d0] sm:$0xf]
      %v1532 = vld [vmem:[%s202 + $0x16d4] sm:$0xff]
      %v1533 = vld [vmem:[%s202 + $0x16dc] sm:$0xf]
      %v1534 = vld [vmem:[%s202 + $0x16e0] sm:$0xff]
      %v1535 = vld [vmem:[%s202 + $0x16e8] sm:$0xf]
      %v1536 = vld [vmem:[%s202 + $0x16ec] sm:$0xff]
      %v1537 = vld [vmem:[%s202 + $0x16f4] sm:$0xf]
      %v1538 = vld [vmem:[%s202 + $0x16f8] sm:$0xff]
      %v1539 = vld [vmem:[%s202 + $0x1700] sm:$0xf]
      %v1540 = vld [vmem:[%s202 + $0x1704] sm:$0xff]
      %v1541 = vld [vmem:[%s202 + $0x170c] sm:$0xf]
      %v1542 = vld [vmem:[%s202 + $0x1710] sm:$0xff]
      %v1543 = vld [vmem:[%s202 + $0x1718] sm:$0xf]
      %v1544 = vld [vmem:[%s202 + $0x171c] sm:$0xff]
      %v1545 = vld [vmem:[%s202 + $0x1724] sm:$0xf]
      %v1546 = vld [vmem:[%s202 + $0x1728] sm:$0xff]
      %v1547 = vld [vmem:[%s202 + $0x1730] sm:$0xf]
      %v1548 = vld [vmem:[%s202 + $0x1734] sm:$0xff]
      %v1549 = vld [vmem:[%s202 + $0x173c] sm:$0xf]
      %v1550 = vld [vmem:[%s202 + $0x1740] sm:$0xff]
      %v1551 = vld [vmem:[%s202 + $0x1748] sm:$0xf]
      %v1552 = vld [vmem:[%s202 + $0x174c] sm:$0xff]
      %v1553 = vld [vmem:[%s202 + $0x1754] sm:$0xf]
      %v1554 = vld [vmem:[%s202 + $0x1758] sm:$0xff]
      %v1555 = vld [vmem:[%s202 + $0x1760] sm:$0xf]
      %v1556 = vld [vmem:[%s202 + $0x1764] sm:$0xff]
      %v1557 = vld [vmem:[%s202 + $0x176c] sm:$0xf]
      %v1558 = vld [vmem:[%s202 + $0x1770] sm:$0xff]
      %v1559 = vld [vmem:[%s202 + $0x1778] sm:$0xf]
      %v1560 = vld [vmem:[%s202 + $0x177c] sm:$0xff]
      %v1561 = vld [vmem:[%s202 + $0x1784] sm:$0xf]
      %v1562 = vld [vmem:[%s202 + $0x1788] sm:$0xff]
      %v1563 = vld [vmem:[%s202 + $0x1790] sm:$0xf]
      %v1564 = vld [vmem:[%s202 + $0x1794] sm:$0xff]
      %v1565 = vld [vmem:[%s202 + $0x179c] sm:$0xf]
      %v1566 = vld [vmem:[%s202 + $0x17a0] sm:$0xff]
      %v1567 = vld [vmem:[%s202 + $0x17a8] sm:$0xf]
      %v1568 = vld [vmem:[%s202 + $0x17ac] sm:$0xff]
      %v1569 = vld [vmem:[%s202 + $0x17b4] sm:$0xf]
      %v1570 = vld [vmem:[%s202 + $0x17b8] sm:$0xff]
      %v1571 = vld [vmem:[%s202 + $0x17c0] sm:$0xf]
      %v1572 = vld [vmem:[%s202 + $0x17c4] sm:$0xff]
      %v1573 = vld [vmem:[%s202 + $0x17cc] sm:$0xf]
      %v1574 = vld [vmem:[%s202 + $0x17d0] sm:$0xff]
      %v1575 = vld [vmem:[%s202 + $0x17d8] sm:$0xf]
      %v1576 = vld [vmem:[%s202 + $0x17dc] sm:$0xff]
      %v1577 = vld [vmem:[%s202 + $0x17e4] sm:$0xf]
      %v1578 = vld [vmem:[%s202 + $0x17e8] sm:$0xff]
      %v1579 = vld [vmem:[%s202 + $0x17f0] sm:$0xf]
      %v1580 = vld [vmem:[%s202 + $0x17f4] sm:$0xff]
      %v1581 = vld [vmem:[%s202 + $0x17fc] sm:$0xf]
      %v1582 = vld [vmem:[%s202 + $0x1800] sm:$0xff]
      %v1583 = vld [vmem:[%s202 + $0x1808] sm:$0xf]
      %v1584 = vld [vmem:[%s202 + $0x180c] sm:$0xff]
      %v1585 = vld [vmem:[%s202 + $0x1814] sm:$0xf]
      %v1586 = vld [vmem:[%s202 + $0x1818] sm:$0xff]
      %v1587 = vld [vmem:[%s202 + $0x1820] sm:$0xf]
      %v1588 = vld [vmem:[%s202 + $0x1824] sm:$0xff]
      %v1589 = vld [vmem:[%s202 + $0x182c] sm:$0xf]
      %v1590 = vld [vmem:[%s202 + $0x1830] sm:$0xff]
      %v1591 = vld [vmem:[%s202 + $0x1838] sm:$0xf]
      %v1592 = vld [vmem:[%s202 + $0x183c] sm:$0xff]
      %v1593 = vld [vmem:[%s202 + $0x1844] sm:$0xf]
      %v1594 = vld [vmem:[%s202 + $0x1848] sm:$0xff]
      %v1595 = vld [vmem:[%s202 + $0x1850] sm:$0xf]
      %v1596 = vld [vmem:[%s202 + $0x1854] sm:$0xff]
      %v1597 = vld [vmem:[%s202 + $0x185c] sm:$0xf]
      %v1598 = vld [vmem:[%s202 + $0x1860] sm:$0xff]
      %v1599 = vld [vmem:[%s202 + $0x1868] sm:$0xf]
      %v1600 = vld [vmem:[%s202 + $0x186c] sm:$0xff]
      %v1601 = vld [vmem:[%s202 + $0x1874] sm:$0xf]
      %v1602 = vld [vmem:[%s202 + $0x1878] sm:$0xff]
      %v1603 = vld [vmem:[%s202 + $0x1880] sm:$0xf]
      %v1604 = vld [vmem:[%s202 + $0x1884] sm:$0xff]
      %v1605 = vld [vmem:[%s202 + $0x188c] sm:$0xf]
      %v1606 = vld [vmem:[%s202 + $0x1890] sm:$0xff]
      %v1607 = vld [vmem:[%s202 + $0x1898] sm:$0xf]
      %v1608 = vld [vmem:[%s202 + $0x189c] sm:$0xff]
      %v1609 = vld [vmem:[%s202 + $0x18a4] sm:$0xf]
      %v1610 = vld [vmem:[%s202 + $0x18a8] sm:$0xff]
      %v1611 = vld [vmem:[%s202 + $0x18b0] sm:$0xf]
      %v1612 = vld [vmem:[%s202 + $0x18b4] sm:$0xff]
      %v1613 = vld [vmem:[%s202 + $0x18bc] sm:$0xf]
      %v1614 = vld [vmem:[%s202 + $0x18c0] sm:$0xff]
      %v1615 = vld [vmem:[%s202 + $0x18c8] sm:$0xf]
      %v1616 = vld [vmem:[%s202 + $0x18cc] sm:$0xff]
      %v1617 = vld [vmem:[%s202 + $0x18d4] sm:$0xf]
      %v1618 = vld [vmem:[%s202 + $0x18d8] sm:$0xff]
      %v1619 = vld [vmem:[%s202 + $0x18e0] sm:$0xf]
      %v1620 = vld [vmem:[%s202 + $0x18e4] sm:$0xff]
      %v1621 = vld [vmem:[%s202 + $0x18ec] sm:$0xf]
      %v1622 = vld [vmem:[%s202 + $0x18f0] sm:$0xff]
      %v1623 = vld [vmem:[%s202 + $0x18f8] sm:$0xf]
      %v1624 = vld [vmem:[%s202 + $0x18fc] sm:$0xff]
      %v1625 = vld [vmem:[%s202 + $0x1904] sm:$0xf]
      %v1626 = vld [vmem:[%s202 + $0x1908] sm:$0xff]
      %v1627 = vld [vmem:[%s202 + $0x1910] sm:$0xf]
      %v1628 = vld [vmem:[%s202 + $0x1914] sm:$0xff]
      %v1629 = vld [vmem:[%s202 + $0x191c] sm:$0xf]
      %v1630 = vld [vmem:[%s202 + $0x1920] sm:$0xff]
      %v1631 = vld [vmem:[%s202 + $0x1928] sm:$0xf]
      %v1632 = vld [vmem:[%s202 + $0x192c] sm:$0xff]
      %v1633 = vld [vmem:[%s202 + $0x1934] sm:$0xf]
      %v1634 = vld [vmem:[%s202 + $0x1938] sm:$0xff]
      %v1635 = vld [vmem:[%s202 + $0x1940] sm:$0xf]
      %v1636 = vld [vmem:[%s202 + $0x1944] sm:$0xff]
      %v1637 = vld [vmem:[%s202 + $0x194c] sm:$0xf]
      %v1638 = vld [vmem:[%s202 + $0x1950] sm:$0xff]
      %v1639 = vld [vmem:[%s202 + $0x1958] sm:$0xf]
      %v1640 = vld [vmem:[%s202 + $0x195c] sm:$0xff]
      %v1641 = vld [vmem:[%s202 + $0x1964] sm:$0xf]
      %v1642 = vld [vmem:[%s202 + $0x1968] sm:$0xff]
      %v1643 = vld [vmem:[%s202 + $0x1970] sm:$0xf]
      %v1644 = vld [vmem:[%s202 + $0x1974] sm:$0xff]
      %v1645 = vld [vmem:[%s202 + $0x197c] sm:$0xf]
      %v1646 = vld [vmem:[%s202 + $0x1980] sm:$0xff]
      %v1647 = vld [vmem:[%s202 + $0x1988] sm:$0xf]
      %v1648 = vld [vmem:[%s202 + $0x198c] sm:$0xff]
      %v1649 = vld [vmem:[%s202 + $0x1994] sm:$0xf]
      %v1650 = vld [vmem:[%s202 + $0x1998] sm:$0xff]
      %v1651 = vld [vmem:[%s202 + $0x19a0] sm:$0xf]
      %v1652 = vld [vmem:[%s202 + $0x19a4] sm:$0xff]
      %v1653 = vld [vmem:[%s202 + $0x19ac] sm:$0xf]
      %v1654 = vld [vmem:[%s202 + $0x19b0] sm:$0xff]
      %v1655 = vld [vmem:[%s202 + $0x19b8] sm:$0xf]
      %v1656 = vld [vmem:[%s202 + $0x19bc] sm:$0xff]
      %v1657 = vld [vmem:[%s202 + $0x19c4] sm:$0xf]
      %v1658 = vld [vmem:[%s202 + $0x19c8] sm:$0xff]
      %v1659 = vld [vmem:[%s202 + $0x19d0] sm:$0xf]
      %v1660 = vld [vmem:[%s202 + $0x19d4] sm:$0xff]
      %v1661 = vld [vmem:[%s202 + $0x19dc] sm:$0xf]
      %v1662 = vld [vmem:[%s202 + $0x19e0] sm:$0xff]
      %v1663 = vld [vmem:[%s202 + $0x19e8] sm:$0xf]
      %v1664 = vld [vmem:[%s202 + $0x19ec] sm:$0xff]
      %v1665 = vld [vmem:[%s202 + $0x19f4] sm:$0xf]
      %v1666 = vld [vmem:[%s202 + $0x19f8] sm:$0xff]
      %v1667 = vld [vmem:[%s202 + $0x1a00] sm:$0xf]
      %v1668 = vld [vmem:[%s202 + $0x1a04] sm:$0xff]
      %v1669 = vld [vmem:[%s202 + $0x1a0c] sm:$0xf]
      %v1670 = vld [vmem:[%s202 + $0x1a10] sm:$0xff]
      %v1671 = vld [vmem:[%s202 + $0x1a18] sm:$0xf]
      %v1672 = vld [vmem:[%s202 + $0x1a1c] sm:$0xff]
      %v1673 = vld [vmem:[%s202 + $0x1a24] sm:$0xf]
      %v1674 = vld [vmem:[%s202 + $0x1a28] sm:$0xff]
      %v1675 = vld [vmem:[%s202 + $0x1a30] sm:$0xf]
      %v1676 = vld [vmem:[%s202 + $0x1a34] sm:$0xff]
      %v1677 = vld [vmem:[%s202 + $0x1a3c] sm:$0xf]
      %v1678 = vld [vmem:[%s202 + $0x1a40] sm:$0xff]
      %v1679 = vld [vmem:[%s202 + $0x1a48] sm:$0xf]
      %v1680 = vld [vmem:[%s202 + $0x1a4c] sm:$0xff]
      %v1681 = vld [vmem:[%s202 + $0x1a54] sm:$0xf]
      %v1682 = vld [vmem:[%s202 + $0x1a58] sm:$0xff]
      %v1683 = vld [vmem:[%s202 + $0x1a60] sm:$0xf]
      %v1684 = vld [vmem:[%s202 + $0x1a64] sm:$0xff]
      %v1685 = vld [vmem:[%s202 + $0x1a6c] sm:$0xf]
      %v1686 = vld [vmem:[%s202 + $0x1a70] sm:$0xff]
      %v1687 = vld [vmem:[%s202 + $0x1a78] sm:$0xf]
      %v1688 = vld [vmem:[%s202 + $0x1a7c] sm:$0xff]
      %v1689 = vld [vmem:[%s202 + $0x1a84] sm:$0xf]
      %v1690 = vld [vmem:[%s202 + $0x1a88] sm:$0xff]
      %v1691 = vld [vmem:[%s202 + $0x1a90] sm:$0xf]
      %v1692 = vld [vmem:[%s202 + $0x1a94] sm:$0xff]
      %v1693 = vld [vmem:[%s202 + $0x1a9c] sm:$0xf]
      %v1694 = vld [vmem:[%s202 + $0x1aa0] sm:$0xff]
      %v1695 = vld [vmem:[%s202 + $0x1aa8] sm:$0xf]
      %v1696 = vld [vmem:[%s202 + $0x1aac] sm:$0xff]
      %v1697 = vld [vmem:[%s202 + $0x1ab4] sm:$0xf]
      %v1698 = vld [vmem:[%s202 + $0x1ab8] sm:$0xff]
      %v1699 = vld [vmem:[%s202 + $0x1ac0] sm:$0xf]
      %v1700 = vld [vmem:[%s202 + $0x1ac4] sm:$0xff]
      %v1701 = vld [vmem:[%s202 + $0x1acc] sm:$0xf]
      %v1702 = vld [vmem:[%s202 + $0x1ad0] sm:$0xff]
      %v1703 = vld [vmem:[%s202 + $0x1ad8] sm:$0xf]
      %v1704 = vld [vmem:[%s202 + $0x1adc] sm:$0xff]
      %v1705 = vld [vmem:[%s202 + $0x1ae4] sm:$0xf]
      %v1706 = vld [vmem:[%s202 + $0x1ae8] sm:$0xff]
      %v1707 = vld [vmem:[%s202 + $0x1af0] sm:$0xf]
      %v1708 = vld [vmem:[%s202 + $0x1af4] sm:$0xff]
      %v1709 = vld [vmem:[%s202 + $0x1afc] sm:$0xf]
      %v1710 = vld [vmem:[%s202 + $0x1b00] sm:$0xff]
      %v1711 = vld [vmem:[%s202 + $0x1b08] sm:$0xf]
      %v1712 = vld [vmem:[%s202 + $0x1b0c] sm:$0xff]
      %v1713 = vld [vmem:[%s202 + $0x1b14] sm:$0xf]
      %v1714 = vld [vmem:[%s202 + $0x1b18] sm:$0xff]
      %v1715 = vld [vmem:[%s202 + $0x1b20] sm:$0xf]
      %v1716 = vld [vmem:[%s202 + $0x1b24] sm:$0xff]
      %v1717 = vld [vmem:[%s202 + $0x1b2c] sm:$0xf]
      %v1718 = vld [vmem:[%s202 + $0x1b30] sm:$0xff]
      %v1719 = vld [vmem:[%s202 + $0x1b38] sm:$0xf]
      %v1720 = vld [vmem:[%s202 + $0x1b3c] sm:$0xff]
      %v1721 = vld [vmem:[%s202 + $0x1b44] sm:$0xf]
      %v1722 = vld [vmem:[%s202 + $0x1b48] sm:$0xff]
      %v1723 = vld [vmem:[%s202 + $0x1b50] sm:$0xf]
      %v1724 = vld [vmem:[%s202 + $0x1b54] sm:$0xff]
      %v1725 = vld [vmem:[%s202 + $0x1b5c] sm:$0xf]
      %v1726 = vld [vmem:[%s202 + $0x1b60] sm:$0xff]
      %v1727 = vld [vmem:[%s202 + $0x1b68] sm:$0xf]
      %v1728 = vld [vmem:[%s202 + $0x1b6c] sm:$0xff]
      %v1729 = vld [vmem:[%s202 + $0x1b74] sm:$0xf]
      %v1730 = vld [vmem:[%s202 + $0x1b78] sm:$0xff]
      %v1731 = vld [vmem:[%s202 + $0x1b80] sm:$0xf]
      %v1732 = vld [vmem:[%s202 + $0x1b84] sm:$0xff]
      %v1733 = vld [vmem:[%s202 + $0x1b8c] sm:$0xf]
      %v1734 = vld [vmem:[%s202 + $0x1b90] sm:$0xff]
      %v1735 = vld [vmem:[%s202 + $0x1b98] sm:$0xf]
      %v1736 = vld [vmem:[%s202 + $0x1b9c] sm:$0xff]
      %v1737 = vld [vmem:[%s202 + $0x1ba4] sm:$0xf]
      %v1738 = vld [vmem:[%s202 + $0x1ba8] sm:$0xff]
      %v1739 = vld [vmem:[%s202 + $0x1bb0] sm:$0xf]
      %v1740 = vld [vmem:[%s202 + $0x1bb4] sm:$0xff]
      %v1741 = vld [vmem:[%s202 + $0x1bbc] sm:$0xf]
      %v1742 = vld [vmem:[%s202 + $0x1bc0] sm:$0xff]
      %v1743 = vld [vmem:[%s202 + $0x1bc8] sm:$0xf]
      %v1744 = vld [vmem:[%s202 + $0x1bcc] sm:$0xff]
      %v1745 = vld [vmem:[%s202 + $0x1bd4] sm:$0xf]
      %v1746 = vld [vmem:[%s202 + $0x1bd8] sm:$0xff]
      %v1747 = vld [vmem:[%s202 + $0x1be0] sm:$0xf]
      %v1748 = vld [vmem:[%s202 + $0x1be4] sm:$0xff]
      %v1749 = vld [vmem:[%s202 + $0x1bec] sm:$0xf]
      %v1750 = vld [vmem:[%s202 + $0x1bf0] sm:$0xff]
      %v1751 = vld [vmem:[%s202 + $0x1bf8] sm:$0xf]
      %v1752 = vld [vmem:[%s202 + $0x1bfc] sm:$0xff]
      %v1753 = vld [vmem:[%s202 + $0x1c04] sm:$0xf]
      %v1754 = vld [vmem:[%s202 + $0x1c08] sm:$0xff]
      %v1755 = vld [vmem:[%s202 + $0x1c10] sm:$0xf]
      %v1756 = vld [vmem:[%s202 + $0x1c14] sm:$0xff]
      %v1757 = vld [vmem:[%s202 + $0x1c1c] sm:$0xf]
      %v1758 = vld [vmem:[%s202 + $0x1c20] sm:$0xff]
      %v1759 = vld [vmem:[%s202 + $0x1c28] sm:$0xf]
      %v1760 = vld [vmem:[%s202 + $0x1c2c] sm:$0xff]
      %v1761 = vld [vmem:[%s202 + $0x1c34] sm:$0xf]
      %v1762 = vld [vmem:[%s202 + $0x1c38] sm:$0xff]
      %v1763 = vld [vmem:[%s202 + $0x1c40] sm:$0xf]
      %v1764 = vld [vmem:[%s202 + $0x1c44] sm:$0xff]
      %v1765 = vld [vmem:[%s202 + $0x1c4c] sm:$0xf]
      %v1766 = vld [vmem:[%s202 + $0x1c50] sm:$0xff]
      %v1767 = vld [vmem:[%s202 + $0x1c58] sm:$0xf]
      %v1768 = vld [vmem:[%s202 + $0x1c5c] sm:$0xff]
      %v1769 = vld [vmem:[%s202 + $0x1c64] sm:$0xf]
      %v1770 = vld [vmem:[%s202 + $0x1c68] sm:$0xff]
      %v1771 = vld [vmem:[%s202 + $0x1c70] sm:$0xf]
      %v1772 = vld [vmem:[%s202 + $0x1c74] sm:$0xff]
      %v1773 = vld [vmem:[%s202 + $0x1c7c] sm:$0xf]
      %v1774 = vld [vmem:[%s202 + $0x1c80] sm:$0xff]
      %v1775 = vld [vmem:[%s202 + $0x1c88] sm:$0xf]
      %v1776 = vld [vmem:[%s202 + $0x1c8c] sm:$0xff]
      %v1777 = vld [vmem:[%s202 + $0x1c94] sm:$0xf]
      %v1778 = vld [vmem:[%s202 + $0x1c98] sm:$0xff]
      %v1779 = vld [vmem:[%s202 + $0x1ca0] sm:$0xf]
      %v1780 = vld [vmem:[%s202 + $0x1ca4] sm:$0xff]
      %v1781 = vld [vmem:[%s202 + $0x1cac] sm:$0xf]
      %v1782 = vld [vmem:[%s202 + $0x1cb0] sm:$0xff]
      %v1783 = vld [vmem:[%s202 + $0x1cb8] sm:$0xf]
      %v1784 = vld [vmem:[%s202 + $0x1cbc] sm:$0xff]
      %v1785 = vld [vmem:[%s202 + $0x1cc4] sm:$0xf]
      %v1786 = vld [vmem:[%s202 + $0x1cc8] sm:$0xff]
      %v1787 = vld [vmem:[%s202 + $0x1cd0] sm:$0xf]
      %v1788 = vld [vmem:[%s202 + $0x1cd4] sm:$0xff]
      %v1789 = vld [vmem:[%s202 + $0x1cdc] sm:$0xf]
      %v1790 = vld [vmem:[%s202 + $0x1ce0] sm:$0xff]
      %v1791 = vld [vmem:[%s202 + $0x1ce8] sm:$0xf]
      %v1792 = vld [vmem:[%s202 + $0x1cec] sm:$0xff]
      %v1793 = vld [vmem:[%s202 + $0x1cf4] sm:$0xf]
      %v1794 = vld [vmem:[%s202 + $0x1cf8] sm:$0xff]
      %v1795 = vld [vmem:[%s202 + $0x1d00] sm:$0xf]
      %v1796 = vld [vmem:[%s202 + $0x1d04] sm:$0xff]
      %v1797 = vld [vmem:[%s202 + $0x1d0c] sm:$0xf]
      %v1798 = vld [vmem:[%s202 + $0x1d10] sm:$0xff]
      %v1799 = vld [vmem:[%s202 + $0x1d18] sm:$0xf]
      %v1800 = vld [vmem:[%s202 + $0x1d1c] sm:$0xff]
      %v1801 = vld [vmem:[%s202 + $0x1d24] sm:$0xf]
      %v1802 = vld [vmem:[%s202 + $0x1d28] sm:$0xff]
      %v1803 = vld [vmem:[%s202 + $0x1d30] sm:$0xf]
      %v1804 = vld [vmem:[%s202 + $0x1d34] sm:$0xff]
      %v1805 = vld [vmem:[%s202 + $0x1d3c] sm:$0xf]
      %v1806 = vld [vmem:[%s202 + $0x1d40] sm:$0xff]
      %v1807 = vld [vmem:[%s202 + $0x1d48] sm:$0xf]
      %v1808 = vld [vmem:[%s202 + $0x1d4c] sm:$0xff]
      %v1809 = vld [vmem:[%s202 + $0x1d54] sm:$0xf]
      %v1810 = vld [vmem:[%s202 + $0x1d58] sm:$0xff]
      %v1811 = vld [vmem:[%s202 + $0x1d60] sm:$0xf]
      %v1812 = vld [vmem:[%s202 + $0x1d64] sm:$0xff]
      %v1813 = vld [vmem:[%s202 + $0x1d6c] sm:$0xf]
      %v1814 = vld [vmem:[%s202 + $0x1d70] sm:$0xff]
      %v1815 = vld [vmem:[%s202 + $0x1d78] sm:$0xf]
      %v1816 = vld [vmem:[%s202 + $0x1d7c] sm:$0xff]
      %v1817 = vld [vmem:[%s202 + $0x1d84] sm:$0xf]
      %v1818 = vld [vmem:[%s202 + $0x1d88] sm:$0xff]
      %v1819 = vld [vmem:[%s202 + $0x1d90] sm:$0xf]
      %v1820 = vld [vmem:[%s202 + $0x1d94] sm:$0xff]
      %v1821 = vld [vmem:[%s202 + $0x1d9c] sm:$0xf]
      %v1822 = vld [vmem:[%s202 + $0x1da0] sm:$0xff]
      %v1823 = vld [vmem:[%s202 + $0x1da8] sm:$0xf]
      %v1824 = vld [vmem:[%s202 + $0x1dac] sm:$0xff]
      %v1825 = vld [vmem:[%s202 + $0x1db4] sm:$0xf]
      %v1826 = vld [vmem:[%s202 + $0x1db8] sm:$0xff]
      %v1827 = vld [vmem:[%s202 + $0x1dc0] sm:$0xf]
      %v1828 = vld [vmem:[%s202 + $0x1dc4] sm:$0xff]
      %v1829 = vld [vmem:[%s202 + $0x1dcc] sm:$0xf]
      %v1830 = vld [vmem:[%s202 + $0x1dd0] sm:$0xff]
      %v1831 = vld [vmem:[%s202 + $0x1dd8] sm:$0xf]
      %v1832 = vld [vmem:[%s202 + $0x1ddc] sm:$0xff]
      %v1833 = vld [vmem:[%s202 + $0x1de4] sm:$0xf]
      %v1834 = vld [vmem:[%s202 + $0x1de8] sm:$0xff]
      %v1835 = vld [vmem:[%s202 + $0x1df0] sm:$0xf]
      %v1836 = vld [vmem:[%s202 + $0x1df4] sm:$0xff]
      %v1837 = vld [vmem:[%s202 + $0x1dfc] sm:$0xf]
      %v1838 = vld [vmem:[%s202 + $0x1e00] sm:$0xff]
      %v1839 = vld [vmem:[%s202 + $0x1e08] sm:$0xf]
      %v1840 = vld [vmem:[%s202 + $0x1e0c] sm:$0xff]
      %v1841 = vld [vmem:[%s202 + $0x1e14] sm:$0xf]
      %v1842 = vld [vmem:[%s202 + $0x1e18] sm:$0xff]
      %v1843 = vld [vmem:[%s202 + $0x1e20] sm:$0xf]
      %v1844 = vld [vmem:[%s202 + $0x1e24] sm:$0xff]
      %v1845 = vld [vmem:[%s202 + $0x1e2c] sm:$0xf]
      %v1846 = vld [vmem:[%s202 + $0x1e30] sm:$0xff]
      %v1847 = vld [vmem:[%s202 + $0x1e38] sm:$0xf]
      %v1848 = vld [vmem:[%s202 + $0x1e3c] sm:$0xff]
      %v1849 = vld [vmem:[%s202 + $0x1e44] sm:$0xf]
      %v1850 = vld [vmem:[%s202 + $0x1e48] sm:$0xff]
      %v1851 = vld [vmem:[%s202 + $0x1e50] sm:$0xf]
      %v1852 = vld [vmem:[%s202 + $0x1e54] sm:$0xff]
      %v1853 = vld [vmem:[%s202 + $0x1e5c] sm:$0xf]
      %v1854 = vld [vmem:[%s202 + $0x1e60] sm:$0xff]
      %v1855 = vld [vmem:[%s202 + $0x1e68] sm:$0xf]
      %v1856 = vld [vmem:[%s202 + $0x1e6c] sm:$0xff]
      %v1857 = vld [vmem:[%s202 + $0x1e74] sm:$0xf]
      %v1858 = vld [vmem:[%s202 + $0x1e78] sm:$0xff]
      %v1859 = vld [vmem:[%s202 + $0x1e80] sm:$0xf]
      %v1860 = vld [vmem:[%s202 + $0x1e84] sm:$0xff]
      %v1861 = vld [vmem:[%s202 + $0x1e8c] sm:$0xf]
      %v1862 = vld [vmem:[%s202 + $0x1e90] sm:$0xff]
      %v1863 = vld [vmem:[%s202 + $0x1e98] sm:$0xf]
      %v1864 = vld [vmem:[%s202 + $0x1e9c] sm:$0xff]
      %v1865 = vld [vmem:[%s202 + $0x1ea4] sm:$0xf]
      %v1866 = vld [vmem:[%s202 + $0x1ea8] sm:$0xff]
      %v1867 = vld [vmem:[%s202 + $0x1eb0] sm:$0xf]
      %v1868 = vld [vmem:[%s202 + $0x1eb4] sm:$0xff]
      %v1869 = vld [vmem:[%s202 + $0x1ebc] sm:$0xf]
      %v1870 = vld [vmem:[%s202 + $0x1ec0] sm:$0xff]
      %v1871 = vld [vmem:[%s202 + $0x1ec8] sm:$0xf]
      %v1872 = vld [vmem:[%s202 + $0x1ecc] sm:$0xff]
      %v1873 = vld [vmem:[%s202 + $0x1ed4] sm:$0xf]
      %v1874 = vld [vmem:[%s202 + $0x1ed8] sm:$0xff]
      %v1875 = vld [vmem:[%s202 + $0x1ee0] sm:$0xf]
      %v1876 = vld [vmem:[%s202 + $0x1ee4] sm:$0xff]
      %v1877 = vld [vmem:[%s202 + $0x1eec] sm:$0xf]
      %v1878 = vld [vmem:[%s202 + $0x1ef0] sm:$0xff]
      %v1879 = vld [vmem:[%s202 + $0x1ef8] sm:$0xf]
      %v1880 = vld [vmem:[%s202 + $0x1efc] sm:$0xff]
      %v1881 = vld [vmem:[%s202 + $0x1f04] sm:$0xf]
      %v1882 = vld [vmem:[%s202 + $0x1f08] sm:$0xff]
      %v1883 = vld [vmem:[%s202 + $0x1f10] sm:$0xf]
      %v1884 = vld [vmem:[%s202 + $0x1f14] sm:$0xff]
      %v1885 = vld [vmem:[%s202 + $0x1f1c] sm:$0xf]
      %v1886 = vld [vmem:[%s202 + $0x1f20] sm:$0xff]
      %v1887 = vld [vmem:[%s202 + $0x1f28] sm:$0xf]
      %v1888 = vld [vmem:[%s202 + $0x1f2c] sm:$0xff]
      %v1889 = vld [vmem:[%s202 + $0x1f34] sm:$0xf]
      %v1890 = vld [vmem:[%s202 + $0x1f38] sm:$0xff]
      %v1891 = vld [vmem:[%s202 + $0x1f40] sm:$0xf]
      %v1892 = vld [vmem:[%s202 + $0x1f44] sm:$0xff]
      %v1893 = vld [vmem:[%s202 + $0x1f4c] sm:$0xf]
      %v1894 = vld [vmem:[%s202 + $0x1f50] sm:$0xff]
      %v1895 = vld [vmem:[%s202 + $0x1f58] sm:$0xf]
      %v1896 = vld [vmem:[%s202 + $0x1f5c] sm:$0xff]
      %v1897 = vld [vmem:[%s202 + $0x1f64] sm:$0xf]
      %v1898 = vld [vmem:[%s202 + $0x1f68] sm:$0xff]
      %v1899 = vld [vmem:[%s202 + $0x1f70] sm:$0xf]
      %v1900 = vld [vmem:[%s202 + $0x1f74] sm:$0xff]
      %v1901 = vld [vmem:[%s202 + $0x1f7c] sm:$0xf]
      %v1902 = vld [vmem:[%s202 + $0x1f80] sm:$0xff]
      %v1903 = vld [vmem:[%s202 + $0x1f88] sm:$0xf]
      %v1904 = vld [vmem:[%s202 + $0x1f8c] sm:$0xff]
      %v1905 = vld [vmem:[%s202 + $0x1f94] sm:$0xf]
      %v1906 = vld [vmem:[%s202 + $0x1f98] sm:$0xff]
      %v1907 = vld [vmem:[%s202 + $0x1fa0] sm:$0xf]
      %v1908 = vld [vmem:[%s202 + $0x1fa4] sm:$0xff]
      %v1909 = vld [vmem:[%s202 + $0x1fac] sm:$0xf]
      %v1910 = vld [vmem:[%s202 + $0x1fb0] sm:$0xff]
      %v1911 = vld [vmem:[%s202 + $0x1fb8] sm:$0xf]
      %v1912 = vld [vmem:[%s202 + $0x1fbc] sm:$0xff]
      %v1913 = vld [vmem:[%s202 + $0x1fc4] sm:$0xf]
      %v1914 = vld [vmem:[%s202 + $0x1fc8] sm:$0xff]
      %v1915 = vld [vmem:[%s202 + $0x1fd0] sm:$0xf]
      %v1916 = vld [vmem:[%s202 + $0x1fd4] sm:$0xff]
      %v1917 = vld [vmem:[%s202 + $0x1fdc] sm:$0xf]
      %v1918 = vld [vmem:[%s202 + $0x1fe0] sm:$0xff]
      %v1919 = vld [vmem:[%s202 + $0x1fe8] sm:$0xf]
      %v1920 = vld [vmem:[%s202 + $0x1fec] sm:$0xff]
      %v1921 = vld [vmem:[%s202 + $0x1ff4] sm:$0xf]
      %v1922 = vld [vmem:[%s202 + $0x1ff8] sm:$0xff]
      %v1923 = vld [vmem:[%s202 + $0x2000] sm:$0xf]
      %v1924 = vld [vmem:[%s202 + $0x2004] sm:$0xff]
      %v1925 = vld [vmem:[%s202 + $0x200c] sm:$0xf]
      %v1926 = vld [vmem:[%s202 + $0x2010] sm:$0xff]
      %v1927 = vld [vmem:[%s202 + $0x2018] sm:$0xf]
      %v1928 = vld [vmem:[%s202 + $0x201c] sm:$0xff]
      %v1929 = vld [vmem:[%s202 + $0x2024] sm:$0xf]
      %v1930 = vld [vmem:[%s202 + $0x2028] sm:$0xff]
      %v1931 = vld [vmem:[%s202 + $0x2030] sm:$0xf]
      %v1932 = vld [vmem:[%s202 + $0x2034] sm:$0xff]
      %v1933 = vld [vmem:[%s202 + $0x203c] sm:$0xf]
      %v1934 = vld [vmem:[%s202 + $0x2040] sm:$0xff]
      %v1935 = vld [vmem:[%s202 + $0x2048] sm:$0xf]
      %v1936 = vld [vmem:[%s202 + $0x204c] sm:$0xff]
      %v1937 = vld [vmem:[%s202 + $0x2054] sm:$0xf]
      %v1938 = vld [vmem:[%s202 + $0x2058] sm:$0xff]
      %v1939 = vld [vmem:[%s202 + $0x2060] sm:$0xf]
      %v1940 = vld [vmem:[%s202 + $0x2064] sm:$0xff]
      %v1941 = vld [vmem:[%s202 + $0x206c] sm:$0xf]
      %v1942 = vld [vmem:[%s202 + $0x2070] sm:$0xff]
      %v1943 = vld [vmem:[%s202 + $0x2078] sm:$0xf]
      %v1944 = vld [vmem:[%s202 + $0x207c] sm:$0xff]
      %v1945 = vld [vmem:[%s202 + $0x2084] sm:$0xf]
      %v1946 = vld [vmem:[%s202 + $0x2088] sm:$0xff]
      %v1947 = vld [vmem:[%s202 + $0x2090] sm:$0xf]
      %v1948 = vld [vmem:[%s202 + $0x2094] sm:$0xff]
      %v1949 = vld [vmem:[%s202 + $0x209c] sm:$0xf]
      %v1950 = vld [vmem:[%s202 + $0x20a0] sm:$0xff]
      %v1951 = vld [vmem:[%s202 + $0x20a8] sm:$0xf]
      %v1952 = vld [vmem:[%s202 + $0x20ac] sm:$0xff]
      %v1953 = vld [vmem:[%s202 + $0x20b4] sm:$0xf]
      %v1954 = vld [vmem:[%s202 + $0x20b8] sm:$0xff]
      %v1955 = vld [vmem:[%s202 + $0x20c0] sm:$0xf]
      %v1956 = vld [vmem:[%s202 + $0x20c4] sm:$0xff]
      %v1957 = vld [vmem:[%s202 + $0x20cc] sm:$0xf]
      %v1958 = vld [vmem:[%s202 + $0x20d0] sm:$0xff]
      %v1959 = vld [vmem:[%s202 + $0x20d8] sm:$0xf]
      %v1960 = vld [vmem:[%s202 + $0x20dc] sm:$0xff]
      %v1961 = vld [vmem:[%s202 + $0x20e4] sm:$0xf]
      %v1962 = vld [vmem:[%s202 + $0x20e8] sm:$0xff]
      %v1963 = vld [vmem:[%s202 + $0x20f0] sm:$0xf]
      %v1964 = vld [vmem:[%s202 + $0x20f4] sm:$0xff]
      %v1965 = vld [vmem:[%s202 + $0x20fc] sm:$0xf]
      %v1966 = vld [vmem:[%s202 + $0x2100] sm:$0xff]
      %v1967 = vld [vmem:[%s202 + $0x2108] sm:$0xf]
      %v1968 = vld [vmem:[%s202 + $0x210c] sm:$0xff]
      %v1969 = vld [vmem:[%s202 + $0x2114] sm:$0xf]
      %v1970 = vld [vmem:[%s202 + $0x2118] sm:$0xff]
      %v1971 = vld [vmem:[%s202 + $0x2120] sm:$0xf]
      %v1972 = vld [vmem:[%s202 + $0x2124] sm:$0xff]
      %v1973 = vld [vmem:[%s202 + $0x212c] sm:$0xf]
      %v1974 = vld [vmem:[%s202 + $0x2130] sm:$0xff]
      %v1975 = vld [vmem:[%s202 + $0x2138] sm:$0xf]
      %v1976 = vld [vmem:[%s202 + $0x213c] sm:$0xff]
      %v1977 = vld [vmem:[%s202 + $0x2144] sm:$0xf]
      %v1978 = vld [vmem:[%s202 + $0x2148] sm:$0xff]
      %v1979 = vld [vmem:[%s202 + $0x2150] sm:$0xf]
      %v1980 = vld [vmem:[%s202 + $0x2154] sm:$0xff]
      %v1981 = vld [vmem:[%s202 + $0x215c] sm:$0xf]
      %v1982 = vld [vmem:[%s202 + $0x2160] sm:$0xff]
      %v1983 = vld [vmem:[%s202 + $0x2168] sm:$0xf]
      %v1984 = vld [vmem:[%s202 + $0x216c] sm:$0xff]
      %v1985 = vld [vmem:[%s202 + $0x2174] sm:$0xf]
      %v1986 = vld [vmem:[%s202 + $0x2178] sm:$0xff]
      %v1987 = vld [vmem:[%s202 + $0x2180] sm:$0xf]
      %v1988 = vld [vmem:[%s202 + $0x2184] sm:$0xff]
      %v1989 = vld [vmem:[%s202 + $0x218c] sm:$0xf]
      %v1990 = vld [vmem:[%s202 + $0x2190] sm:$0xff]
      %v1991 = vld [vmem:[%s202 + $0x2198] sm:$0xf]
      %v1992 = vld [vmem:[%s202 + $0x219c] sm:$0xff]
      %v1993 = vld [vmem:[%s202 + $0x21a4] sm:$0xf]
      %v1994 = vld [vmem:[%s202 + $0x21a8] sm:$0xff]
      %v1995 = vld [vmem:[%s202 + $0x21b0] sm:$0xf]
      %v1996 = vld [vmem:[%s202 + $0x21b4] sm:$0xff]
      %v1997 = vld [vmem:[%s202 + $0x21bc] sm:$0xf]
      %v1998 = vld [vmem:[%s202 + $0x21c0] sm:$0xff]
      %v1999 = vld [vmem:[%s202 + $0x21c8] sm:$0xf]
      %v2000 = vld [vmem:[%s202 + $0x21cc] sm:$0xff]
      %v2001 = vld [vmem:[%s202 + $0x21d4] sm:$0xf]
      %v2002 = vld [vmem:[%s202 + $0x21d8] sm:$0xff]
      %v2003 = vld [vmem:[%s202 + $0x21e0] sm:$0xf]
      %v2004 = vld [vmem:[%s202 + $0x21e4] sm:$0xff]
      %v2005 = vld [vmem:[%s202 + $0x21ec] sm:$0xf]
      %v2006 = vld [vmem:[%s202 + $0x21f0] sm:$0xff]
      %v2007 = vld [vmem:[%s202 + $0x21f8] sm:$0xf]
      %v2008 = vld [vmem:[%s202 + $0x21fc] sm:$0xff]
      %v2009 = vld [vmem:[%s202 + $0x2204] sm:$0xf]
      %v2010 = vld [vmem:[%s202 + $0x2208] sm:$0xff]
      %v2011 = vld [vmem:[%s202 + $0x2210] sm:$0xf]
      %v2012 = vld [vmem:[%s202 + $0x2214] sm:$0xff]
      %v2013 = vld [vmem:[%s202 + $0x221c] sm:$0xf]
      %v2014 = vld [vmem:[%s202 + $0x2220] sm:$0xff]
      %v2015 = vld [vmem:[%s202 + $0x2228] sm:$0xf]
      %v2016 = vld [vmem:[%s202 + $0x222c] sm:$0xff]
      %v2017 = vld [vmem:[%s202 + $0x2234] sm:$0xf]
      %v2018 = vld [vmem:[%s202 + $0x2238] sm:$0xff]
      %v2019 = vld [vmem:[%s202 + $0x2240] sm:$0xf]
      %v2020 = vld [vmem:[%s202 + $0x2244] sm:$0xff]
      %v2021 = vld [vmem:[%s202 + $0x224c] sm:$0xf]
      %v2022 = vld [vmem:[%s202 + $0x2250] sm:$0xff]
      %v2023 = vld [vmem:[%s202 + $0x2258] sm:$0xf]
      %v2024 = vld [vmem:[%s202 + $0x225c] sm:$0xff]
      %v2025 = vld [vmem:[%s202 + $0x2264] sm:$0xf]
      %v2026 = vld [vmem:[%s202 + $0x2268] sm:$0xff]
      %v2027 = vld [vmem:[%s202 + $0x2270] sm:$0xf]
      %v2028 = vld [vmem:[%s202 + $0x2274] sm:$0xff]
      %v2029 = vld [vmem:[%s202 + $0x227c] sm:$0xf]
      %v2030 = vld [vmem:[%s202 + $0x2280] sm:$0xff]
      %v2031 = vld [vmem:[%s202 + $0x2288] sm:$0xf]
      %v2032 = vld [vmem:[%s202 + $0x228c] sm:$0xff]
      %v2033 = vld [vmem:[%s202 + $0x2294] sm:$0xf]
      %v2034 = vld [vmem:[%s202 + $0x2298] sm:$0xff]
      %v2035 = vld [vmem:[%s202 + $0x22a0] sm:$0xf]
      %v2036 = vld [vmem:[%s202 + $0x22a4] sm:$0xff]
      %v2037 = vld [vmem:[%s202 + $0x22ac] sm:$0xf]
      %v2038 = vld [vmem:[%s202 + $0x22b0] sm:$0xff]
      %v2039 = vld [vmem:[%s202 + $0x22b8] sm:$0xf]
      %v2040 = vld [vmem:[%s202 + $0x22bc] sm:$0xff]
      %v2041 = vld [vmem:[%s202 + $0x22c4] sm:$0xf]
      %v2042 = vld [vmem:[%s202 + $0x22c8] sm:$0xff]
      %v2043 = vld [vmem:[%s202 + $0x22d0] sm:$0xf]
      %v2044 = vld [vmem:[%s202 + $0x22d4] sm:$0xff]
      %v2045 = vld [vmem:[%s202 + $0x22dc] sm:$0xf]
      %v2046 = vld [vmem:[%s202 + $0x22e0] sm:$0xff]
      %v2047 = vld [vmem:[%s202 + $0x22e8] sm:$0xf]
      %v2048 = vld [vmem:[%s202 + $0x22ec] sm:$0xff]
      %v2049 = vld [vmem:[%s202 + $0x22f4] sm:$0xf]
      %v2050 = vld [vmem:[%s202 + $0x22f8] sm:$0xff]
      %v2051 = vld [vmem:[%s202 + $0x2300] sm:$0xf]
      %v2052 = vld [vmem:[%s202 + $0x2304] sm:$0xff]
      %v2053 = vld [vmem:[%s202 + $0x230c] sm:$0xf]
      %v2054 = vld [vmem:[%s202 + $0x2310] sm:$0xff]
      %v2055 = vld [vmem:[%s202 + $0x2318] sm:$0xf]
      %v2056 = vld [vmem:[%s202 + $0x231c] sm:$0xff]
      %v2057 = vld [vmem:[%s202 + $0x2324] sm:$0xf]
      %v2058 = vld [vmem:[%s202 + $0x2328] sm:$0xff]
      %v2059 = vld [vmem:[%s202 + $0x2330] sm:$0xf]
      %v2060 = vld [vmem:[%s202 + $0x2334] sm:$0xff]
      %v2061 = vld [vmem:[%s202 + $0x233c] sm:$0xf]
      %v2062 = vld [vmem:[%s202 + $0x2340] sm:$0xff]
      %v2063 = vld [vmem:[%s202 + $0x2348] sm:$0xf]
      %v2064 = vld [vmem:[%s202 + $0x234c] sm:$0xff]
      %v2065 = vld [vmem:[%s202 + $0x2354] sm:$0xf]
      %v2066 = vld [vmem:[%s202 + $0x2358] sm:$0xff]
      %v2067 = vld [vmem:[%s202 + $0x2360] sm:$0xf]
      %v2068 = vld [vmem:[%s202 + $0x2364] sm:$0xff]
      %v2069 = vld [vmem:[%s202 + $0x236c] sm:$0xf]
      %v2070 = vld [vmem:[%s202 + $0x2370] sm:$0xff]
      %v2071 = vld [vmem:[%s202 + $0x2378] sm:$0xf]
      %v2072 = vld [vmem:[%s202 + $0x237c] sm:$0xff]
      %v2073 = vld [vmem:[%s202 + $0x2384] sm:$0xf]
      %v2074 = vld [vmem:[%s202 + $0x2388] sm:$0xff]
      %v2075 = vld [vmem:[%s202 + $0x2390] sm:$0xf]
      %v2076 = vld [vmem:[%s202 + $0x2394] sm:$0xff]
      %v2077 = vld [vmem:[%s202 + $0x239c] sm:$0xf]
      %v2078 = vld [vmem:[%s202 + $0x23a0] sm:$0xff]
      %v2079 = vld [vmem:[%s202 + $0x23a8] sm:$0xf]
      %v2080 = vld [vmem:[%s202 + $0x23ac] sm:$0xff]
      %v2081 = vld [vmem:[%s202 + $0x23b4] sm:$0xf]
      %v2082 = vld [vmem:[%s202 + $0x23b8] sm:$0xff]
      %v2083 = vld [vmem:[%s202 + $0x23c0] sm:$0xf]
      %v2084 = vld [vmem:[%s202 + $0x23c4] sm:$0xff]
      %v2085 = vld [vmem:[%s202 + $0x23cc] sm:$0xf]
      %v2086 = vld [vmem:[%s202 + $0x23d0] sm:$0xff]
      %v2087 = vld [vmem:[%s202 + $0x23d8] sm:$0xf]
      %v2088 = vld [vmem:[%s202 + $0x23dc] sm:$0xff]
      %v2089 = vld [vmem:[%s202 + $0x23e4] sm:$0xf]
      %v2090 = vld [vmem:[%s202 + $0x23e8] sm:$0xff]
      %v2091 = vld [vmem:[%s202 + $0x23f0] sm:$0xf]
      %v2092 = vld [vmem:[%s202 + $0x23f4] sm:$0xff]
      %v2093 = vld [vmem:[%s202 + $0x23fc] sm:$0xf]
      %v2094 = vld [vmem:[%s202 + $0x2400] sm:$0xff]
      %v2095 = vld [vmem:[%s202 + $0x2408] sm:$0xf]
      %v2096 = vld [vmem:[%s202 + $0x240c] sm:$0xff]
      %v2097 = vld [vmem:[%s202 + $0x2414] sm:$0xf]
      %v2098 = vld [vmem:[%s202 + $0x2418] sm:$0xff]
      %v2099 = vld [vmem:[%s202 + $0x2420] sm:$0xf]
      %v2100 = vld [vmem:[%s202 + $0x2424] sm:$0xff]
      %v2101 = vld [vmem:[%s202 + $0x242c] sm:$0xf]
      %v2102 = vld [vmem:[%s202 + $0x2430] sm:$0xff]
      %v2103 = vld [vmem:[%s202 + $0x2438] sm:$0xf]
      %v2104 = vld [vmem:[%s202 + $0x243c] sm:$0xff]
      %v2105 = vld [vmem:[%s202 + $0x2444] sm:$0xf]
      %v2106 = vld [vmem:[%s202 + $0x2448] sm:$0xff]
      %v2107 = vld [vmem:[%s202 + $0x2450] sm:$0xf]
      %v2108 = vld [vmem:[%s202 + $0x2454] sm:$0xff]
      %v2109 = vld [vmem:[%s202 + $0x245c] sm:$0xf]
      %v2110 = vld [vmem:[%s202 + $0x2460] sm:$0xff]
      %v2111 = vld [vmem:[%s202 + $0x2468] sm:$0xf]
      %v2112 = vld [vmem:[%s202 + $0x246c] sm:$0xff]
      %v2113 = vld [vmem:[%s202 + $0x2474] sm:$0xf]
      %v2114 = vld [vmem:[%s202 + $0x2478] sm:$0xff]
      %v2115 = vld [vmem:[%s202 + $0x2480] sm:$0xf]
      %v2116 = vld [vmem:[%s202 + $0x2484] sm:$0xff]
      %v2117 = vld [vmem:[%s202 + $0x248c] sm:$0xf]
      %v2118 = vld [vmem:[%s202 + $0x2490] sm:$0xff]
      %v2119 = vld [vmem:[%s202 + $0x2498] sm:$0xf]
      %v2120 = vld [vmem:[%s202 + $0x249c] sm:$0xff]
      %v2121 = vld [vmem:[%s202 + $0x24a4] sm:$0xf]
      %v2122 = vld [vmem:[%s202 + $0x24a8] sm:$0xff]
      %v2123 = vld [vmem:[%s202 + $0x24b0] sm:$0xf]
      %v2124 = vld [vmem:[%s202 + $0x24b4] sm:$0xff]
      %v2125 = vld [vmem:[%s202 + $0x24bc] sm:$0xf]
      %v3694 = vunpack.c.l.b16 %v558
      %v3695 = vunpack.c.h.b16 %v558
      %v3696 = vunpack.c.l.b16 %v559
      %v3697 = vunpack.c.l.b16 %v560
      %v3698 = vunpack.c.h.b16 %v560
      %v3699 = vunpack.c.l.b16 %v561
      %v3700 = vunpack.c.l.b16 %v562
      %v3701 = vunpack.c.h.b16 %v562
      %v3702 = vunpack.c.l.b16 %v563
      %v3703 = vunpack.c.l.b16 %v564
      %v3704 = vunpack.c.h.b16 %v564
      %v3705 = vunpack.c.l.b16 %v565
      %v3706 = vunpack.c.l.b16 %v566
      %v3707 = vunpack.c.h.b16 %v566
      %v3708 = vunpack.c.l.b16 %v567
      %v3709 = vunpack.c.l.b16 %v568
      %v3710 = vunpack.c.h.b16 %v568
      %v3711 = vunpack.c.l.b16 %v569
      %v3712 = vunpack.c.l.b16 %v570
      %v3713 = vunpack.c.h.b16 %v570
      %v3714 = vunpack.c.l.b16 %v571
      %v3715 = vunpack.c.l.b16 %v572
      %v3716 = vunpack.c.h.b16 %v572
      %v3717 = vunpack.c.l.b16 %v573
      %v3718 = vunpack.c.l.b16 %v574
      %v3719 = vunpack.c.h.b16 %v574
      %v3720 = vunpack.c.l.b16 %v575
      %v3721 = vunpack.c.l.b16 %v576
      %v3722 = vunpack.c.h.b16 %v576
      %v3723 = vunpack.c.l.b16 %v577
      %v3724 = vunpack.c.l.b16 %v578
      %v3725 = vunpack.c.h.b16 %v578
      %v3726 = vunpack.c.l.b16 %v579
      %v3727 = vunpack.c.l.b16 %v580
      %v3728 = vunpack.c.h.b16 %v580
      %v3729 = vunpack.c.l.b16 %v581
      %v3730 = vunpack.c.l.b16 %v582
      %v3731 = vunpack.c.h.b16 %v582
      %v3732 = vunpack.c.l.b16 %v583
      %v3733 = vunpack.c.l.b16 %v584
      %v3734 = vunpack.c.h.b16 %v584
      %v3735 = vunpack.c.l.b16 %v585
      %v3736 = vunpack.c.l.b16 %v586
      %v3737 = vunpack.c.h.b16 %v586
      %v3738 = vunpack.c.l.b16 %v587
      %v3739 = vunpack.c.l.b16 %v588
      %v3740 = vunpack.c.h.b16 %v588
      %v3741 = vunpack.c.l.b16 %v589
      %v3742 = vunpack.c.l.b16 %v590
      %v3743 = vunpack.c.h.b16 %v590
      %v3744 = vunpack.c.l.b16 %v591
      %v3745 = vunpack.c.l.b16 %v592
      %v3746 = vunpack.c.h.b16 %v592
      %v3747 = vunpack.c.l.b16 %v593
      %v3748 = vunpack.c.l.b16 %v594
      %v3749 = vunpack.c.h.b16 %v594
      %v3750 = vunpack.c.l.b16 %v595
      %v3751 = vunpack.c.l.b16 %v596
      %v3752 = vunpack.c.h.b16 %v596
      %v3753 = vunpack.c.l.b16 %v597
      %v3754 = vunpack.c.l.b16 %v598
      %v3755 = vunpack.c.h.b16 %v598
      %v3756 = vunpack.c.l.b16 %v599
      %v3757 = vunpack.c.l.b16 %v600
      %v3758 = vunpack.c.h.b16 %v600
      %v3759 = vunpack.c.l.b16 %v601
      %v3760 = vunpack.c.l.b16 %v602
      %v3761 = vunpack.c.h.b16 %v602
      %v3762 = vunpack.c.l.b16 %v603
      %v3763 = vunpack.c.l.b16 %v604
      %v3764 = vunpack.c.h.b16 %v604
      %v3765 = vunpack.c.l.b16 %v605
      %v3766 = vunpack.c.l.b16 %v606
      %v3767 = vunpack.c.h.b16 %v606
      %v3768 = vunpack.c.l.b16 %v607
      %v3769 = vunpack.c.l.b16 %v608
      %v3770 = vunpack.c.h.b16 %v608
      %v3771 = vunpack.c.l.b16 %v609
      %v3772 = vunpack.c.l.b16 %v610
      %v3773 = vunpack.c.h.b16 %v610
      %v3774 = vunpack.c.l.b16 %v611
      %v3775 = vunpack.c.l.b16 %v612
      %v3776 = vunpack.c.h.b16 %v612
      %v3777 = vunpack.c.l.b16 %v613
      %v3778 = vunpack.c.l.b16 %v614
      %v3779 = vunpack.c.h.b16 %v614
      %v3780 = vunpack.c.l.b16 %v615
      %v3781 = vunpack.c.l.b16 %v616
      %v3782 = vunpack.c.h.b16 %v616
      %v3783 = vunpack.c.l.b16 %v617
      %v3784 = vunpack.c.l.b16 %v618
      %v3785 = vunpack.c.h.b16 %v618
      %v3786 = vunpack.c.l.b16 %v619
      %v3787 = vunpack.c.l.b16 %v620
      %v3788 = vunpack.c.h.b16 %v620
      %v3789 = vunpack.c.l.b16 %v621
      %v3790 = vunpack.c.l.b16 %v622
      %v3791 = vunpack.c.h.b16 %v622
      %v3792 = vunpack.c.l.b16 %v623
      %v3793 = vunpack.c.l.b16 %v624
      %v3794 = vunpack.c.h.b16 %v624
      %v3795 = vunpack.c.l.b16 %v625
      %v3796 = vunpack.c.l.b16 %v626
      %v3797 = vunpack.c.h.b16 %v626
      %v3798 = vunpack.c.l.b16 %v627
      %v3799 = vunpack.c.l.b16 %v628
      %v3800 = vunpack.c.h.b16 %v628
      %v3801 = vunpack.c.l.b16 %v629
      %v3802 = vunpack.c.l.b16 %v630
      %v3803 = vunpack.c.h.b16 %v630
      %v3804 = vunpack.c.l.b16 %v631
      %v3805 = vunpack.c.l.b16 %v632
      %v3806 = vunpack.c.h.b16 %v632
      %v3807 = vunpack.c.l.b16 %v633
      %v3808 = vunpack.c.l.b16 %v634
      %v3809 = vunpack.c.h.b16 %v634
      %v3810 = vunpack.c.l.b16 %v635
      %v3811 = vunpack.c.l.b16 %v636
      %v3812 = vunpack.c.h.b16 %v636
      %v3813 = vunpack.c.l.b16 %v637
      %v3814 = vunpack.c.l.b16 %v638
      %v3815 = vunpack.c.h.b16 %v638
      %v3816 = vunpack.c.l.b16 %v639
      %v3817 = vunpack.c.l.b16 %v640
      %v3818 = vunpack.c.h.b16 %v640
      %v3819 = vunpack.c.l.b16 %v641
      %v3820 = vunpack.c.l.b16 %v642
      %v3821 = vunpack.c.h.b16 %v642
      %v3822 = vunpack.c.l.b16 %v643
      %v3823 = vunpack.c.l.b16 %v644
      %v3824 = vunpack.c.h.b16 %v644
      %v3825 = vunpack.c.l.b16 %v645
      %v3826 = vunpack.c.l.b16 %v646
      %v3827 = vunpack.c.h.b16 %v646
      %v3828 = vunpack.c.l.b16 %v647
      %v3829 = vunpack.c.l.b16 %v648
      %v3830 = vunpack.c.h.b16 %v648
      %v3831 = vunpack.c.l.b16 %v649
      %v3832 = vunpack.c.l.b16 %v650
      %v3833 = vunpack.c.h.b16 %v650
      %v3834 = vunpack.c.l.b16 %v651
      %v3835 = vunpack.c.l.b16 %v652
      %v3836 = vunpack.c.h.b16 %v652
      %v3837 = vunpack.c.l.b16 %v653
      %v3838 = vunpack.c.l.b16 %v654
      %v3839 = vunpack.c.h.b16 %v654
      %v3840 = vunpack.c.l.b16 %v655
      %v3841 = vunpack.c.l.b16 %v656
      %v3842 = vunpack.c.h.b16 %v656
      %v3843 = vunpack.c.l.b16 %v657
      %v3844 = vunpack.c.l.b16 %v658
      %v3845 = vunpack.c.h.b16 %v658
      %v3846 = vunpack.c.l.b16 %v659
      %v3847 = vunpack.c.l.b16 %v660
      %v3848 = vunpack.c.h.b16 %v660
      %v3849 = vunpack.c.l.b16 %v661
      %v3850 = vunpack.c.l.b16 %v662
      %v3851 = vunpack.c.h.b16 %v662
      %v3852 = vunpack.c.l.b16 %v663
      %v3853 = vunpack.c.l.b16 %v664
      %v3854 = vunpack.c.h.b16 %v664
      %v3855 = vunpack.c.l.b16 %v665
      %v3856 = vunpack.c.l.b16 %v666
      %v3857 = vunpack.c.h.b16 %v666
      %v3858 = vunpack.c.l.b16 %v667
      %v3859 = vunpack.c.l.b16 %v668
      %v3860 = vunpack.c.h.b16 %v668
      %v3861 = vunpack.c.l.b16 %v669
      %v3862 = vunpack.c.l.b16 %v670
      %v3863 = vunpack.c.h.b16 %v670
      %v3864 = vunpack.c.l.b16 %v671
      %v3865 = vunpack.c.l.b16 %v672
      %v3866 = vunpack.c.h.b16 %v672
      %v3867 = vunpack.c.l.b16 %v673
      %v3868 = vunpack.c.l.b16 %v674
      %v3869 = vunpack.c.h.b16 %v674
      %v3870 = vunpack.c.l.b16 %v675
      %v3871 = vunpack.c.l.b16 %v676
      %v3872 = vunpack.c.h.b16 %v676
      %v3873 = vunpack.c.l.b16 %v677
      %v3874 = vunpack.c.l.b16 %v678
      %v3875 = vunpack.c.h.b16 %v678
      %v3876 = vunpack.c.l.b16 %v679
      %v3877 = vunpack.c.l.b16 %v680
      %v3878 = vunpack.c.h.b16 %v680
      %v3879 = vunpack.c.l.b16 %v681
      %v3880 = vunpack.c.l.b16 %v682
      %v3881 = vunpack.c.h.b16 %v682
      %v3882 = vunpack.c.l.b16 %v683
      %v3883 = vunpack.c.l.b16 %v684
      %v3884 = vunpack.c.h.b16 %v684
      %v3885 = vunpack.c.l.b16 %v685
      %v3886 = vunpack.c.l.b16 %v686
      %v3887 = vunpack.c.h.b16 %v686
      %v3888 = vunpack.c.l.b16 %v687
      %v3889 = vunpack.c.l.b16 %v688
      %v3890 = vunpack.c.h.b16 %v688
      %v3891 = vunpack.c.l.b16 %v689
      %v3892 = vunpack.c.l.b16 %v690
      %v3893 = vunpack.c.h.b16 %v690
      %v3894 = vunpack.c.l.b16 %v691
      %v3895 = vunpack.c.l.b16 %v692
      %v3896 = vunpack.c.h.b16 %v692
      %v3897 = vunpack.c.l.b16 %v693
      %v3898 = vunpack.c.l.b16 %v694
      %v3899 = vunpack.c.h.b16 %v694
      %v3900 = vunpack.c.l.b16 %v695
      %v3901 = vunpack.c.l.b16 %v696
      %v3902 = vunpack.c.h.b16 %v696
      %v3903 = vunpack.c.l.b16 %v697
      %v3904 = vunpack.c.l.b16 %v698
      %v3905 = vunpack.c.h.b16 %v698
      %v3906 = vunpack.c.l.b16 %v699
      %v3907 = vunpack.c.l.b16 %v700
      %v3908 = vunpack.c.h.b16 %v700
      %v3909 = vunpack.c.l.b16 %v701
      %v3910 = vunpack.c.l.b16 %v702
      %v3911 = vunpack.c.h.b16 %v702
      %v3912 = vunpack.c.l.b16 %v703
      %v3913 = vunpack.c.l.b16 %v704
      %v3914 = vunpack.c.h.b16 %v704
      %v3915 = vunpack.c.l.b16 %v705
      %v3916 = vunpack.c.l.b16 %v706
      %v3917 = vunpack.c.h.b16 %v706
      %v3918 = vunpack.c.l.b16 %v707
      %v3919 = vunpack.c.l.b16 %v708
      %v3920 = vunpack.c.h.b16 %v708
      %v3921 = vunpack.c.l.b16 %v709
      %v3922 = vunpack.c.l.b16 %v710
      %v3923 = vunpack.c.h.b16 %v710
      %v3924 = vunpack.c.l.b16 %v711
      %v3925 = vunpack.c.l.b16 %v712
      %v3926 = vunpack.c.h.b16 %v712
      %v3927 = vunpack.c.l.b16 %v713
      %v3928 = vunpack.c.l.b16 %v714
      %v3929 = vunpack.c.h.b16 %v714
      %v3930 = vunpack.c.l.b16 %v715
      %v3931 = vunpack.c.l.b16 %v716
      %v3932 = vunpack.c.h.b16 %v716
      %v3933 = vunpack.c.l.b16 %v717
      %v3934 = vunpack.c.l.b16 %v718
      %v3935 = vunpack.c.h.b16 %v718
      %v3936 = vunpack.c.l.b16 %v719
      %v3937 = vunpack.c.l.b16 %v720
      %v3938 = vunpack.c.h.b16 %v720
      %v3939 = vunpack.c.l.b16 %v721
      %v3940 = vunpack.c.l.b16 %v722
      %v3941 = vunpack.c.h.b16 %v722
      %v3942 = vunpack.c.l.b16 %v723
      %v3943 = vunpack.c.l.b16 %v724
      %v3944 = vunpack.c.h.b16 %v724
      %v3945 = vunpack.c.l.b16 %v725
      %v3946 = vunpack.c.l.b16 %v726
      %v3947 = vunpack.c.h.b16 %v726
      %v3948 = vunpack.c.l.b16 %v727
      %v3949 = vunpack.c.l.b16 %v728
      %v3950 = vunpack.c.h.b16 %v728
      %v3951 = vunpack.c.l.b16 %v729
      %v3952 = vunpack.c.l.b16 %v730
      %v3953 = vunpack.c.h.b16 %v730
      %v3954 = vunpack.c.l.b16 %v731
      %v3955 = vunpack.c.l.b16 %v732
      %v3956 = vunpack.c.h.b16 %v732
      %v3957 = vunpack.c.l.b16 %v733
      %v3958 = vunpack.c.l.b16 %v734
      %v3959 = vunpack.c.h.b16 %v734
      %v3960 = vunpack.c.l.b16 %v735
      %v3961 = vunpack.c.l.b16 %v736
      %v3962 = vunpack.c.h.b16 %v736
      %v3963 = vunpack.c.l.b16 %v737
      %v3964 = vunpack.c.l.b16 %v738
      %v3965 = vunpack.c.h.b16 %v738
      %v3966 = vunpack.c.l.b16 %v739
      %v3967 = vunpack.c.l.b16 %v740
      %v3968 = vunpack.c.h.b16 %v740
      %v3969 = vunpack.c.l.b16 %v741
      %v3970 = vunpack.c.l.b16 %v742
      %v3971 = vunpack.c.h.b16 %v742
      %v3972 = vunpack.c.l.b16 %v743
      %v3973 = vunpack.c.l.b16 %v744
      %v3974 = vunpack.c.h.b16 %v744
      %v3975 = vunpack.c.l.b16 %v745
      %v3976 = vunpack.c.l.b16 %v746
      %v3977 = vunpack.c.h.b16 %v746
      %v3978 = vunpack.c.l.b16 %v747
      %v3979 = vunpack.c.l.b16 %v748
      %v3980 = vunpack.c.h.b16 %v748
      %v3981 = vunpack.c.l.b16 %v749
      %v3982 = vunpack.c.l.b16 %v750
      %v3983 = vunpack.c.h.b16 %v750
      %v3984 = vunpack.c.l.b16 %v751
      %v3985 = vunpack.c.l.b16 %v752
      %v3986 = vunpack.c.h.b16 %v752
      %v3987 = vunpack.c.l.b16 %v753
      %v3988 = vunpack.c.l.b16 %v754
      %v3989 = vunpack.c.h.b16 %v754
      %v3990 = vunpack.c.l.b16 %v755
      %v3991 = vunpack.c.l.b16 %v756
      %v3992 = vunpack.c.h.b16 %v756
      %v3993 = vunpack.c.l.b16 %v757
      %v3994 = vunpack.c.l.b16 %v758
      %v3995 = vunpack.c.h.b16 %v758
      %v3996 = vunpack.c.l.b16 %v759
      %v3997 = vunpack.c.l.b16 %v760
      %v3998 = vunpack.c.h.b16 %v760
      %v3999 = vunpack.c.l.b16 %v761
      %v4000 = vunpack.c.l.b16 %v762
      %v4001 = vunpack.c.h.b16 %v762
      %v4002 = vunpack.c.l.b16 %v763
      %v4003 = vunpack.c.l.b16 %v764
      %v4004 = vunpack.c.h.b16 %v764
      %v4005 = vunpack.c.l.b16 %v765
      %v4006 = vunpack.c.l.b16 %v766
      %v4007 = vunpack.c.h.b16 %v766
      %v4008 = vunpack.c.l.b16 %v767
      %v4009 = vunpack.c.l.b16 %v768
      %v4010 = vunpack.c.h.b16 %v768
      %v4011 = vunpack.c.l.b16 %v769
      %v4012 = vunpack.c.l.b16 %v770
      %v4013 = vunpack.c.h.b16 %v770
      %v4014 = vunpack.c.l.b16 %v771
      %v4015 = vunpack.c.l.b16 %v772
      %v4016 = vunpack.c.h.b16 %v772
      %v4017 = vunpack.c.l.b16 %v773
      %v4018 = vunpack.c.l.b16 %v774
      %v4019 = vunpack.c.h.b16 %v774
      %v4020 = vunpack.c.l.b16 %v775
      %v4021 = vunpack.c.l.b16 %v776
      %v4022 = vunpack.c.h.b16 %v776
      %v4023 = vunpack.c.l.b16 %v777
      %v4024 = vunpack.c.l.b16 %v778
      %v4025 = vunpack.c.h.b16 %v778
      %v4026 = vunpack.c.l.b16 %v779
      %v4027 = vunpack.c.l.b16 %v780
      %v4028 = vunpack.c.h.b16 %v780
      %v4029 = vunpack.c.l.b16 %v781
      %v4030 = vunpack.c.l.b16 %v782
      %v4031 = vunpack.c.h.b16 %v782
      %v4032 = vunpack.c.l.b16 %v783
      %v4033 = vunpack.c.l.b16 %v784
      %v4034 = vunpack.c.h.b16 %v784
      %v4035 = vunpack.c.l.b16 %v785
      %v4036 = vunpack.c.l.b16 %v786
      %v4037 = vunpack.c.h.b16 %v786
      %v4038 = vunpack.c.l.b16 %v787
      %v4039 = vunpack.c.l.b16 %v788
      %v4040 = vunpack.c.h.b16 %v788
      %v4041 = vunpack.c.l.b16 %v789
      %v4042 = vunpack.c.l.b16 %v790
      %v4043 = vunpack.c.h.b16 %v790
      %v4044 = vunpack.c.l.b16 %v791
      %v4045 = vunpack.c.l.b16 %v792
      %v4046 = vunpack.c.h.b16 %v792
      %v4047 = vunpack.c.l.b16 %v793
      %v4048 = vunpack.c.l.b16 %v794
      %v4049 = vunpack.c.h.b16 %v794
      %v4050 = vunpack.c.l.b16 %v795
      %v4051 = vunpack.c.l.b16 %v796
      %v4052 = vunpack.c.h.b16 %v796
      %v4053 = vunpack.c.l.b16 %v797
      %v4054 = vunpack.c.l.b16 %v798
      %v4055 = vunpack.c.h.b16 %v798
      %v4056 = vunpack.c.l.b16 %v799
      %v4057 = vunpack.c.l.b16 %v800
      %v4058 = vunpack.c.h.b16 %v800
      %v4059 = vunpack.c.l.b16 %v801
      %v4060 = vunpack.c.l.b16 %v802
      %v4061 = vunpack.c.h.b16 %v802
      %v4062 = vunpack.c.l.b16 %v803
      %v4063 = vunpack.c.l.b16 %v804
      %v4064 = vunpack.c.h.b16 %v804
      %v4065 = vunpack.c.l.b16 %v805
      %v4066 = vunpack.c.l.b16 %v806
      %v4067 = vunpack.c.h.b16 %v806
      %v4068 = vunpack.c.l.b16 %v807
      %v4069 = vunpack.c.l.b16 %v808
      %v4070 = vunpack.c.h.b16 %v808
      %v4071 = vunpack.c.l.b16 %v809
      %v4072 = vunpack.c.l.b16 %v810
      %v4073 = vunpack.c.h.b16 %v810
      %v4074 = vunpack.c.l.b16 %v811
      %v4075 = vunpack.c.l.b16 %v812
      %v4076 = vunpack.c.h.b16 %v812
      %v4077 = vunpack.c.l.b16 %v813
      %v4078 = vunpack.c.l.b16 %v814
      %v4079 = vunpack.c.h.b16 %v814
      %v4080 = vunpack.c.l.b16 %v815
      %v4081 = vunpack.c.l.b16 %v816
      %v4082 = vunpack.c.h.b16 %v816
      %v4083 = vunpack.c.l.b16 %v817
      %v4084 = vunpack.c.l.b16 %v818
      %v4085 = vunpack.c.h.b16 %v818
      %v4086 = vunpack.c.l.b16 %v819
      %v4087 = vunpack.c.l.b16 %v820
      %v4088 = vunpack.c.h.b16 %v820
      %v4089 = vunpack.c.l.b16 %v821
      %v4090 = vunpack.c.l.b16 %v822
      %v4091 = vunpack.c.h.b16 %v822
      %v4092 = vunpack.c.l.b16 %v823
      %v4093 = vunpack.c.l.b16 %v824
      %v4094 = vunpack.c.h.b16 %v824
      %v4095 = vunpack.c.l.b16 %v825
      %v4096 = vunpack.c.l.b16 %v826
      %v4097 = vunpack.c.h.b16 %v826
      %v4098 = vunpack.c.l.b16 %v827
      %v4099 = vunpack.c.l.b16 %v828
      %v4100 = vunpack.c.h.b16 %v828
      %v4101 = vunpack.c.l.b16 %v829
      %v4102 = vunpack.c.l.b16 %v830
      %v4103 = vunpack.c.h.b16 %v830
      %v4104 = vunpack.c.l.b16 %v831
      %v4105 = vunpack.c.l.b16 %v832
      %v4106 = vunpack.c.h.b16 %v832
      %v4107 = vunpack.c.l.b16 %v833
      %v4108 = vunpack.c.l.b16 %v834
      %v4109 = vunpack.c.h.b16 %v834
      %v4110 = vunpack.c.l.b16 %v835
      %v4111 = vunpack.c.l.b16 %v836
      %v4112 = vunpack.c.h.b16 %v836
      %v4113 = vunpack.c.l.b16 %v837
      %v4114 = vunpack.c.l.b16 %v838
      %v4115 = vunpack.c.h.b16 %v838
      %v4116 = vunpack.c.l.b16 %v839
      %v4117 = vunpack.c.l.b16 %v840
      %v4118 = vunpack.c.h.b16 %v840
      %v4119 = vunpack.c.l.b16 %v841
      %v4120 = vunpack.c.l.b16 %v842
      %v4121 = vunpack.c.h.b16 %v842
      %v4122 = vunpack.c.l.b16 %v843
      %v4123 = vunpack.c.l.b16 %v844
      %v4124 = vunpack.c.h.b16 %v844
      %v4125 = vunpack.c.l.b16 %v845
      %v4126 = vunpack.c.l.b16 %v846
      %v4127 = vunpack.c.h.b16 %v846
      %v4128 = vunpack.c.l.b16 %v847
      %v4129 = vunpack.c.l.b16 %v848
      %v4130 = vunpack.c.h.b16 %v848
      %v4131 = vunpack.c.l.b16 %v849
      %v4132 = vunpack.c.l.b16 %v850
      %v4133 = vunpack.c.h.b16 %v850
      %v4134 = vunpack.c.l.b16 %v851
      %v4135 = vunpack.c.l.b16 %v852
      %v4136 = vunpack.c.h.b16 %v852
      %v4137 = vunpack.c.l.b16 %v853
      %v4138 = vunpack.c.l.b16 %v854
      %v4139 = vunpack.c.h.b16 %v854
      %v4140 = vunpack.c.l.b16 %v855
      %v4141 = vunpack.c.l.b16 %v856
      %v4142 = vunpack.c.h.b16 %v856
      %v4143 = vunpack.c.l.b16 %v857
      %v4144 = vunpack.c.l.b16 %v858
      %v4145 = vunpack.c.h.b16 %v858
      %v4146 = vunpack.c.l.b16 %v859
      %v4147 = vunpack.c.l.b16 %v860
      %v4148 = vunpack.c.h.b16 %v860
      %v4149 = vunpack.c.l.b16 %v861
      %v4150 = vunpack.c.l.b16 %v862
      %v4151 = vunpack.c.h.b16 %v862
      %v4152 = vunpack.c.l.b16 %v863
      %v4153 = vunpack.c.l.b16 %v864
      %v4154 = vunpack.c.h.b16 %v864
      %v4155 = vunpack.c.l.b16 %v865
      %v4156 = vunpack.c.l.b16 %v866
      %v4157 = vunpack.c.h.b16 %v866
      %v4158 = vunpack.c.l.b16 %v867
      %v4159 = vunpack.c.l.b16 %v868
      %v4160 = vunpack.c.h.b16 %v868
      %v4161 = vunpack.c.l.b16 %v869
      %v4162 = vunpack.c.l.b16 %v870
      %v4163 = vunpack.c.h.b16 %v870
      %v4164 = vunpack.c.l.b16 %v871
      %v4165 = vunpack.c.l.b16 %v872
      %v4166 = vunpack.c.h.b16 %v872
      %v4167 = vunpack.c.l.b16 %v873
      %v4168 = vunpack.c.l.b16 %v874
      %v4169 = vunpack.c.h.b16 %v874
      %v4170 = vunpack.c.l.b16 %v875
      %v4171 = vunpack.c.l.b16 %v876
      %v4172 = vunpack.c.h.b16 %v876
      %v4173 = vunpack.c.l.b16 %v877
      %v4174 = vunpack.c.l.b16 %v878
      %v4175 = vunpack.c.h.b16 %v878
      %v4176 = vunpack.c.l.b16 %v879
      %v4177 = vunpack.c.l.b16 %v880
      %v4178 = vunpack.c.h.b16 %v880
      %v4179 = vunpack.c.l.b16 %v881
      %v4180 = vunpack.c.l.b16 %v882
      %v4181 = vunpack.c.h.b16 %v882
      %v4182 = vunpack.c.l.b16 %v883
      %v4183 = vunpack.c.l.b16 %v884
      %v4184 = vunpack.c.h.b16 %v884
      %v4185 = vunpack.c.l.b16 %v885
      %v4186 = vunpack.c.l.b16 %v886
      %v4187 = vunpack.c.h.b16 %v886
      %v4188 = vunpack.c.l.b16 %v887
      %v4189 = vunpack.c.l.b16 %v888
      %v4190 = vunpack.c.h.b16 %v888
      %v4191 = vunpack.c.l.b16 %v889
      %v4192 = vunpack.c.l.b16 %v890
      %v4193 = vunpack.c.h.b16 %v890
      %v4194 = vunpack.c.l.b16 %v891
      %v4195 = vunpack.c.l.b16 %v892
      %v4196 = vunpack.c.h.b16 %v892
      %v4197 = vunpack.c.l.b16 %v893
      %v4198 = vunpack.c.l.b16 %v894
      %v4199 = vunpack.c.h.b16 %v894
      %v4200 = vunpack.c.l.b16 %v895
      %v4201 = vunpack.c.l.b16 %v896
      %v4202 = vunpack.c.h.b16 %v896
      %v4203 = vunpack.c.l.b16 %v897
      %v4204 = vunpack.c.l.b16 %v898
      %v4205 = vunpack.c.h.b16 %v898
      %v4206 = vunpack.c.l.b16 %v899
      %v4207 = vunpack.c.l.b16 %v900
      %v4208 = vunpack.c.h.b16 %v900
      %v4209 = vunpack.c.l.b16 %v901
      %v4210 = vunpack.c.l.b16 %v902
      %v4211 = vunpack.c.h.b16 %v902
      %v4212 = vunpack.c.l.b16 %v903
      %v4213 = vunpack.c.l.b16 %v904
      %v4214 = vunpack.c.h.b16 %v904
      %v4215 = vunpack.c.l.b16 %v905
      %v4216 = vunpack.c.l.b16 %v906
      %v4217 = vunpack.c.h.b16 %v906
      %v4218 = vunpack.c.l.b16 %v907
      %v4219 = vunpack.c.l.b16 %v908
      %v4220 = vunpack.c.h.b16 %v908
      %v4221 = vunpack.c.l.b16 %v909
      %v4222 = vunpack.c.l.b16 %v910
      %v4223 = vunpack.c.h.b16 %v910
      %v4224 = vunpack.c.l.b16 %v911
      %v4225 = vunpack.c.l.b16 %v912
      %v4226 = vunpack.c.h.b16 %v912
      %v4227 = vunpack.c.l.b16 %v913
      %v4228 = vunpack.c.l.b16 %v914
      %v4229 = vunpack.c.h.b16 %v914
      %v4230 = vunpack.c.l.b16 %v915
      %v4231 = vunpack.c.l.b16 %v916
      %v4232 = vunpack.c.h.b16 %v916
      %v4233 = vunpack.c.l.b16 %v917
      %v4234 = vunpack.c.l.b16 %v918
      %v4235 = vunpack.c.h.b16 %v918
      %v4236 = vunpack.c.l.b16 %v919
      %v4237 = vunpack.c.l.b16 %v920
      %v4238 = vunpack.c.h.b16 %v920
      %v4239 = vunpack.c.l.b16 %v921
      %v4240 = vunpack.c.l.b16 %v922
      %v4241 = vunpack.c.h.b16 %v922
      %v4242 = vunpack.c.l.b16 %v923
      %v4243 = vunpack.c.l.b16 %v924
      %v4244 = vunpack.c.h.b16 %v924
      %v4245 = vunpack.c.l.b16 %v925
      %v4246 = vunpack.c.l.b16 %v926
      %v4247 = vunpack.c.h.b16 %v926
      %v4248 = vunpack.c.l.b16 %v927
      %v4249 = vunpack.c.l.b16 %v928
      %v4250 = vunpack.c.h.b16 %v928
      %v4251 = vunpack.c.l.b16 %v929
      %v4252 = vunpack.c.l.b16 %v930
      %v4253 = vunpack.c.h.b16 %v930
      %v4254 = vunpack.c.l.b16 %v931
      %v4255 = vunpack.c.l.b16 %v932
      %v4256 = vunpack.c.h.b16 %v932
      %v4257 = vunpack.c.l.b16 %v933
      %v4258 = vunpack.c.l.b16 %v934
      %v4259 = vunpack.c.h.b16 %v934
      %v4260 = vunpack.c.l.b16 %v935
      %v4261 = vunpack.c.l.b16 %v936
      %v4262 = vunpack.c.h.b16 %v936
      %v4263 = vunpack.c.l.b16 %v937
      %v4264 = vunpack.c.l.b16 %v938
      %v4265 = vunpack.c.h.b16 %v938
      %v4266 = vunpack.c.l.b16 %v939
      %v4267 = vunpack.c.l.b16 %v940
      %v4268 = vunpack.c.h.b16 %v940
      %v4269 = vunpack.c.l.b16 %v941
      %v4270 = vunpack.c.l.b16 %v942
      %v4271 = vunpack.c.h.b16 %v942
      %v4272 = vunpack.c.l.b16 %v943
      %v4273 = vunpack.c.l.b16 %v944
      %v4274 = vunpack.c.h.b16 %v944
      %v4275 = vunpack.c.l.b16 %v945
      %v4276 = vunpack.c.l.b16 %v946
      %v4277 = vunpack.c.h.b16 %v946
      %v4278 = vunpack.c.l.b16 %v947
      %v4279 = vunpack.c.l.b16 %v948
      %v4280 = vunpack.c.h.b16 %v948
      %v4281 = vunpack.c.l.b16 %v949
      %v4282 = vunpack.c.l.b16 %v950
      %v4283 = vunpack.c.h.b16 %v950
      %v4284 = vunpack.c.l.b16 %v951
      %v4285 = vunpack.c.l.b16 %v952
      %v4286 = vunpack.c.h.b16 %v952
      %v4287 = vunpack.c.l.b16 %v953
      %v4288 = vunpack.c.l.b16 %v954
      %v4289 = vunpack.c.h.b16 %v954
      %v4290 = vunpack.c.l.b16 %v955
      %v4291 = vunpack.c.l.b16 %v956
      %v4292 = vunpack.c.h.b16 %v956
      %v4293 = vunpack.c.l.b16 %v957
      %v4294 = vunpack.c.l.b16 %v958
      %v4295 = vunpack.c.h.b16 %v958
      %v4296 = vunpack.c.l.b16 %v959
      %v4297 = vunpack.c.l.b16 %v960
      %v4298 = vunpack.c.h.b16 %v960
      %v4299 = vunpack.c.l.b16 %v961
      %v4300 = vunpack.c.l.b16 %v962
      %v4301 = vunpack.c.h.b16 %v962
      %v4302 = vunpack.c.l.b16 %v963
      %v4303 = vunpack.c.l.b16 %v964
      %v4304 = vunpack.c.h.b16 %v964
      %v4305 = vunpack.c.l.b16 %v965
      %v4306 = vunpack.c.l.b16 %v966
      %v4307 = vunpack.c.h.b16 %v966
      %v4308 = vunpack.c.l.b16 %v967
      %v4309 = vunpack.c.l.b16 %v968
      %v4310 = vunpack.c.h.b16 %v968
      %v4311 = vunpack.c.l.b16 %v969
      %v4312 = vunpack.c.l.b16 %v970
      %v4313 = vunpack.c.h.b16 %v970
      %v4314 = vunpack.c.l.b16 %v971
      %v4315 = vunpack.c.l.b16 %v972
      %v4316 = vunpack.c.h.b16 %v972
      %v4317 = vunpack.c.l.b16 %v973
      %v4318 = vunpack.c.l.b16 %v974
      %v4319 = vunpack.c.h.b16 %v974
      %v4320 = vunpack.c.l.b16 %v975
      %v4321 = vunpack.c.l.b16 %v976
      %v4322 = vunpack.c.h.b16 %v976
      %v4323 = vunpack.c.l.b16 %v977
      %v4324 = vunpack.c.l.b16 %v978
      %v4325 = vunpack.c.h.b16 %v978
      %v4326 = vunpack.c.l.b16 %v979
      %v4327 = vunpack.c.l.b16 %v980
      %v4328 = vunpack.c.h.b16 %v980
      %v4329 = vunpack.c.l.b16 %v981
      %v4330 = vunpack.c.l.b16 %v982
      %v4331 = vunpack.c.h.b16 %v982
      %v4332 = vunpack.c.l.b16 %v983
      %v4333 = vunpack.c.l.b16 %v984
      %v4334 = vunpack.c.h.b16 %v984
      %v4335 = vunpack.c.l.b16 %v985
      %v4336 = vunpack.c.l.b16 %v986
      %v4337 = vunpack.c.h.b16 %v986
      %v4338 = vunpack.c.l.b16 %v987
      %v4339 = vunpack.c.l.b16 %v988
      %v4340 = vunpack.c.h.b16 %v988
      %v4341 = vunpack.c.l.b16 %v989
      %v4342 = vunpack.c.l.b16 %v990
      %v4343 = vunpack.c.h.b16 %v990
      %v4344 = vunpack.c.l.b16 %v991
      %v4345 = vunpack.c.l.b16 %v992
      %v4346 = vunpack.c.h.b16 %v992
      %v4347 = vunpack.c.l.b16 %v993
      %v4348 = vunpack.c.l.b16 %v994
      %v4349 = vunpack.c.h.b16 %v994
      %v4350 = vunpack.c.l.b16 %v995
      %v4351 = vunpack.c.l.b16 %v996
      %v4352 = vunpack.c.h.b16 %v996
      %v4353 = vunpack.c.l.b16 %v997
      %v4354 = vunpack.c.l.b16 %v998
      %v4355 = vunpack.c.h.b16 %v998
      %v4356 = vunpack.c.l.b16 %v999
      %v4357 = vunpack.c.l.b16 %v1000
      %v4358 = vunpack.c.h.b16 %v1000
      %v4359 = vunpack.c.l.b16 %v1001
      %v4360 = vunpack.c.l.b16 %v1002
      %v4361 = vunpack.c.h.b16 %v1002
      %v4362 = vunpack.c.l.b16 %v1003
      %v4363 = vunpack.c.l.b16 %v1004
      %v4364 = vunpack.c.h.b16 %v1004
      %v4365 = vunpack.c.l.b16 %v1005
      %v4366 = vunpack.c.l.b16 %v1006
      %v4367 = vunpack.c.h.b16 %v1006
      %v4368 = vunpack.c.l.b16 %v1007
      %v4369 = vunpack.c.l.b16 %v1008
      %v4370 = vunpack.c.h.b16 %v1008
      %v4371 = vunpack.c.l.b16 %v1009
      %v4372 = vunpack.c.l.b16 %v1010
      %v4373 = vunpack.c.h.b16 %v1010
      %v4374 = vunpack.c.l.b16 %v1011
      %v4375 = vunpack.c.l.b16 %v1012
      %v4376 = vunpack.c.h.b16 %v1012
      %v4377 = vunpack.c.l.b16 %v1013
      %v4378 = vunpack.c.l.b16 %v1014
      %v4379 = vunpack.c.h.b16 %v1014
      %v4380 = vunpack.c.l.b16 %v1015
      %v4381 = vunpack.c.l.b16 %v1016
      %v4382 = vunpack.c.h.b16 %v1016
      %v4383 = vunpack.c.l.b16 %v1017
      %v4384 = vunpack.c.l.b16 %v1018
      %v4385 = vunpack.c.h.b16 %v1018
      %v4386 = vunpack.c.l.b16 %v1019
      %v4387 = vunpack.c.l.b16 %v1020
      %v4388 = vunpack.c.h.b16 %v1020
      %v4389 = vunpack.c.l.b16 %v1021
      %v4390 = vunpack.c.l.b16 %v1022
      %v4391 = vunpack.c.h.b16 %v1022
      %v4392 = vunpack.c.l.b16 %v1023
      %v4393 = vunpack.c.l.b16 %v1024
      %v4394 = vunpack.c.h.b16 %v1024
      %v4395 = vunpack.c.l.b16 %v1025
      %v4396 = vunpack.c.l.b16 %v1026
      %v4397 = vunpack.c.h.b16 %v1026
      %v4398 = vunpack.c.l.b16 %v1027
      %v4399 = vunpack.c.l.b16 %v1028
      %v4400 = vunpack.c.h.b16 %v1028
      %v4401 = vunpack.c.l.b16 %v1029
      %v4402 = vunpack.c.l.b16 %v1030
      %v4403 = vunpack.c.h.b16 %v1030
      %v4404 = vunpack.c.l.b16 %v1031
      %v4405 = vunpack.c.l.b16 %v1032
      %v4406 = vunpack.c.h.b16 %v1032
      %v4407 = vunpack.c.l.b16 %v1033
      %v4408 = vunpack.c.l.b16 %v1034
      %v4409 = vunpack.c.h.b16 %v1034
      %v4410 = vunpack.c.l.b16 %v1035
      %v4411 = vunpack.c.l.b16 %v1036
      %v4412 = vunpack.c.h.b16 %v1036
      %v4413 = vunpack.c.l.b16 %v1037
      %v4414 = vunpack.c.l.b16 %v1038
      %v4415 = vunpack.c.h.b16 %v1038
      %v4416 = vunpack.c.l.b16 %v1039
      %v4417 = vunpack.c.l.b16 %v1040
      %v4418 = vunpack.c.h.b16 %v1040
      %v4419 = vunpack.c.l.b16 %v1041
      %v4420 = vunpack.c.l.b16 %v1042
      %v4421 = vunpack.c.h.b16 %v1042
      %v4422 = vunpack.c.l.b16 %v1043
      %v4423 = vunpack.c.l.b16 %v1044
      %v4424 = vunpack.c.h.b16 %v1044
      %v4425 = vunpack.c.l.b16 %v1045
      %v4426 = vunpack.c.l.b16 %v1046
      %v4427 = vunpack.c.h.b16 %v1046
      %v4428 = vunpack.c.l.b16 %v1047
      %v4429 = vunpack.c.l.b16 %v1048
      %v4430 = vunpack.c.h.b16 %v1048
      %v4431 = vunpack.c.l.b16 %v1049
      %v4432 = vunpack.c.l.b16 %v1050
      %v4433 = vunpack.c.h.b16 %v1050
      %v4434 = vunpack.c.l.b16 %v1051
      %v4435 = vunpack.c.l.b16 %v1052
      %v4436 = vunpack.c.h.b16 %v1052
      %v4437 = vunpack.c.l.b16 %v1053
      %v4438 = vunpack.c.l.b16 %v1054
      %v4439 = vunpack.c.h.b16 %v1054
      %v4440 = vunpack.c.l.b16 %v1055
      %v4441 = vunpack.c.l.b16 %v1056
      %v4442 = vunpack.c.h.b16 %v1056
      %v4443 = vunpack.c.l.b16 %v1057
      %v4444 = vunpack.c.l.b16 %v1058
      %v4445 = vunpack.c.h.b16 %v1058
      %v4446 = vunpack.c.l.b16 %v1059
      %v4447 = vunpack.c.l.b16 %v1060
      %v4448 = vunpack.c.h.b16 %v1060
      %v4449 = vunpack.c.l.b16 %v1061
      %v4450 = vunpack.c.l.b16 %v1062
      %v4451 = vunpack.c.h.b16 %v1062
      %v4452 = vunpack.c.l.b16 %v1063
      %v4453 = vunpack.c.l.b16 %v1064
      %v4454 = vunpack.c.h.b16 %v1064
      %v4455 = vunpack.c.l.b16 %v1065
      %v4456 = vunpack.c.l.b16 %v1066
      %v4457 = vunpack.c.h.b16 %v1066
      %v4458 = vunpack.c.l.b16 %v1067
      %v4459 = vunpack.c.l.b16 %v1068
      %v4460 = vunpack.c.h.b16 %v1068
      %v4461 = vunpack.c.l.b16 %v1069
      %v4462 = vunpack.c.l.b16 %v1070
      %v4463 = vunpack.c.h.b16 %v1070
      %v4464 = vunpack.c.l.b16 %v1071
      %v4465 = vunpack.c.l.b16 %v1072
      %v4466 = vunpack.c.h.b16 %v1072
      %v4467 = vunpack.c.l.b16 %v1073
      %v4468 = vunpack.c.l.b16 %v1074
      %v4469 = vunpack.c.h.b16 %v1074
      %v4470 = vunpack.c.l.b16 %v1075
      %v4471 = vunpack.c.l.b16 %v1076
      %v4472 = vunpack.c.h.b16 %v1076
      %v4473 = vunpack.c.l.b16 %v1077
      %v4474 = vunpack.c.l.b16 %v1078
      %v4475 = vunpack.c.h.b16 %v1078
      %v4476 = vunpack.c.l.b16 %v1079
      %v4477 = vunpack.c.l.b16 %v1080
      %v4478 = vunpack.c.h.b16 %v1080
      %v4479 = vunpack.c.l.b16 %v1081
      %v4480 = vunpack.c.l.b16 %v1082
      %v4481 = vunpack.c.h.b16 %v1082
      %v4482 = vunpack.c.l.b16 %v1083
      %v4483 = vunpack.c.l.b16 %v1084
      %v4484 = vunpack.c.h.b16 %v1084
      %v4485 = vunpack.c.l.b16 %v1085
      %v4486 = vunpack.c.l.b16 %v1086
      %v4487 = vunpack.c.h.b16 %v1086
      %v4488 = vunpack.c.l.b16 %v1087
      %v4489 = vunpack.c.l.b16 %v1088
      %v4490 = vunpack.c.h.b16 %v1088
      %v4491 = vunpack.c.l.b16 %v1089
      %v4492 = vunpack.c.l.b16 %v1090
      %v4493 = vunpack.c.h.b16 %v1090
      %v4494 = vunpack.c.l.b16 %v1091
      %v4495 = vunpack.c.l.b16 %v1092
      %v4496 = vunpack.c.h.b16 %v1092
      %v4497 = vunpack.c.l.b16 %v1093
      %v4498 = vunpack.c.l.b16 %v1094
      %v4499 = vunpack.c.h.b16 %v1094
      %v4500 = vunpack.c.l.b16 %v1095
      %v4501 = vunpack.c.l.b16 %v1096
      %v4502 = vunpack.c.h.b16 %v1096
      %v4503 = vunpack.c.l.b16 %v1097
      %v4504 = vunpack.c.l.b16 %v1098
      %v4505 = vunpack.c.h.b16 %v1098
      %v4506 = vunpack.c.l.b16 %v1099
      %v4507 = vunpack.c.l.b16 %v1100
      %v4508 = vunpack.c.h.b16 %v1100
      %v4509 = vunpack.c.l.b16 %v1101
      %v4510 = vunpack.c.l.b16 %v1102
      %v4511 = vunpack.c.h.b16 %v1102
      %v4512 = vunpack.c.l.b16 %v1103
      %v4513 = vunpack.c.l.b16 %v1104
      %v4514 = vunpack.c.h.b16 %v1104
      %v4515 = vunpack.c.l.b16 %v1105
      %v4516 = vunpack.c.l.b16 %v1106
      %v4517 = vunpack.c.h.b16 %v1106
      %v4518 = vunpack.c.l.b16 %v1107
      %v4519 = vunpack.c.l.b16 %v1108
      %v4520 = vunpack.c.h.b16 %v1108
      %v4521 = vunpack.c.l.b16 %v1109
      %v4522 = vunpack.c.l.b16 %v1110
      %v4523 = vunpack.c.h.b16 %v1110
      %v4524 = vunpack.c.l.b16 %v1111
      %v4525 = vunpack.c.l.b16 %v1112
      %v4526 = vunpack.c.h.b16 %v1112
      %v4527 = vunpack.c.l.b16 %v1113
      %v4528 = vunpack.c.l.b16 %v1114
      %v4529 = vunpack.c.h.b16 %v1114
      %v4530 = vunpack.c.l.b16 %v1115
      %v4531 = vunpack.c.l.b16 %v1116
      %v4532 = vunpack.c.h.b16 %v1116
      %v4533 = vunpack.c.l.b16 %v1117
      %v4534 = vunpack.c.l.b16 %v1118
      %v4535 = vunpack.c.h.b16 %v1118
      %v4536 = vunpack.c.l.b16 %v1119
      %v4537 = vunpack.c.l.b16 %v1120
      %v4538 = vunpack.c.h.b16 %v1120
      %v4539 = vunpack.c.l.b16 %v1121
      %v4540 = vunpack.c.l.b16 %v1122
      %v4541 = vunpack.c.h.b16 %v1122
      %v4542 = vunpack.c.l.b16 %v1123
      %v4543 = vunpack.c.l.b16 %v1124
      %v4544 = vunpack.c.h.b16 %v1124
      %v4545 = vunpack.c.l.b16 %v1125
      %v4546 = vunpack.c.l.b16 %v1126
      %v4547 = vunpack.c.h.b16 %v1126
      %v4548 = vunpack.c.l.b16 %v1127
      %v4549 = vunpack.c.l.b16 %v1128
      %v4550 = vunpack.c.h.b16 %v1128
      %v4551 = vunpack.c.l.b16 %v1129
      %v4552 = vunpack.c.l.b16 %v1130
      %v4553 = vunpack.c.h.b16 %v1130
      %v4554 = vunpack.c.l.b16 %v1131
      %v4555 = vunpack.c.l.b16 %v1132
      %v4556 = vunpack.c.h.b16 %v1132
      %v4557 = vunpack.c.l.b16 %v1133
      %v4558 = vunpack.c.l.b16 %v1134
      %v4559 = vunpack.c.h.b16 %v1134
      %v4560 = vunpack.c.l.b16 %v1135
      %v4561 = vunpack.c.l.b16 %v1136
      %v4562 = vunpack.c.h.b16 %v1136
      %v4563 = vunpack.c.l.b16 %v1137
      %v4564 = vunpack.c.l.b16 %v1138
      %v4565 = vunpack.c.h.b16 %v1138
      %v4566 = vunpack.c.l.b16 %v1139
      %v4567 = vunpack.c.l.b16 %v1140
      %v4568 = vunpack.c.h.b16 %v1140
      %v4569 = vunpack.c.l.b16 %v1141
      %v4570 = vunpack.c.l.b16 %v1142
      %v4571 = vunpack.c.h.b16 %v1142
      %v4572 = vunpack.c.l.b16 %v1143
      %v4573 = vunpack.c.l.b16 %v1144
      %v4574 = vunpack.c.h.b16 %v1144
      %v4575 = vunpack.c.l.b16 %v1145
      %v4576 = vunpack.c.l.b16 %v1146
      %v4577 = vunpack.c.h.b16 %v1146
      %v4578 = vunpack.c.l.b16 %v1147
      %v4579 = vunpack.c.l.b16 %v1148
      %v4580 = vunpack.c.h.b16 %v1148
      %v4581 = vunpack.c.l.b16 %v1149
      %v4582 = vunpack.c.l.b16 %v1150
      %v4583 = vunpack.c.h.b16 %v1150
      %v4584 = vunpack.c.l.b16 %v1151
      %v4585 = vunpack.c.l.b16 %v1152
      %v4586 = vunpack.c.h.b16 %v1152
      %v4587 = vunpack.c.l.b16 %v1153
      %v4588 = vunpack.c.l.b16 %v1154
      %v4589 = vunpack.c.h.b16 %v1154
      %v4590 = vunpack.c.l.b16 %v1155
      %v4591 = vunpack.c.l.b16 %v1156
      %v4592 = vunpack.c.h.b16 %v1156
      %v4593 = vunpack.c.l.b16 %v1157
      %v4594 = vunpack.c.l.b16 %v1158
      %v4595 = vunpack.c.h.b16 %v1158
      %v4596 = vunpack.c.l.b16 %v1159
      %v4597 = vunpack.c.l.b16 %v1160
      %v4598 = vunpack.c.h.b16 %v1160
      %v4599 = vunpack.c.l.b16 %v1161
      %v4600 = vunpack.c.l.b16 %v1162
      %v4601 = vunpack.c.h.b16 %v1162
      %v4602 = vunpack.c.l.b16 %v1163
      %v4603 = vunpack.c.l.b16 %v1164
      %v4604 = vunpack.c.h.b16 %v1164
      %v4605 = vunpack.c.l.b16 %v1165
      %v4606 = vunpack.c.l.b16 %v1166
      %v4607 = vunpack.c.h.b16 %v1166
      %v4608 = vunpack.c.l.b16 %v1167
      %v4609 = vunpack.c.l.b16 %v1168
      %v4610 = vunpack.c.h.b16 %v1168
      %v4611 = vunpack.c.l.b16 %v1169
      %v4612 = vunpack.c.l.b16 %v1170
      %v4613 = vunpack.c.h.b16 %v1170
      %v4614 = vunpack.c.l.b16 %v1171
      %v4615 = vunpack.c.l.b16 %v1172
      %v4616 = vunpack.c.h.b16 %v1172
      %v4617 = vunpack.c.l.b16 %v1173
      %v4618 = vunpack.c.l.b16 %v1174
      %v4619 = vunpack.c.h.b16 %v1174
      %v4620 = vunpack.c.l.b16 %v1175
      %v4621 = vunpack.c.l.b16 %v1176
      %v4622 = vunpack.c.h.b16 %v1176
      %v4623 = vunpack.c.l.b16 %v1177
      %v4624 = vunpack.c.l.b16 %v1178
      %v4625 = vunpack.c.h.b16 %v1178
      %v4626 = vunpack.c.l.b16 %v1179
      %v4627 = vunpack.c.l.b16 %v1180
      %v4628 = vunpack.c.h.b16 %v1180
      %v4629 = vunpack.c.l.b16 %v1181
      %v4630 = vunpack.c.l.b16 %v1182
      %v4631 = vunpack.c.h.b16 %v1182
      %v4632 = vunpack.c.l.b16 %v1183
      %v4633 = vunpack.c.l.b16 %v1184
      %v4634 = vunpack.c.h.b16 %v1184
      %v4635 = vunpack.c.l.b16 %v1185
      %v4636 = vunpack.c.l.b16 %v1186
      %v4637 = vunpack.c.h.b16 %v1186
      %v4638 = vunpack.c.l.b16 %v1187
      %v4639 = vunpack.c.l.b16 %v1188
      %v4640 = vunpack.c.h.b16 %v1188
      %v4641 = vunpack.c.l.b16 %v1189
      %v4642 = vunpack.c.l.b16 %v1190
      %v4643 = vunpack.c.h.b16 %v1190
      %v4644 = vunpack.c.l.b16 %v1191
      %v4645 = vunpack.c.l.b16 %v1192
      %v4646 = vunpack.c.h.b16 %v1192
      %v4647 = vunpack.c.l.b16 %v1193
      %v4648 = vunpack.c.l.b16 %v1194
      %v4649 = vunpack.c.h.b16 %v1194
      %v4650 = vunpack.c.l.b16 %v1195
      %v4651 = vunpack.c.l.b16 %v1196
      %v4652 = vunpack.c.h.b16 %v1196
      %v4653 = vunpack.c.l.b16 %v1197
      %v4654 = vunpack.c.l.b16 %v1198
      %v4655 = vunpack.c.h.b16 %v1198
      %v4656 = vunpack.c.l.b16 %v1199
      %v4657 = vunpack.c.l.b16 %v1200
      %v4658 = vunpack.c.h.b16 %v1200
      %v4659 = vunpack.c.l.b16 %v1201
      %v4660 = vunpack.c.l.b16 %v1202
      %v4661 = vunpack.c.h.b16 %v1202
      %v4662 = vunpack.c.l.b16 %v1203
      %v4663 = vunpack.c.l.b16 %v1204
      %v4664 = vunpack.c.h.b16 %v1204
      %v4665 = vunpack.c.l.b16 %v1205
      %v4666 = vunpack.c.l.b16 %v1206
      %v4667 = vunpack.c.h.b16 %v1206
      %v4668 = vunpack.c.l.b16 %v1207
      %v4669 = vunpack.c.l.b16 %v1208
      %v4670 = vunpack.c.h.b16 %v1208
      %v4671 = vunpack.c.l.b16 %v1209
      %v4672 = vunpack.c.l.b16 %v1210
      %v4673 = vunpack.c.h.b16 %v1210
      %v4674 = vunpack.c.l.b16 %v1211
      %v4675 = vunpack.c.l.b16 %v1212
      %v4676 = vunpack.c.h.b16 %v1212
      %v4677 = vunpack.c.l.b16 %v1213
      %v4678 = vunpack.c.l.b16 %v1214
      %v4679 = vunpack.c.h.b16 %v1214
      %v4680 = vunpack.c.l.b16 %v1215
      %v4681 = vunpack.c.l.b16 %v1216
      %v4682 = vunpack.c.h.b16 %v1216
      %v4683 = vunpack.c.l.b16 %v1217
      %v4684 = vunpack.c.l.b16 %v1218
      %v4685 = vunpack.c.h.b16 %v1218
      %v4686 = vunpack.c.l.b16 %v1219
      %v4687 = vunpack.c.l.b16 %v1220
      %v4688 = vunpack.c.h.b16 %v1220
      %v4689 = vunpack.c.l.b16 %v1221
      %v4690 = vunpack.c.l.b16 %v1222
      %v4691 = vunpack.c.h.b16 %v1222
      %v4692 = vunpack.c.l.b16 %v1223
      %v4693 = vunpack.c.l.b16 %v1224
      %v4694 = vunpack.c.h.b16 %v1224
      %v4695 = vunpack.c.l.b16 %v1225
      %v4696 = vunpack.c.l.b16 %v1226
      %v4697 = vunpack.c.h.b16 %v1226
      %v4698 = vunpack.c.l.b16 %v1227
      %v4699 = vunpack.c.l.b16 %v1228
      %v4700 = vunpack.c.h.b16 %v1228
      %v4701 = vunpack.c.l.b16 %v1229
      %v4702 = vunpack.c.l.b16 %v1230
      %v4703 = vunpack.c.h.b16 %v1230
      %v4704 = vunpack.c.l.b16 %v1231
      %v4705 = vunpack.c.l.b16 %v1232
      %v4706 = vunpack.c.h.b16 %v1232
      %v4707 = vunpack.c.l.b16 %v1233
      %v4708 = vunpack.c.l.b16 %v1234
      %v4709 = vunpack.c.h.b16 %v1234
      %v4710 = vunpack.c.l.b16 %v1235
      %v4711 = vunpack.c.l.b16 %v1236
      %v4712 = vunpack.c.h.b16 %v1236
      %v4713 = vunpack.c.l.b16 %v1237
      %v4714 = vunpack.c.l.b16 %v1238
      %v4715 = vunpack.c.h.b16 %v1238
      %v4716 = vunpack.c.l.b16 %v1239
      %v4717 = vunpack.c.l.b16 %v1240
      %v4718 = vunpack.c.h.b16 %v1240
      %v4719 = vunpack.c.l.b16 %v1241
      %v4720 = vunpack.c.l.b16 %v1242
      %v4721 = vunpack.c.h.b16 %v1242
      %v4722 = vunpack.c.l.b16 %v1243
      %v4723 = vunpack.c.l.b16 %v1244
      %v4724 = vunpack.c.h.b16 %v1244
      %v4725 = vunpack.c.l.b16 %v1245
      %v4726 = vunpack.c.l.b16 %v1246
      %v4727 = vunpack.c.h.b16 %v1246
      %v4728 = vunpack.c.l.b16 %v1247
      %v4729 = vunpack.c.l.b16 %v1248
      %v4730 = vunpack.c.h.b16 %v1248
      %v4731 = vunpack.c.l.b16 %v1249
      %v4732 = vunpack.c.l.b16 %v1250
      %v4733 = vunpack.c.h.b16 %v1250
      %v4734 = vunpack.c.l.b16 %v1251
      %v4735 = vunpack.c.l.b16 %v1252
      %v4736 = vunpack.c.h.b16 %v1252
      %v4737 = vunpack.c.l.b16 %v1253
      %v4738 = vunpack.c.l.b16 %v1254
      %v4739 = vunpack.c.h.b16 %v1254
      %v4740 = vunpack.c.l.b16 %v1255
      %v4741 = vunpack.c.l.b16 %v1256
      %v4742 = vunpack.c.h.b16 %v1256
      %v4743 = vunpack.c.l.b16 %v1257
      %v4744 = vunpack.c.l.b16 %v1258
      %v4745 = vunpack.c.h.b16 %v1258
      %v4746 = vunpack.c.l.b16 %v1259
      %v4747 = vunpack.c.l.b16 %v1260
      %v4748 = vunpack.c.h.b16 %v1260
      %v4749 = vunpack.c.l.b16 %v1261
      %v4750 = vunpack.c.l.b16 %v1262
      %v4751 = vunpack.c.h.b16 %v1262
      %v4752 = vunpack.c.l.b16 %v1263
      %v4753 = vunpack.c.l.b16 %v1264
      %v4754 = vunpack.c.h.b16 %v1264
      %v4755 = vunpack.c.l.b16 %v1265
      %v4756 = vunpack.c.l.b16 %v1266
      %v4757 = vunpack.c.h.b16 %v1266
      %v4758 = vunpack.c.l.b16 %v1267
      %v4759 = vunpack.c.l.b16 %v1268
      %v4760 = vunpack.c.h.b16 %v1268
      %v4761 = vunpack.c.l.b16 %v1269
      %v4762 = vunpack.c.l.b16 %v1270
      %v4763 = vunpack.c.h.b16 %v1270
      %v4764 = vunpack.c.l.b16 %v1271
      %v4765 = vunpack.c.l.b16 %v1272
      %v4766 = vunpack.c.h.b16 %v1272
      %v4767 = vunpack.c.l.b16 %v1273
      %v4768 = vunpack.c.l.b16 %v1274
      %v4769 = vunpack.c.h.b16 %v1274
      %v4770 = vunpack.c.l.b16 %v1275
      %v4771 = vunpack.c.l.b16 %v1276
      %v4772 = vunpack.c.h.b16 %v1276
      %v4773 = vunpack.c.l.b16 %v1277
      %v4774 = vunpack.c.l.b16 %v1278
      %v4775 = vunpack.c.h.b16 %v1278
      %v4776 = vunpack.c.l.b16 %v1279
      %v4777 = vunpack.c.l.b16 %v1280
      %v4778 = vunpack.c.h.b16 %v1280
      %v4779 = vunpack.c.l.b16 %v1281
      %v4780 = vunpack.c.l.b16 %v1282
      %v4781 = vunpack.c.h.b16 %v1282
      %v4782 = vunpack.c.l.b16 %v1283
      %v4783 = vunpack.c.l.b16 %v1284
      %v4784 = vunpack.c.h.b16 %v1284
      %v4785 = vunpack.c.l.b16 %v1285
      %v4786 = vunpack.c.l.b16 %v1286
      %v4787 = vunpack.c.h.b16 %v1286
      %v4788 = vunpack.c.l.b16 %v1287
      %v4789 = vunpack.c.l.b16 %v1288
      %v4790 = vunpack.c.h.b16 %v1288
      %v4791 = vunpack.c.l.b16 %v1289
      %v4792 = vunpack.c.l.b16 %v1290
      %v4793 = vunpack.c.h.b16 %v1290
      %v4794 = vunpack.c.l.b16 %v1291
      %v4795 = vunpack.c.l.b16 %v1292
      %v4796 = vunpack.c.h.b16 %v1292
      %v4797 = vunpack.c.l.b16 %v1293
      %v4798 = vunpack.c.l.b16 %v1294
      %v4799 = vunpack.c.h.b16 %v1294
      %v4800 = vunpack.c.l.b16 %v1295
      %v4801 = vunpack.c.l.b16 %v1296
      %v4802 = vunpack.c.h.b16 %v1296
      %v4803 = vunpack.c.l.b16 %v1297
      %v4804 = vunpack.c.l.b16 %v1298
      %v4805 = vunpack.c.h.b16 %v1298
      %v4806 = vunpack.c.l.b16 %v1299
      %v4807 = vunpack.c.l.b16 %v1300
      %v4808 = vunpack.c.h.b16 %v1300
      %v4809 = vunpack.c.l.b16 %v1301
      %v4810 = vunpack.c.l.b16 %v1302
      %v4811 = vunpack.c.h.b16 %v1302
      %v4812 = vunpack.c.l.b16 %v1303
      %v4813 = vunpack.c.l.b16 %v1304
      %v4814 = vunpack.c.h.b16 %v1304
      %v4815 = vunpack.c.l.b16 %v1305
      %v4816 = vunpack.c.l.b16 %v1306
      %v4817 = vunpack.c.h.b16 %v1306
      %v4818 = vunpack.c.l.b16 %v1307
      %v4819 = vunpack.c.l.b16 %v1308
      %v4820 = vunpack.c.h.b16 %v1308
      %v4821 = vunpack.c.l.b16 %v1309
      %v4822 = vunpack.c.l.b16 %v1310
      %v4823 = vunpack.c.h.b16 %v1310
      %v4824 = vunpack.c.l.b16 %v1311
      %v4825 = vunpack.c.l.b16 %v1312
      %v4826 = vunpack.c.h.b16 %v1312
      %v4827 = vunpack.c.l.b16 %v1313
      %v4828 = vunpack.c.l.b16 %v1314
      %v4829 = vunpack.c.h.b16 %v1314
      %v4830 = vunpack.c.l.b16 %v1315
      %v4831 = vunpack.c.l.b16 %v1316
      %v4832 = vunpack.c.h.b16 %v1316
      %v4833 = vunpack.c.l.b16 %v1317
      %v4834 = vunpack.c.l.b16 %v1318
      %v4835 = vunpack.c.h.b16 %v1318
      %v4836 = vunpack.c.l.b16 %v1319
      %v4837 = vunpack.c.l.b16 %v1320
      %v4838 = vunpack.c.h.b16 %v1320
      %v4839 = vunpack.c.l.b16 %v1321
      %v4840 = vunpack.c.l.b16 %v1322
      %v4841 = vunpack.c.h.b16 %v1322
      %v4842 = vunpack.c.l.b16 %v1323
      %v4843 = vunpack.c.l.b16 %v1324
      %v4844 = vunpack.c.h.b16 %v1324
      %v4845 = vunpack.c.l.b16 %v1325
      %v4846 = vunpack.c.l.b16 %v1326
      %v4847 = vunpack.c.h.b16 %v1326
      %v4848 = vunpack.c.l.b16 %v1327
      %v4849 = vunpack.c.l.b16 %v1328
      %v4850 = vunpack.c.h.b16 %v1328
      %v4851 = vunpack.c.l.b16 %v1329
      %v4852 = vunpack.c.l.b16 %v1330
      %v4853 = vunpack.c.h.b16 %v1330
      %v4854 = vunpack.c.l.b16 %v1331
      %v4855 = vunpack.c.l.b16 %v1332
      %v4856 = vunpack.c.h.b16 %v1332
      %v4857 = vunpack.c.l.b16 %v1333
      %v4858 = vunpack.c.l.b16 %v1334
      %v4859 = vunpack.c.h.b16 %v1334
      %v4860 = vunpack.c.l.b16 %v1335
      %v4861 = vunpack.c.l.b16 %v1336
      %v4862 = vunpack.c.h.b16 %v1336
      %v4863 = vunpack.c.l.b16 %v1337
      %v4864 = vunpack.c.l.b16 %v1338
      %v4865 = vunpack.c.h.b16 %v1338
      %v4866 = vunpack.c.l.b16 %v1339
      %v4867 = vunpack.c.l.b16 %v1340
      %v4868 = vunpack.c.h.b16 %v1340
      %v4869 = vunpack.c.l.b16 %v1341
      %v4870 = vunpack.c.l.b16 %v1342
      %v4871 = vunpack.c.h.b16 %v1342
      %v4872 = vunpack.c.l.b16 %v1343
      %v4873 = vunpack.c.l.b16 %v1344
      %v4874 = vunpack.c.h.b16 %v1344
      %v4875 = vunpack.c.l.b16 %v1345
      %v4876 = vunpack.c.l.b16 %v1346
      %v4877 = vunpack.c.h.b16 %v1346
      %v4878 = vunpack.c.l.b16 %v1347
      %v4879 = vunpack.c.l.b16 %v1348
      %v4880 = vunpack.c.h.b16 %v1348
      %v4881 = vunpack.c.l.b16 %v1349
      %v4882 = vunpack.c.l.b16 %v1350
      %v4883 = vunpack.c.h.b16 %v1350
      %v4884 = vunpack.c.l.b16 %v1351
      %v4885 = vunpack.c.l.b16 %v1352
      %v4886 = vunpack.c.h.b16 %v1352
      %v4887 = vunpack.c.l.b16 %v1353
      %v4888 = vunpack.c.l.b16 %v1354
      %v4889 = vunpack.c.h.b16 %v1354
      %v4890 = vunpack.c.l.b16 %v1355
      %v4891 = vunpack.c.l.b16 %v1356
      %v4892 = vunpack.c.h.b16 %v1356
      %v4893 = vunpack.c.l.b16 %v1357
      %v4894 = vunpack.c.l.b16 %v1358
      %v4895 = vunpack.c.h.b16 %v1358
      %v4896 = vunpack.c.l.b16 %v1359
      %v4897 = vunpack.c.l.b16 %v1360
      %v4898 = vunpack.c.h.b16 %v1360
      %v4899 = vunpack.c.l.b16 %v1361
      %v4900 = vunpack.c.l.b16 %v1362
      %v4901 = vunpack.c.h.b16 %v1362
      %v4902 = vunpack.c.l.b16 %v1363
      %v4903 = vunpack.c.l.b16 %v1364
      %v4904 = vunpack.c.h.b16 %v1364
      %v4905 = vunpack.c.l.b16 %v1365
      %v4906 = vunpack.c.l.b16 %v1366
      %v4907 = vunpack.c.h.b16 %v1366
      %v4908 = vunpack.c.l.b16 %v1367
      %v4909 = vunpack.c.l.b16 %v1368
      %v4910 = vunpack.c.h.b16 %v1368
      %v4911 = vunpack.c.l.b16 %v1369
      %v4912 = vunpack.c.l.b16 %v1370
      %v4913 = vunpack.c.h.b16 %v1370
      %v4914 = vunpack.c.l.b16 %v1371
      %v4915 = vunpack.c.l.b16 %v1372
      %v4916 = vunpack.c.h.b16 %v1372
      %v4917 = vunpack.c.l.b16 %v1373
      %v4918 = vunpack.c.l.b16 %v1374
      %v4919 = vunpack.c.h.b16 %v1374
      %v4920 = vunpack.c.l.b16 %v1375
      %v4921 = vunpack.c.l.b16 %v1376
      %v4922 = vunpack.c.h.b16 %v1376
      %v4923 = vunpack.c.l.b16 %v1377
      %v4924 = vunpack.c.l.b16 %v1378
      %v4925 = vunpack.c.h.b16 %v1378
      %v4926 = vunpack.c.l.b16 %v1379
      %v4927 = vunpack.c.l.b16 %v1380
      %v4928 = vunpack.c.h.b16 %v1380
      %v4929 = vunpack.c.l.b16 %v1381
      %v4930 = vunpack.c.l.b16 %v1382
      %v4931 = vunpack.c.h.b16 %v1382
      %v4932 = vunpack.c.l.b16 %v1383
      %v4933 = vunpack.c.l.b16 %v1384
      %v4934 = vunpack.c.h.b16 %v1384
      %v4935 = vunpack.c.l.b16 %v1385
      %v4936 = vunpack.c.l.b16 %v1386
      %v4937 = vunpack.c.h.b16 %v1386
      %v4938 = vunpack.c.l.b16 %v1387
      %v4939 = vunpack.c.l.b16 %v1388
      %v4940 = vunpack.c.h.b16 %v1388
      %v4941 = vunpack.c.l.b16 %v1389
      %v4942 = vunpack.c.l.b16 %v1390
      %v4943 = vunpack.c.h.b16 %v1390
      %v4944 = vunpack.c.l.b16 %v1391
      %v4945 = vunpack.c.l.b16 %v1392
      %v4946 = vunpack.c.h.b16 %v1392
      %v4947 = vunpack.c.l.b16 %v1393
      %v4948 = vunpack.c.l.b16 %v1394
      %v4949 = vunpack.c.h.b16 %v1394
      %v4950 = vunpack.c.l.b16 %v1395
      %v4951 = vunpack.c.l.b16 %v1396
      %v4952 = vunpack.c.h.b16 %v1396
      %v4953 = vunpack.c.l.b16 %v1397
      %v4954 = vunpack.c.l.b16 %v1398
      %v4955 = vunpack.c.h.b16 %v1398
      %v4956 = vunpack.c.l.b16 %v1399
      %v4957 = vunpack.c.l.b16 %v1400
      %v4958 = vunpack.c.h.b16 %v1400
      %v4959 = vunpack.c.l.b16 %v1401
      %v4960 = vunpack.c.l.b16 %v1402
      %v4961 = vunpack.c.h.b16 %v1402
      %v4962 = vunpack.c.l.b16 %v1403
      %v4963 = vunpack.c.l.b16 %v1404
      %v4964 = vunpack.c.h.b16 %v1404
      %v4965 = vunpack.c.l.b16 %v1405
      %v4966 = vunpack.c.l.b16 %v1406
      %v4967 = vunpack.c.h.b16 %v1406
      %v4968 = vunpack.c.l.b16 %v1407
      %v4969 = vunpack.c.l.b16 %v1408
      %v4970 = vunpack.c.h.b16 %v1408
      %v4971 = vunpack.c.l.b16 %v1409
      %v4972 = vunpack.c.l.b16 %v1410
      %v4973 = vunpack.c.h.b16 %v1410
      %v4974 = vunpack.c.l.b16 %v1411
      %v4975 = vunpack.c.l.b16 %v1412
      %v4976 = vunpack.c.h.b16 %v1412
      %v4977 = vunpack.c.l.b16 %v1413
      %v4978 = vunpack.c.l.b16 %v1414
      %v4979 = vunpack.c.h.b16 %v1414
      %v4980 = vunpack.c.l.b16 %v1415
      %v4981 = vunpack.c.l.b16 %v1416
      %v4982 = vunpack.c.h.b16 %v1416
      %v4983 = vunpack.c.l.b16 %v1417
      %v4984 = vunpack.c.l.b16 %v1418
      %v4985 = vunpack.c.h.b16 %v1418
      %v4986 = vunpack.c.l.b16 %v1419
      %v4987 = vunpack.c.l.b16 %v1420
      %v4988 = vunpack.c.h.b16 %v1420
      %v4989 = vunpack.c.l.b16 %v1421
      %v4990 = vunpack.c.l.b16 %v1422
      %v4991 = vunpack.c.h.b16 %v1422
      %v4992 = vunpack.c.l.b16 %v1423
      %v4993 = vunpack.c.l.b16 %v1424
      %v4994 = vunpack.c.h.b16 %v1424
      %v4995 = vunpack.c.l.b16 %v1425
      %v4996 = vunpack.c.l.b16 %v1426
      %v4997 = vunpack.c.h.b16 %v1426
      %v4998 = vunpack.c.l.b16 %v1427
      %v4999 = vunpack.c.l.b16 %v1428
      %v5000 = vunpack.c.h.b16 %v1428
      %v5001 = vunpack.c.l.b16 %v1429
      %v5002 = vunpack.c.l.b16 %v1430
      %v5003 = vunpack.c.h.b16 %v1430
      %v5004 = vunpack.c.l.b16 %v1431
      %v5005 = vunpack.c.l.b16 %v1432
      %v5006 = vunpack.c.h.b16 %v1432
      %v5007 = vunpack.c.l.b16 %v1433
      %v5008 = vunpack.c.l.b16 %v1434
      %v5009 = vunpack.c.h.b16 %v1434
      %v5010 = vunpack.c.l.b16 %v1435
      %v5011 = vunpack.c.l.b16 %v1436
      %v5012 = vunpack.c.h.b16 %v1436
      %v5013 = vunpack.c.l.b16 %v1437
      %v5014 = vunpack.c.l.b16 %v1438
      %v5015 = vunpack.c.h.b16 %v1438
      %v5016 = vunpack.c.l.b16 %v1439
      %v5017 = vunpack.c.l.b16 %v1440
      %v5018 = vunpack.c.h.b16 %v1440
      %v5019 = vunpack.c.l.b16 %v1441
      %v5020 = vunpack.c.l.b16 %v1442
      %v5021 = vunpack.c.h.b16 %v1442
      %v5022 = vunpack.c.l.b16 %v1443
      %v5023 = vunpack.c.l.b16 %v1444
      %v5024 = vunpack.c.h.b16 %v1444
      %v5025 = vunpack.c.l.b16 %v1445
      %v5026 = vunpack.c.l.b16 %v1446
      %v5027 = vunpack.c.h.b16 %v1446
      %v5028 = vunpack.c.l.b16 %v1447
      %v5029 = vunpack.c.l.b16 %v1448
      %v5030 = vunpack.c.h.b16 %v1448
      %v5031 = vunpack.c.l.b16 %v1449
      %v5032 = vunpack.c.l.b16 %v1450
      %v5033 = vunpack.c.h.b16 %v1450
      %v5034 = vunpack.c.l.b16 %v1451
      %v5035 = vunpack.c.l.b16 %v1452
      %v5036 = vunpack.c.h.b16 %v1452
      %v5037 = vunpack.c.l.b16 %v1453
      %v5038 = vunpack.c.l.b16 %v1454
      %v5039 = vunpack.c.h.b16 %v1454
      %v5040 = vunpack.c.l.b16 %v1455
      %v5041 = vunpack.c.l.b16 %v1456
      %v5042 = vunpack.c.h.b16 %v1456
      %v5043 = vunpack.c.l.b16 %v1457
      %v5044 = vunpack.c.l.b16 %v1458
      %v5045 = vunpack.c.h.b16 %v1458
      %v5046 = vunpack.c.l.b16 %v1459
      %v5047 = vunpack.c.l.b16 %v1460
      %v5048 = vunpack.c.h.b16 %v1460
      %v5049 = vunpack.c.l.b16 %v1461
      %v5050 = vunpack.c.l.b16 %v1462
      %v5051 = vunpack.c.h.b16 %v1462
      %v5052 = vunpack.c.l.b16 %v1463
      %v5053 = vunpack.c.l.b16 %v1464
      %v5054 = vunpack.c.h.b16 %v1464
      %v5055 = vunpack.c.l.b16 %v1465
      %v5056 = vunpack.c.l.b16 %v1466
      %v5057 = vunpack.c.h.b16 %v1466
      %v5058 = vunpack.c.l.b16 %v1467
      %v5059 = vunpack.c.l.b16 %v1468
      %v5060 = vunpack.c.h.b16 %v1468
      %v5061 = vunpack.c.l.b16 %v1469
      %v5062 = vunpack.c.l.b16 %v1470
      %v5063 = vunpack.c.h.b16 %v1470
      %v5064 = vunpack.c.l.b16 %v1471
      %v5065 = vunpack.c.l.b16 %v1472
      %v5066 = vunpack.c.h.b16 %v1472
      %v5067 = vunpack.c.l.b16 %v1473
      %v5068 = vunpack.c.l.b16 %v1474
      %v5069 = vunpack.c.h.b16 %v1474
      %v5070 = vunpack.c.l.b16 %v1475
      %v5071 = vunpack.c.l.b16 %v1476
      %v5072 = vunpack.c.h.b16 %v1476
      %v5073 = vunpack.c.l.b16 %v1477
      %v5074 = vunpack.c.l.b16 %v1478
      %v5075 = vunpack.c.h.b16 %v1478
      %v5076 = vunpack.c.l.b16 %v1479
      %v5077 = vunpack.c.l.b16 %v1480
      %v5078 = vunpack.c.h.b16 %v1480
      %v5079 = vunpack.c.l.b16 %v1481
      %v5080 = vunpack.c.l.b16 %v1482
      %v5081 = vunpack.c.h.b16 %v1482
      %v5082 = vunpack.c.l.b16 %v1483
      %v5083 = vunpack.c.l.b16 %v1484
      %v5084 = vunpack.c.h.b16 %v1484
      %v5085 = vunpack.c.l.b16 %v1485
      %v5086 = vunpack.c.l.b16 %v1486
      %v5087 = vunpack.c.h.b16 %v1486
      %v5088 = vunpack.c.l.b16 %v1487
      %v5089 = vunpack.c.l.b16 %v1488
      %v5090 = vunpack.c.h.b16 %v1488
      %v5091 = vunpack.c.l.b16 %v1489
      %v5092 = vunpack.c.l.b16 %v1490
      %v5093 = vunpack.c.h.b16 %v1490
      %v5094 = vunpack.c.l.b16 %v1491
      %v5095 = vunpack.c.l.b16 %v1492
      %v5096 = vunpack.c.h.b16 %v1492
      %v5097 = vunpack.c.l.b16 %v1493
      %v5098 = vunpack.c.l.b16 %v1494
      %v5099 = vunpack.c.h.b16 %v1494
      %v5100 = vunpack.c.l.b16 %v1495
      %v5101 = vunpack.c.l.b16 %v1496
      %v5102 = vunpack.c.h.b16 %v1496
      %v5103 = vunpack.c.l.b16 %v1497
      %v5104 = vunpack.c.l.b16 %v1498
      %v5105 = vunpack.c.h.b16 %v1498
      %v5106 = vunpack.c.l.b16 %v1499
      %v5107 = vunpack.c.l.b16 %v1500
      %v5108 = vunpack.c.h.b16 %v1500
      %v5109 = vunpack.c.l.b16 %v1501
      %v5110 = vunpack.c.l.b16 %v1502
      %v5111 = vunpack.c.h.b16 %v1502
      %v5112 = vunpack.c.l.b16 %v1503
      %v5113 = vunpack.c.l.b16 %v1504
      %v5114 = vunpack.c.h.b16 %v1504
      %v5115 = vunpack.c.l.b16 %v1505
      %v5116 = vunpack.c.l.b16 %v1506
      %v5117 = vunpack.c.h.b16 %v1506
      %v5118 = vunpack.c.l.b16 %v1507
      %v5119 = vunpack.c.l.b16 %v1508
      %v5120 = vunpack.c.h.b16 %v1508
      %v5121 = vunpack.c.l.b16 %v1509
      %v5122 = vunpack.c.l.b16 %v1510
      %v5123 = vunpack.c.h.b16 %v1510
      %v5124 = vunpack.c.l.b16 %v1511
      %v5125 = vunpack.c.l.b16 %v1512
      %v5126 = vunpack.c.h.b16 %v1512
      %v5127 = vunpack.c.l.b16 %v1513
      %v5128 = vunpack.c.l.b16 %v1514
      %v5129 = vunpack.c.h.b16 %v1514
      %v5130 = vunpack.c.l.b16 %v1515
      %v5131 = vunpack.c.l.b16 %v1516
      %v5132 = vunpack.c.h.b16 %v1516
      %v5133 = vunpack.c.l.b16 %v1517
      %v5134 = vunpack.c.l.b16 %v1518
      %v5135 = vunpack.c.h.b16 %v1518
      %v5136 = vunpack.c.l.b16 %v1519
      %v5137 = vunpack.c.l.b16 %v1520
      %v5138 = vunpack.c.h.b16 %v1520
      %v5139 = vunpack.c.l.b16 %v1521
      %v5140 = vunpack.c.l.b16 %v1522
      %v5141 = vunpack.c.h.b16 %v1522
      %v5142 = vunpack.c.l.b16 %v1523
      %v5143 = vunpack.c.l.b16 %v1524
      %v5144 = vunpack.c.h.b16 %v1524
      %v5145 = vunpack.c.l.b16 %v1525
      %v5146 = vunpack.c.l.b16 %v1526
      %v5147 = vunpack.c.h.b16 %v1526
      %v5148 = vunpack.c.l.b16 %v1527
      %v5149 = vunpack.c.l.b16 %v1528
      %v5150 = vunpack.c.h.b16 %v1528
      %v5151 = vunpack.c.l.b16 %v1529
      %v5152 = vunpack.c.l.b16 %v1530
      %v5153 = vunpack.c.h.b16 %v1530
      %v5154 = vunpack.c.l.b16 %v1531
      %v5155 = vunpack.c.l.b16 %v1532
      %v5156 = vunpack.c.h.b16 %v1532
      %v5157 = vunpack.c.l.b16 %v1533
      %v5158 = vunpack.c.l.b16 %v1534
      %v5159 = vunpack.c.h.b16 %v1534
      %v5160 = vunpack.c.l.b16 %v1535
      %v5161 = vunpack.c.l.b16 %v1536
      %v5162 = vunpack.c.h.b16 %v1536
      %v5163 = vunpack.c.l.b16 %v1537
      %v5164 = vunpack.c.l.b16 %v1538
      %v5165 = vunpack.c.h.b16 %v1538
      %v5166 = vunpack.c.l.b16 %v1539
      %v5167 = vunpack.c.l.b16 %v1540
      %v5168 = vunpack.c.h.b16 %v1540
      %v5169 = vunpack.c.l.b16 %v1541
      %v5170 = vunpack.c.l.b16 %v1542
      %v5171 = vunpack.c.h.b16 %v1542
      %v5172 = vunpack.c.l.b16 %v1543
      %v5173 = vunpack.c.l.b16 %v1544
      %v5174 = vunpack.c.h.b16 %v1544
      %v5175 = vunpack.c.l.b16 %v1545
      %v5176 = vunpack.c.l.b16 %v1546
      %v5177 = vunpack.c.h.b16 %v1546
      %v5178 = vunpack.c.l.b16 %v1547
      %v5179 = vunpack.c.l.b16 %v1548
      %v5180 = vunpack.c.h.b16 %v1548
      %v5181 = vunpack.c.l.b16 %v1549
      %v5182 = vunpack.c.l.b16 %v1550
      %v5183 = vunpack.c.h.b16 %v1550
      %v5184 = vunpack.c.l.b16 %v1551
      %v5185 = vunpack.c.l.b16 %v1552
      %v5186 = vunpack.c.h.b16 %v1552
      %v5187 = vunpack.c.l.b16 %v1553
      %v5188 = vunpack.c.l.b16 %v1554
      %v5189 = vunpack.c.h.b16 %v1554
      %v5190 = vunpack.c.l.b16 %v1555
      %v5191 = vunpack.c.l.b16 %v1556
      %v5192 = vunpack.c.h.b16 %v1556
      %v5193 = vunpack.c.l.b16 %v1557
      %v5194 = vunpack.c.l.b16 %v1558
      %v5195 = vunpack.c.h.b16 %v1558
      %v5196 = vunpack.c.l.b16 %v1559
      %v5197 = vunpack.c.l.b16 %v1560
      %v5198 = vunpack.c.h.b16 %v1560
      %v5199 = vunpack.c.l.b16 %v1561
      %v5200 = vunpack.c.l.b16 %v1562
      %v5201 = vunpack.c.h.b16 %v1562
      %v5202 = vunpack.c.l.b16 %v1563
      %v5203 = vunpack.c.l.b16 %v1564
      %v5204 = vunpack.c.h.b16 %v1564
      %v5205 = vunpack.c.l.b16 %v1565
      %v5206 = vunpack.c.l.b16 %v1566
      %v5207 = vunpack.c.h.b16 %v1566
      %v5208 = vunpack.c.l.b16 %v1567
      %v5209 = vunpack.c.l.b16 %v1568
      %v5210 = vunpack.c.h.b16 %v1568
      %v5211 = vunpack.c.l.b16 %v1569
      %v5212 = vunpack.c.l.b16 %v1570
      %v5213 = vunpack.c.h.b16 %v1570
      %v5214 = vunpack.c.l.b16 %v1571
      %v5215 = vunpack.c.l.b16 %v1572
      %v5216 = vunpack.c.h.b16 %v1572
      %v5217 = vunpack.c.l.b16 %v1573
      %v5218 = vunpack.c.l.b16 %v1574
      %v5219 = vunpack.c.h.b16 %v1574
      %v5220 = vunpack.c.l.b16 %v1575
      %v5221 = vunpack.c.l.b16 %v1576
      %v5222 = vunpack.c.h.b16 %v1576
      %v5223 = vunpack.c.l.b16 %v1577
      %v5224 = vunpack.c.l.b16 %v1578
      %v5225 = vunpack.c.h.b16 %v1578
      %v5226 = vunpack.c.l.b16 %v1579
      %v5227 = vunpack.c.l.b16 %v1580
      %v5228 = vunpack.c.h.b16 %v1580
      %v5229 = vunpack.c.l.b16 %v1581
      %v5230 = vunpack.c.l.b16 %v1582
      %v5231 = vunpack.c.h.b16 %v1582
      %v5232 = vunpack.c.l.b16 %v1583
      %v5233 = vunpack.c.l.b16 %v1584
      %v5234 = vunpack.c.h.b16 %v1584
      %v5235 = vunpack.c.l.b16 %v1585
      %v5236 = vunpack.c.l.b16 %v1586
      %v5237 = vunpack.c.h.b16 %v1586
      %v5238 = vunpack.c.l.b16 %v1587
      %v5239 = vunpack.c.l.b16 %v1588
      %v5240 = vunpack.c.h.b16 %v1588
      %v5241 = vunpack.c.l.b16 %v1589
      %v5242 = vunpack.c.l.b16 %v1590
      %v5243 = vunpack.c.h.b16 %v1590
      %v5244 = vunpack.c.l.b16 %v1591
      %v5245 = vunpack.c.l.b16 %v1592
      %v5246 = vunpack.c.h.b16 %v1592
      %v5247 = vunpack.c.l.b16 %v1593
      %v5248 = vunpack.c.l.b16 %v1594
      %v5249 = vunpack.c.h.b16 %v1594
      %v5250 = vunpack.c.l.b16 %v1595
      %v5251 = vunpack.c.l.b16 %v1596
      %v5252 = vunpack.c.h.b16 %v1596
      %v5253 = vunpack.c.l.b16 %v1597
      %v5254 = vunpack.c.l.b16 %v1598
      %v5255 = vunpack.c.h.b16 %v1598
      %v5256 = vunpack.c.l.b16 %v1599
      %v5257 = vunpack.c.l.b16 %v1600
      %v5258 = vunpack.c.h.b16 %v1600
      %v5259 = vunpack.c.l.b16 %v1601
      %v5260 = vunpack.c.l.b16 %v1602
      %v5261 = vunpack.c.h.b16 %v1602
      %v5262 = vunpack.c.l.b16 %v1603
      %v5263 = vunpack.c.l.b16 %v1604
      %v5264 = vunpack.c.h.b16 %v1604
      %v5265 = vunpack.c.l.b16 %v1605
      %v5266 = vunpack.c.l.b16 %v1606
      %v5267 = vunpack.c.h.b16 %v1606
      %v5268 = vunpack.c.l.b16 %v1607
      %v5269 = vunpack.c.l.b16 %v1608
      %v5270 = vunpack.c.h.b16 %v1608
      %v5271 = vunpack.c.l.b16 %v1609
      %v5272 = vunpack.c.l.b16 %v1610
      %v5273 = vunpack.c.h.b16 %v1610
      %v5274 = vunpack.c.l.b16 %v1611
      %v5275 = vunpack.c.l.b16 %v1612
      %v5276 = vunpack.c.h.b16 %v1612
      %v5277 = vunpack.c.l.b16 %v1613
      %v5278 = vunpack.c.l.b16 %v1614
      %v5279 = vunpack.c.h.b16 %v1614
      %v5280 = vunpack.c.l.b16 %v1615
      %v5281 = vunpack.c.l.b16 %v1616
      %v5282 = vunpack.c.h.b16 %v1616
      %v5283 = vunpack.c.l.b16 %v1617
      %v5284 = vunpack.c.l.b16 %v1618
      %v5285 = vunpack.c.h.b16 %v1618
      %v5286 = vunpack.c.l.b16 %v1619
      %v5287 = vunpack.c.l.b16 %v1620
      %v5288 = vunpack.c.h.b16 %v1620
      %v5289 = vunpack.c.l.b16 %v1621
      %v5290 = vunpack.c.l.b16 %v1622
      %v5291 = vunpack.c.h.b16 %v1622
      %v5292 = vunpack.c.l.b16 %v1623
      %v5293 = vunpack.c.l.b16 %v1624
      %v5294 = vunpack.c.h.b16 %v1624
      %v5295 = vunpack.c.l.b16 %v1625
      %v5296 = vunpack.c.l.b16 %v1626
      %v5297 = vunpack.c.h.b16 %v1626
      %v5298 = vunpack.c.l.b16 %v1627
      %v5299 = vunpack.c.l.b16 %v1628
      %v5300 = vunpack.c.h.b16 %v1628
      %v5301 = vunpack.c.l.b16 %v1629
      %v5302 = vunpack.c.l.b16 %v1630
      %v5303 = vunpack.c.h.b16 %v1630
      %v5304 = vunpack.c.l.b16 %v1631
      %v5305 = vunpack.c.l.b16 %v1632
      %v5306 = vunpack.c.h.b16 %v1632
      %v5307 = vunpack.c.l.b16 %v1633
      %v5308 = vunpack.c.l.b16 %v1634
      %v5309 = vunpack.c.h.b16 %v1634
      %v5310 = vunpack.c.l.b16 %v1635
      %v5311 = vunpack.c.l.b16 %v1636
      %v5312 = vunpack.c.h.b16 %v1636
      %v5313 = vunpack.c.l.b16 %v1637
      %v5314 = vunpack.c.l.b16 %v1638
      %v5315 = vunpack.c.h.b16 %v1638
      %v5316 = vunpack.c.l.b16 %v1639
      %v5317 = vunpack.c.l.b16 %v1640
      %v5318 = vunpack.c.h.b16 %v1640
      %v5319 = vunpack.c.l.b16 %v1641
      %v5320 = vunpack.c.l.b16 %v1642
      %v5321 = vunpack.c.h.b16 %v1642
      %v5322 = vunpack.c.l.b16 %v1643
      %v5323 = vunpack.c.l.b16 %v1644
      %v5324 = vunpack.c.h.b16 %v1644
      %v5325 = vunpack.c.l.b16 %v1645
      %v5326 = vunpack.c.l.b16 %v1646
      %v5327 = vunpack.c.h.b16 %v1646
      %v5328 = vunpack.c.l.b16 %v1647
      %v5329 = vunpack.c.l.b16 %v1648
      %v5330 = vunpack.c.h.b16 %v1648
      %v5331 = vunpack.c.l.b16 %v1649
      %v5332 = vunpack.c.l.b16 %v1650
      %v5333 = vunpack.c.h.b16 %v1650
      %v5334 = vunpack.c.l.b16 %v1651
      %v5335 = vunpack.c.l.b16 %v1652
      %v5336 = vunpack.c.h.b16 %v1652
      %v5337 = vunpack.c.l.b16 %v1653
      %v5338 = vunpack.c.l.b16 %v1654
      %v5339 = vunpack.c.h.b16 %v1654
      %v5340 = vunpack.c.l.b16 %v1655
      %v5341 = vunpack.c.l.b16 %v1656
      %v5342 = vunpack.c.h.b16 %v1656
      %v5343 = vunpack.c.l.b16 %v1657
      %v5344 = vunpack.c.l.b16 %v1658
      %v5345 = vunpack.c.h.b16 %v1658
      %v5346 = vunpack.c.l.b16 %v1659
      %v5347 = vunpack.c.l.b16 %v1660
      %v5348 = vunpack.c.h.b16 %v1660
      %v5349 = vunpack.c.l.b16 %v1661
      %v5350 = vunpack.c.l.b16 %v1662
      %v5351 = vunpack.c.h.b16 %v1662
      %v5352 = vunpack.c.l.b16 %v1663
      %v5353 = vunpack.c.l.b16 %v1664
      %v5354 = vunpack.c.h.b16 %v1664
      %v5355 = vunpack.c.l.b16 %v1665
      %v5356 = vunpack.c.l.b16 %v1666
      %v5357 = vunpack.c.h.b16 %v1666
      %v5358 = vunpack.c.l.b16 %v1667
      %v5359 = vunpack.c.l.b16 %v1668
      %v5360 = vunpack.c.h.b16 %v1668
      %v5361 = vunpack.c.l.b16 %v1669
      %v5362 = vunpack.c.l.b16 %v1670
      %v5363 = vunpack.c.h.b16 %v1670
      %v5364 = vunpack.c.l.b16 %v1671
      %v5365 = vunpack.c.l.b16 %v1672
      %v5366 = vunpack.c.h.b16 %v1672
      %v5367 = vunpack.c.l.b16 %v1673
      %v5368 = vunpack.c.l.b16 %v1674
      %v5369 = vunpack.c.h.b16 %v1674
      %v5370 = vunpack.c.l.b16 %v1675
      %v5371 = vunpack.c.l.b16 %v1676
      %v5372 = vunpack.c.h.b16 %v1676
      %v5373 = vunpack.c.l.b16 %v1677
      %v5374 = vunpack.c.l.b16 %v1678
      %v5375 = vunpack.c.h.b16 %v1678
      %v5376 = vunpack.c.l.b16 %v1679
      %v5377 = vunpack.c.l.b16 %v1680
      %v5378 = vunpack.c.h.b16 %v1680
      %v5379 = vunpack.c.l.b16 %v1681
      %v5380 = vunpack.c.l.b16 %v1682
      %v5381 = vunpack.c.h.b16 %v1682
      %v5382 = vunpack.c.l.b16 %v1683
      %v5383 = vunpack.c.l.b16 %v1684
      %v5384 = vunpack.c.h.b16 %v1684
      %v5385 = vunpack.c.l.b16 %v1685
      %v5386 = vunpack.c.l.b16 %v1686
      %v5387 = vunpack.c.h.b16 %v1686
      %v5388 = vunpack.c.l.b16 %v1687
      %v5389 = vunpack.c.l.b16 %v1688
      %v5390 = vunpack.c.h.b16 %v1688
      %v5391 = vunpack.c.l.b16 %v1689
      %v5392 = vunpack.c.l.b16 %v1690
      %v5393 = vunpack.c.h.b16 %v1690
      %v5394 = vunpack.c.l.b16 %v1691
      %v5395 = vunpack.c.l.b16 %v1692
      %v5396 = vunpack.c.h.b16 %v1692
      %v5397 = vunpack.c.l.b16 %v1693
      %v5398 = vunpack.c.l.b16 %v1694
      %v5399 = vunpack.c.h.b16 %v1694
      %v5400 = vunpack.c.l.b16 %v1695
      %v5401 = vunpack.c.l.b16 %v1696
      %v5402 = vunpack.c.h.b16 %v1696
      %v5403 = vunpack.c.l.b16 %v1697
      %v5404 = vunpack.c.l.b16 %v1698
      %v5405 = vunpack.c.h.b16 %v1698
      %v5406 = vunpack.c.l.b16 %v1699
      %v5407 = vunpack.c.l.b16 %v1700
      %v5408 = vunpack.c.h.b16 %v1700
      %v5409 = vunpack.c.l.b16 %v1701
      %v5410 = vunpack.c.l.b16 %v1702
      %v5411 = vunpack.c.h.b16 %v1702
      %v5412 = vunpack.c.l.b16 %v1703
      %v5413 = vunpack.c.l.b16 %v1704
      %v5414 = vunpack.c.h.b16 %v1704
      %v5415 = vunpack.c.l.b16 %v1705
      %v5416 = vunpack.c.l.b16 %v1706
      %v5417 = vunpack.c.h.b16 %v1706
      %v5418 = vunpack.c.l.b16 %v1707
      %v5419 = vunpack.c.l.b16 %v1708
      %v5420 = vunpack.c.h.b16 %v1708
      %v5421 = vunpack.c.l.b16 %v1709
      %v5422 = vunpack.c.l.b16 %v1710
      %v5423 = vunpack.c.h.b16 %v1710
      %v5424 = vunpack.c.l.b16 %v1711
      %v5425 = vunpack.c.l.b16 %v1712
      %v5426 = vunpack.c.h.b16 %v1712
      %v5427 = vunpack.c.l.b16 %v1713
      %v5428 = vunpack.c.l.b16 %v1714
      %v5429 = vunpack.c.h.b16 %v1714
      %v5430 = vunpack.c.l.b16 %v1715
      %v5431 = vunpack.c.l.b16 %v1716
      %v5432 = vunpack.c.h.b16 %v1716
      %v5433 = vunpack.c.l.b16 %v1717
      %v5434 = vunpack.c.l.b16 %v1718
      %v5435 = vunpack.c.h.b16 %v1718
      %v5436 = vunpack.c.l.b16 %v1719
      %v5437 = vunpack.c.l.b16 %v1720
      %v5438 = vunpack.c.h.b16 %v1720
      %v5439 = vunpack.c.l.b16 %v1721
      %v5440 = vunpack.c.l.b16 %v1722
      %v5441 = vunpack.c.h.b16 %v1722
      %v5442 = vunpack.c.l.b16 %v1723
      %v5443 = vunpack.c.l.b16 %v1724
      %v5444 = vunpack.c.h.b16 %v1724
      %v5445 = vunpack.c.l.b16 %v1725
      %v5446 = vunpack.c.l.b16 %v1726
      %v5447 = vunpack.c.h.b16 %v1726
      %v5448 = vunpack.c.l.b16 %v1727
      %v5449 = vunpack.c.l.b16 %v1728
      %v5450 = vunpack.c.h.b16 %v1728
      %v5451 = vunpack.c.l.b16 %v1729
      %v5452 = vunpack.c.l.b16 %v1730
      %v5453 = vunpack.c.h.b16 %v1730
      %v5454 = vunpack.c.l.b16 %v1731
      %v5455 = vunpack.c.l.b16 %v1732
      %v5456 = vunpack.c.h.b16 %v1732
      %v5457 = vunpack.c.l.b16 %v1733
      %v5458 = vunpack.c.l.b16 %v1734
      %v5459 = vunpack.c.h.b16 %v1734
      %v5460 = vunpack.c.l.b16 %v1735
      %v5461 = vunpack.c.l.b16 %v1736
      %v5462 = vunpack.c.h.b16 %v1736
      %v5463 = vunpack.c.l.b16 %v1737
      %v5464 = vunpack.c.l.b16 %v1738
      %v5465 = vunpack.c.h.b16 %v1738
      %v5466 = vunpack.c.l.b16 %v1739
      %v5467 = vunpack.c.l.b16 %v1740
      %v5468 = vunpack.c.h.b16 %v1740
      %v5469 = vunpack.c.l.b16 %v1741
      %v5470 = vunpack.c.l.b16 %v1742
      %v5471 = vunpack.c.h.b16 %v1742
      %v5472 = vunpack.c.l.b16 %v1743
      %v5473 = vunpack.c.l.b16 %v1744
      %v5474 = vunpack.c.h.b16 %v1744
      %v5475 = vunpack.c.l.b16 %v1745
      %v5476 = vunpack.c.l.b16 %v1746
      %v5477 = vunpack.c.h.b16 %v1746
      %v5478 = vunpack.c.l.b16 %v1747
      %v5479 = vunpack.c.l.b16 %v1748
      %v5480 = vunpack.c.h.b16 %v1748
      %v5481 = vunpack.c.l.b16 %v1749
      %v5482 = vunpack.c.l.b16 %v1750
      %v5483 = vunpack.c.h.b16 %v1750
      %v5484 = vunpack.c.l.b16 %v1751
      %v5485 = vunpack.c.l.b16 %v1752
      %v5486 = vunpack.c.h.b16 %v1752
      %v5487 = vunpack.c.l.b16 %v1753
      %v5488 = vunpack.c.l.b16 %v1754
      %v5489 = vunpack.c.h.b16 %v1754
      %v5490 = vunpack.c.l.b16 %v1755
      %v5491 = vunpack.c.l.b16 %v1756
      %v5492 = vunpack.c.h.b16 %v1756
      %v5493 = vunpack.c.l.b16 %v1757
      %v5494 = vunpack.c.l.b16 %v1758
      %v5495 = vunpack.c.h.b16 %v1758
      %v5496 = vunpack.c.l.b16 %v1759
      %v5497 = vunpack.c.l.b16 %v1760
      %v5498 = vunpack.c.h.b16 %v1760
      %v5499 = vunpack.c.l.b16 %v1761
      %v5500 = vunpack.c.l.b16 %v1762
      %v5501 = vunpack.c.h.b16 %v1762
      %v5502 = vunpack.c.l.b16 %v1763
      %v5503 = vunpack.c.l.b16 %v1764
      %v5504 = vunpack.c.h.b16 %v1764
      %v5505 = vunpack.c.l.b16 %v1765
      %v5506 = vunpack.c.l.b16 %v1766
      %v5507 = vunpack.c.h.b16 %v1766
      %v5508 = vunpack.c.l.b16 %v1767
      %v5509 = vunpack.c.l.b16 %v1768
      %v5510 = vunpack.c.h.b16 %v1768
      %v5511 = vunpack.c.l.b16 %v1769
      %v5512 = vunpack.c.l.b16 %v1770
      %v5513 = vunpack.c.h.b16 %v1770
      %v5514 = vunpack.c.l.b16 %v1771
      %v5515 = vunpack.c.l.b16 %v1772
      %v5516 = vunpack.c.h.b16 %v1772
      %v5517 = vunpack.c.l.b16 %v1773
      %v5518 = vunpack.c.l.b16 %v1774
      %v5519 = vunpack.c.h.b16 %v1774
      %v5520 = vunpack.c.l.b16 %v1775
      %v5521 = vunpack.c.l.b16 %v1776
      %v5522 = vunpack.c.h.b16 %v1776
      %v5523 = vunpack.c.l.b16 %v1777
      %v5524 = vunpack.c.l.b16 %v1778
      %v5525 = vunpack.c.h.b16 %v1778
      %v5526 = vunpack.c.l.b16 %v1779
      %v5527 = vunpack.c.l.b16 %v1780
      %v5528 = vunpack.c.h.b16 %v1780
      %v5529 = vunpack.c.l.b16 %v1781
      %v5530 = vunpack.c.l.b16 %v1782
      %v5531 = vunpack.c.h.b16 %v1782
      %v5532 = vunpack.c.l.b16 %v1783
      %v5533 = vunpack.c.l.b16 %v1784
      %v5534 = vunpack.c.h.b16 %v1784
      %v5535 = vunpack.c.l.b16 %v1785
      %v5536 = vunpack.c.l.b16 %v1786
      %v5537 = vunpack.c.h.b16 %v1786
      %v5538 = vunpack.c.l.b16 %v1787
      %v5539 = vunpack.c.l.b16 %v1788
      %v5540 = vunpack.c.h.b16 %v1788
      %v5541 = vunpack.c.l.b16 %v1789
      %v5542 = vunpack.c.l.b16 %v1790
      %v5543 = vunpack.c.h.b16 %v1790
      %v5544 = vunpack.c.l.b16 %v1791
      %v5545 = vunpack.c.l.b16 %v1792
      %v5546 = vunpack.c.h.b16 %v1792
      %v5547 = vunpack.c.l.b16 %v1793
      %v5548 = vunpack.c.l.b16 %v1794
      %v5549 = vunpack.c.h.b16 %v1794
      %v5550 = vunpack.c.l.b16 %v1795
      %v5551 = vunpack.c.l.b16 %v1796
      %v5552 = vunpack.c.h.b16 %v1796
      %v5553 = vunpack.c.l.b16 %v1797
      %v5554 = vunpack.c.l.b16 %v1798
      %v5555 = vunpack.c.h.b16 %v1798
      %v5556 = vunpack.c.l.b16 %v1799
      %v5557 = vunpack.c.l.b16 %v1800
      %v5558 = vunpack.c.h.b16 %v1800
      %v5559 = vunpack.c.l.b16 %v1801
      %v5560 = vunpack.c.l.b16 %v1802
      %v5561 = vunpack.c.h.b16 %v1802
      %v5562 = vunpack.c.l.b16 %v1803
      %v5563 = vunpack.c.l.b16 %v1804
      %v5564 = vunpack.c.h.b16 %v1804
      %v5565 = vunpack.c.l.b16 %v1805
      %v5566 = vunpack.c.l.b16 %v1806
      %v5567 = vunpack.c.h.b16 %v1806
      %v5568 = vunpack.c.l.b16 %v1807
      %v5569 = vunpack.c.l.b16 %v1808
      %v5570 = vunpack.c.h.b16 %v1808
      %v5571 = vunpack.c.l.b16 %v1809
      %v5572 = vunpack.c.l.b16 %v1810
      %v5573 = vunpack.c.h.b16 %v1810
      %v5574 = vunpack.c.l.b16 %v1811
      %v5575 = vunpack.c.l.b16 %v1812
      %v5576 = vunpack.c.h.b16 %v1812
      %v5577 = vunpack.c.l.b16 %v1813
      %v5578 = vunpack.c.l.b16 %v1814
      %v5579 = vunpack.c.h.b16 %v1814
      %v5580 = vunpack.c.l.b16 %v1815
      %v5581 = vunpack.c.l.b16 %v1816
      %v5582 = vunpack.c.h.b16 %v1816
      %v5583 = vunpack.c.l.b16 %v1817
      %v5584 = vunpack.c.l.b16 %v1818
      %v5585 = vunpack.c.h.b16 %v1818
      %v5586 = vunpack.c.l.b16 %v1819
      %v5587 = vunpack.c.l.b16 %v1820
      %v5588 = vunpack.c.h.b16 %v1820
      %v5589 = vunpack.c.l.b16 %v1821
      %v5590 = vunpack.c.l.b16 %v1822
      %v5591 = vunpack.c.h.b16 %v1822
      %v5592 = vunpack.c.l.b16 %v1823
      %v5593 = vunpack.c.l.b16 %v1824
      %v5594 = vunpack.c.h.b16 %v1824
      %v5595 = vunpack.c.l.b16 %v1825
      %v5596 = vunpack.c.l.b16 %v1826
      %v5597 = vunpack.c.h.b16 %v1826
      %v5598 = vunpack.c.l.b16 %v1827
      %v5599 = vunpack.c.l.b16 %v1828
      %v5600 = vunpack.c.h.b16 %v1828
      %v5601 = vunpack.c.l.b16 %v1829
      %v5602 = vunpack.c.l.b16 %v1830
      %v5603 = vunpack.c.h.b16 %v1830
      %v5604 = vunpack.c.l.b16 %v1831
      %v5605 = vunpack.c.l.b16 %v1832
      %v5606 = vunpack.c.h.b16 %v1832
      %v5607 = vunpack.c.l.b16 %v1833
      %v5608 = vunpack.c.l.b16 %v1834
      %v5609 = vunpack.c.h.b16 %v1834
      %v5610 = vunpack.c.l.b16 %v1835
      %v5611 = vunpack.c.l.b16 %v1836
      %v5612 = vunpack.c.h.b16 %v1836
      %v5613 = vunpack.c.l.b16 %v1837
      %v5614 = vunpack.c.l.b16 %v1838
      %v5615 = vunpack.c.h.b16 %v1838
      %v5616 = vunpack.c.l.b16 %v1839
      %v5617 = vunpack.c.l.b16 %v1840
      %v5618 = vunpack.c.h.b16 %v1840
      %v5619 = vunpack.c.l.b16 %v1841
      %v5620 = vunpack.c.l.b16 %v1842
      %v5621 = vunpack.c.h.b16 %v1842
      %v5622 = vunpack.c.l.b16 %v1843
      %v5623 = vunpack.c.l.b16 %v1844
      %v5624 = vunpack.c.h.b16 %v1844
      %v5625 = vunpack.c.l.b16 %v1845
      %v5626 = vunpack.c.l.b16 %v1846
      %v5627 = vunpack.c.h.b16 %v1846
      %v5628 = vunpack.c.l.b16 %v1847
      %v5629 = vunpack.c.l.b16 %v1848
      %v5630 = vunpack.c.h.b16 %v1848
      %v5631 = vunpack.c.l.b16 %v1849
      %v5632 = vunpack.c.l.b16 %v1850
      %v5633 = vunpack.c.h.b16 %v1850
      %v5634 = vunpack.c.l.b16 %v1851
      %v5635 = vunpack.c.l.b16 %v1852
      %v5636 = vunpack.c.h.b16 %v1852
      %v5637 = vunpack.c.l.b16 %v1853
      %v5638 = vunpack.c.l.b16 %v1854
      %v5639 = vunpack.c.h.b16 %v1854
      %v5640 = vunpack.c.l.b16 %v1855
      %v5641 = vunpack.c.l.b16 %v1856
      %v5642 = vunpack.c.h.b16 %v1856
      %v5643 = vunpack.c.l.b16 %v1857
      %v5644 = vunpack.c.l.b16 %v1858
      %v5645 = vunpack.c.h.b16 %v1858
      %v5646 = vunpack.c.l.b16 %v1859
      %v5647 = vunpack.c.l.b16 %v1860
      %v5648 = vunpack.c.h.b16 %v1860
      %v5649 = vunpack.c.l.b16 %v1861
      %v5650 = vunpack.c.l.b16 %v1862
      %v5651 = vunpack.c.h.b16 %v1862
      %v5652 = vunpack.c.l.b16 %v1863
      %v5653 = vunpack.c.l.b16 %v1864
      %v5654 = vunpack.c.h.b16 %v1864
      %v5655 = vunpack.c.l.b16 %v1865
      %v5656 = vunpack.c.l.b16 %v1866
      %v5657 = vunpack.c.h.b16 %v1866
      %v5658 = vunpack.c.l.b16 %v1867
      %v5659 = vunpack.c.l.b16 %v1868
      %v5660 = vunpack.c.h.b16 %v1868
      %v5661 = vunpack.c.l.b16 %v1869
      %v5662 = vunpack.c.l.b16 %v1870
      %v5663 = vunpack.c.h.b16 %v1870
      %v5664 = vunpack.c.l.b16 %v1871
      %v5665 = vunpack.c.l.b16 %v1872
      %v5666 = vunpack.c.h.b16 %v1872
      %v5667 = vunpack.c.l.b16 %v1873
      %v5668 = vunpack.c.l.b16 %v1874
      %v5669 = vunpack.c.h.b16 %v1874
      %v5670 = vunpack.c.l.b16 %v1875
      %v5671 = vunpack.c.l.b16 %v1876
      %v5672 = vunpack.c.h.b16 %v1876
      %v5673 = vunpack.c.l.b16 %v1877
      %v5674 = vunpack.c.l.b16 %v1878
      %v5675 = vunpack.c.h.b16 %v1878
      %v5676 = vunpack.c.l.b16 %v1879
      %v5677 = vunpack.c.l.b16 %v1880
      %v5678 = vunpack.c.h.b16 %v1880
      %v5679 = vunpack.c.l.b16 %v1881
      %v5680 = vunpack.c.l.b16 %v1882
      %v5681 = vunpack.c.h.b16 %v1882
      %v5682 = vunpack.c.l.b16 %v1883
      %v5683 = vunpack.c.l.b16 %v1884
      %v5684 = vunpack.c.h.b16 %v1884
      %v5685 = vunpack.c.l.b16 %v1885
      %v5686 = vunpack.c.l.b16 %v1886
      %v5687 = vunpack.c.h.b16 %v1886
      %v5688 = vunpack.c.l.b16 %v1887
      %v5689 = vunpack.c.l.b16 %v1888
      %v5690 = vunpack.c.h.b16 %v1888
      %v5691 = vunpack.c.l.b16 %v1889
      %v5692 = vunpack.c.l.b16 %v1890
      %v5693 = vunpack.c.h.b16 %v1890
      %v5694 = vunpack.c.l.b16 %v1891
      %v5695 = vunpack.c.l.b16 %v1892
      %v5696 = vunpack.c.h.b16 %v1892
      %v5697 = vunpack.c.l.b16 %v1893
      %v5698 = vunpack.c.l.b16 %v1894
      %v5699 = vunpack.c.h.b16 %v1894
      %v5700 = vunpack.c.l.b16 %v1895
      %v5701 = vunpack.c.l.b16 %v1896
      %v5702 = vunpack.c.h.b16 %v1896
      %v5703 = vunpack.c.l.b16 %v1897
      %v5704 = vunpack.c.l.b16 %v1898
      %v5705 = vunpack.c.h.b16 %v1898
      %v5706 = vunpack.c.l.b16 %v1899
      %v5707 = vunpack.c.l.b16 %v1900
      %v5708 = vunpack.c.h.b16 %v1900
      %v5709 = vunpack.c.l.b16 %v1901
      %v5710 = vunpack.c.l.b16 %v1902
      %v5711 = vunpack.c.h.b16 %v1902
      %v5712 = vunpack.c.l.b16 %v1903
      %v5713 = vunpack.c.l.b16 %v1904
      %v5714 = vunpack.c.h.b16 %v1904
      %v5715 = vunpack.c.l.b16 %v1905
      %v5716 = vunpack.c.l.b16 %v1906
      %v5717 = vunpack.c.h.b16 %v1906
      %v5718 = vunpack.c.l.b16 %v1907
      %v5719 = vunpack.c.l.b16 %v1908
      %v5720 = vunpack.c.h.b16 %v1908
      %v5721 = vunpack.c.l.b16 %v1909
      %v5722 = vunpack.c.l.b16 %v1910
      %v5723 = vunpack.c.h.b16 %v1910
      %v5724 = vunpack.c.l.b16 %v1911
      %v5725 = vunpack.c.l.b16 %v1912
      %v5726 = vunpack.c.h.b16 %v1912
      %v5727 = vunpack.c.l.b16 %v1913
      %v5728 = vunpack.c.l.b16 %v1914
      %v5729 = vunpack.c.h.b16 %v1914
      %v5730 = vunpack.c.l.b16 %v1915
      %v5731 = vunpack.c.l.b16 %v1916
      %v5732 = vunpack.c.h.b16 %v1916
      %v5733 = vunpack.c.l.b16 %v1917
      %v5734 = vunpack.c.l.b16 %v1918
      %v5735 = vunpack.c.h.b16 %v1918
      %v5736 = vunpack.c.l.b16 %v1919
      %v5737 = vunpack.c.l.b16 %v1920
      %v5738 = vunpack.c.h.b16 %v1920
      %v5739 = vunpack.c.l.b16 %v1921
      %v5740 = vunpack.c.l.b16 %v1922
      %v5741 = vunpack.c.h.b16 %v1922
      %v5742 = vunpack.c.l.b16 %v1923
      %v5743 = vunpack.c.l.b16 %v1924
      %v5744 = vunpack.c.h.b16 %v1924
      %v5745 = vunpack.c.l.b16 %v1925
      %v5746 = vunpack.c.l.b16 %v1926
      %v5747 = vunpack.c.h.b16 %v1926
      %v5748 = vunpack.c.l.b16 %v1927
      %v5749 = vunpack.c.l.b16 %v1928
      %v5750 = vunpack.c.h.b16 %v1928
      %v5751 = vunpack.c.l.b16 %v1929
      %v5752 = vunpack.c.l.b16 %v1930
      %v5753 = vunpack.c.h.b16 %v1930
      %v5754 = vunpack.c.l.b16 %v1931
      %v5755 = vunpack.c.l.b16 %v1932
      %v5756 = vunpack.c.h.b16 %v1932
      %v5757 = vunpack.c.l.b16 %v1933
      %v5758 = vunpack.c.l.b16 %v1934
      %v5759 = vunpack.c.h.b16 %v1934
      %v5760 = vunpack.c.l.b16 %v1935
      %v5761 = vunpack.c.l.b16 %v1936
      %v5762 = vunpack.c.h.b16 %v1936
      %v5763 = vunpack.c.l.b16 %v1937
      %v5764 = vunpack.c.l.b16 %v1938
      %v5765 = vunpack.c.h.b16 %v1938
      %v5766 = vunpack.c.l.b16 %v1939
      %v5767 = vunpack.c.l.b16 %v1940
      %v5768 = vunpack.c.h.b16 %v1940
      %v5769 = vunpack.c.l.b16 %v1941
      %v5770 = vunpack.c.l.b16 %v1942
      %v5771 = vunpack.c.h.b16 %v1942
      %v5772 = vunpack.c.l.b16 %v1943
      %v5773 = vunpack.c.l.b16 %v1944
      %v5774 = vunpack.c.h.b16 %v1944
      %v5775 = vunpack.c.l.b16 %v1945
      %v5776 = vunpack.c.l.b16 %v1946
      %v5777 = vunpack.c.h.b16 %v1946
      %v5778 = vunpack.c.l.b16 %v1947
      %v5779 = vunpack.c.l.b16 %v1948
      %v5780 = vunpack.c.h.b16 %v1948
      %v5781 = vunpack.c.l.b16 %v1949
      %v5782 = vunpack.c.l.b16 %v1950
      %v5783 = vunpack.c.h.b16 %v1950
      %v5784 = vunpack.c.l.b16 %v1951
      %v5785 = vunpack.c.l.b16 %v1952
      %v5786 = vunpack.c.h.b16 %v1952
      %v5787 = vunpack.c.l.b16 %v1953
      %v5788 = vunpack.c.l.b16 %v1954
      %v5789 = vunpack.c.h.b16 %v1954
      %v5790 = vunpack.c.l.b16 %v1955
      %v5791 = vunpack.c.l.b16 %v1956
      %v5792 = vunpack.c.h.b16 %v1956
      %v5793 = vunpack.c.l.b16 %v1957
      %v5794 = vunpack.c.l.b16 %v1958
      %v5795 = vunpack.c.h.b16 %v1958
      %v5796 = vunpack.c.l.b16 %v1959
      %v5797 = vunpack.c.l.b16 %v1960
      %v5798 = vunpack.c.h.b16 %v1960
      %v5799 = vunpack.c.l.b16 %v1961
      %v5800 = vunpack.c.l.b16 %v1962
      %v5801 = vunpack.c.h.b16 %v1962
      %v5802 = vunpack.c.l.b16 %v1963
      %v5803 = vunpack.c.l.b16 %v1964
      %v5804 = vunpack.c.h.b16 %v1964
      %v5805 = vunpack.c.l.b16 %v1965
      %v5806 = vunpack.c.l.b16 %v1966
      %v5807 = vunpack.c.h.b16 %v1966
      %v5808 = vunpack.c.l.b16 %v1967
      %v5809 = vunpack.c.l.b16 %v1968
      %v5810 = vunpack.c.h.b16 %v1968
      %v5811 = vunpack.c.l.b16 %v1969
      %v5812 = vunpack.c.l.b16 %v1970
      %v5813 = vunpack.c.h.b16 %v1970
      %v5814 = vunpack.c.l.b16 %v1971
      %v5815 = vunpack.c.l.b16 %v1972
      %v5816 = vunpack.c.h.b16 %v1972
      %v5817 = vunpack.c.l.b16 %v1973
      %v5818 = vunpack.c.l.b16 %v1974
      %v5819 = vunpack.c.h.b16 %v1974
      %v5820 = vunpack.c.l.b16 %v1975
      %v5821 = vunpack.c.l.b16 %v1976
      %v5822 = vunpack.c.h.b16 %v1976
      %v5823 = vunpack.c.l.b16 %v1977
      %v5824 = vunpack.c.l.b16 %v1978
      %v5825 = vunpack.c.h.b16 %v1978
      %v5826 = vunpack.c.l.b16 %v1979
      %v5827 = vunpack.c.l.b16 %v1980
      %v5828 = vunpack.c.h.b16 %v1980
      %v5829 = vunpack.c.l.b16 %v1981
      %v5830 = vunpack.c.l.b16 %v1982
      %v5831 = vunpack.c.h.b16 %v1982
      %v5832 = vunpack.c.l.b16 %v1983
      %v5833 = vunpack.c.l.b16 %v1984
      %v5834 = vunpack.c.h.b16 %v1984
      %v5835 = vunpack.c.l.b16 %v1985
      %v5836 = vunpack.c.l.b16 %v1986
      %v5837 = vunpack.c.h.b16 %v1986
      %v5838 = vunpack.c.l.b16 %v1987
      %v5839 = vunpack.c.l.b16 %v1988
      %v5840 = vunpack.c.h.b16 %v1988
      %v5841 = vunpack.c.l.b16 %v1989
      %v5842 = vunpack.c.l.b16 %v1990
      %v5843 = vunpack.c.h.b16 %v1990
      %v5844 = vunpack.c.l.b16 %v1991
      %v5845 = vunpack.c.l.b16 %v1992
      %v5846 = vunpack.c.h.b16 %v1992
      %v5847 = vunpack.c.l.b16 %v1993
      %v5848 = vunpack.c.l.b16 %v1994
      %v5849 = vunpack.c.h.b16 %v1994
      %v5850 = vunpack.c.l.b16 %v1995
      %v5851 = vunpack.c.l.b16 %v1996
      %v5852 = vunpack.c.h.b16 %v1996
      %v5853 = vunpack.c.l.b16 %v1997
      %v5854 = vunpack.c.l.b16 %v1998
      %v5855 = vunpack.c.h.b16 %v1998
      %v5856 = vunpack.c.l.b16 %v1999
      %v5857 = vunpack.c.l.b16 %v2000
      %v5858 = vunpack.c.h.b16 %v2000
      %v5859 = vunpack.c.l.b16 %v2001
      %v5860 = vunpack.c.l.b16 %v2002
      %v5861 = vunpack.c.h.b16 %v2002
      %v5862 = vunpack.c.l.b16 %v2003
      %v5863 = vunpack.c.l.b16 %v2004
      %v5864 = vunpack.c.h.b16 %v2004
      %v5865 = vunpack.c.l.b16 %v2005
      %v5866 = vunpack.c.l.b16 %v2006
      %v5867 = vunpack.c.h.b16 %v2006
      %v5868 = vunpack.c.l.b16 %v2007
      %v5869 = vunpack.c.l.b16 %v2008
      %v5870 = vunpack.c.h.b16 %v2008
      %v5871 = vunpack.c.l.b16 %v2009
      %v5872 = vunpack.c.l.b16 %v2010
      %v5873 = vunpack.c.h.b16 %v2010
      %v5874 = vunpack.c.l.b16 %v2011
      %v5875 = vunpack.c.l.b16 %v2012
      %v5876 = vunpack.c.h.b16 %v2012
      %v5877 = vunpack.c.l.b16 %v2013
      %v5878 = vunpack.c.l.b16 %v2014
      %v5879 = vunpack.c.h.b16 %v2014
      %v5880 = vunpack.c.l.b16 %v2015
      %v5881 = vunpack.c.l.b16 %v2016
      %v5882 = vunpack.c.h.b16 %v2016
      %v5883 = vunpack.c.l.b16 %v2017
      %v5884 = vunpack.c.l.b16 %v2018
      %v5885 = vunpack.c.h.b16 %v2018
      %v5886 = vunpack.c.l.b16 %v2019
      %v5887 = vunpack.c.l.b16 %v2020
      %v5888 = vunpack.c.h.b16 %v2020
      %v5889 = vunpack.c.l.b16 %v2021
      %v5890 = vunpack.c.l.b16 %v2022
      %v5891 = vunpack.c.h.b16 %v2022
      %v5892 = vunpack.c.l.b16 %v2023
      %v5893 = vunpack.c.l.b16 %v2024
      %v5894 = vunpack.c.h.b16 %v2024
      %v5895 = vunpack.c.l.b16 %v2025
      %v5896 = vunpack.c.l.b16 %v2026
      %v5897 = vunpack.c.h.b16 %v2026
      %v5898 = vunpack.c.l.b16 %v2027
      %v5899 = vunpack.c.l.b16 %v2028
      %v5900 = vunpack.c.h.b16 %v2028
      %v5901 = vunpack.c.l.b16 %v2029
      %v5902 = vunpack.c.l.b16 %v2030
      %v5903 = vunpack.c.h.b16 %v2030
      %v5904 = vunpack.c.l.b16 %v2031
      %v5905 = vunpack.c.l.b16 %v2032
      %v5906 = vunpack.c.h.b16 %v2032
      %v5907 = vunpack.c.l.b16 %v2033
      %v5908 = vunpack.c.l.b16 %v2034
      %v5909 = vunpack.c.h.b16 %v2034
      %v5910 = vunpack.c.l.b16 %v2035
      %v5911 = vunpack.c.l.b16 %v2036
      %v5912 = vunpack.c.h.b16 %v2036
      %v5913 = vunpack.c.l.b16 %v2037
      %v5914 = vunpack.c.l.b16 %v2038
      %v5915 = vunpack.c.h.b16 %v2038
      %v5916 = vunpack.c.l.b16 %v2039
      %v5917 = vunpack.c.l.b16 %v2040
      %v5918 = vunpack.c.h.b16 %v2040
      %v5919 = vunpack.c.l.b16 %v2041
      %v5920 = vunpack.c.l.b16 %v2042
      %v5921 = vunpack.c.h.b16 %v2042
      %v5922 = vunpack.c.l.b16 %v2043
      %v5923 = vunpack.c.l.b16 %v2044
      %v5924 = vunpack.c.h.b16 %v2044
      %v5925 = vunpack.c.l.b16 %v2045
      %v5926 = vunpack.c.l.b16 %v2046
      %v5927 = vunpack.c.h.b16 %v2046
      %v5928 = vunpack.c.l.b16 %v2047
      %v5929 = vunpack.c.l.b16 %v2048
      %v5930 = vunpack.c.h.b16 %v2048
      %v5931 = vunpack.c.l.b16 %v2049
      %v5932 = vunpack.c.l.b16 %v2050
      %v5933 = vunpack.c.h.b16 %v2050
      %v5934 = vunpack.c.l.b16 %v2051
      %v5935 = vunpack.c.l.b16 %v2052
      %v5936 = vunpack.c.h.b16 %v2052
      %v5937 = vunpack.c.l.b16 %v2053
      %v5938 = vunpack.c.l.b16 %v2054
      %v5939 = vunpack.c.h.b16 %v2054
      %v5940 = vunpack.c.l.b16 %v2055
      %v5941 = vunpack.c.l.b16 %v2056
      %v5942 = vunpack.c.h.b16 %v2056
      %v5943 = vunpack.c.l.b16 %v2057
      %v5944 = vunpack.c.l.b16 %v2058
      %v5945 = vunpack.c.h.b16 %v2058
      %v5946 = vunpack.c.l.b16 %v2059
      %v5947 = vunpack.c.l.b16 %v2060
      %v5948 = vunpack.c.h.b16 %v2060
      %v5949 = vunpack.c.l.b16 %v2061
      %v5950 = vunpack.c.l.b16 %v2062
      %v5951 = vunpack.c.h.b16 %v2062
      %v5952 = vunpack.c.l.b16 %v2063
      %v5953 = vunpack.c.l.b16 %v2064
      %v5954 = vunpack.c.h.b16 %v2064
      %v5955 = vunpack.c.l.b16 %v2065
      %v5956 = vunpack.c.l.b16 %v2066
      %v5957 = vunpack.c.h.b16 %v2066
      %v5958 = vunpack.c.l.b16 %v2067
      %v5959 = vunpack.c.l.b16 %v2068
      %v5960 = vunpack.c.h.b16 %v2068
      %v5961 = vunpack.c.l.b16 %v2069
      %v5962 = vunpack.c.l.b16 %v2070
      %v5963 = vunpack.c.h.b16 %v2070
      %v5964 = vunpack.c.l.b16 %v2071
      %v5965 = vunpack.c.l.b16 %v2072
      %v5966 = vunpack.c.h.b16 %v2072
      %v5967 = vunpack.c.l.b16 %v2073
      %v5968 = vunpack.c.l.b16 %v2074
      %v5969 = vunpack.c.h.b16 %v2074
      %v5970 = vunpack.c.l.b16 %v2075
      %v5971 = vunpack.c.l.b16 %v2076
      %v5972 = vunpack.c.h.b16 %v2076
      %v5973 = vunpack.c.l.b16 %v2077
      %v5974 = vunpack.c.l.b16 %v2078
      %v5975 = vunpack.c.h.b16 %v2078
      %v5976 = vunpack.c.l.b16 %v2079
      %v5977 = vunpack.c.l.b16 %v2080
      %v5978 = vunpack.c.h.b16 %v2080
      %v5979 = vunpack.c.l.b16 %v2081
      %v5980 = vunpack.c.l.b16 %v2082
      %v5981 = vunpack.c.h.b16 %v2082
      %v5982 = vunpack.c.l.b16 %v2083
      %v5983 = vunpack.c.l.b16 %v2084
      %v5984 = vunpack.c.h.b16 %v2084
      %v5985 = vunpack.c.l.b16 %v2085
      %v5986 = vunpack.c.l.b16 %v2086
      %v5987 = vunpack.c.h.b16 %v2086
      %v5988 = vunpack.c.l.b16 %v2087
      %v5989 = vunpack.c.l.b16 %v2088
      %v5990 = vunpack.c.h.b16 %v2088
      %v5991 = vunpack.c.l.b16 %v2089
      %v5992 = vunpack.c.l.b16 %v2090
      %v5993 = vunpack.c.h.b16 %v2090
      %v5994 = vunpack.c.l.b16 %v2091
      %v5995 = vunpack.c.l.b16 %v2092
      %v5996 = vunpack.c.h.b16 %v2092
      %v5997 = vunpack.c.l.b16 %v2093
      %v5998 = vunpack.c.l.b16 %v2094
      %v5999 = vunpack.c.h.b16 %v2094
      %v6000 = vunpack.c.l.b16 %v2095
      %v6001 = vunpack.c.l.b16 %v2096
      %v6002 = vunpack.c.h.b16 %v2096
      %v6003 = vunpack.c.l.b16 %v2097
      %v6004 = vunpack.c.l.b16 %v2098
      %v6005 = vunpack.c.h.b16 %v2098
      %v6006 = vunpack.c.l.b16 %v2099
      %v6007 = vunpack.c.l.b16 %v2100
      %v6008 = vunpack.c.h.b16 %v2100
      %v6009 = vunpack.c.l.b16 %v2101
      %v6010 = vunpack.c.l.b16 %v2102
      %v6011 = vunpack.c.h.b16 %v2102
      %v6012 = vunpack.c.l.b16 %v2103
      %v6013 = vunpack.c.l.b16 %v2104
      %v6014 = vunpack.c.h.b16 %v2104
      %v6015 = vunpack.c.l.b16 %v2105
      %v6016 = vunpack.c.l.b16 %v2106
      %v6017 = vunpack.c.h.b16 %v2106
      %v6018 = vunpack.c.l.b16 %v2107
      %v6019 = vunpack.c.l.b16 %v2108
      %v6020 = vunpack.c.h.b16 %v2108
      %v6021 = vunpack.c.l.b16 %v2109
      %v6022 = vunpack.c.l.b16 %v2110
      %v6023 = vunpack.c.h.b16 %v2110
      %v6024 = vunpack.c.l.b16 %v2111
      %v6025 = vunpack.c.l.b16 %v2112
      %v6026 = vunpack.c.h.b16 %v2112
      %v6027 = vunpack.c.l.b16 %v2113
      %v6028 = vunpack.c.l.b16 %v2114
      %v6029 = vunpack.c.h.b16 %v2114
      %v6030 = vunpack.c.l.b16 %v2115
      %v6031 = vunpack.c.l.b16 %v2116
      %v6032 = vunpack.c.h.b16 %v2116
      %v6033 = vunpack.c.l.b16 %v2117
      %v6034 = vunpack.c.l.b16 %v2118
      %v6035 = vunpack.c.h.b16 %v2118
      %v6036 = vunpack.c.l.b16 %v2119
      %v6037 = vunpack.c.l.b16 %v2120
      %v6038 = vunpack.c.h.b16 %v2120
      %v6039 = vunpack.c.l.b16 %v2121
      %v6040 = vunpack.c.l.b16 %v2122
      %v6041 = vunpack.c.h.b16 %v2122
      %v6042 = vunpack.c.l.b16 %v2123
      %v6043 = vunpack.c.l.b16 %v2124
      %v6044 = vunpack.c.h.b16 %v2124
      %v6045 = vunpack.c.l.b16 %v2125
      %v6046 = vpack.c.b16 %v3697, %v3694
      %v6047 = vpack.c.b16 %v3698, %v3695
      %v6048 = vpack.c.b16 %v3699, %v3696
      %v6049 = vpack.c.b16 %v3703, %v3700
      %v6050 = vpack.c.b16 %v3704, %v3701
      %v6051 = vpack.c.b16 %v3705, %v3702
      %v6052 = vpack.c.b16 %v3709, %v3706
      %v6053 = vpack.c.b16 %v3710, %v3707
      %v6054 = vpack.c.b16 %v3711, %v3708
      %v6055 = vpack.c.b16 %v3715, %v3712
      %v6056 = vpack.c.b16 %v3716, %v3713
      %v6057 = vpack.c.b16 %v3717, %v3714
      %v6058 = vpack.c.b16 %v3721, %v3718
      %v6059 = vpack.c.b16 %v3722, %v3719
      %v6060 = vpack.c.b16 %v3723, %v3720
      %v6061 = vpack.c.b16 %v3727, %v3724
      %v6062 = vpack.c.b16 %v3728, %v3725
      %v6063 = vpack.c.b16 %v3729, %v3726
      %v6064 = vpack.c.b16 %v3733, %v3730
      %v6065 = vpack.c.b16 %v3734, %v3731
      %v6066 = vpack.c.b16 %v3735, %v3732
      %v6067 = vpack.c.b16 %v3739, %v3736
      %v6068 = vpack.c.b16 %v3740, %v3737
      %v6069 = vpack.c.b16 %v3741, %v3738
      %v6070 = vpack.c.b16 %v3745, %v3742
      %v6071 = vpack.c.b16 %v3746, %v3743
      %v6072 = vpack.c.b16 %v3747, %v3744
      %v6073 = vpack.c.b16 %v3751, %v3748
      %v6074 = vpack.c.b16 %v3752, %v3749
      %v6075 = vpack.c.b16 %v3753, %v3750
      %v6076 = vpack.c.b16 %v3757, %v3754
      %v6077 = vpack.c.b16 %v3758, %v3755
      %v6078 = vpack.c.b16 %v3759, %v3756
      %v6079 = vpack.c.b16 %v3763, %v3760
      %v6080 = vpack.c.b16 %v3764, %v3761
      %v6081 = vpack.c.b16 %v3765, %v3762
      %v6082 = vpack.c.b16 %v3769, %v3766
      %v6083 = vpack.c.b16 %v3770, %v3767
      %v6084 = vpack.c.b16 %v3771, %v3768
      %v6085 = vpack.c.b16 %v3775, %v3772
      %v6086 = vpack.c.b16 %v3776, %v3773
      %v6087 = vpack.c.b16 %v3777, %v3774
      %v6088 = vpack.c.b16 %v3781, %v3778
      %v6089 = vpack.c.b16 %v3782, %v3779
      %v6090 = vpack.c.b16 %v3783, %v3780
      %v6091 = vpack.c.b16 %v3787, %v3784
      %v6092 = vpack.c.b16 %v3788, %v3785
      %v6093 = vpack.c.b16 %v3789, %v3786
      %v6094 = vpack.c.b16 %v3793, %v3790
      %v6095 = vpack.c.b16 %v3794, %v3791
      %v6096 = vpack.c.b16 %v3795, %v3792
      %v6097 = vpack.c.b16 %v3799, %v3796
      %v6098 = vpack.c.b16 %v3800, %v3797
      %v6099 = vpack.c.b16 %v3801, %v3798
      %v6100 = vpack.c.b16 %v3805, %v3802
      %v6101 = vpack.c.b16 %v3806, %v3803
      %v6102 = vpack.c.b16 %v3807, %v3804
      %v6103 = vpack.c.b16 %v3811, %v3808
      %v6104 = vpack.c.b16 %v3812, %v3809
      %v6105 = vpack.c.b16 %v3813, %v3810
      %v6106 = vpack.c.b16 %v3817, %v3814
      %v6107 = vpack.c.b16 %v3818, %v3815
      %v6108 = vpack.c.b16 %v3819, %v3816
      %v6109 = vpack.c.b16 %v3823, %v3820
      %v6110 = vpack.c.b16 %v3824, %v3821
      %v6111 = vpack.c.b16 %v3825, %v3822
      %v6112 = vpack.c.b16 %v3829, %v3826
      %v6113 = vpack.c.b16 %v3830, %v3827
      %v6114 = vpack.c.b16 %v3831, %v3828
      %v6115 = vpack.c.b16 %v3835, %v3832
      %v6116 = vpack.c.b16 %v3836, %v3833
      %v6117 = vpack.c.b16 %v3837, %v3834
      %v6118 = vpack.c.b16 %v3841, %v3838
      %v6119 = vpack.c.b16 %v3842, %v3839
      %v6120 = vpack.c.b16 %v3843, %v3840
      %v6121 = vpack.c.b16 %v3847, %v3844
      %v6122 = vpack.c.b16 %v3848, %v3845
      %v6123 = vpack.c.b16 %v3849, %v3846
      %v6124 = vpack.c.b16 %v3853, %v3850
      %v6125 = vpack.c.b16 %v3854, %v3851
      %v6126 = vpack.c.b16 %v3855, %v3852
      %v6127 = vpack.c.b16 %v3859, %v3856
      %v6128 = vpack.c.b16 %v3860, %v3857
      %v6129 = vpack.c.b16 %v3861, %v3858
      %v6130 = vpack.c.b16 %v3865, %v3862
      %v6131 = vpack.c.b16 %v3866, %v3863
      %v6132 = vpack.c.b16 %v3867, %v3864
      %v6133 = vpack.c.b16 %v3871, %v3868
      %v6134 = vpack.c.b16 %v3872, %v3869
      %v6135 = vpack.c.b16 %v3873, %v3870
      %v6136 = vpack.c.b16 %v3877, %v3874
      %v6137 = vpack.c.b16 %v3878, %v3875
      %v6138 = vpack.c.b16 %v3879, %v3876
      %v6139 = vpack.c.b16 %v3883, %v3880
      %v6140 = vpack.c.b16 %v3884, %v3881
      %v6141 = vpack.c.b16 %v3885, %v3882
      %v6142 = vpack.c.b16 %v3889, %v3886
      %v6143 = vpack.c.b16 %v3890, %v3887
      %v6144 = vpack.c.b16 %v3891, %v3888
      %v6145 = vpack.c.b16 %v3895, %v3892
      %v6146 = vpack.c.b16 %v3896, %v3893
      %v6147 = vpack.c.b16 %v3897, %v3894
      %v6148 = vpack.c.b16 %v3901, %v3898
      %v6149 = vpack.c.b16 %v3902, %v3899
      %v6150 = vpack.c.b16 %v3903, %v3900
      %v6151 = vpack.c.b16 %v3907, %v3904
      %v6152 = vpack.c.b16 %v3908, %v3905
      %v6153 = vpack.c.b16 %v3909, %v3906
      %v6154 = vpack.c.b16 %v3913, %v3910
      %v6155 = vpack.c.b16 %v3914, %v3911
      %v6156 = vpack.c.b16 %v3915, %v3912
      %v6157 = vpack.c.b16 %v3919, %v3916
      %v6158 = vpack.c.b16 %v3920, %v3917
      %v6159 = vpack.c.b16 %v3921, %v3918
      %v6160 = vpack.c.b16 %v3925, %v3922
      %v6161 = vpack.c.b16 %v3926, %v3923
      %v6162 = vpack.c.b16 %v3927, %v3924
      %v6163 = vpack.c.b16 %v3931, %v3928
      %v6164 = vpack.c.b16 %v3932, %v3929
      %v6165 = vpack.c.b16 %v3933, %v3930
      %v6166 = vpack.c.b16 %v3937, %v3934
      %v6167 = vpack.c.b16 %v3938, %v3935
      %v6168 = vpack.c.b16 %v3939, %v3936
      %v6169 = vpack.c.b16 %v3943, %v3940
      %v6170 = vpack.c.b16 %v3944, %v3941
      %v6171 = vpack.c.b16 %v3945, %v3942
      %v6172 = vpack.c.b16 %v3949, %v3946
      %v6173 = vpack.c.b16 %v3950, %v3947
      %v6174 = vpack.c.b16 %v3951, %v3948
      %v6175 = vpack.c.b16 %v3955, %v3952
      %v6176 = vpack.c.b16 %v3956, %v3953
      %v6177 = vpack.c.b16 %v3957, %v3954
      %v6178 = vpack.c.b16 %v3961, %v3958
      %v6179 = vpack.c.b16 %v3962, %v3959
      %v6180 = vpack.c.b16 %v3963, %v3960
      %v6181 = vpack.c.b16 %v3967, %v3964
      %v6182 = vpack.c.b16 %v3968, %v3965
      %v6183 = vpack.c.b16 %v3969, %v3966
      %v6184 = vpack.c.b16 %v3973, %v3970
      %v6185 = vpack.c.b16 %v3974, %v3971
      %v6186 = vpack.c.b16 %v3975, %v3972
      %v6187 = vpack.c.b16 %v3979, %v3976
      %v6188 = vpack.c.b16 %v3980, %v3977
      %v6189 = vpack.c.b16 %v3981, %v3978
      %v6190 = vpack.c.b16 %v3985, %v3982
      %v6191 = vpack.c.b16 %v3986, %v3983
      %v6192 = vpack.c.b16 %v3987, %v3984
      %v6193 = vpack.c.b16 %v3991, %v3988
      %v6194 = vpack.c.b16 %v3992, %v3989
      %v6195 = vpack.c.b16 %v3993, %v3990
      %v6196 = vpack.c.b16 %v3997, %v3994
      %v6197 = vpack.c.b16 %v3998, %v3995
      %v6198 = vpack.c.b16 %v3999, %v3996
      %v6199 = vpack.c.b16 %v4003, %v4000
      %v6200 = vpack.c.b16 %v4004, %v4001
      %v6201 = vpack.c.b16 %v4005, %v4002
      %v6202 = vpack.c.b16 %v4009, %v4006
      %v6203 = vpack.c.b16 %v4010, %v4007
      %v6204 = vpack.c.b16 %v4011, %v4008
      %v6205 = vpack.c.b16 %v4015, %v4012
      %v6206 = vpack.c.b16 %v4016, %v4013
      %v6207 = vpack.c.b16 %v4017, %v4014
      %v6208 = vpack.c.b16 %v4021, %v4018
      %v6209 = vpack.c.b16 %v4022, %v4019
      %v6210 = vpack.c.b16 %v4023, %v4020
      %v6211 = vpack.c.b16 %v4027, %v4024
      %v6212 = vpack.c.b16 %v4028, %v4025
      %v6213 = vpack.c.b16 %v4029, %v4026
      %v6214 = vpack.c.b16 %v4033, %v4030
      %v6215 = vpack.c.b16 %v4034, %v4031
      %v6216 = vpack.c.b16 %v4035, %v4032
      %v6217 = vpack.c.b16 %v4039, %v4036
      %v6218 = vpack.c.b16 %v4040, %v4037
      %v6219 = vpack.c.b16 %v4041, %v4038
      %v6220 = vpack.c.b16 %v4045, %v4042
      %v6221 = vpack.c.b16 %v4046, %v4043
      %v6222 = vpack.c.b16 %v4047, %v4044
      %v6223 = vpack.c.b16 %v4051, %v4048
      %v6224 = vpack.c.b16 %v4052, %v4049
      %v6225 = vpack.c.b16 %v4053, %v4050
      %v6226 = vpack.c.b16 %v4057, %v4054
      %v6227 = vpack.c.b16 %v4058, %v4055
      %v6228 = vpack.c.b16 %v4059, %v4056
      %v6229 = vpack.c.b16 %v4063, %v4060
      %v6230 = vpack.c.b16 %v4064, %v4061
      %v6231 = vpack.c.b16 %v4065, %v4062
      %v6232 = vpack.c.b16 %v4069, %v4066
      %v6233 = vpack.c.b16 %v4070, %v4067
      %v6234 = vpack.c.b16 %v4071, %v4068
      %v6235 = vpack.c.b16 %v4075, %v4072
      %v6236 = vpack.c.b16 %v4076, %v4073
      %v6237 = vpack.c.b16 %v4077, %v4074
      %v6238 = vpack.c.b16 %v4081, %v4078
      %v6239 = vpack.c.b16 %v4082, %v4079
      %v6240 = vpack.c.b16 %v4083, %v4080
      %v6241 = vpack.c.b16 %v4087, %v4084
      %v6242 = vpack.c.b16 %v4088, %v4085
      %v6243 = vpack.c.b16 %v4089, %v4086
      %v6244 = vpack.c.b16 %v4093, %v4090
      %v6245 = vpack.c.b16 %v4094, %v4091
      %v6246 = vpack.c.b16 %v4095, %v4092
      %v6247 = vpack.c.b16 %v4099, %v4096
      %v6248 = vpack.c.b16 %v4100, %v4097
      %v6249 = vpack.c.b16 %v4101, %v4098
      %v6250 = vpack.c.b16 %v4105, %v4102
      %v6251 = vpack.c.b16 %v4106, %v4103
      %v6252 = vpack.c.b16 %v4107, %v4104
      %v6253 = vpack.c.b16 %v4111, %v4108
      %v6254 = vpack.c.b16 %v4112, %v4109
      %v6255 = vpack.c.b16 %v4113, %v4110
      %v6256 = vpack.c.b16 %v4117, %v4114
      %v6257 = vpack.c.b16 %v4118, %v4115
      %v6258 = vpack.c.b16 %v4119, %v4116
      %v6259 = vpack.c.b16 %v4123, %v4120
      %v6260 = vpack.c.b16 %v4124, %v4121
      %v6261 = vpack.c.b16 %v4125, %v4122
      %v6262 = vpack.c.b16 %v4129, %v4126
      %v6263 = vpack.c.b16 %v4130, %v4127
      %v6264 = vpack.c.b16 %v4131, %v4128
      %v6265 = vpack.c.b16 %v4135, %v4132
      %v6266 = vpack.c.b16 %v4136, %v4133
      %v6267 = vpack.c.b16 %v4137, %v4134
      %v6268 = vpack.c.b16 %v4141, %v4138
      %v6269 = vpack.c.b16 %v4142, %v4139
      %v6270 = vpack.c.b16 %v4143, %v4140
      %v6271 = vpack.c.b16 %v4147, %v4144
      %v6272 = vpack.c.b16 %v4148, %v4145
      %v6273 = vpack.c.b16 %v4149, %v4146
      %v6274 = vpack.c.b16 %v4153, %v4150
      %v6275 = vpack.c.b16 %v4154, %v4151
      %v6276 = vpack.c.b16 %v4155, %v4152
      %v6277 = vpack.c.b16 %v4159, %v4156
      %v6278 = vpack.c.b16 %v4160, %v4157
      %v6279 = vpack.c.b16 %v4161, %v4158
      %v6280 = vpack.c.b16 %v4165, %v4162
      %v6281 = vpack.c.b16 %v4166, %v4163
      %v6282 = vpack.c.b16 %v4167, %v4164
      %v6283 = vpack.c.b16 %v4171, %v4168
      %v6284 = vpack.c.b16 %v4172, %v4169
      %v6285 = vpack.c.b16 %v4173, %v4170
      %v6286 = vpack.c.b16 %v4177, %v4174
      %v6287 = vpack.c.b16 %v4178, %v4175
      %v6288 = vpack.c.b16 %v4179, %v4176
      %v6289 = vpack.c.b16 %v4183, %v4180
      %v6290 = vpack.c.b16 %v4184, %v4181
      %v6291 = vpack.c.b16 %v4185, %v4182
      %v6292 = vpack.c.b16 %v4189, %v4186
      %v6293 = vpack.c.b16 %v4190, %v4187
      %v6294 = vpack.c.b16 %v4191, %v4188
      %v6295 = vpack.c.b16 %v4195, %v4192
      %v6296 = vpack.c.b16 %v4196, %v4193
      %v6297 = vpack.c.b16 %v4197, %v4194
      %v6298 = vpack.c.b16 %v4201, %v4198
      %v6299 = vpack.c.b16 %v4202, %v4199
      %v6300 = vpack.c.b16 %v4203, %v4200
      %v6301 = vpack.c.b16 %v4207, %v4204
      %v6302 = vpack.c.b16 %v4208, %v4205
      %v6303 = vpack.c.b16 %v4209, %v4206
      %v6304 = vpack.c.b16 %v4213, %v4210
      %v6305 = vpack.c.b16 %v4214, %v4211
      %v6306 = vpack.c.b16 %v4215, %v4212
      %v6307 = vpack.c.b16 %v4219, %v4216
      %v6308 = vpack.c.b16 %v4220, %v4217
      %v6309 = vpack.c.b16 %v4221, %v4218
      %v6310 = vpack.c.b16 %v4225, %v4222
      %v6311 = vpack.c.b16 %v4226, %v4223
      %v6312 = vpack.c.b16 %v4227, %v4224
      %v6313 = vpack.c.b16 %v4231, %v4228
      %v6314 = vpack.c.b16 %v4232, %v4229
      %v6315 = vpack.c.b16 %v4233, %v4230
      %v6316 = vpack.c.b16 %v4237, %v4234
      %v6317 = vpack.c.b16 %v4238, %v4235
      %v6318 = vpack.c.b16 %v4239, %v4236
      %v6319 = vpack.c.b16 %v4243, %v4240
      %v6320 = vpack.c.b16 %v4244, %v4241
      %v6321 = vpack.c.b16 %v4245, %v4242
      %v6322 = vpack.c.b16 %v4249, %v4246
      %v6323 = vpack.c.b16 %v4250, %v4247
      %v6324 = vpack.c.b16 %v4251, %v4248
      %v6325 = vpack.c.b16 %v4255, %v4252
      %v6326 = vpack.c.b16 %v4256, %v4253
      %v6327 = vpack.c.b16 %v4257, %v4254
      %v6328 = vpack.c.b16 %v4261, %v4258
      %v6329 = vpack.c.b16 %v4262, %v4259
      %v6330 = vpack.c.b16 %v4263, %v4260
      %v6331 = vpack.c.b16 %v4267, %v4264
      %v6332 = vpack.c.b16 %v4268, %v4265
      %v6333 = vpack.c.b16 %v4269, %v4266
      %v6334 = vpack.c.b16 %v4273, %v4270
      %v6335 = vpack.c.b16 %v4274, %v4271
      %v6336 = vpack.c.b16 %v4275, %v4272
      %v6337 = vpack.c.b16 %v4279, %v4276
      %v6338 = vpack.c.b16 %v4280, %v4277
      %v6339 = vpack.c.b16 %v4281, %v4278
      %v6340 = vpack.c.b16 %v4285, %v4282
      %v6341 = vpack.c.b16 %v4286, %v4283
      %v6342 = vpack.c.b16 %v4287, %v4284
      %v6343 = vpack.c.b16 %v4291, %v4288
      %v6344 = vpack.c.b16 %v4292, %v4289
      %v6345 = vpack.c.b16 %v4293, %v4290
      %v6346 = vpack.c.b16 %v4297, %v4294
      %v6347 = vpack.c.b16 %v4298, %v4295
      %v6348 = vpack.c.b16 %v4299, %v4296
      %v6349 = vpack.c.b16 %v4303, %v4300
      %v6350 = vpack.c.b16 %v4304, %v4301
      %v6351 = vpack.c.b16 %v4305, %v4302
      %v6352 = vpack.c.b16 %v4309, %v4306
      %v6353 = vpack.c.b16 %v4310, %v4307
      %v6354 = vpack.c.b16 %v4311, %v4308
      %v6355 = vpack.c.b16 %v4315, %v4312
      %v6356 = vpack.c.b16 %v4316, %v4313
      %v6357 = vpack.c.b16 %v4317, %v4314
      %v6358 = vpack.c.b16 %v4321, %v4318
      %v6359 = vpack.c.b16 %v4322, %v4319
      %v6360 = vpack.c.b16 %v4323, %v4320
      %v6361 = vpack.c.b16 %v4327, %v4324
      %v6362 = vpack.c.b16 %v4328, %v4325
      %v6363 = vpack.c.b16 %v4329, %v4326
      %v6364 = vpack.c.b16 %v4333, %v4330
      %v6365 = vpack.c.b16 %v4334, %v4331
      %v6366 = vpack.c.b16 %v4335, %v4332
      %v6367 = vpack.c.b16 %v4339, %v4336
      %v6368 = vpack.c.b16 %v4340, %v4337
      %v6369 = vpack.c.b16 %v4341, %v4338
      %v6370 = vpack.c.b16 %v4345, %v4342
      %v6371 = vpack.c.b16 %v4346, %v4343
      %v6372 = vpack.c.b16 %v4347, %v4344
      %v6373 = vpack.c.b16 %v4351, %v4348
      %v6374 = vpack.c.b16 %v4352, %v4349
      %v6375 = vpack.c.b16 %v4353, %v4350
      %v6376 = vpack.c.b16 %v4357, %v4354
      %v6377 = vpack.c.b16 %v4358, %v4355
      %v6378 = vpack.c.b16 %v4359, %v4356
      %v6379 = vpack.c.b16 %v4363, %v4360
      %v6380 = vpack.c.b16 %v4364, %v4361
      %v6381 = vpack.c.b16 %v4365, %v4362
      %v6382 = vpack.c.b16 %v4369, %v4366
      %v6383 = vpack.c.b16 %v4370, %v4367
      %v6384 = vpack.c.b16 %v4371, %v4368
      %v6385 = vpack.c.b16 %v4375, %v4372
      %v6386 = vpack.c.b16 %v4376, %v4373
      %v6387 = vpack.c.b16 %v4377, %v4374
      %v6388 = vpack.c.b16 %v4381, %v4378
      %v6389 = vpack.c.b16 %v4382, %v4379
      %v6390 = vpack.c.b16 %v4383, %v4380
      %v6391 = vpack.c.b16 %v4387, %v4384
      %v6392 = vpack.c.b16 %v4388, %v4385
      %v6393 = vpack.c.b16 %v4389, %v4386
      %v6394 = vpack.c.b16 %v4393, %v4390
      %v6395 = vpack.c.b16 %v4394, %v4391
      %v6396 = vpack.c.b16 %v4395, %v4392
      %v6397 = vpack.c.b16 %v4399, %v4396
      %v6398 = vpack.c.b16 %v4400, %v4397
      %v6399 = vpack.c.b16 %v4401, %v4398
      %v6400 = vpack.c.b16 %v4405, %v4402
      %v6401 = vpack.c.b16 %v4406, %v4403
      %v6402 = vpack.c.b16 %v4407, %v4404
      %v6403 = vpack.c.b16 %v4411, %v4408
      %v6404 = vpack.c.b16 %v4412, %v4409
      %v6405 = vpack.c.b16 %v4413, %v4410
      %v6406 = vpack.c.b16 %v4417, %v4414
      %v6407 = vpack.c.b16 %v4418, %v4415
      %v6408 = vpack.c.b16 %v4419, %v4416
      %v6409 = vpack.c.b16 %v4423, %v4420
      %v6410 = vpack.c.b16 %v4424, %v4421
      %v6411 = vpack.c.b16 %v4425, %v4422
      %v6412 = vpack.c.b16 %v4429, %v4426
      %v6413 = vpack.c.b16 %v4430, %v4427
      %v6414 = vpack.c.b16 %v4431, %v4428
      %v6415 = vpack.c.b16 %v4435, %v4432
      %v6416 = vpack.c.b16 %v4436, %v4433
      %v6417 = vpack.c.b16 %v4437, %v4434
      %v6418 = vpack.c.b16 %v4441, %v4438
      %v6419 = vpack.c.b16 %v4442, %v4439
      %v6420 = vpack.c.b16 %v4443, %v4440
      %v6421 = vpack.c.b16 %v4447, %v4444
      %v6422 = vpack.c.b16 %v4448, %v4445
      %v6423 = vpack.c.b16 %v4449, %v4446
      %v6424 = vpack.c.b16 %v4453, %v4450
      %v6425 = vpack.c.b16 %v4454, %v4451
      %v6426 = vpack.c.b16 %v4455, %v4452
      %v6427 = vpack.c.b16 %v4459, %v4456
      %v6428 = vpack.c.b16 %v4460, %v4457
      %v6429 = vpack.c.b16 %v4461, %v4458
      %v6430 = vpack.c.b16 %v4465, %v4462
      %v6431 = vpack.c.b16 %v4466, %v4463
      %v6432 = vpack.c.b16 %v4467, %v4464
      %v6433 = vpack.c.b16 %v4471, %v4468
      %v6434 = vpack.c.b16 %v4472, %v4469
      %v6435 = vpack.c.b16 %v4473, %v4470
      %v6436 = vpack.c.b16 %v4477, %v4474
      %v6437 = vpack.c.b16 %v4478, %v4475
      %v6438 = vpack.c.b16 %v4479, %v4476
      %v6439 = vpack.c.b16 %v4483, %v4480
      %v6440 = vpack.c.b16 %v4484, %v4481
      %v6441 = vpack.c.b16 %v4485, %v4482
      %v6442 = vpack.c.b16 %v4489, %v4486
      %v6443 = vpack.c.b16 %v4490, %v4487
      %v6444 = vpack.c.b16 %v4491, %v4488
      %v6445 = vpack.c.b16 %v4495, %v4492
      %v6446 = vpack.c.b16 %v4496, %v4493
      %v6447 = vpack.c.b16 %v4497, %v4494
      %v6448 = vpack.c.b16 %v4501, %v4498
      %v6449 = vpack.c.b16 %v4502, %v4499
      %v6450 = vpack.c.b16 %v4503, %v4500
      %v6451 = vpack.c.b16 %v4507, %v4504
      %v6452 = vpack.c.b16 %v4508, %v4505
      %v6453 = vpack.c.b16 %v4509, %v4506
      %v6454 = vpack.c.b16 %v4513, %v4510
      %v6455 = vpack.c.b16 %v4514, %v4511
      %v6456 = vpack.c.b16 %v4515, %v4512
      %v6457 = vpack.c.b16 %v4519, %v4516
      %v6458 = vpack.c.b16 %v4520, %v4517
      %v6459 = vpack.c.b16 %v4521, %v4518
      %v6460 = vpack.c.b16 %v4525, %v4522
      %v6461 = vpack.c.b16 %v4526, %v4523
      %v6462 = vpack.c.b16 %v4527, %v4524
      %v6463 = vpack.c.b16 %v4531, %v4528
      %v6464 = vpack.c.b16 %v4532, %v4529
      %v6465 = vpack.c.b16 %v4533, %v4530
      %v6466 = vpack.c.b16 %v4537, %v4534
      %v6467 = vpack.c.b16 %v4538, %v4535
      %v6468 = vpack.c.b16 %v4539, %v4536
      %v6469 = vpack.c.b16 %v4543, %v4540
      %v6470 = vpack.c.b16 %v4544, %v4541
      %v6471 = vpack.c.b16 %v4545, %v4542
      %v6472 = vpack.c.b16 %v4549, %v4546
      %v6473 = vpack.c.b16 %v4550, %v4547
      %v6474 = vpack.c.b16 %v4551, %v4548
      %v6475 = vpack.c.b16 %v4555, %v4552
      %v6476 = vpack.c.b16 %v4556, %v4553
      %v6477 = vpack.c.b16 %v4557, %v4554
      %v6478 = vpack.c.b16 %v4561, %v4558
      %v6479 = vpack.c.b16 %v4562, %v4559
      %v6480 = vpack.c.b16 %v4563, %v4560
      %v6481 = vpack.c.b16 %v4567, %v4564
      %v6482 = vpack.c.b16 %v4568, %v4565
      %v6483 = vpack.c.b16 %v4569, %v4566
      %v6484 = vpack.c.b16 %v4573, %v4570
      %v6485 = vpack.c.b16 %v4574, %v4571
      %v6486 = vpack.c.b16 %v4575, %v4572
      %v6487 = vpack.c.b16 %v4579, %v4576
      %v6488 = vpack.c.b16 %v4580, %v4577
      %v6489 = vpack.c.b16 %v4581, %v4578
      %v6490 = vpack.c.b16 %v4585, %v4582
      %v6491 = vpack.c.b16 %v4586, %v4583
      %v6492 = vpack.c.b16 %v4587, %v4584
      %v6493 = vpack.c.b16 %v4591, %v4588
      %v6494 = vpack.c.b16 %v4592, %v4589
      %v6495 = vpack.c.b16 %v4593, %v4590
      %v6496 = vpack.c.b16 %v4597, %v4594
      %v6497 = vpack.c.b16 %v4598, %v4595
      %v6498 = vpack.c.b16 %v4599, %v4596
      %v6499 = vpack.c.b16 %v4603, %v4600
      %v6500 = vpack.c.b16 %v4604, %v4601
      %v6501 = vpack.c.b16 %v4605, %v4602
      %v6502 = vpack.c.b16 %v4609, %v4606
      %v6503 = vpack.c.b16 %v4610, %v4607
      %v6504 = vpack.c.b16 %v4611, %v4608
      %v6505 = vpack.c.b16 %v4615, %v4612
      %v6506 = vpack.c.b16 %v4616, %v4613
      %v6507 = vpack.c.b16 %v4617, %v4614
      %v6508 = vpack.c.b16 %v4621, %v4618
      %v6509 = vpack.c.b16 %v4622, %v4619
      %v6510 = vpack.c.b16 %v4623, %v4620
      %v6511 = vpack.c.b16 %v4627, %v4624
      %v6512 = vpack.c.b16 %v4628, %v4625
      %v6513 = vpack.c.b16 %v4629, %v4626
      %v6514 = vpack.c.b16 %v4633, %v4630
      %v6515 = vpack.c.b16 %v4634, %v4631
      %v6516 = vpack.c.b16 %v4635, %v4632
      %v6517 = vpack.c.b16 %v4639, %v4636
      %v6518 = vpack.c.b16 %v4640, %v4637
      %v6519 = vpack.c.b16 %v4641, %v4638
      %v6520 = vpack.c.b16 %v4645, %v4642
      %v6521 = vpack.c.b16 %v4646, %v4643
      %v6522 = vpack.c.b16 %v4647, %v4644
      %v6523 = vpack.c.b16 %v4651, %v4648
      %v6524 = vpack.c.b16 %v4652, %v4649
      %v6525 = vpack.c.b16 %v4653, %v4650
      %v6526 = vpack.c.b16 %v4657, %v4654
      %v6527 = vpack.c.b16 %v4658, %v4655
      %v6528 = vpack.c.b16 %v4659, %v4656
      %v6529 = vpack.c.b16 %v4663, %v4660
      %v6530 = vpack.c.b16 %v4664, %v4661
      %v6531 = vpack.c.b16 %v4665, %v4662
      %v6532 = vpack.c.b16 %v4669, %v4666
      %v6533 = vpack.c.b16 %v4670, %v4667
      %v6534 = vpack.c.b16 %v4671, %v4668
      %v6535 = vpack.c.b16 %v4675, %v4672
      %v6536 = vpack.c.b16 %v4676, %v4673
      %v6537 = vpack.c.b16 %v4677, %v4674
      %v6538 = vpack.c.b16 %v4681, %v4678
      %v6539 = vpack.c.b16 %v4682, %v4679
      %v6540 = vpack.c.b16 %v4683, %v4680
      %v6541 = vpack.c.b16 %v4687, %v4684
      %v6542 = vpack.c.b16 %v4688, %v4685
      %v6543 = vpack.c.b16 %v4689, %v4686
      %v6544 = vpack.c.b16 %v4693, %v4690
      %v6545 = vpack.c.b16 %v4694, %v4691
      %v6546 = vpack.c.b16 %v4695, %v4692
      %v6547 = vpack.c.b16 %v4699, %v4696
      %v6548 = vpack.c.b16 %v4700, %v4697
      %v6549 = vpack.c.b16 %v4701, %v4698
      %v6550 = vpack.c.b16 %v4705, %v4702
      %v6551 = vpack.c.b16 %v4706, %v4703
      %v6552 = vpack.c.b16 %v4707, %v4704
      %v6553 = vpack.c.b16 %v4711, %v4708
      %v6554 = vpack.c.b16 %v4712, %v4709
      %v6555 = vpack.c.b16 %v4713, %v4710
      %v6556 = vpack.c.b16 %v4717, %v4714
      %v6557 = vpack.c.b16 %v4718, %v4715
      %v6558 = vpack.c.b16 %v4719, %v4716
      %v6559 = vpack.c.b16 %v4723, %v4720
      %v6560 = vpack.c.b16 %v4724, %v4721
      %v6561 = vpack.c.b16 %v4725, %v4722
      %v6562 = vpack.c.b16 %v4729, %v4726
      %v6563 = vpack.c.b16 %v4730, %v4727
      %v6564 = vpack.c.b16 %v4731, %v4728
      %v6565 = vpack.c.b16 %v4735, %v4732
      %v6566 = vpack.c.b16 %v4736, %v4733
      %v6567 = vpack.c.b16 %v4737, %v4734
      %v6568 = vpack.c.b16 %v4741, %v4738
      %v6569 = vpack.c.b16 %v4742, %v4739
      %v6570 = vpack.c.b16 %v4743, %v4740
      %v6571 = vpack.c.b16 %v4747, %v4744
      %v6572 = vpack.c.b16 %v4748, %v4745
      %v6573 = vpack.c.b16 %v4749, %v4746
      %v6574 = vpack.c.b16 %v4753, %v4750
      %v6575 = vpack.c.b16 %v4754, %v4751
      %v6576 = vpack.c.b16 %v4755, %v4752
      %v6577 = vpack.c.b16 %v4759, %v4756
      %v6578 = vpack.c.b16 %v4760, %v4757
      %v6579 = vpack.c.b16 %v4761, %v4758
      %v6580 = vpack.c.b16 %v4765, %v4762
      %v6581 = vpack.c.b16 %v4766, %v4763
      %v6582 = vpack.c.b16 %v4767, %v4764
      %v6583 = vpack.c.b16 %v4771, %v4768
      %v6584 = vpack.c.b16 %v4772, %v4769
      %v6585 = vpack.c.b16 %v4773, %v4770
      %v6586 = vpack.c.b16 %v4777, %v4774
      %v6587 = vpack.c.b16 %v4778, %v4775
      %v6588 = vpack.c.b16 %v4779, %v4776
      %v6589 = vpack.c.b16 %v4783, %v4780
      %v6590 = vpack.c.b16 %v4784, %v4781
      %v6591 = vpack.c.b16 %v4785, %v4782
      %v6592 = vpack.c.b16 %v4789, %v4786
      %v6593 = vpack.c.b16 %v4790, %v4787
      %v6594 = vpack.c.b16 %v4791, %v4788
      %v6595 = vpack.c.b16 %v4795, %v4792
      %v6596 = vpack.c.b16 %v4796, %v4793
      %v6597 = vpack.c.b16 %v4797, %v4794
      %v6598 = vpack.c.b16 %v4801, %v4798
      %v6599 = vpack.c.b16 %v4802, %v4799
      %v6600 = vpack.c.b16 %v4803, %v4800
      %v6601 = vpack.c.b16 %v4807, %v4804
      %v6602 = vpack.c.b16 %v4808, %v4805
      %v6603 = vpack.c.b16 %v4809, %v4806
      %v6604 = vpack.c.b16 %v4813, %v4810
      %v6605 = vpack.c.b16 %v4814, %v4811
      %v6606 = vpack.c.b16 %v4815, %v4812
      %v6607 = vpack.c.b16 %v4819, %v4816
      %v6608 = vpack.c.b16 %v4820, %v4817
      %v6609 = vpack.c.b16 %v4821, %v4818
      %v6610 = vpack.c.b16 %v4825, %v4822
      %v6611 = vpack.c.b16 %v4826, %v4823
      %v6612 = vpack.c.b16 %v4827, %v4824
      %v6613 = vpack.c.b16 %v4831, %v4828
      %v6614 = vpack.c.b16 %v4832, %v4829
      %v6615 = vpack.c.b16 %v4833, %v4830
      %v6616 = vpack.c.b16 %v4837, %v4834
      %v6617 = vpack.c.b16 %v4838, %v4835
      %v6618 = vpack.c.b16 %v4839, %v4836
      %v6619 = vpack.c.b16 %v4843, %v4840
      %v6620 = vpack.c.b16 %v4844, %v4841
      %v6621 = vpack.c.b16 %v4845, %v4842
      %v6622 = vpack.c.b16 %v4849, %v4846
      %v6623 = vpack.c.b16 %v4850, %v4847
      %v6624 = vpack.c.b16 %v4851, %v4848
      %v6625 = vpack.c.b16 %v4855, %v4852
      %v6626 = vpack.c.b16 %v4856, %v4853
      %v6627 = vpack.c.b16 %v4857, %v4854
      %v6628 = vpack.c.b16 %v4861, %v4858
      %v6629 = vpack.c.b16 %v4862, %v4859
      %v6630 = vpack.c.b16 %v4863, %v4860
      %v6631 = vpack.c.b16 %v4867, %v4864
      %v6632 = vpack.c.b16 %v4868, %v4865
      %v6633 = vpack.c.b16 %v4869, %v4866
      %v6634 = vpack.c.b16 %v4873, %v4870
      %v6635 = vpack.c.b16 %v4874, %v4871
      %v6636 = vpack.c.b16 %v4875, %v4872
      %v6637 = vpack.c.b16 %v4879, %v4876
      %v6638 = vpack.c.b16 %v4880, %v4877
      %v6639 = vpack.c.b16 %v4881, %v4878
      %v6640 = vpack.c.b16 %v4885, %v4882
      %v6641 = vpack.c.b16 %v4886, %v4883
      %v6642 = vpack.c.b16 %v4887, %v4884
      %v6643 = vpack.c.b16 %v4891, %v4888
      %v6644 = vpack.c.b16 %v4892, %v4889
      %v6645 = vpack.c.b16 %v4893, %v4890
      %v6646 = vpack.c.b16 %v4897, %v4894
      %v6647 = vpack.c.b16 %v4898, %v4895
      %v6648 = vpack.c.b16 %v4899, %v4896
      %v6649 = vpack.c.b16 %v4903, %v4900
      %v6650 = vpack.c.b16 %v4904, %v4901
      %v6651 = vpack.c.b16 %v4905, %v4902
      %v6652 = vpack.c.b16 %v4909, %v4906
      %v6653 = vpack.c.b16 %v4910, %v4907
      %v6654 = vpack.c.b16 %v4911, %v4908
      %v6655 = vpack.c.b16 %v4915, %v4912
      %v6656 = vpack.c.b16 %v4916, %v4913
      %v6657 = vpack.c.b16 %v4917, %v4914
      %v6658 = vpack.c.b16 %v4921, %v4918
      %v6659 = vpack.c.b16 %v4922, %v4919
      %v6660 = vpack.c.b16 %v4923, %v4920
      %v6661 = vpack.c.b16 %v4927, %v4924
      %v6662 = vpack.c.b16 %v4928, %v4925
      %v6663 = vpack.c.b16 %v4929, %v4926
      %v6664 = vpack.c.b16 %v4933, %v4930
      %v6665 = vpack.c.b16 %v4934, %v4931
      %v6666 = vpack.c.b16 %v4935, %v4932
      %v6667 = vpack.c.b16 %v4939, %v4936
      %v6668 = vpack.c.b16 %v4940, %v4937
      %v6669 = vpack.c.b16 %v4941, %v4938
      %v6670 = vpack.c.b16 %v4945, %v4942
      %v6671 = vpack.c.b16 %v4946, %v4943
      %v6672 = vpack.c.b16 %v4947, %v4944
      %v6673 = vpack.c.b16 %v4951, %v4948
      %v6674 = vpack.c.b16 %v4952, %v4949
      %v6675 = vpack.c.b16 %v4953, %v4950
      %v6676 = vpack.c.b16 %v4957, %v4954
      %v6677 = vpack.c.b16 %v4958, %v4955
      %v6678 = vpack.c.b16 %v4959, %v4956
      %v6679 = vpack.c.b16 %v4963, %v4960
      %v6680 = vpack.c.b16 %v4964, %v4961
      %v6681 = vpack.c.b16 %v4965, %v4962
      %v6682 = vpack.c.b16 %v4969, %v4966
      %v6683 = vpack.c.b16 %v4970, %v4967
      %v6684 = vpack.c.b16 %v4971, %v4968
      %v6685 = vpack.c.b16 %v4975, %v4972
      %v6686 = vpack.c.b16 %v4976, %v4973
      %v6687 = vpack.c.b16 %v4977, %v4974
      %v6688 = vpack.c.b16 %v4981, %v4978
      %v6689 = vpack.c.b16 %v4982, %v4979
      %v6690 = vpack.c.b16 %v4983, %v4980
      %v6691 = vpack.c.b16 %v4987, %v4984
      %v6692 = vpack.c.b16 %v4988, %v4985
      %v6693 = vpack.c.b16 %v4989, %v4986
      %v6694 = vpack.c.b16 %v4993, %v4990
      %v6695 = vpack.c.b16 %v4994, %v4991
      %v6696 = vpack.c.b16 %v4995, %v4992
      %v6697 = vpack.c.b16 %v4999, %v4996
      %v6698 = vpack.c.b16 %v5000, %v4997
      %v6699 = vpack.c.b16 %v5001, %v4998
      %v6700 = vpack.c.b16 %v5005, %v5002
      %v6701 = vpack.c.b16 %v5006, %v5003
      %v6702 = vpack.c.b16 %v5007, %v5004
      %v6703 = vpack.c.b16 %v5011, %v5008
      %v6704 = vpack.c.b16 %v5012, %v5009
      %v6705 = vpack.c.b16 %v5013, %v5010
      %v6706 = vpack.c.b16 %v5017, %v5014
      %v6707 = vpack.c.b16 %v5018, %v5015
      %v6708 = vpack.c.b16 %v5019, %v5016
      %v6709 = vpack.c.b16 %v5023, %v5020
      %v6710 = vpack.c.b16 %v5024, %v5021
      %v6711 = vpack.c.b16 %v5025, %v5022
      %v6712 = vpack.c.b16 %v5029, %v5026
      %v6713 = vpack.c.b16 %v5030, %v5027
      %v6714 = vpack.c.b16 %v5031, %v5028
      %v6715 = vpack.c.b16 %v5035, %v5032
      %v6716 = vpack.c.b16 %v5036, %v5033
      %v6717 = vpack.c.b16 %v5037, %v5034
      %v6718 = vpack.c.b16 %v5041, %v5038
      %v6719 = vpack.c.b16 %v5042, %v5039
      %v6720 = vpack.c.b16 %v5043, %v5040
      %v6721 = vpack.c.b16 %v5047, %v5044
      %v6722 = vpack.c.b16 %v5048, %v5045
      %v6723 = vpack.c.b16 %v5049, %v5046
      %v6724 = vpack.c.b16 %v5053, %v5050
      %v6725 = vpack.c.b16 %v5054, %v5051
      %v6726 = vpack.c.b16 %v5055, %v5052
      %v6727 = vpack.c.b16 %v5059, %v5056
      %v6728 = vpack.c.b16 %v5060, %v5057
      %v6729 = vpack.c.b16 %v5061, %v5058
      %v6730 = vpack.c.b16 %v5065, %v5062
      %v6731 = vpack.c.b16 %v5066, %v5063
      %v6732 = vpack.c.b16 %v5067, %v5064
      %v6733 = vpack.c.b16 %v5071, %v5068
      %v6734 = vpack.c.b16 %v5072, %v5069
      %v6735 = vpack.c.b16 %v5073, %v5070
      %v6736 = vpack.c.b16 %v5077, %v5074
      %v6737 = vpack.c.b16 %v5078, %v5075
      %v6738 = vpack.c.b16 %v5079, %v5076
      %v6739 = vpack.c.b16 %v5083, %v5080
      %v6740 = vpack.c.b16 %v5084, %v5081
      %v6741 = vpack.c.b16 %v5085, %v5082
      %v6742 = vpack.c.b16 %v5089, %v5086
      %v6743 = vpack.c.b16 %v5090, %v5087
      %v6744 = vpack.c.b16 %v5091, %v5088
      %v6745 = vpack.c.b16 %v5095, %v5092
      %v6746 = vpack.c.b16 %v5096, %v5093
      %v6747 = vpack.c.b16 %v5097, %v5094
      %v6748 = vpack.c.b16 %v5101, %v5098
      %v6749 = vpack.c.b16 %v5102, %v5099
      %v6750 = vpack.c.b16 %v5103, %v5100
      %v6751 = vpack.c.b16 %v5107, %v5104
      %v6752 = vpack.c.b16 %v5108, %v5105
      %v6753 = vpack.c.b16 %v5109, %v5106
      %v6754 = vpack.c.b16 %v5113, %v5110
      %v6755 = vpack.c.b16 %v5114, %v5111
      %v6756 = vpack.c.b16 %v5115, %v5112
      %v6757 = vpack.c.b16 %v5119, %v5116
      %v6758 = vpack.c.b16 %v5120, %v5117
      %v6759 = vpack.c.b16 %v5121, %v5118
      %v6760 = vpack.c.b16 %v5125, %v5122
      %v6761 = vpack.c.b16 %v5126, %v5123
      %v6762 = vpack.c.b16 %v5127, %v5124
      %v6763 = vpack.c.b16 %v5131, %v5128
      %v6764 = vpack.c.b16 %v5132, %v5129
      %v6765 = vpack.c.b16 %v5133, %v5130
      %v6766 = vpack.c.b16 %v5137, %v5134
      %v6767 = vpack.c.b16 %v5138, %v5135
      %v6768 = vpack.c.b16 %v5139, %v5136
      %v6769 = vpack.c.b16 %v5143, %v5140
      %v6770 = vpack.c.b16 %v5144, %v5141
      %v6771 = vpack.c.b16 %v5145, %v5142
      %v6772 = vpack.c.b16 %v5149, %v5146
      %v6773 = vpack.c.b16 %v5150, %v5147
      %v6774 = vpack.c.b16 %v5151, %v5148
      %v6775 = vpack.c.b16 %v5155, %v5152
      %v6776 = vpack.c.b16 %v5156, %v5153
      %v6777 = vpack.c.b16 %v5157, %v5154
      %v6778 = vpack.c.b16 %v5161, %v5158
      %v6779 = vpack.c.b16 %v5162, %v5159
      %v6780 = vpack.c.b16 %v5163, %v5160
      %v6781 = vpack.c.b16 %v5167, %v5164
      %v6782 = vpack.c.b16 %v5168, %v5165
      %v6783 = vpack.c.b16 %v5169, %v5166
      %v6784 = vpack.c.b16 %v5173, %v5170
      %v6785 = vpack.c.b16 %v5174, %v5171
      %v6786 = vpack.c.b16 %v5175, %v5172
      %v6787 = vpack.c.b16 %v5179, %v5176
      %v6788 = vpack.c.b16 %v5180, %v5177
      %v6789 = vpack.c.b16 %v5181, %v5178
      %v6790 = vpack.c.b16 %v5185, %v5182
      %v6791 = vpack.c.b16 %v5186, %v5183
      %v6792 = vpack.c.b16 %v5187, %v5184
      %v6793 = vpack.c.b16 %v5191, %v5188
      %v6794 = vpack.c.b16 %v5192, %v5189
      %v6795 = vpack.c.b16 %v5193, %v5190
      %v6796 = vpack.c.b16 %v5197, %v5194
      %v6797 = vpack.c.b16 %v5198, %v5195
      %v6798 = vpack.c.b16 %v5199, %v5196
      %v6799 = vpack.c.b16 %v5203, %v5200
      %v6800 = vpack.c.b16 %v5204, %v5201
      %v6801 = vpack.c.b16 %v5205, %v5202
      %v6802 = vpack.c.b16 %v5209, %v5206
      %v6803 = vpack.c.b16 %v5210, %v5207
      %v6804 = vpack.c.b16 %v5211, %v5208
      %v6805 = vpack.c.b16 %v5215, %v5212
      %v6806 = vpack.c.b16 %v5216, %v5213
      %v6807 = vpack.c.b16 %v5217, %v5214
      %v6808 = vpack.c.b16 %v5221, %v5218
      %v6809 = vpack.c.b16 %v5222, %v5219
      %v6810 = vpack.c.b16 %v5223, %v5220
      %v6811 = vpack.c.b16 %v5227, %v5224
      %v6812 = vpack.c.b16 %v5228, %v5225
      %v6813 = vpack.c.b16 %v5229, %v5226
      %v6814 = vpack.c.b16 %v5233, %v5230
      %v6815 = vpack.c.b16 %v5234, %v5231
      %v6816 = vpack.c.b16 %v5235, %v5232
      %v6817 = vpack.c.b16 %v5239, %v5236
      %v6818 = vpack.c.b16 %v5240, %v5237
      %v6819 = vpack.c.b16 %v5241, %v5238
      %v6820 = vpack.c.b16 %v5245, %v5242
      %v6821 = vpack.c.b16 %v5246, %v5243
      %v6822 = vpack.c.b16 %v5247, %v5244
      %v6823 = vpack.c.b16 %v5251, %v5248
      %v6824 = vpack.c.b16 %v5252, %v5249
      %v6825 = vpack.c.b16 %v5253, %v5250
      %v6826 = vpack.c.b16 %v5257, %v5254
      %v6827 = vpack.c.b16 %v5258, %v5255
      %v6828 = vpack.c.b16 %v5259, %v5256
      %v6829 = vpack.c.b16 %v5263, %v5260
      %v6830 = vpack.c.b16 %v5264, %v5261
      %v6831 = vpack.c.b16 %v5265, %v5262
      %v6832 = vpack.c.b16 %v5269, %v5266
      %v6833 = vpack.c.b16 %v5270, %v5267
      %v6834 = vpack.c.b16 %v5271, %v5268
      %v6835 = vpack.c.b16 %v5275, %v5272
      %v6836 = vpack.c.b16 %v5276, %v5273
      %v6837 = vpack.c.b16 %v5277, %v5274
      %v6838 = vpack.c.b16 %v5281, %v5278
      %v6839 = vpack.c.b16 %v5282, %v5279
      %v6840 = vpack.c.b16 %v5283, %v5280
      %v6841 = vpack.c.b16 %v5287, %v5284
      %v6842 = vpack.c.b16 %v5288, %v5285
      %v6843 = vpack.c.b16 %v5289, %v5286
      %v6844 = vpack.c.b16 %v5293, %v5290
      %v6845 = vpack.c.b16 %v5294, %v5291
      %v6846 = vpack.c.b16 %v5295, %v5292
      %v6847 = vpack.c.b16 %v5299, %v5296
      %v6848 = vpack.c.b16 %v5300, %v5297
      %v6849 = vpack.c.b16 %v5301, %v5298
      %v6850 = vpack.c.b16 %v5305, %v5302
      %v6851 = vpack.c.b16 %v5306, %v5303
      %v6852 = vpack.c.b16 %v5307, %v5304
      %v6853 = vpack.c.b16 %v5311, %v5308
      %v6854 = vpack.c.b16 %v5312, %v5309
      %v6855 = vpack.c.b16 %v5313, %v5310
      %v6856 = vpack.c.b16 %v5317, %v5314
      %v6857 = vpack.c.b16 %v5318, %v5315
      %v6858 = vpack.c.b16 %v5319, %v5316
      %v6859 = vpack.c.b16 %v5323, %v5320
      %v6860 = vpack.c.b16 %v5324, %v5321
      %v6861 = vpack.c.b16 %v5325, %v5322
      %v6862 = vpack.c.b16 %v5329, %v5326
      %v6863 = vpack.c.b16 %v5330, %v5327
      %v6864 = vpack.c.b16 %v5331, %v5328
      %v6865 = vpack.c.b16 %v5335, %v5332
      %v6866 = vpack.c.b16 %v5336, %v5333
      %v6867 = vpack.c.b16 %v5337, %v5334
      %v6868 = vpack.c.b16 %v5341, %v5338
      %v6869 = vpack.c.b16 %v5342, %v5339
      %v6870 = vpack.c.b16 %v5343, %v5340
      %v6871 = vpack.c.b16 %v5347, %v5344
      %v6872 = vpack.c.b16 %v5348, %v5345
      %v6873 = vpack.c.b16 %v5349, %v5346
      %v6874 = vpack.c.b16 %v5353, %v5350
      %v6875 = vpack.c.b16 %v5354, %v5351
      %v6876 = vpack.c.b16 %v5355, %v5352
      %v6877 = vpack.c.b16 %v5359, %v5356
      %v6878 = vpack.c.b16 %v5360, %v5357
      %v6879 = vpack.c.b16 %v5361, %v5358
      %v6880 = vpack.c.b16 %v5365, %v5362
      %v6881 = vpack.c.b16 %v5366, %v5363
      %v6882 = vpack.c.b16 %v5367, %v5364
      %v6883 = vpack.c.b16 %v5371, %v5368
      %v6884 = vpack.c.b16 %v5372, %v5369
      %v6885 = vpack.c.b16 %v5373, %v5370
      %v6886 = vpack.c.b16 %v5377, %v5374
      %v6887 = vpack.c.b16 %v5378, %v5375
      %v6888 = vpack.c.b16 %v5379, %v5376
      %v6889 = vpack.c.b16 %v5383, %v5380
      %v6890 = vpack.c.b16 %v5384, %v5381
      %v6891 = vpack.c.b16 %v5385, %v5382
      %v6892 = vpack.c.b16 %v5389, %v5386
      %v6893 = vpack.c.b16 %v5390, %v5387
      %v6894 = vpack.c.b16 %v5391, %v5388
      %v6895 = vpack.c.b16 %v5395, %v5392
      %v6896 = vpack.c.b16 %v5396, %v5393
      %v6897 = vpack.c.b16 %v5397, %v5394
      %v6898 = vpack.c.b16 %v5401, %v5398
      %v6899 = vpack.c.b16 %v5402, %v5399
      %v6900 = vpack.c.b16 %v5403, %v5400
      %v6901 = vpack.c.b16 %v5407, %v5404
      %v6902 = vpack.c.b16 %v5408, %v5405
      %v6903 = vpack.c.b16 %v5409, %v5406
      %v6904 = vpack.c.b16 %v5413, %v5410
      %v6905 = vpack.c.b16 %v5414, %v5411
      %v6906 = vpack.c.b16 %v5415, %v5412
      %v6907 = vpack.c.b16 %v5419, %v5416
      %v6908 = vpack.c.b16 %v5420, %v5417
      %v6909 = vpack.c.b16 %v5421, %v5418
      %v6910 = vpack.c.b16 %v5425, %v5422
      %v6911 = vpack.c.b16 %v5426, %v5423
      %v6912 = vpack.c.b16 %v5427, %v5424
      %v6913 = vpack.c.b16 %v5431, %v5428
      %v6914 = vpack.c.b16 %v5432, %v5429
      %v6915 = vpack.c.b16 %v5433, %v5430
      %v6916 = vpack.c.b16 %v5437, %v5434
      %v6917 = vpack.c.b16 %v5438, %v5435
      %v6918 = vpack.c.b16 %v5439, %v5436
      %v6919 = vpack.c.b16 %v5443, %v5440
      %v6920 = vpack.c.b16 %v5444, %v5441
      %v6921 = vpack.c.b16 %v5445, %v5442
      %v6922 = vpack.c.b16 %v5449, %v5446
      %v6923 = vpack.c.b16 %v5450, %v5447
      %v6924 = vpack.c.b16 %v5451, %v5448
      %v6925 = vpack.c.b16 %v5455, %v5452
      %v6926 = vpack.c.b16 %v5456, %v5453
      %v6927 = vpack.c.b16 %v5457, %v5454
      %v6928 = vpack.c.b16 %v5461, %v5458
      %v6929 = vpack.c.b16 %v5462, %v5459
      %v6930 = vpack.c.b16 %v5463, %v5460
      %v6931 = vpack.c.b16 %v5467, %v5464
      %v6932 = vpack.c.b16 %v5468, %v5465
      %v6933 = vpack.c.b16 %v5469, %v5466
      %v6934 = vpack.c.b16 %v5473, %v5470
      %v6935 = vpack.c.b16 %v5474, %v5471
      %v6936 = vpack.c.b16 %v5475, %v5472
      %v6937 = vpack.c.b16 %v5479, %v5476
      %v6938 = vpack.c.b16 %v5480, %v5477
      %v6939 = vpack.c.b16 %v5481, %v5478
      %v6940 = vpack.c.b16 %v5485, %v5482
      %v6941 = vpack.c.b16 %v5486, %v5483
      %v6942 = vpack.c.b16 %v5487, %v5484
      %v6943 = vpack.c.b16 %v5491, %v5488
      %v6944 = vpack.c.b16 %v5492, %v5489
      %v6945 = vpack.c.b16 %v5493, %v5490
      %v6946 = vpack.c.b16 %v5497, %v5494
      %v6947 = vpack.c.b16 %v5498, %v5495
      %v6948 = vpack.c.b16 %v5499, %v5496
      %v6949 = vpack.c.b16 %v5503, %v5500
      %v6950 = vpack.c.b16 %v5504, %v5501
      %v6951 = vpack.c.b16 %v5505, %v5502
      %v6952 = vpack.c.b16 %v5509, %v5506
      %v6953 = vpack.c.b16 %v5510, %v5507
      %v6954 = vpack.c.b16 %v5511, %v5508
      %v6955 = vpack.c.b16 %v5515, %v5512
      %v6956 = vpack.c.b16 %v5516, %v5513
      %v6957 = vpack.c.b16 %v5517, %v5514
      %v6958 = vpack.c.b16 %v5521, %v5518
      %v6959 = vpack.c.b16 %v5522, %v5519
      %v6960 = vpack.c.b16 %v5523, %v5520
      %v6961 = vpack.c.b16 %v5527, %v5524
      %v6962 = vpack.c.b16 %v5528, %v5525
      %v6963 = vpack.c.b16 %v5529, %v5526
      %v6964 = vpack.c.b16 %v5533, %v5530
      %v6965 = vpack.c.b16 %v5534, %v5531
      %v6966 = vpack.c.b16 %v5535, %v5532
      %v6967 = vpack.c.b16 %v5539, %v5536
      %v6968 = vpack.c.b16 %v5540, %v5537
      %v6969 = vpack.c.b16 %v5541, %v5538
      %v6970 = vpack.c.b16 %v5545, %v5542
      %v6971 = vpack.c.b16 %v5546, %v5543
      %v6972 = vpack.c.b16 %v5547, %v5544
      %v6973 = vpack.c.b16 %v5551, %v5548
      %v6974 = vpack.c.b16 %v5552, %v5549
      %v6975 = vpack.c.b16 %v5553, %v5550
      %v6976 = vpack.c.b16 %v5557, %v5554
      %v6977 = vpack.c.b16 %v5558, %v5555
      %v6978 = vpack.c.b16 %v5559, %v5556
      %v6979 = vpack.c.b16 %v5563, %v5560
      %v6980 = vpack.c.b16 %v5564, %v5561
      %v6981 = vpack.c.b16 %v5565, %v5562
      %v6982 = vpack.c.b16 %v5569, %v5566
      %v6983 = vpack.c.b16 %v5570, %v5567
      %v6984 = vpack.c.b16 %v5571, %v5568
      %v6985 = vpack.c.b16 %v5575, %v5572
      %v6986 = vpack.c.b16 %v5576, %v5573
      %v6987 = vpack.c.b16 %v5577, %v5574
      %v6988 = vpack.c.b16 %v5581, %v5578
      %v6989 = vpack.c.b16 %v5582, %v5579
      %v6990 = vpack.c.b16 %v5583, %v5580
      %v6991 = vpack.c.b16 %v5587, %v5584
      %v6992 = vpack.c.b16 %v5588, %v5585
      %v6993 = vpack.c.b16 %v5589, %v5586
      %v6994 = vpack.c.b16 %v5593, %v5590
      %v6995 = vpack.c.b16 %v5594, %v5591
      %v6996 = vpack.c.b16 %v5595, %v5592
      %v6997 = vpack.c.b16 %v5599, %v5596
      %v6998 = vpack.c.b16 %v5600, %v5597
      %v6999 = vpack.c.b16 %v5601, %v5598
      %v7000 = vpack.c.b16 %v5605, %v5602
      %v7001 = vpack.c.b16 %v5606, %v5603
      %v7002 = vpack.c.b16 %v5607, %v5604
      %v7003 = vpack.c.b16 %v5611, %v5608
      %v7004 = vpack.c.b16 %v5612, %v5609
      %v7005 = vpack.c.b16 %v5613, %v5610
      %v7006 = vpack.c.b16 %v5617, %v5614
      %v7007 = vpack.c.b16 %v5618, %v5615
      %v7008 = vpack.c.b16 %v5619, %v5616
      %v7009 = vpack.c.b16 %v5623, %v5620
      %v7010 = vpack.c.b16 %v5624, %v5621
      %v7011 = vpack.c.b16 %v5625, %v5622
      %v7012 = vpack.c.b16 %v5629, %v5626
      %v7013 = vpack.c.b16 %v5630, %v5627
      %v7014 = vpack.c.b16 %v5631, %v5628
      %v7015 = vpack.c.b16 %v5635, %v5632
      %v7016 = vpack.c.b16 %v5636, %v5633
      %v7017 = vpack.c.b16 %v5637, %v5634
      %v7018 = vpack.c.b16 %v5641, %v5638
      %v7019 = vpack.c.b16 %v5642, %v5639
      %v7020 = vpack.c.b16 %v5643, %v5640
      %v7021 = vpack.c.b16 %v5647, %v5644
      %v7022 = vpack.c.b16 %v5648, %v5645
      %v7023 = vpack.c.b16 %v5649, %v5646
      %v7024 = vpack.c.b16 %v5653, %v5650
      %v7025 = vpack.c.b16 %v5654, %v5651
      %v7026 = vpack.c.b16 %v5655, %v5652
      %v7027 = vpack.c.b16 %v5659, %v5656
      %v7028 = vpack.c.b16 %v5660, %v5657
      %v7029 = vpack.c.b16 %v5661, %v5658
      %v7030 = vpack.c.b16 %v5665, %v5662
      %v7031 = vpack.c.b16 %v5666, %v5663
      %v7032 = vpack.c.b16 %v5667, %v5664
      %v7033 = vpack.c.b16 %v5671, %v5668
      %v7034 = vpack.c.b16 %v5672, %v5669
      %v7035 = vpack.c.b16 %v5673, %v5670
      %v7036 = vpack.c.b16 %v5677, %v5674
      %v7037 = vpack.c.b16 %v5678, %v5675
      %v7038 = vpack.c.b16 %v5679, %v5676
      %v7039 = vpack.c.b16 %v5683, %v5680
      %v7040 = vpack.c.b16 %v5684, %v5681
      %v7041 = vpack.c.b16 %v5685, %v5682
      %v7042 = vpack.c.b16 %v5689, %v5686
      %v7043 = vpack.c.b16 %v5690, %v5687
      %v7044 = vpack.c.b16 %v5691, %v5688
      %v7045 = vpack.c.b16 %v5695, %v5692
      %v7046 = vpack.c.b16 %v5696, %v5693
      %v7047 = vpack.c.b16 %v5697, %v5694
      %v7048 = vpack.c.b16 %v5701, %v5698
      %v7049 = vpack.c.b16 %v5702, %v5699
      %v7050 = vpack.c.b16 %v5703, %v5700
      %v7051 = vpack.c.b16 %v5707, %v5704
      %v7052 = vpack.c.b16 %v5708, %v5705
      %v7053 = vpack.c.b16 %v5709, %v5706
      %v7054 = vpack.c.b16 %v5713, %v5710
      %v7055 = vpack.c.b16 %v5714, %v5711
      %v7056 = vpack.c.b16 %v5715, %v5712
      %v7057 = vpack.c.b16 %v5719, %v5716
      %v7058 = vpack.c.b16 %v5720, %v5717
      %v7059 = vpack.c.b16 %v5721, %v5718
      %v7060 = vpack.c.b16 %v5725, %v5722
      %v7061 = vpack.c.b16 %v5726, %v5723
      %v7062 = vpack.c.b16 %v5727, %v5724
      %v7063 = vpack.c.b16 %v5731, %v5728
      %v7064 = vpack.c.b16 %v5732, %v5729
      %v7065 = vpack.c.b16 %v5733, %v5730
      %v7066 = vpack.c.b16 %v5737, %v5734
      %v7067 = vpack.c.b16 %v5738, %v5735
      %v7068 = vpack.c.b16 %v5739, %v5736
      %v7069 = vpack.c.b16 %v5743, %v5740
      %v7070 = vpack.c.b16 %v5744, %v5741
      %v7071 = vpack.c.b16 %v5745, %v5742
      %v7072 = vpack.c.b16 %v5749, %v5746
      %v7073 = vpack.c.b16 %v5750, %v5747
      %v7074 = vpack.c.b16 %v5751, %v5748
      %v7075 = vpack.c.b16 %v5755, %v5752
      %v7076 = vpack.c.b16 %v5756, %v5753
      %v7077 = vpack.c.b16 %v5757, %v5754
      %v7078 = vpack.c.b16 %v5761, %v5758
      %v7079 = vpack.c.b16 %v5762, %v5759
      %v7080 = vpack.c.b16 %v5763, %v5760
      %v7081 = vpack.c.b16 %v5767, %v5764
      %v7082 = vpack.c.b16 %v5768, %v5765
      %v7083 = vpack.c.b16 %v5769, %v5766
      %v7084 = vpack.c.b16 %v5773, %v5770
      %v7085 = vpack.c.b16 %v5774, %v5771
      %v7086 = vpack.c.b16 %v5775, %v5772
      %v7087 = vpack.c.b16 %v5779, %v5776
      %v7088 = vpack.c.b16 %v5780, %v5777
      %v7089 = vpack.c.b16 %v5781, %v5778
      %v7090 = vpack.c.b16 %v5785, %v5782
      %v7091 = vpack.c.b16 %v5786, %v5783
      %v7092 = vpack.c.b16 %v5787, %v5784
      %v7093 = vpack.c.b16 %v5791, %v5788
      %v7094 = vpack.c.b16 %v5792, %v5789
      %v7095 = vpack.c.b16 %v5793, %v5790
      %v7096 = vpack.c.b16 %v5797, %v5794
      %v7097 = vpack.c.b16 %v5798, %v5795
      %v7098 = vpack.c.b16 %v5799, %v5796
      %v7099 = vpack.c.b16 %v5803, %v5800
      %v7100 = vpack.c.b16 %v5804, %v5801
      %v7101 = vpack.c.b16 %v5805, %v5802
      %v7102 = vpack.c.b16 %v5809, %v5806
      %v7103 = vpack.c.b16 %v5810, %v5807
      %v7104 = vpack.c.b16 %v5811, %v5808
      %v7105 = vpack.c.b16 %v5815, %v5812
      %v7106 = vpack.c.b16 %v5816, %v5813
      %v7107 = vpack.c.b16 %v5817, %v5814
      %v7108 = vpack.c.b16 %v5821, %v5818
      %v7109 = vpack.c.b16 %v5822, %v5819
      %v7110 = vpack.c.b16 %v5823, %v5820
      %v7111 = vpack.c.b16 %v5827, %v5824
      %v7112 = vpack.c.b16 %v5828, %v5825
      %v7113 = vpack.c.b16 %v5829, %v5826
      %v7114 = vpack.c.b16 %v5833, %v5830
      %v7115 = vpack.c.b16 %v5834, %v5831
      %v7116 = vpack.c.b16 %v5835, %v5832
      %v7117 = vpack.c.b16 %v5839, %v5836
      %v7118 = vpack.c.b16 %v5840, %v5837
      %v7119 = vpack.c.b16 %v5841, %v5838
      %v7120 = vpack.c.b16 %v5845, %v5842
      %v7121 = vpack.c.b16 %v5846, %v5843
      %v7122 = vpack.c.b16 %v5847, %v5844
      %v7123 = vpack.c.b16 %v5851, %v5848
      %v7124 = vpack.c.b16 %v5852, %v5849
      %v7125 = vpack.c.b16 %v5853, %v5850
      %v7126 = vpack.c.b16 %v5857, %v5854
      %v7127 = vpack.c.b16 %v5858, %v5855
      %v7128 = vpack.c.b16 %v5859, %v5856
      %v7129 = vpack.c.b16 %v5863, %v5860
      %v7130 = vpack.c.b16 %v5864, %v5861
      %v7131 = vpack.c.b16 %v5865, %v5862
      %v7132 = vpack.c.b16 %v5869, %v5866
      %v7133 = vpack.c.b16 %v5870, %v5867
      %v7134 = vpack.c.b16 %v5871, %v5868
      %v7135 = vpack.c.b16 %v5875, %v5872
      %v7136 = vpack.c.b16 %v5876, %v5873
      %v7137 = vpack.c.b16 %v5877, %v5874
      %v7138 = vpack.c.b16 %v5881, %v5878
      %v7139 = vpack.c.b16 %v5882, %v5879
      %v7140 = vpack.c.b16 %v5883, %v5880
      %v7141 = vpack.c.b16 %v5887, %v5884
      %v7142 = vpack.c.b16 %v5888, %v5885
      %v7143 = vpack.c.b16 %v5889, %v5886
      %v7144 = vpack.c.b16 %v5893, %v5890
      %v7145 = vpack.c.b16 %v5894, %v5891
      %v7146 = vpack.c.b16 %v5895, %v5892
      %v7147 = vpack.c.b16 %v5899, %v5896
      %v7148 = vpack.c.b16 %v5900, %v5897
      %v7149 = vpack.c.b16 %v5901, %v5898
      %v7150 = vpack.c.b16 %v5905, %v5902
      %v7151 = vpack.c.b16 %v5906, %v5903
      %v7152 = vpack.c.b16 %v5907, %v5904
      %v7153 = vpack.c.b16 %v5911, %v5908
      %v7154 = vpack.c.b16 %v5912, %v5909
      %v7155 = vpack.c.b16 %v5913, %v5910
      %v7156 = vpack.c.b16 %v5917, %v5914
      %v7157 = vpack.c.b16 %v5918, %v5915
      %v7158 = vpack.c.b16 %v5919, %v5916
      %v7159 = vpack.c.b16 %v5923, %v5920
      %v7160 = vpack.c.b16 %v5924, %v5921
      %v7161 = vpack.c.b16 %v5925, %v5922
      %v7162 = vpack.c.b16 %v5929, %v5926
      %v7163 = vpack.c.b16 %v5930, %v5927
      %v7164 = vpack.c.b16 %v5931, %v5928
      %v7165 = vpack.c.b16 %v5935, %v5932
      %v7166 = vpack.c.b16 %v5936, %v5933
      %v7167 = vpack.c.b16 %v5937, %v5934
      %v7168 = vpack.c.b16 %v5941, %v5938
      %v7169 = vpack.c.b16 %v5942, %v5939
      %v7170 = vpack.c.b16 %v5943, %v5940
      %v7171 = vpack.c.b16 %v5947, %v5944
      %v7172 = vpack.c.b16 %v5948, %v5945
      %v7173 = vpack.c.b16 %v5949, %v5946
      %v7174 = vpack.c.b16 %v5953, %v5950
      %v7175 = vpack.c.b16 %v5954, %v5951
      %v7176 = vpack.c.b16 %v5955, %v5952
      %v7177 = vpack.c.b16 %v5959, %v5956
      %v7178 = vpack.c.b16 %v5960, %v5957
      %v7179 = vpack.c.b16 %v5961, %v5958
      %v7180 = vpack.c.b16 %v5965, %v5962
      %v7181 = vpack.c.b16 %v5966, %v5963
      %v7182 = vpack.c.b16 %v5967, %v5964
      %v7183 = vpack.c.b16 %v5971, %v5968
      %v7184 = vpack.c.b16 %v5972, %v5969
      %v7185 = vpack.c.b16 %v5973, %v5970
      %v7186 = vpack.c.b16 %v5977, %v5974
      %v7187 = vpack.c.b16 %v5978, %v5975
      %v7188 = vpack.c.b16 %v5979, %v5976
      %v7189 = vpack.c.b16 %v5983, %v5980
      %v7190 = vpack.c.b16 %v5984, %v5981
      %v7191 = vpack.c.b16 %v5985, %v5982
      %v7192 = vpack.c.b16 %v5989, %v5986
      %v7193 = vpack.c.b16 %v5990, %v5987
      %v7194 = vpack.c.b16 %v5991, %v5988
      %v7195 = vpack.c.b16 %v5995, %v5992
      %v7196 = vpack.c.b16 %v5996, %v5993
      %v7197 = vpack.c.b16 %v5997, %v5994
      %v7198 = vpack.c.b16 %v6001, %v5998
      %v7199 = vpack.c.b16 %v6002, %v5999
      %v7200 = vpack.c.b16 %v6003, %v6000
      %v7201 = vpack.c.b16 %v6007, %v6004
      %v7202 = vpack.c.b16 %v6008, %v6005
      %v7203 = vpack.c.b16 %v6009, %v6006
      %v7204 = vpack.c.b16 %v6013, %v6010
      %v7205 = vpack.c.b16 %v6014, %v6011
      %v7206 = vpack.c.b16 %v6015, %v6012
      %v7207 = vpack.c.b16 %v6019, %v6016
      %v7208 = vpack.c.b16 %v6020, %v6017
      %v7209 = vpack.c.b16 %v6021, %v6018
      %v7210 = vpack.c.b16 %v6025, %v6022
      %v7211 = vpack.c.b16 %v6026, %v6023
      %v7212 = vpack.c.b16 %v6027, %v6024
      %v7213 = vpack.c.b16 %v6031, %v6028
      %v7214 = vpack.c.b16 %v6032, %v6029
      %v7215 = vpack.c.b16 %v6033, %v6030
      %v7216 = vpack.c.b16 %v6037, %v6034
      %v7217 = vpack.c.b16 %v6038, %v6035
      %v7218 = vpack.c.b16 %v6039, %v6036
      %v7219 = vpack.c.b16 %v6043, %v6040
      %v7220 = vpack.c.b16 %v6044, %v6041
      %v7221 = vpack.c.b16 %v6045, %v6042
      %8398 = vmatprep.subr.bf16.mxu0 %v6047
      %8399 = vmatpush1.bf16.msra.mxu0 %v6046
      %8400 = vmatprep.subr.bf16.mxu0 %v6050
      %8401 = vmatpush1.bf16.msra.mxu0 %v6049
      %8402 = vmatprep.subr.bf16.mxu0 %v6053
      %8403 = vmatpush1.bf16.msra.mxu0 %v6052
      %8404 = vmatprep.subr.bf16.mxu0 %v6056
      %8405 = vmatpush1.bf16.msra.mxu0 %v6055
      %8406 = vmatprep.subr.bf16.mxu0 %v6059
      %8407 = vmatpush1.bf16.msra.mxu0 %v6058
      %8408 = vmatprep.subr.bf16.mxu0 %v6062
      %8409 = vmatpush1.bf16.msra.mxu0 %v6061
      %8410 = vmatprep.subr.bf16.mxu0 %v6065
      %8411 = vmatpush1.bf16.msra.mxu0 %v6064
      %8412 = vmatprep.subr.bf16.mxu0 %v6068
      %8413 = vmatpush1.bf16.msra.mxu0 %v6067
      %8414 = vmatprep.subr.bf16.mxu0 %v6071
      %8415 = vmatpush1.bf16.msra.mxu0 %v6070
      %8416 = vmatprep.subr.bf16.mxu0 %v6074
      %8417 = vmatpush1.bf16.msra.mxu0 %v6073
      %8418 = vmatprep.subr.bf16.mxu0 %v6077
      %8419 = vmatpush1.bf16.msra.mxu0 %v6076
      %8420 = vmatprep.subr.bf16.mxu0 %v6080
      %8421 = vmatpush1.bf16.msra.mxu0 %v6079
      %8422 = vmatprep.subr.bf16.mxu0 %v6083
      %8423 = vmatpush1.bf16.msra.mxu0 %v6082
      %8424 = vmatprep.subr.bf16.mxu0 %v6086
      %8425 = vmatpush1.bf16.msra.mxu0 %v6085
      %8426 = vmatprep.subr.bf16.mxu0 %v6089
      %8427 = vmatpush1.bf16.msra.mxu0 %v6088
      %8428 = vmatprep.subr.bf16.mxu0 %v6092
      %8429 = vmatpush1.bf16.msra.mxu0 %v6091
      %8430 = vmatprep.mubr.bf16.mxu0 %v510
      %8431 = vmatmul.mubr.bf16.gmra.mrb[0].mxu0 %v509
      %v8432 = vpop.f32.mrb[0].mxu0
      %v8433 = vadd.f32 0.0, %v8432
      %v8434 = vpop.f32.mrb[0].mxu0
      %v8435 = vadd.f32 0.0, %v8434
      %v8436 = vpop.f32.mrb[0].mxu0
      %v8437 = vpop.f32.mrb[0].mxu0
      %8438 = vdwg.mxu0
      %8439 = vmatprep.subr.bf16.mxu0 %v6095
      %8440 = vmatpush1.bf16.msra.mxu0 %v6094
      %8441 = vmatprep.subr.bf16.mxu0 %v6098
      %8442 = vmatpush1.bf16.msra.mxu0 %v6097
      %8443 = vmatprep.subr.bf16.mxu0 %v6101
      %8444 = vmatpush1.bf16.msra.mxu0 %v6100
      %8445 = vmatprep.subr.bf16.mxu0 %v6104
      %8446 = vmatpush1.bf16.msra.mxu0 %v6103
      %8447 = vmatprep.subr.bf16.mxu0 %v6107
      %8448 = vmatpush1.bf16.msra.mxu0 %v6106
      %8449 = vmatprep.subr.bf16.mxu0 %v6110
      %8450 = vmatpush1.bf16.msra.mxu0 %v6109
      %8451 = vmatprep.subr.bf16.mxu0 %v6113
      %8452 = vmatpush1.bf16.msra.mxu0 %v6112
      %8453 = vmatprep.subr.bf16.mxu0 %v6116
      %8454 = vmatpush1.bf16.msra.mxu0 %v6115
      %8455 = vmatprep.subr.bf16.mxu0 %v6119
      %8456 = vmatpush1.bf16.msra.mxu0 %v6118
      %8457 = vmatprep.subr.bf16.mxu0 %v6122
      %8458 = vmatpush1.bf16.msra.mxu0 %v6121
      %8459 = vmatprep.subr.bf16.mxu0 %v6125
      %8460 = vmatpush1.bf16.msra.mxu0 %v6124
      %8461 = vmatprep.subr.bf16.mxu0 %v6128
      %8462 = vmatpush1.bf16.msra.mxu0 %v6127
      %8463 = vmatprep.subr.bf16.mxu0 %v6131
      %8464 = vmatpush1.bf16.msra.mxu0 %v6130
      %8465 = vmatprep.subr.bf16.mxu0 %v6134
      %8466 = vmatpush1.bf16.msra.mxu0 %v6133
      %8467 = vmatprep.subr.bf16.mxu0 %v6137
      %8468 = vmatpush1.bf16.msra.mxu0 %v6136
      %8469 = vmatprep.subr.bf16.mxu0 %v6140
      %8470 = vmatpush1.bf16.msra.mxu0 %v6139
      %8471 = vmatprep.mubr.bf16.mxu0 %v512
      %8472 = vmatmul.mubr.bf16.gmra.mrb[0].mxu0 %v511
      %v8473 = vpop.f32.mrb[0].mxu0
      %v8474 = vadd.f32 %v8433, %v8473
      %v8475 = vpop.f32.mrb[0].mxu0
      %v8476 = vadd.f32 %v8435, %v8475
      %v8477 = vpop.f32.mrb[0].mxu0
      %v8478 = vpop.f32.mrb[0].mxu0
      %8479 = vdwg.mxu0
      %8480 = vmatprep.subr.bf16.mxu0 %v6143
      %8481 = vmatpush1.bf16.msra.mxu0 %v6142
      %8482 = vmatprep.subr.bf16.mxu0 %v6146
      %8483 = vmatpush1.bf16.msra.mxu0 %v6145
      %8484 = vmatprep.subr.bf16.mxu0 %v6149
      %8485 = vmatpush1.bf16.msra.mxu0 %v6148
      %8486 = vmatprep.subr.bf16.mxu0 %v6152
      %8487 = vmatpush1.bf16.msra.mxu0 %v6151
      %8488 = vmatprep.subr.bf16.mxu0 %v6155
      %8489 = vmatpush1.bf16.msra.mxu0 %v6154
      %8490 = vmatprep.subr.bf16.mxu0 %v6158
      %8491 = vmatpush1.bf16.msra.mxu0 %v6157
      %8492 = vmatprep.subr.bf16.mxu0 %v6161
      %8493 = vmatpush1.bf16.msra.mxu0 %v6160
      %8494 = vmatprep.subr.bf16.mxu0 %v6164
      %8495 = vmatpush1.bf16.msra.mxu0 %v6163
      %8496 = vmatprep.subr.bf16.mxu0 %v6167
      %8497 = vmatpush1.bf16.msra.mxu0 %v6166
      %8498 = vmatprep.subr.bf16.mxu0 %v6170
      %8499 = vmatpush1.bf16.msra.mxu0 %v6169
      %8500 = vmatprep.subr.bf16.mxu0 %v6173
      %8501 = vmatpush1.bf16.msra.mxu0 %v6172
      %8502 = vmatprep.subr.bf16.mxu0 %v6176
      %8503 = vmatpush1.bf16.msra.mxu0 %v6175
      %8504 = vmatprep.subr.bf16.mxu0 %v6179
      %8505 = vmatpush1.bf16.msra.mxu0 %v6178
      %8506 = vmatprep.subr.bf16.mxu0 %v6182
      %8507 = vmatpush1.bf16.msra.mxu0 %v6181
      %8508 = vmatprep.subr.bf16.mxu0 %v6185
      %8509 = vmatpush1.bf16.msra.mxu0 %v6184
      %8510 = vmatprep.subr.bf16.mxu0 %v6188
      %8511 = vmatpush1.bf16.msra.mxu0 %v6187
      %8512 = vmatprep.mubr.bf16.mxu0 %v514
      %8513 = vmatmul.mubr.bf16.gmra.mrb[0].mxu0 %v513
      %v8514 = vpop.f32.mrb[0].mxu0
      %v8515 = vadd.f32 %v8474, %v8514
      %v8516 = vpop.f32.mrb[0].mxu0
      %v8517 = vadd.f32 %v8476, %v8516
      %v8518 = vpop.f32.mrb[0].mxu0
      %v8519 = vpop.f32.mrb[0].mxu0
      %8520 = vdwg.mxu0
      %8521 = vmatprep.subr.bf16.mxu0 %v6191
      %8522 = vmatpush1.bf16.msra.mxu0 %v6190
      %8523 = vmatprep.subr.bf16.mxu0 %v6194
      %8524 = vmatpush1.bf16.msra.mxu0 %v6193
      %8525 = vmatprep.subr.bf16.mxu0 %v6197
      %8526 = vmatpush1.bf16.msra.mxu0 %v6196
      %8527 = vmatprep.subr.bf16.mxu0 %v6200
      %8528 = vmatpush1.bf16.msra.mxu0 %v6199
      %8529 = vmatprep.subr.bf16.mxu0 %v6203
      %8530 = vmatpush1.bf16.msra.mxu0 %v6202
      %8531 = vmatprep.subr.bf16.mxu0 %v6206
      %8532 = vmatpush1.bf16.msra.mxu0 %v6205
      %8533 = vmatprep.subr.bf16.mxu0 %v6209
      %8534 = vmatpush1.bf16.msra.mxu0 %v6208
      %8535 = vmatprep.subr.bf16.mxu0 %v6212
      %8536 = vmatpush1.bf16.msra.mxu0 %v6211
      %8537 = vmatprep.subr.bf16.mxu0 %v6215
      %8538 = vmatpush1.bf16.msra.mxu0 %v6214
      %8539 = vmatprep.subr.bf16.mxu0 %v6218
      %8540 = vmatpush1.bf16.msra.mxu0 %v6217
      %8541 = vmatprep.subr.bf16.mxu0 %v6221
      %8542 = vmatpush1.bf16.msra.mxu0 %v6220
      %8543 = vmatprep.subr.bf16.mxu0 %v6224
      %8544 = vmatpush1.bf16.msra.mxu0 %v6223
      %8545 = vmatprep.subr.bf16.mxu0 %v6227
      %8546 = vmatpush1.bf16.msra.mxu0 %v6226
      %8547 = vmatprep.subr.bf16.mxu0 %v6230
      %8548 = vmatpush1.bf16.msra.mxu0 %v6229
      %8549 = vmatprep.subr.bf16.mxu0 %v6233
      %8550 = vmatpush1.bf16.msra.mxu0 %v6232
      %8551 = vmatprep.subr.bf16.mxu0 %v6236
      %8552 = vmatpush1.bf16.msra.mxu0 %v6235
      %8553 = vmatprep.mubr.bf16.mxu0 %v516
      %8554 = vmatmul.mubr.bf16.gmra.mrb[0].mxu0 %v515
      %v8555 = vpop.f32.mrb[0].mxu0
      %v8556 = vadd.f32 %v8515, %v8555
      %v8557 = vpop.f32.mrb[0].mxu0
      %v8558 = vadd.f32 %v8517, %v8557
      %v8559 = vpop.f32.mrb[0].mxu0
      %v8560 = vpop.f32.mrb[0].mxu0
      %8561 = vdwg.mxu0
      %8562 = vmatprep.subr.bf16.mxu0 %v6239
      %8563 = vmatpush1.bf16.msra.mxu0 %v6238
      %8564 = vmatprep.subr.bf16.mxu0 %v6242
      %8565 = vmatpush1.bf16.msra.mxu0 %v6241
      %8566 = vmatprep.subr.bf16.mxu0 %v6245
      %8567 = vmatpush1.bf16.msra.mxu0 %v6244
      %8568 = vmatprep.subr.bf16.mxu0 %v6248
      %8569 = vmatpush1.bf16.msra.mxu0 %v6247
      %8570 = vmatprep.subr.bf16.mxu0 %v6251
      %8571 = vmatpush1.bf16.msra.mxu0 %v6250
      %8572 = vmatprep.subr.bf16.mxu0 %v6254
      %8573 = vmatpush1.bf16.msra.mxu0 %v6253
      %8574 = vmatprep.subr.bf16.mxu0 %v6257
      %8575 = vmatpush1.bf16.msra.mxu0 %v6256
      %8576 = vmatprep.subr.bf16.mxu0 %v6260
      %8577 = vmatpush1.bf16.msra.mxu0 %v6259
      %8578 = vmatprep.subr.bf16.mxu0 %v6263
      %8579 = vmatpush1.bf16.msra.mxu0 %v6262
      %8580 = vmatprep.subr.bf16.mxu0 %v6266
      %8581 = vmatpush1.bf16.msra.mxu0 %v6265
      %8582 = vmatprep.subr.bf16.mxu0 %v6269
      %8583 = vmatpush1.bf16.msra.mxu0 %v6268
      %8584 = vmatprep.subr.bf16.mxu0 %v6272
      %8585 = vmatpush1.bf16.msra.mxu0 %v6271
      %8586 = vmatprep.subr.bf16.mxu0 %v6275
      %8587 = vmatpush1.bf16.msra.mxu0 %v6274
      %8588 = vmatprep.subr.bf16.mxu0 %v6278
      %8589 = vmatpush1.bf16.msra.mxu0 %v6277
      %8590 = vmatprep.subr.bf16.mxu0 %v6281
      %8591 = vmatpush1.bf16.msra.mxu0 %v6280
      %8592 = vmatprep.subr.bf16.mxu0 %v6284
      %8593 = vmatpush1.bf16.msra.mxu0 %v6283
      %8594 = vmatprep.mubr.bf16.mxu0 %v518
      %8595 = vmatmul.mubr.bf16.gmra.mrb[0].mxu0 %v517
      %v8596 = vpop.f32.mrb[0].mxu0
      %v8597 = vadd.f32 %v8556, %v8596
      %v8598 = vpop.f32.mrb[0].mxu0
      %v8599 = vadd.f32 %v8558, %v8598
      %v8600 = vpop.f32.mrb[0].mxu0
      %v8601 = vpop.f32.mrb[0].mxu0
      %8602 = vdwg.mxu0
      %8603 = vmatprep.subr.bf16.mxu0 %v6287
      %8604 = vmatpush1.bf16.msra.mxu0 %v6286
      %8605 = vmatprep.subr.bf16.mxu0 %v6290
      %8606 = vmatpush1.bf16.msra.mxu0 %v6289
      %8607 = vmatprep.subr.bf16.mxu0 %v6293
      %8608 = vmatpush1.bf16.msra.mxu0 %v6292
      %8609 = vmatprep.subr.bf16.mxu0 %v6296
      %8610 = vmatpush1.bf16.msra.mxu0 %v6295
      %8611 = vmatprep.subr.bf16.mxu0 %v6299
      %8612 = vmatpush1.bf16.msra.mxu0 %v6298
      %8613 = vmatprep.subr.bf16.mxu0 %v6302
      %8614 = vmatpush1.bf16.msra.mxu0 %v6301
      %8615 = vmatprep.subr.bf16.mxu0 %v6305
      %8616 = vmatpush1.bf16.msra.mxu0 %v6304
      %8617 = vmatprep.subr.bf16.mxu0 %v6308
      %8618 = vmatpush1.bf16.msra.mxu0 %v6307
      %8619 = vmatprep.subr.bf16.mxu0 %v6311
      %8620 = vmatpush1.bf16.msra.mxu0 %v6310
      %8621 = vmatprep.subr.bf16.mxu0 %v6314
      %8622 = vmatpush1.bf16.msra.mxu0 %v6313
      %8623 = vmatprep.subr.bf16.mxu0 %v6317
      %8624 = vmatpush1.bf16.msra.mxu0 %v6316
      %8625 = vmatprep.subr.bf16.mxu0 %v6320
      %8626 = vmatpush1.bf16.msra.mxu0 %v6319
      %8627 = vmatprep.subr.bf16.mxu0 %v6323
      %8628 = vmatpush1.bf16.msra.mxu0 %v6322
      %8629 = vmatprep.subr.bf16.mxu0 %v6326
      %8630 = vmatpush1.bf16.msra.mxu0 %v6325
      %8631 = vmatprep.subr.bf16.mxu0 %v6329
      %8632 = vmatpush1.bf16.msra.mxu0 %v6328
      %8633 = vmatprep.subr.bf16.mxu0 %v6332
      %8634 = vmatpush1.bf16.msra.mxu0 %v6331
      %8635 = vmatprep.mubr.bf16.mxu0 %v520
      %8636 = vmatmul.mubr.bf16.gmra.mrb[0].mxu0 %v519
      %v8637 = vpop.f32.mrb[0].mxu0
      %v8638 = vadd.f32 %v8597, %v8637
      %v8639 = vpop.f32.mrb[0].mxu0
      %v8640 = vadd.f32 %v8599, %v8639
      %v8641 = vpop.f32.mrb[0].mxu0
      %v8642 = vpop.f32.mrb[0].mxu0
      %8643 = vdwg.mxu0
      %8644 = vmatprep.subr.bf16.mxu0 %v6335
      %8645 = vmatpush1.bf16.msra.mxu0 %v6334
      %8646 = vmatprep.subr.bf16.mxu0 %v6338
      %8647 = vmatpush1.bf16.msra.mxu0 %v6337
      %8648 = vmatprep.subr.bf16.mxu0 %v6341
      %8649 = vmatpush1.bf16.msra.mxu0 %v6340
      %8650 = vmatprep.subr.bf16.mxu0 %v6344
      %8651 = vmatpush1.bf16.msra.mxu0 %v6343
      %8652 = vmatprep.subr.bf16.mxu0 %v6347
      %8653 = vmatpush1.bf16.msra.mxu0 %v6346
      %8654 = vmatprep.subr.bf16.mxu0 %v6350
      %8655 = vmatpush1.bf16.msra.mxu0 %v6349
      %8656 = vmatprep.subr.bf16.mxu0 %v6353
      %8657 = vmatpush1.bf16.msra.mxu0 %v6352
      %8658 = vmatprep.subr.bf16.mxu0 %v6356
      %8659 = vmatpush1.bf16.msra.mxu0 %v6355
      %8660 = vmatprep.subr.bf16.mxu0 %v6359
      %8661 = vmatpush1.bf16.msra.mxu0 %v6358
      %8662 = vmatprep.subr.bf16.mxu0 %v6362
      %8663 = vmatpush1.bf16.msra.mxu0 %v6361
      %8664 = vmatprep.subr.bf16.mxu0 %v6365
      %8665 = vmatpush1.bf16.msra.mxu0 %v6364
      %8666 = vmatprep.subr.bf16.mxu0 %v6368
      %8667 = vmatpush1.bf16.msra.mxu0 %v6367
      %8668 = vmatprep.subr.bf16.mxu0 %v6371
      %8669 = vmatpush1.bf16.msra.mxu0 %v6370
      %8670 = vmatprep.subr.bf16.mxu0 %v6374
      %8671 = vmatpush1.bf16.msra.mxu0 %v6373
      %8672 = vmatprep.subr.bf16.mxu0 %v6377
      %8673 = vmatpush1.bf16.msra.mxu0 %v6376
      %8674 = vmatprep.subr.bf16.mxu0 %v6380
      %8675 = vmatpush1.bf16.msra.mxu0 %v6379
      %8676 = vmatprep.mubr.bf16.mxu0 %v522
      %8677 = vmatmul.mubr.bf16.gmra.mrb[0].mxu0 %v521
      %v8678 = vpop.f32.mrb[0].mxu0
      %v8679 = vadd.f32 %v8638, %v8678
      %v8680 = vpop.f32.mrb[0].mxu0
      %v8681 = vadd.f32 %v8640, %v8680
      %v8682 = vpop.f32.mrb[0].mxu0
      %v8683 = vpop.f32.mrb[0].mxu0
      %8684 = vdwg.mxu0
      %8685 = vmatprep.subr.bf16.mxu0 %v6383
      %8686 = vmatpush1.bf16.msra.mxu0 %v6382
      %8687 = vmatprep.subr.bf16.mxu0 %v6386
      %8688 = vmatpush1.bf16.msra.mxu0 %v6385
      %8689 = vmatprep.subr.bf16.mxu0 %v6389
      %8690 = vmatpush1.bf16.msra.mxu0 %v6388
      %8691 = vmatprep.subr.bf16.mxu0 %v6392
      %8692 = vmatpush1.bf16.msra.mxu0 %v6391
      %8693 = vmatprep.subr.bf16.mxu0 %v6395
      %8694 = vmatpush1.bf16.msra.mxu0 %v6394
      %8695 = vmatprep.subr.bf16.mxu0 %v6398
      %8696 = vmatpush1.bf16.msra.mxu0 %v6397
      %8697 = vmatprep.subr.bf16.mxu0 %v6401
      %8698 = vmatpush1.bf16.msra.mxu0 %v6400
      %8699 = vmatprep.subr.bf16.mxu0 %v6404
      %8700 = vmatpush1.bf16.msra.mxu0 %v6403
      %8701 = vmatprep.subr.bf16.mxu0 %v6407
      %8702 = vmatpush1.bf16.msra.mxu0 %v6406
      %8703 = vmatprep.subr.bf16.mxu0 %v6410
      %8704 = vmatpush1.bf16.msra.mxu0 %v6409
      %8705 = vmatprep.subr.bf16.mxu0 %v6413
      %8706 = vmatpush1.bf16.msra.mxu0 %v6412
      %8707 = vmatprep.subr.bf16.mxu0 %v6416
      %8708 = vmatpush1.bf16.msra.mxu0 %v6415
      %8709 = vmatprep.subr.bf16.mxu0 %v6419
      %8710 = vmatpush1.bf16.msra.mxu0 %v6418
      %8711 = vmatprep.subr.bf16.mxu0 %v6422
      %8712 = vmatpush1.bf16.msra.mxu0 %v6421
      %8713 = vmatprep.subr.bf16.mxu0 %v6425
      %8714 = vmatpush1.bf16.msra.mxu0 %v6424
      %8715 = vmatprep.subr.bf16.mxu0 %v6428
      %8716 = vmatpush1.bf16.msra.mxu0 %v6427
      %8717 = vmatprep.mubr.bf16.mxu0 %v524
      %8718 = vmatmul.mubr.bf16.gmra.mrb[0].mxu0 %v523
      %v8719 = vpop.f32.mrb[0].mxu0
      %v8720 = vadd.f32 %v8679, %v8719
      %v8721 = vpop.f32.mrb[0].mxu0
      %v8722 = vadd.f32 %v8681, %v8721
      %v8723 = vpop.f32.mrb[0].mxu0
      %v8724 = vpop.f32.mrb[0].mxu0
      %8725 = vdwg.mxu0
      %8726 = vmatprep.subr.bf16.mxu0 %v6431
      %8727 = vmatpush1.bf16.msra.mxu0 %v6430
      %8728 = vmatprep.subr.bf16.mxu0 %v6434
      %8729 = vmatpush1.bf16.msra.mxu0 %v6433
      %8730 = vmatprep.subr.bf16.mxu0 %v6437
      %8731 = vmatpush1.bf16.msra.mxu0 %v6436
      %8732 = vmatprep.subr.bf16.mxu0 %v6440
      %8733 = vmatpush1.bf16.msra.mxu0 %v6439
      %8734 = vmatprep.subr.bf16.mxu0 %v6443
      %8735 = vmatpush1.bf16.msra.mxu0 %v6442
      %8736 = vmatprep.subr.bf16.mxu0 %v6446
      %8737 = vmatpush1.bf16.msra.mxu0 %v6445
      %8738 = vmatprep.subr.bf16.mxu0 %v6449
      %8739 = vmatpush1.bf16.msra.mxu0 %v6448
      %8740 = vmatprep.subr.bf16.mxu0 %v6452
      %8741 = vmatpush1.bf16.msra.mxu0 %v6451
      %8742 = vmatprep.subr.bf16.mxu0 %v6455
      %8743 = vmatpush1.bf16.msra.mxu0 %v6454
      %8744 = vmatprep.subr.bf16.mxu0 %v6458
      %8745 = vmatpush1.bf16.msra.mxu0 %v6457
      %8746 = vmatprep.subr.bf16.mxu0 %v6461
      %8747 = vmatpush1.bf16.msra.mxu0 %v6460
      %8748 = vmatprep.subr.bf16.mxu0 %v6464
      %8749 = vmatpush1.bf16.msra.mxu0 %v6463
      %8750 = vmatprep.subr.bf16.mxu0 %v6467
      %8751 = vmatpush1.bf16.msra.mxu0 %v6466
      %8752 = vmatprep.subr.bf16.mxu0 %v6470
      %8753 = vmatpush1.bf16.msra.mxu0 %v6469
      %8754 = vmatprep.subr.bf16.mxu0 %v6473
      %8755 = vmatpush1.bf16.msra.mxu0 %v6472
      %8756 = vmatprep.subr.bf16.mxu0 %v6476
      %8757 = vmatpush1.bf16.msra.mxu0 %v6475
      %8758 = vmatprep.mubr.bf16.mxu0 %v526
      %8759 = vmatmul.mubr.bf16.gmra.mrb[0].mxu0 %v525
      %v8760 = vpop.f32.mrb[0].mxu0
      %v8761 = vadd.f32 %v8720, %v8760
      %v8762 = vpop.f32.mrb[0].mxu0
      %v8763 = vadd.f32 %v8722, %v8762
      %v8764 = vpop.f32.mrb[0].mxu0
      %v8765 = vpop.f32.mrb[0].mxu0
      %8766 = vdwg.mxu0
      %8767 = vmatprep.subr.bf16.mxu0 %v6479
      %8768 = vmatpush1.bf16.msra.mxu0 %v6478
      %8769 = vmatprep.subr.bf16.mxu0 %v6482
      %8770 = vmatpush1.bf16.msra.mxu0 %v6481
      %8771 = vmatprep.subr.bf16.mxu0 %v6485
      %8772 = vmatpush1.bf16.msra.mxu0 %v6484
      %8773 = vmatprep.subr.bf16.mxu0 %v6488
      %8774 = vmatpush1.bf16.msra.mxu0 %v6487
      %8775 = vmatprep.subr.bf16.mxu0 %v6491
      %8776 = vmatpush1.bf16.msra.mxu0 %v6490
      %8777 = vmatprep.subr.bf16.mxu0 %v6494
      %8778 = vmatpush1.bf16.msra.mxu0 %v6493
      %8779 = vmatprep.subr.bf16.mxu0 %v6497
      %8780 = vmatpush1.bf16.msra.mxu0 %v6496
      %8781 = vmatprep.subr.bf16.mxu0 %v6500
      %8782 = vmatpush1.bf16.msra.mxu0 %v6499
      %8783 = vmatprep.subr.bf16.mxu0 %v6503
      %8784 = vmatpush1.bf16.msra.mxu0 %v6502
      %8785 = vmatprep.subr.bf16.mxu0 %v6506
      %8786 = vmatpush1.bf16.msra.mxu0 %v6505
      %8787 = vmatprep.subr.bf16.mxu0 %v6509
      %8788 = vmatpush1.bf16.msra.mxu0 %v6508
      %8789 = vmatprep.subr.bf16.mxu0 %v6512
      %8790 = vmatpush1.bf16.msra.mxu0 %v6511
      %8791 = vmatprep.subr.bf16.mxu0 %v6515
      %8792 = vmatpush1.bf16.msra.mxu0 %v6514
      %8793 = vmatprep.subr.bf16.mxu0 %v6518
      %8794 = vmatpush1.bf16.msra.mxu0 %v6517
      %8795 = vmatprep.subr.bf16.mxu0 %v6521
      %8796 = vmatpush1.bf16.msra.mxu0 %v6520
      %8797 = vmatprep.subr.bf16.mxu0 %v6524
      %8798 = vmatpush1.bf16.msra.mxu0 %v6523
      %8799 = vmatprep.mubr.bf16.mxu0 %v528
      %8800 = vmatmul.mubr.bf16.gmra.mrb[0].mxu0 %v527
      %v8801 = vpop.f32.mrb[0].mxu0
      %v8802 = vadd.f32 %v8761, %v8801
      %v8803 = vpop.f32.mrb[0].mxu0
      %v8804 = vadd.f32 %v8763, %v8803
      %v8805 = vpop.f32.mrb[0].mxu0
      %v8806 = vpop.f32.mrb[0].mxu0
      %8807 = vdwg.mxu0
      %8808 = vmatprep.subr.bf16.mxu0 %v6527
      %8809 = vmatpush1.bf16.msra.mxu0 %v6526
      %8810 = vmatprep.subr.bf16.mxu0 %v6530
      %8811 = vmatpush1.bf16.msra.mxu0 %v6529
      %8812 = vmatprep.subr.bf16.mxu0 %v6533
      %8813 = vmatpush1.bf16.msra.mxu0 %v6532
      %8814 = vmatprep.subr.bf16.mxu0 %v6536
      %8815 = vmatpush1.bf16.msra.mxu0 %v6535
      %8816 = vmatprep.subr.bf16.mxu0 %v6539
      %8817 = vmatpush1.bf16.msra.mxu0 %v6538
      %8818 = vmatprep.subr.bf16.mxu0 %v6542
      %8819 = vmatpush1.bf16.msra.mxu0 %v6541
      %8820 = vmatprep.subr.bf16.mxu0 %v6545
      %8821 = vmatpush1.bf16.msra.mxu0 %v6544
      %8822 = vmatprep.subr.bf16.mxu0 %v6548
      %8823 = vmatpush1.bf16.msra.mxu0 %v6547
      %8824 = vmatprep.subr.bf16.mxu0 %v6551
      %8825 = vmatpush1.bf16.msra.mxu0 %v6550
      %8826 = vmatprep.subr.bf16.mxu0 %v6554
      %8827 = vmatpush1.bf16.msra.mxu0 %v6553
      %8828 = vmatprep.subr.bf16.mxu0 %v6557
      %8829 = vmatpush1.bf16.msra.mxu0 %v6556
      %8830 = vmatprep.subr.bf16.mxu0 %v6560
      %8831 = vmatpush1.bf16.msra.mxu0 %v6559
      %8832 = vmatprep.subr.bf16.mxu0 %v6563
      %8833 = vmatpush1.bf16.msra.mxu0 %v6562
      %8834 = vmatprep.subr.bf16.mxu0 %v6566
      %8835 = vmatpush1.bf16.msra.mxu0 %v6565
      %8836 = vmatprep.subr.bf16.mxu0 %v6569
      %8837 = vmatpush1.bf16.msra.mxu0 %v6568
      %8838 = vmatprep.subr.bf16.mxu0 %v6572
      %8839 = vmatpush1.bf16.msra.mxu0 %v6571
      %8840 = vmatprep.mubr.bf16.mxu0 %v530
      %8841 = vmatmul.mubr.bf16.gmra.mrb[0].mxu0 %v529
      %v8842 = vpop.f32.mrb[0].mxu0
      %v8843 = vadd.f32 %v8802, %v8842
      %v8844 = vpop.f32.mrb[0].mxu0
      %v8845 = vadd.f32 %v8804, %v8844
      %v8846 = vpop.f32.mrb[0].mxu0
      %v8847 = vpop.f32.mrb[0].mxu0
      %8848 = vdwg.mxu0
      %8849 = vmatprep.subr.bf16.mxu0 %v6575
      %8850 = vmatpush1.bf16.msra.mxu0 %v6574
      %8851 = vmatprep.subr.bf16.mxu0 %v6578
      %8852 = vmatpush1.bf16.msra.mxu0 %v6577
      %8853 = vmatprep.subr.bf16.mxu0 %v6581
      %8854 = vmatpush1.bf16.msra.mxu0 %v6580
      %8855 = vmatprep.subr.bf16.mxu0 %v6584
      %8856 = vmatpush1.bf16.msra.mxu0 %v6583
      %8857 = vmatprep.subr.bf16.mxu0 %v6587
      %8858 = vmatpush1.bf16.msra.mxu0 %v6586
      %8859 = vmatprep.subr.bf16.mxu0 %v6590
      %8860 = vmatpush1.bf16.msra.mxu0 %v6589
      %8861 = vmatprep.subr.bf16.mxu0 %v6593
      %8862 = vmatpush1.bf16.msra.mxu0 %v6592
      %8863 = vmatprep.subr.bf16.mxu0 %v6596
      %8864 = vmatpush1.bf16.msra.mxu0 %v6595
      %8865 = vmatprep.subr.bf16.mxu0 %v6599
      %8866 = vmatpush1.bf16.msra.mxu0 %v6598
      %8867 = vmatprep.subr.bf16.mxu0 %v6602
      %8868 = vmatpush1.bf16.msra.mxu0 %v6601
      %8869 = vmatprep.subr.bf16.mxu0 %v6605
      %8870 = vmatpush1.bf16.msra.mxu0 %v6604
      %8871 = vmatprep.subr.bf16.mxu0 %v6608
      %8872 = vmatpush1.bf16.msra.mxu0 %v6607
      %8873 = vmatprep.subr.bf16.mxu0 %v6611
      %8874 = vmatpush1.bf16.msra.mxu0 %v6610
      %8875 = vmatprep.subr.bf16.mxu0 %v6614
      %8876 = vmatpush1.bf16.msra.mxu0 %v6613
      %8877 = vmatprep.subr.bf16.mxu0 %v6617
      %8878 = vmatpush1.bf16.msra.mxu0 %v6616
      %8879 = vmatprep.subr.bf16.mxu0 %v6620
      %8880 = vmatpush1.bf16.msra.mxu0 %v6619
      %8881 = vmatprep.mubr.bf16.mxu0 %v532
      %8882 = vmatmul.mubr.bf16.gmra.mrb[0].mxu0 %v531
      %v8883 = vpop.f32.mrb[0].mxu0
      %v8884 = vadd.f32 %v8843, %v8883
      %v8885 = vpop.f32.mrb[0].mxu0
      %v8886 = vadd.f32 %v8845, %v8885
      %v8887 = vpop.f32.mrb[0].mxu0
      %v8888 = vpop.f32.mrb[0].mxu0
      %8889 = vdwg.mxu0
      %8890 = vmatprep.subr.bf16.mxu0 %v6623
      %8891 = vmatpush1.bf16.msra.mxu0 %v6622
      %8892 = vmatprep.subr.bf16.mxu0 %v6626
      %8893 = vmatpush1.bf16.msra.mxu0 %v6625
      %8894 = vmatprep.subr.bf16.mxu0 %v6629
      %8895 = vmatpush1.bf16.msra.mxu0 %v6628
      %8896 = vmatprep.subr.bf16.mxu0 %v6632
      %8897 = vmatpush1.bf16.msra.mxu0 %v6631
      %8898 = vmatprep.subr.bf16.mxu0 %v6635
      %8899 = vmatpush1.bf16.msra.mxu0 %v6634
      %8900 = vmatprep.subr.bf16.mxu0 %v6638
      %8901 = vmatpush1.bf16.msra.mxu0 %v6637
      %8902 = vmatprep.subr.bf16.mxu0 %v6641
      %8903 = vmatpush1.bf16.msra.mxu0 %v6640
      %8904 = vmatprep.subr.bf16.mxu0 %v6644
      %8905 = vmatpush1.bf16.msra.mxu0 %v6643
      %8906 = vmatprep.subr.bf16.mxu0 %v6647
      %8907 = vmatpush1.bf16.msra.mxu0 %v6646
      %8908 = vmatprep.subr.bf16.mxu0 %v6650
      %8909 = vmatpush1.bf16.msra.mxu0 %v6649
      %8910 = vmatprep.subr.bf16.mxu0 %v6653
      %8911 = vmatpush1.bf16.msra.mxu0 %v6652
      %8912 = vmatprep.subr.bf16.mxu0 %v6656
      %8913 = vmatpush1.bf16.msra.mxu0 %v6655
      %8914 = vmatprep.subr.bf16.mxu0 %v6659
      %8915 = vmatpush1.bf16.msra.mxu0 %v6658
      %8916 = vmatprep.subr.bf16.mxu0 %v6662
      %8917 = vmatpush1.bf16.msra.mxu0 %v6661
      %8918 = vmatprep.subr.bf16.mxu0 %v6665
      %8919 = vmatpush1.bf16.msra.mxu0 %v6664
      %8920 = vmatprep.subr.bf16.mxu0 %v6668
      %8921 = vmatpush1.bf16.msra.mxu0 %v6667
      %8922 = vmatprep.mubr.bf16.mxu0 %v534
      %8923 = vmatmul.mubr.bf16.gmra.mrb[0].mxu0 %v533
      %v8924 = vpop.f32.mrb[0].mxu0
      %v8925 = vadd.f32 %v8884, %v8924
      %v8926 = vpop.f32.mrb[0].mxu0
      %v8927 = vadd.f32 %v8886, %v8926
      %v8928 = vpop.f32.mrb[0].mxu0
      %v8929 = vpop.f32.mrb[0].mxu0
      %8930 = vdwg.mxu0
      %8931 = vmatprep.subr.bf16.mxu0 %v6671
      %8932 = vmatpush1.bf16.msra.mxu0 %v6670
      %8933 = vmatprep.subr.bf16.mxu0 %v6674
      %8934 = vmatpush1.bf16.msra.mxu0 %v6673
      %8935 = vmatprep.subr.bf16.mxu0 %v6677
      %8936 = vmatpush1.bf16.msra.mxu0 %v6676
      %8937 = vmatprep.subr.bf16.mxu0 %v6680
      %8938 = vmatpush1.bf16.msra.mxu0 %v6679
      %8939 = vmatprep.subr.bf16.mxu0 %v6683
      %8940 = vmatpush1.bf16.msra.mxu0 %v6682
      %8941 = vmatprep.subr.bf16.mxu0 %v6686
      %8942 = vmatpush1.bf16.msra.mxu0 %v6685
      %8943 = vmatprep.subr.bf16.mxu0 %v6689
      %8944 = vmatpush1.bf16.msra.mxu0 %v6688
      %8945 = vmatprep.subr.bf16.mxu0 %v6692
      %8946 = vmatpush1.bf16.msra.mxu0 %v6691
      %8947 = vmatprep.subr.bf16.mxu0 %v6695
      %8948 = vmatpush1.bf16.msra.mxu0 %v6694
      %8949 = vmatprep.subr.bf16.mxu0 %v6698
      %8950 = vmatpush1.bf16.msra.mxu0 %v6697
      %8951 = vmatprep.subr.bf16.mxu0 %v6701
      %8952 = vmatpush1.bf16.msra.mxu0 %v6700
      %8953 = vmatprep.subr.bf16.mxu0 %v6704
      %8954 = vmatpush1.bf16.msra.mxu0 %v6703
      %8955 = vmatprep.subr.bf16.mxu0 %v6707
      %8956 = vmatpush1.bf16.msra.mxu0 %v6706
      %8957 = vmatprep.subr.bf16.mxu0 %v6710
      %8958 = vmatpush1.bf16.msra.mxu0 %v6709
      %8959 = vmatprep.subr.bf16.mxu0 %v6713
      %8960 = vmatpush1.bf16.msra.mxu0 %v6712
      %8961 = vmatprep.subr.bf16.mxu0 %v6716
      %8962 = vmatpush1.bf16.msra.mxu0 %v6715
      %8963 = vmatprep.mubr.bf16.mxu0 %v536
      %8964 = vmatmul.mubr.bf16.gmra.mrb[0].mxu0 %v535
      %v8965 = vpop.f32.mrb[0].mxu0
      %v8966 = vadd.f32 %v8925, %v8965
      %v8967 = vpop.f32.mrb[0].mxu0
      %v8968 = vadd.f32 %v8927, %v8967
      %v8969 = vpop.f32.mrb[0].mxu0
      %v8970 = vpop.f32.mrb[0].mxu0
      %8971 = vdwg.mxu0
      %8972 = vmatprep.subr.bf16.mxu0 %v6719
      %8973 = vmatpush1.bf16.msra.mxu0 %v6718
      %8974 = vmatprep.subr.bf16.mxu0 %v6722
      %8975 = vmatpush1.bf16.msra.mxu0 %v6721
      %8976 = vmatprep.subr.bf16.mxu0 %v6725
      %8977 = vmatpush1.bf16.msra.mxu0 %v6724
      %8978 = vmatprep.subr.bf16.mxu0 %v6728
      %8979 = vmatpush1.bf16.msra.mxu0 %v6727
      %8980 = vmatprep.subr.bf16.mxu0 %v6731
      %8981 = vmatpush1.bf16.msra.mxu0 %v6730
      %8982 = vmatprep.subr.bf16.mxu0 %v6734
      %8983 = vmatpush1.bf16.msra.mxu0 %v6733
      %8984 = vmatprep.subr.bf16.mxu0 %v6737
      %8985 = vmatpush1.bf16.msra.mxu0 %v6736
      %8986 = vmatprep.subr.bf16.mxu0 %v6740
      %8987 = vmatpush1.bf16.msra.mxu0 %v6739
      %8988 = vmatprep.subr.bf16.mxu0 %v6743
      %8989 = vmatpush1.bf16.msra.mxu0 %v6742
      %8990 = vmatprep.subr.bf16.mxu0 %v6746
      %8991 = vmatpush1.bf16.msra.mxu0 %v6745
      %8992 = vmatprep.subr.bf16.mxu0 %v6749
      %8993 = vmatpush1.bf16.msra.mxu0 %v6748
      %8994 = vmatprep.subr.bf16.mxu0 %v6752
      %8995 = vmatpush1.bf16.msra.mxu0 %v6751
      %8996 = vmatprep.subr.bf16.mxu0 %v6755
      %8997 = vmatpush1.bf16.msra.mxu0 %v6754
      %8998 = vmatprep.subr.bf16.mxu0 %v6758
      %8999 = vmatpush1.bf16.msra.mxu0 %v6757
      %9000 = vmatprep.subr.bf16.mxu0 %v6761
      %9001 = vmatpush1.bf16.msra.mxu0 %v6760
      %9002 = vmatprep.subr.bf16.mxu0 %v6764
      %9003 = vmatpush1.bf16.msra.mxu0 %v6763
      %9004 = vmatprep.mubr.bf16.mxu0 %v538
      %9005 = vmatmul.mubr.bf16.gmra.mrb[0].mxu0 %v537
      %v9006 = vpop.f32.mrb[0].mxu0
      %v9007 = vadd.f32 %v8966, %v9006
      %v9008 = vpop.f32.mrb[0].mxu0
      %v9009 = vadd.f32 %v8968, %v9008
      %v9010 = vpop.f32.mrb[0].mxu0
      %v9011 = vpop.f32.mrb[0].mxu0
      %9012 = vdwg.mxu0
      %9013 = vmatprep.subr.bf16.mxu0 %v6767
      %9014 = vmatpush1.bf16.msra.mxu0 %v6766
      %9015 = vmatprep.subr.bf16.mxu0 %v6770
      %9016 = vmatpush1.bf16.msra.mxu0 %v6769
      %9017 = vmatprep.subr.bf16.mxu0 %v6773
      %9018 = vmatpush1.bf16.msra.mxu0 %v6772
      %9019 = vmatprep.subr.bf16.mxu0 %v6776
      %9020 = vmatpush1.bf16.msra.mxu0 %v6775
      %9021 = vmatprep.subr.bf16.mxu0 %v6779
      %9022 = vmatpush1.bf16.msra.mxu0 %v6778
      %9023 = vmatprep.subr.bf16.mxu0 %v6782
      %9024 = vmatpush1.bf16.msra.mxu0 %v6781
      %9025 = vmatprep.subr.bf16.mxu0 %v6785
      %9026 = vmatpush1.bf16.msra.mxu0 %v6784
      %9027 = vmatprep.subr.bf16.mxu0 %v6788
      %9028 = vmatpush1.bf16.msra.mxu0 %v6787
      %9029 = vmatprep.subr.bf16.mxu0 %v6791
      %9030 = vmatpush1.bf16.msra.mxu0 %v6790
      %9031 = vmatprep.subr.bf16.mxu0 %v6794
      %9032 = vmatpush1.bf16.msra.mxu0 %v6793
      %9033 = vmatprep.subr.bf16.mxu0 %v6797
      %9034 = vmatpush1.bf16.msra.mxu0 %v6796
      %9035 = vmatprep.subr.bf16.mxu0 %v6800
      %9036 = vmatpush1.bf16.msra.mxu0 %v6799
      %9037 = vmatprep.subr.bf16.mxu0 %v6803
      %9038 = vmatpush1.bf16.msra.mxu0 %v6802
      %9039 = vmatprep.subr.bf16.mxu0 %v6806
      %9040 = vmatpush1.bf16.msra.mxu0 %v6805
      %9041 = vmatprep.subr.bf16.mxu0 %v6809
      %9042 = vmatpush1.bf16.msra.mxu0 %v6808
      %9043 = vmatprep.subr.bf16.mxu0 %v6812
      %9044 = vmatpush1.bf16.msra.mxu0 %v6811
      %9045 = vmatprep.mubr.bf16.mxu0 %v540
      %9046 = vmatmul.mubr.bf16.gmra.mrb[0].mxu0 %v539
      %v9047 = vpop.f32.mrb[0].mxu0
      %v9048 = vadd.f32 %v9007, %v9047
      %v9049 = vpop.f32.mrb[0].mxu0
      %v9050 = vadd.f32 %v9009, %v9049
      %v9051 = vpop.f32.mrb[0].mxu0
      %v9052 = vpop.f32.mrb[0].mxu0
      %9053 = vdwg.mxu0
      %9054 = vmatprep.subr.bf16.mxu0 %v6815
      %9055 = vmatpush1.bf16.msra.mxu0 %v6814
      %9056 = vmatprep.subr.bf16.mxu0 %v6818
      %9057 = vmatpush1.bf16.msra.mxu0 %v6817
      %9058 = vmatprep.subr.bf16.mxu0 %v6821
      %9059 = vmatpush1.bf16.msra.mxu0 %v6820
      %9060 = vmatprep.subr.bf16.mxu0 %v6824
      %9061 = vmatpush1.bf16.msra.mxu0 %v6823
      %9062 = vmatprep.subr.bf16.mxu0 %v6827
      %9063 = vmatpush1.bf16.msra.mxu0 %v6826
      %9064 = vmatprep.subr.bf16.mxu0 %v6830
      %9065 = vmatpush1.bf16.msra.mxu0 %v6829
      %9066 = vmatprep.subr.bf16.mxu0 %v6833
      %9067 = vmatpush1.bf16.msra.mxu0 %v6832
      %9068 = vmatprep.subr.bf16.mxu0 %v6836
      %9069 = vmatpush1.bf16.msra.mxu0 %v6835
      %9070 = vmatprep.subr.bf16.mxu0 %v6839
      %9071 = vmatpush1.bf16.msra.mxu0 %v6838
      %9072 = vmatprep.subr.bf16.mxu0 %v6842
      %9073 = vmatpush1.bf16.msra.mxu0 %v6841
      %9074 = vmatprep.subr.bf16.mxu0 %v6845
      %9075 = vmatpush1.bf16.msra.mxu0 %v6844
      %9076 = vmatprep.subr.bf16.mxu0 %v6848
      %9077 = vmatpush1.bf16.msra.mxu0 %v6847
      %9078 = vmatprep.subr.bf16.mxu0 %v6851
      %9079 = vmatpush1.bf16.msra.mxu0 %v6850
      %9080 = vmatprep.subr.bf16.mxu0 %v6854
      %9081 = vmatpush1.bf16.msra.mxu0 %v6853
      %9082 = vmatprep.subr.bf16.mxu0 %v6857
      %9083 = vmatpush1.bf16.msra.mxu0 %v6856
      %9084 = vmatprep.subr.bf16.mxu0 %v6860
      %9085 = vmatpush1.bf16.msra.mxu0 %v6859
      %9086 = vmatprep.mubr.bf16.mxu0 %v542
      %9087 = vmatmul.mubr.bf16.gmra.mrb[0].mxu0 %v541
      %v9088 = vpop.f32.mrb[0].mxu0
      %v9089 = vadd.f32 %v9048, %v9088
      %v9090 = vpop.f32.mrb[0].mxu0
      %v9091 = vadd.f32 %v9050, %v9090
      %v9092 = vpop.f32.mrb[0].mxu0
      %v9093 = vpop.f32.mrb[0].mxu0
      %9094 = vdwg.mxu0
      %9095 = vmatprep.subr.bf16.mxu0 %v6863
      %9096 = vmatpush1.bf16.msra.mxu0 %v6862
      %9097 = vmatprep.subr.bf16.mxu0 %v6866
      %9098 = vmatpush1.bf16.msra.mxu0 %v6865
      %9099 = vmatprep.subr.bf16.mxu0 %v6869
      %9100 = vmatpush1.bf16.msra.mxu0 %v6868
      %9101 = vmatprep.subr.bf16.mxu0 %v6872
      %9102 = vmatpush1.bf16.msra.mxu0 %v6871
      %9103 = vmatprep.subr.bf16.mxu0 %v6875
      %9104 = vmatpush1.bf16.msra.mxu0 %v6874
      %9105 = vmatprep.subr.bf16.mxu0 %v6878
      %9106 = vmatpush1.bf16.msra.mxu0 %v6877
      %9107 = vmatprep.subr.bf16.mxu0 %v6881
      %9108 = vmatpush1.bf16.msra.mxu0 %v6880
      %9109 = vmatprep.subr.bf16.mxu0 %v6884
      %9110 = vmatpush1.bf16.msra.mxu0 %v6883
      %9111 = vmatprep.subr.bf16.mxu0 %v6887
      %9112 = vmatpush1.bf16.msra.mxu0 %v6886
      %9113 = vmatprep.subr.bf16.mxu0 %v6890
      %9114 = vmatpush1.bf16.msra.mxu0 %v6889
      %9115 = vmatprep.subr.bf16.mxu0 %v6893
      %9116 = vmatpush1.bf16.msra.mxu0 %v6892
      %9117 = vmatprep.subr.bf16.mxu0 %v6896
      %9118 = vmatpush1.bf16.msra.mxu0 %v6895
      %9119 = vmatprep.subr.bf16.mxu0 %v6899
      %9120 = vmatpush1.bf16.msra.mxu0 %v6898
      %9121 = vmatprep.subr.bf16.mxu0 %v6902
      %9122 = vmatpush1.bf16.msra.mxu0 %v6901
      %9123 = vmatprep.subr.bf16.mxu0 %v6905
      %9124 = vmatpush1.bf16.msra.mxu0 %v6904
      %9125 = vmatprep.subr.bf16.mxu0 %v6908
      %9126 = vmatpush1.bf16.msra.mxu0 %v6907
      %9127 = vmatprep.mubr.bf16.mxu0 %v544
      %9128 = vmatmul.mubr.bf16.gmra.mrb[0].mxu0 %v543
      %v9129 = vpop.f32.mrb[0].mxu0
      %v9130 = vadd.f32 %v9089, %v9129
      %v9131 = vpop.f32.mrb[0].mxu0
      %v9132 = vadd.f32 %v9091, %v9131
      %v9133 = vpop.f32.mrb[0].mxu0
      %v9134 = vpop.f32.mrb[0].mxu0
      %9135 = vdwg.mxu0
      %9136 = vmatprep.subr.bf16.mxu0 %v6911
      %9137 = vmatpush1.bf16.msra.mxu0 %v6910
      %9138 = vmatprep.subr.bf16.mxu0 %v6914
      %9139 = vmatpush1.bf16.msra.mxu0 %v6913
      %9140 = vmatprep.subr.bf16.mxu0 %v6917
      %9141 = vmatpush1.bf16.msra.mxu0 %v6916
      %9142 = vmatprep.subr.bf16.mxu0 %v6920
      %9143 = vmatpush1.bf16.msra.mxu0 %v6919
      %9144 = vmatprep.subr.bf16.mxu0 %v6923
      %9145 = vmatpush1.bf16.msra.mxu0 %v6922
      %9146 = vmatprep.subr.bf16.mxu0 %v6926
      %9147 = vmatpush1.bf16.msra.mxu0 %v6925
      %9148 = vmatprep.subr.bf16.mxu0 %v6929
      %9149 = vmatpush1.bf16.msra.mxu0 %v6928
      %9150 = vmatprep.subr.bf16.mxu0 %v6932
      %9151 = vmatpush1.bf16.msra.mxu0 %v6931
      %9152 = vmatprep.subr.bf16.mxu0 %v6935
      %9153 = vmatpush1.bf16.msra.mxu0 %v6934
      %9154 = vmatprep.subr.bf16.mxu0 %v6938
      %9155 = vmatpush1.bf16.msra.mxu0 %v6937
      %9156 = vmatprep.subr.bf16.mxu0 %v6941
      %9157 = vmatpush1.bf16.msra.mxu0 %v6940
      %9158 = vmatprep.subr.bf16.mxu0 %v6944
      %9159 = vmatpush1.bf16.msra.mxu0 %v6943
      %9160 = vmatprep.subr.bf16.mxu0 %v6947
      %9161 = vmatpush1.bf16.msra.mxu0 %v6946
      %9162 = vmatprep.subr.bf16.mxu0 %v6950
      %9163 = vmatpush1.bf16.msra.mxu0 %v6949
      %9164 = vmatprep.subr.bf16.mxu0 %v6953
      %9165 = vmatpush1.bf16.msra.mxu0 %v6952
      %9166 = vmatprep.subr.bf16.mxu0 %v6956
      %9167 = vmatpush1.bf16.msra.mxu0 %v6955
      %9168 = vmatprep.mubr.bf16.mxu0 %v546
      %9169 = vmatmul.mubr.bf16.gmra.mrb[0].mxu0 %v545
      %v9170 = vpop.f32.mrb[0].mxu0
      %v9171 = vadd.f32 %v9130, %v9170
      %v9172 = vpop.f32.mrb[0].mxu0
      %v9173 = vadd.f32 %v9132, %v9172
      %v9174 = vpop.f32.mrb[0].mxu0
      %v9175 = vpop.f32.mrb[0].mxu0
      %9176 = vdwg.mxu0
      %9177 = vmatprep.subr.bf16.mxu0 %v6959
      %9178 = vmatpush1.bf16.msra.mxu0 %v6958
      %9179 = vmatprep.subr.bf16.mxu0 %v6962
      %9180 = vmatpush1.bf16.msra.mxu0 %v6961
      %9181 = vmatprep.subr.bf16.mxu0 %v6965
      %9182 = vmatpush1.bf16.msra.mxu0 %v6964
      %9183 = vmatprep.subr.bf16.mxu0 %v6968
      %9184 = vmatpush1.bf16.msra.mxu0 %v6967
      %9185 = vmatprep.subr.bf16.mxu0 %v6971
      %9186 = vmatpush1.bf16.msra.mxu0 %v6970
      %9187 = vmatprep.subr.bf16.mxu0 %v6974
      %9188 = vmatpush1.bf16.msra.mxu0 %v6973
      %9189 = vmatprep.subr.bf16.mxu0 %v6977
      %9190 = vmatpush1.bf16.msra.mxu0 %v6976
      %9191 = vmatprep.subr.bf16.mxu0 %v6980
      %9192 = vmatpush1.bf16.msra.mxu0 %v6979
      %9193 = vmatprep.subr.bf16.mxu0 %v6983
      %9194 = vmatpush1.bf16.msra.mxu0 %v6982
      %9195 = vmatprep.subr.bf16.mxu0 %v6986
      %9196 = vmatpush1.bf16.msra.mxu0 %v6985
      %9197 = vmatprep.subr.bf16.mxu0 %v6989
      %9198 = vmatpush1.bf16.msra.mxu0 %v6988
      %9199 = vmatprep.subr.bf16.mxu0 %v6992
      %9200 = vmatpush1.bf16.msra.mxu0 %v6991
      %9201 = vmatprep.subr.bf16.mxu0 %v6995
      %9202 = vmatpush1.bf16.msra.mxu0 %v6994
      %9203 = vmatprep.subr.bf16.mxu0 %v6998
      %9204 = vmatpush1.bf16.msra.mxu0 %v6997
      %9205 = vmatprep.subr.bf16.mxu0 %v7001
      %9206 = vmatpush1.bf16.msra.mxu0 %v7000
      %9207 = vmatprep.subr.bf16.mxu0 %v7004
      %9208 = vmatpush1.bf16.msra.mxu0 %v7003
      %9209 = vmatprep.mubr.bf16.mxu0 %v548
      %9210 = vmatmul.mubr.bf16.gmra.mrb[0].mxu0 %v547
      %v9211 = vpop.f32.mrb[0].mxu0
      %v9212 = vadd.f32 %v9171, %v9211
      %v9213 = vpop.f32.mrb[0].mxu0
      %v9214 = vadd.f32 %v9173, %v9213
      %v9215 = vpop.f32.mrb[0].mxu0
      %v9216 = vpop.f32.mrb[0].mxu0
      %9217 = vdwg.mxu0
      %9218 = vmatprep.subr.bf16.mxu0 %v7007
      %9219 = vmatpush1.bf16.msra.mxu0 %v7006
      %9220 = vmatprep.subr.bf16.mxu0 %v7010
      %9221 = vmatpush1.bf16.msra.mxu0 %v7009
      %9222 = vmatprep.subr.bf16.mxu0 %v7013
      %9223 = vmatpush1.bf16.msra.mxu0 %v7012
      %9224 = vmatprep.subr.bf16.mxu0 %v7016
      %9225 = vmatpush1.bf16.msra.mxu0 %v7015
      %9226 = vmatprep.subr.bf16.mxu0 %v7019
      %9227 = vmatpush1.bf16.msra.mxu0 %v7018
      %9228 = vmatprep.subr.bf16.mxu0 %v7022
      %9229 = vmatpush1.bf16.msra.mxu0 %v7021
      %9230 = vmatprep.subr.bf16.mxu0 %v7025
      %9231 = vmatpush1.bf16.msra.mxu0 %v7024
      %9232 = vmatprep.subr.bf16.mxu0 %v7028
      %9233 = vmatpush1.bf16.msra.mxu0 %v7027
      %9234 = vmatprep.subr.bf16.mxu0 %v7031
      %9235 = vmatpush1.bf16.msra.mxu0 %v7030
      %9236 = vmatprep.subr.bf16.mxu0 %v7034
      %9237 = vmatpush1.bf16.msra.mxu0 %v7033
      %9238 = vmatprep.subr.bf16.mxu0 %v7037
      %9239 = vmatpush1.bf16.msra.mxu0 %v7036
      %9240 = vmatprep.subr.bf16.mxu0 %v7040
      %9241 = vmatpush1.bf16.msra.mxu0 %v7039
      %9242 = vmatprep.subr.bf16.mxu0 %v7043
      %9243 = vmatpush1.bf16.msra.mxu0 %v7042
      %9244 = vmatprep.subr.bf16.mxu0 %v7046
      %9245 = vmatpush1.bf16.msra.mxu0 %v7045
      %9246 = vmatprep.subr.bf16.mxu0 %v7049
      %9247 = vmatpush1.bf16.msra.mxu0 %v7048
      %9248 = vmatprep.subr.bf16.mxu0 %v7052
      %9249 = vmatpush1.bf16.msra.mxu0 %v7051
      %9250 = vmatprep.mubr.bf16.mxu0 %v550
      %9251 = vmatmul.mubr.bf16.gmra.mrb[0].mxu0 %v549
      %v9252 = vpop.f32.mrb[0].mxu0
      %v9253 = vadd.f32 %v9212, %v9252
      %v9254 = vpop.f32.mrb[0].mxu0
      %v9255 = vadd.f32 %v9214, %v9254
      %v9256 = vpop.f32.mrb[0].mxu0
      %v9257 = vpop.f32.mrb[0].mxu0
      %9258 = vdwg.mxu0
      %9259 = vmatprep.subr.bf16.mxu0 %v7055
      %9260 = vmatpush1.bf16.msra.mxu0 %v7054
      %9261 = vmatprep.subr.bf16.mxu0 %v7058
      %9262 = vmatpush1.bf16.msra.mxu0 %v7057
      %9263 = vmatprep.subr.bf16.mxu0 %v7061
      %9264 = vmatpush1.bf16.msra.mxu0 %v7060
      %9265 = vmatprep.subr.bf16.mxu0 %v7064
      %9266 = vmatpush1.bf16.msra.mxu0 %v7063
      %9267 = vmatprep.subr.bf16.mxu0 %v7067
      %9268 = vmatpush1.bf16.msra.mxu0 %v7066
      %9269 = vmatprep.subr.bf16.mxu0 %v7070
      %9270 = vmatpush1.bf16.msra.mxu0 %v7069
      %9271 = vmatprep.subr.bf16.mxu0 %v7073
      %9272 = vmatpush1.bf16.msra.mxu0 %v7072
      %9273 = vmatprep.subr.bf16.mxu0 %v7076
      %9274 = vmatpush1.bf16.msra.mxu0 %v7075
      %9275 = vmatprep.subr.bf16.mxu0 %v7079
      %9276 = vmatpush1.bf16.msra.mxu0 %v7078
      %9277 = vmatprep.subr.bf16.mxu0 %v7082
      %9278 = vmatpush1.bf16.msra.mxu0 %v7081
      %9279 = vmatprep.subr.bf16.mxu0 %v7085
      %9280 = vmatpush1.bf16.msra.mxu0 %v7084
      %9281 = vmatprep.subr.bf16.mxu0 %v7088
      %9282 = vmatpush1.bf16.msra.mxu0 %v7087
      %9283 = vmatprep.subr.bf16.mxu0 %v7091
      %9284 = vmatpush1.bf16.msra.mxu0 %v7090
      %9285 = vmatprep.subr.bf16.mxu0 %v7094
      %9286 = vmatpush1.bf16.msra.mxu0 %v7093
      %9287 = vmatprep.subr.bf16.mxu0 %v7097
      %9288 = vmatpush1.bf16.msra.mxu0 %v7096
      %9289 = vmatprep.subr.bf16.mxu0 %v7100
      %9290 = vmatpush1.bf16.msra.mxu0 %v7099
      %9291 = vmatprep.mubr.bf16.mxu0 %v552
      %9292 = vmatmul.mubr.bf16.gmra.mrb[0].mxu0 %v551
      %v9293 = vpop.f32.mrb[0].mxu0
      %v9294 = vadd.f32 %v9253, %v9293
      %v9295 = vpop.f32.mrb[0].mxu0
      %v9296 = vadd.f32 %v9255, %v9295
      %v9297 = vpop.f32.mrb[0].mxu0
      %v9298 = vpop.f32.mrb[0].mxu0
      %9299 = vdwg.mxu0
      %9300 = vmatprep.subr.bf16.mxu0 %v7103
      %9301 = vmatpush1.bf16.msra.mxu0 %v7102
      %9302 = vmatprep.subr.bf16.mxu0 %v7106
      %9303 = vmatpush1.bf16.msra.mxu0 %v7105
      %9304 = vmatprep.subr.bf16.mxu0 %v7109
      %9305 = vmatpush1.bf16.msra.mxu0 %v7108
      %9306 = vmatprep.subr.bf16.mxu0 %v7112
      %9307 = vmatpush1.bf16.msra.mxu0 %v7111
      %9308 = vmatprep.subr.bf16.mxu0 %v7115
      %9309 = vmatpush1.bf16.msra.mxu0 %v7114
      %9310 = vmatprep.subr.bf16.mxu0 %v7118
      %9311 = vmatpush1.bf16.msra.mxu0 %v7117
      %9312 = vmatprep.subr.bf16.mxu0 %v7121
      %9313 = vmatpush1.bf16.msra.mxu0 %v7120
      %9314 = vmatprep.subr.bf16.mxu0 %v7124
      %9315 = vmatpush1.bf16.msra.mxu0 %v7123
      %9316 = vmatprep.subr.bf16.mxu0 %v7127
      %9317 = vmatpush1.bf16.msra.mxu0 %v7126
      %9318 = vmatprep.subr.bf16.mxu0 %v7130
      %9319 = vmatpush1.bf16.msra.mxu0 %v7129
      %9320 = vmatprep.subr.bf16.mxu0 %v7133
      %9321 = vmatpush1.bf16.msra.mxu0 %v7132
      %9322 = vmatprep.subr.bf16.mxu0 %v7136
      %9323 = vmatpush1.bf16.msra.mxu0 %v7135
      %9324 = vmatprep.subr.bf16.mxu0 %v7139
      %9325 = vmatpush1.bf16.msra.mxu0 %v7138
      %9326 = vmatprep.subr.bf16.mxu0 %v7142
      %9327 = vmatpush1.bf16.msra.mxu0 %v7141
      %9328 = vmatprep.subr.bf16.mxu0 %v7145
      %9329 = vmatpush1.bf16.msra.mxu0 %v7144
      %9330 = vmatprep.subr.bf16.mxu0 %v7148
      %9331 = vmatpush1.bf16.msra.mxu0 %v7147
      %9332 = vmatprep.mubr.bf16.mxu0 %v554
      %9333 = vmatmul.mubr.bf16.gmra.mrb[0].mxu0 %v553
      %v9334 = vpop.f32.mrb[0].mxu0
      %v9335 = vadd.f32 %v9294, %v9334
      %v9336 = vpop.f32.mrb[0].mxu0
      %v9337 = vadd.f32 %v9296, %v9336
      %v9338 = vpop.f32.mrb[0].mxu0
      %v9339 = vpop.f32.mrb[0].mxu0
      %9340 = vdwg.mxu0
      %9341 = vmatprep.subr.bf16.mxu0 %v7151
      %9342 = vmatpush1.bf16.msra.mxu0 %v7150
      %9343 = vmatprep.subr.bf16.mxu0 %v7154
      %9344 = vmatpush1.bf16.msra.mxu0 %v7153
      %9345 = vmatprep.subr.bf16.mxu0 %v7157
      %9346 = vmatpush1.bf16.msra.mxu0 %v7156
      %9347 = vmatprep.subr.bf16.mxu0 %v7160
      %9348 = vmatpush1.bf16.msra.mxu0 %v7159
      %9349 = vmatprep.subr.bf16.mxu0 %v7163
      %9350 = vmatpush1.bf16.msra.mxu0 %v7162
      %9351 = vmatprep.subr.bf16.mxu0 %v7166
      %9352 = vmatpush1.bf16.msra.mxu0 %v7165
      %9353 = vmatprep.subr.bf16.mxu0 %v7169
      %9354 = vmatpush1.bf16.msra.mxu0 %v7168
      %9355 = vmatprep.subr.bf16.mxu0 %v7172
      %9356 = vmatpush1.bf16.msra.mxu0 %v7171
      %9357 = vmatprep.subr.bf16.mxu0 %v7175
      %9358 = vmatpush1.bf16.msra.mxu0 %v7174
      %9359 = vmatprep.subr.bf16.mxu0 %v7178
      %9360 = vmatpush1.bf16.msra.mxu0 %v7177
      %9361 = vmatprep.subr.bf16.mxu0 %v7181
      %9362 = vmatpush1.bf16.msra.mxu0 %v7180
      %9363 = vmatprep.subr.bf16.mxu0 %v7184
      %9364 = vmatpush1.bf16.msra.mxu0 %v7183
      %9365 = vmatprep.subr.bf16.mxu0 %v7187
      %9366 = vmatpush1.bf16.msra.mxu0 %v7186
      %9367 = vmatprep.subr.bf16.mxu0 %v7190
      %9368 = vmatpush1.bf16.msra.mxu0 %v7189
      %9369 = vmatprep.subr.bf16.mxu0 %v7193
      %9370 = vmatpush1.bf16.msra.mxu0 %v7192
      %9371 = vmatprep.subr.bf16.mxu0 %v7196
      %9372 = vmatpush1.bf16.msra.mxu0 %v7195
      %9373 = vmatprep.mubr.bf16.mxu0 %v556
      %9374 = vmatmul.mubr.bf16.gmra.mrb[0].mxu0 %v555
      %v9375 = vpop.f32.mrb[0].mxu0
      %v9376 = vadd.f32 %v9335, %v9375
      %v9377 = vpop.f32.mrb[0].mxu0
      %v9378 = vadd.f32 %v9337, %v9377
      %v9379 = vpop.f32.mrb[0].mxu0
      %v9380 = vpop.f32.mrb[0].mxu0
      %9381 = vdwg.mxu0
      %9382 = vmatprep.subr.bf16.mxu0 %v7199
      %9383 = vmatpush1.bf16.msra.mxu0 %v7198
      %9384 = vmatprep.subr.bf16.mxu0 %v7202
      %9385 = vmatpush1.bf16.msra.mxu0 %v7201
      %9386 = vmatprep.subr.bf16.mxu0 %v7205
      %9387 = vmatpush1.bf16.msra.mxu0 %v7204
      %9388 = vmatprep.subr.bf16.mxu0 %v7208
      %9389 = vmatpush1.bf16.msra.mxu0 %v7207
      %9390 = vmatprep.subr.bf16.mxu0 %v7211
      %9391 = vmatpush1.bf16.msra.mxu0 %v7210
      %9392 = vmatprep.subr.bf16.mxu0 %v7214
      %9393 = vmatpush1.bf16.msra.mxu0 %v7213
      %9394 = vmatprep.subr.bf16.mxu0 %v7217
      %9395 = vmatpush1.bf16.msra.mxu0 %v7216
      %9396 = vmatprep.subr.bf16.mxu0 %v7220
      %9397 = vmatpush1.bf16.msra.mxu0 %v7219
      %9398 = vmatprep.subr.bf16.mxu0 0
      %9399 = vmatpush1.bf16.msra.mxu0 0
      %9400 = vmatprep.subr.bf16.mxu0 0
      %9401 = vmatpush1.bf16.msra.mxu0 0
      %9402 = vmatprep.subr.bf16.mxu0 0
      %9403 = vmatpush1.bf16.msra.mxu0 0
      %9404 = vmatprep.subr.bf16.mxu0 0
      %9405 = vmatpush1.bf16.msra.mxu0 0
      %9406 = vmatprep.subr.bf16.mxu0 0
      %9407 = vmatpush1.bf16.msra.mxu0 0
      %9408 = vmatprep.subr.bf16.mxu0 0
      %9409 = vmatpush1.bf16.msra.mxu0 0
      %9410 = vmatprep.subr.bf16.mxu0 0
      %9411 = vmatpush1.bf16.msra.mxu0 0
      %9412 = vmatprep.subr.bf16.mxu0 0
      %9413 = vmatpush1.bf16.msra.mxu0 0
      %9414 = vmatprep.mubr.bf16.mxu0 0
      %9415 = vmatmul.mubr.bf16.gmra.mrb[0].mxu0 %v557
      %v9416 = vpop.f32.mrb[0].mxu0
      %v9417 = vadd.f32 %v9376, %v9416
      %v9418 = vpop.f32.mrb[0].mxu0
      %v9419 = vadd.f32 %v9378, %v9418
      %v9420 = vpop.f32.mrb[0].mxu0
      %v9421 = vpop.f32.mrb[0].mxu0
      %9422 = vdwg.mxu0
      %9423 = vmatprep.subr.bf16.mxu0 0
      %9424 = vmatpush1.bf16.msra.mxu0 %v6048
      %9425 = vmatprep.subr.bf16.mxu0 0
      %9426 = vmatpush1.bf16.msra.mxu0 %v6051
      %9427 = vmatprep.subr.bf16.mxu0 0
      %9428 = vmatpush1.bf16.msra.mxu0 %v6054
      %9429 = vmatprep.subr.bf16.mxu0 0
      %9430 = vmatpush1.bf16.msra.mxu0 %v6057
      %9431 = vmatprep.subr.bf16.mxu0 0
      %9432 = vmatpush1.bf16.msra.mxu0 %v6060
      %9433 = vmatprep.subr.bf16.mxu0 0
      %9434 = vmatpush1.bf16.msra.mxu0 %v6063
      %9435 = vmatprep.subr.bf16.mxu0 0
      %9436 = vmatpush1.bf16.msra.mxu0 %v6066
      %9437 = vmatprep.subr.bf16.mxu0 0
      %9438 = vmatpush1.bf16.msra.mxu0 %v6069
      %9439 = vmatprep.subr.bf16.mxu0 0
      %9440 = vmatpush1.bf16.msra.mxu0 %v6072
      %9441 = vmatprep.subr.bf16.mxu0 0
      %9442 = vmatpush1.bf16.msra.mxu0 %v6075
      %9443 = vmatprep.subr.bf16.mxu0 0
      %9444 = vmatpush1.bf16.msra.mxu0 %v6078
      %9445 = vmatprep.subr.bf16.mxu0 0
      %9446 = vmatpush1.bf16.msra.mxu0 %v6081
      %9447 = vmatprep.subr.bf16.mxu0 0
      %9448 = vmatpush1.bf16.msra.mxu0 %v6084
      %9449 = vmatprep.subr.bf16.mxu0 0
      %9450 = vmatpush1.bf16.msra.mxu0 %v6087
      %9451 = vmatprep.subr.bf16.mxu0 0
      %9452 = vmatpush1.bf16.msra.mxu0 %v6090
      %9453 = vmatprep.subr.bf16.mxu0 0
      %9454 = vmatpush1.bf16.msra.mxu0 %v6093
      %9455 = vmatprep.mubr.bf16.mxu0 %v510
      %9456 = vmatmul.mubr.bf16.gmra.mrb[0].mxu0 %v509
      %v9457 = vpop.f32.mrb[0].mxu0
      %v9458 = vadd.f32 0.0, %v9457
      %v9459 = vpop.f32.mrb[0].mxu0
      %v9460 = vpop.f32.mrb[0].mxu0
      %v9461 = vpop.f32.mrb[0].mxu0
      %9462 = vdwg.mxu0
      %9463 = vmatprep.subr.bf16.mxu0 0
      %9464 = vmatpush1.bf16.msra.mxu0 %v6096
      %9465 = vmatprep.subr.bf16.mxu0 0
      %9466 = vmatpush1.bf16.msra.mxu0 %v6099
      %9467 = vmatprep.subr.bf16.mxu0 0
      %9468 = vmatpush1.bf16.msra.mxu0 %v6102
      %9469 = vmatprep.subr.bf16.mxu0 0
      %9470 = vmatpush1.bf16.msra.mxu0 %v6105
      %9471 = vmatprep.subr.bf16.mxu0 0
      %9472 = vmatpush1.bf16.msra.mxu0 %v6108
      %9473 = vmatprep.subr.bf16.mxu0 0
      %9474 = vmatpush1.bf16.msra.mxu0 %v6111
      %9475 = vmatprep.subr.bf16.mxu0 0
      %9476 = vmatpush1.bf16.msra.mxu0 %v6114
      %9477 = vmatprep.subr.bf16.mxu0 0
      %9478 = vmatpush1.bf16.msra.mxu0 %v6117
      %9479 = vmatprep.subr.bf16.mxu0 0
      %9480 = vmatpush1.bf16.msra.mxu0 %v6120
      %9481 = vmatprep.subr.bf16.mxu0 0
      %9482 = vmatpush1.bf16.msra.mxu0 %v6123
      %9483 = vmatprep.subr.bf16.mxu0 0
      %9484 = vmatpush1.bf16.msra.mxu0 %v6126
      %9485 = vmatprep.subr.bf16.mxu0 0
      %9486 = vmatpush1.bf16.msra.mxu0 %v6129
      %9487 = vmatprep.subr.bf16.mxu0 0
      %9488 = vmatpush1.bf16.msra.mxu0 %v6132
      %9489 = vmatprep.subr.bf16.mxu0 0
      %9490 = vmatpush1.bf16.msra.mxu0 %v6135
      %9491 = vmatprep.subr.bf16.mxu0 0
      %9492 = vmatpush1.bf16.msra.mxu0 %v6138
      %9493 = vmatprep.subr.bf16.mxu0 0
      %9494 = vmatpush1.bf16.msra.mxu0 %v6141
      %9495 = vmatprep.mubr.bf16.mxu0 %v512
      %9496 = vmatmul.mubr.bf16.gmra.mrb[0].mxu0 %v511
      %v9497 = vpop.f32.mrb[0].mxu0
      %v9498 = vadd.f32 %v9458, %v9497
      %v9499 = vpop.f32.mrb[0].mxu0
      %v9500 = vpop.f32.mrb[0].mxu0
      %v9501 = vpop.f32.mrb[0].mxu0
      %9502 = vdwg.mxu0
      %9503 = vmatprep.subr.bf16.mxu0 0
      %9504 = vmatpush1.bf16.msra.mxu0 %v6144
      %9505 = vmatprep.subr.bf16.mxu0 0
      %9506 = vmatpush1.bf16.msra.mxu0 %v6147
      %9507 = vmatprep.subr.bf16.mxu0 0
      %9508 = vmatpush1.bf16.msra.mxu0 %v6150
      %9509 = vmatprep.subr.bf16.mxu0 0
      %9510 = vmatpush1.bf16.msra.mxu0 %v6153
      %9511 = vmatprep.subr.bf16.mxu0 0
      %9512 = vmatpush1.bf16.msra.mxu0 %v6156
      %9513 = vmatprep.subr.bf16.mxu0 0
      %9514 = vmatpush1.bf16.msra.mxu0 %v6159
      %9515 = vmatprep.subr.bf16.mxu0 0
      %9516 = vmatpush1.bf16.msra.mxu0 %v6162
      %9517 = vmatprep.subr.bf16.mxu0 0
      %9518 = vmatpush1.bf16.msra.mxu0 %v6165
      %9519 = vmatprep.subr.bf16.mxu0 0
      %9520 = vmatpush1.bf16.msra.mxu0 %v6168
      %9521 = vmatprep.subr.bf16.mxu0 0
      %9522 = vmatpush1.bf16.msra.mxu0 %v6171
      %9523 = vmatprep.subr.bf16.mxu0 0
      %9524 = vmatpush1.bf16.msra.mxu0 %v6174
      %9525 = vmatprep.subr.bf16.mxu0 0
      %9526 = vmatpush1.bf16.msra.mxu0 %v6177
      %9527 = vmatprep.subr.bf16.mxu0 0
      %9528 = vmatpush1.bf16.msra.mxu0 %v6180
      %9529 = vmatprep.subr.bf16.mxu0 0
      %9530 = vmatpush1.bf16.msra.mxu0 %v6183
      %9531 = vmatprep.subr.bf16.mxu0 0
      %9532 = vmatpush1.bf16.msra.mxu0 %v6186
      %9533 = vmatprep.subr.bf16.mxu0 0
      %9534 = vmatpush1.bf16.msra.mxu0 %v6189
      %9535 = vmatprep.mubr.bf16.mxu0 %v514
      %9536 = vmatmul.mubr.bf16.gmra.mrb[0].mxu0 %v513
      %v9537 = vpop.f32.mrb[0].mxu0
      %v9538 = vadd.f32 %v9498, %v9537
      %v9539 = vpop.f32.mrb[0].mxu0
      %v9540 = vpop.f32.mrb[0].mxu0
      %v9541 = vpop.f32.mrb[0].mxu0
      %9542 = vdwg.mxu0
      %9543 = vmatprep.subr.bf16.mxu0 0
      %9544 = vmatpush1.bf16.msra.mxu0 %v6192
      %9545 = vmatprep.subr.bf16.mxu0 0
      %9546 = vmatpush1.bf16.msra.mxu0 %v6195
      %9547 = vmatprep.subr.bf16.mxu0 0
      %9548 = vmatpush1.bf16.msra.mxu0 %v6198
      %9549 = vmatprep.subr.bf16.mxu0 0
      %9550 = vmatpush1.bf16.msra.mxu0 %v6201
      %9551 = vmatprep.subr.bf16.mxu0 0
      %9552 = vmatpush1.bf16.msra.mxu0 %v6204
      %9553 = vmatprep.subr.bf16.mxu0 0
      %9554 = vmatpush1.bf16.msra.mxu0 %v6207
      %9555 = vmatprep.subr.bf16.mxu0 0
      %9556 = vmatpush1.bf16.msra.mxu0 %v6210
      %9557 = vmatprep.subr.bf16.mxu0 0
      %9558 = vmatpush1.bf16.msra.mxu0 %v6213
      %9559 = vmatprep.subr.bf16.mxu0 0
      %9560 = vmatpush1.bf16.msra.mxu0 %v6216
      %9561 = vmatprep.subr.bf16.mxu0 0
      %9562 = vmatpush1.bf16.msra.mxu0 %v6219
      %9563 = vmatprep.subr.bf16.mxu0 0
      %9564 = vmatpush1.bf16.msra.mxu0 %v6222
      %9565 = vmatprep.subr.bf16.mxu0 0
      %9566 = vmatpush1.bf16.msra.mxu0 %v6225
      %9567 = vmatprep.subr.bf16.mxu0 0
      %9568 = vmatpush1.bf16.msra.mxu0 %v6228
      %9569 = vmatprep.subr.bf16.mxu0 0
      %9570 = vmatpush1.bf16.msra.mxu0 %v6231
      %9571 = vmatprep.subr.bf16.mxu0 0
      %9572 = vmatpush1.bf16.msra.mxu0 %v6234
      %9573 = vmatprep.subr.bf16.mxu0 0
      %9574 = vmatpush1.bf16.msra.mxu0 %v6237
      %9575 = vmatprep.mubr.bf16.mxu0 %v516
      %9576 = vmatmul.mubr.bf16.gmra.mrb[0].mxu0 %v515
      %v9577 = vpop.f32.mrb[0].mxu0
      %v9578 = vadd.f32 %v9538, %v9577
      %v9579 = vpop.f32.mrb[0].mxu0
      %v9580 = vpop.f32.mrb[0].mxu0
      %v9581 = vpop.f32.mrb[0].mxu0
      %9582 = vdwg.mxu0
      %9583 = vmatprep.subr.bf16.mxu0 0
      %9584 = vmatpush1.bf16.msra.mxu0 %v6240
      %9585 = vmatprep.subr.bf16.mxu0 0
      %9586 = vmatpush1.bf16.msra.mxu0 %v6243
      %9587 = vmatprep.subr.bf16.mxu0 0
      %9588 = vmatpush1.bf16.msra.mxu0 %v6246
      %9589 = vmatprep.subr.bf16.mxu0 0
      %9590 = vmatpush1.bf16.msra.mxu0 %v6249
      %9591 = vmatprep.subr.bf16.mxu0 0
      %9592 = vmatpush1.bf16.msra.mxu0 %v6252
      %9593 = vmatprep.subr.bf16.mxu0 0
      %9594 = vmatpush1.bf16.msra.mxu0 %v6255
      %9595 = vmatprep.subr.bf16.mxu0 0
      %9596 = vmatpush1.bf16.msra.mxu0 %v6258
      %9597 = vmatprep.subr.bf16.mxu0 0
      %9598 = vmatpush1.bf16.msra.mxu0 %v6261
      %9599 = vmatprep.subr.bf16.mxu0 0
      %9600 = vmatpush1.bf16.msra.mxu0 %v6264
      %9601 = vmatprep.subr.bf16.mxu0 0
      %9602 = vmatpush1.bf16.msra.mxu0 %v6267
      %9603 = vmatprep.subr.bf16.mxu0 0
      %9604 = vmatpush1.bf16.msra.mxu0 %v6270
      %9605 = vmatprep.subr.bf16.mxu0 0
      %9606 = vmatpush1.bf16.msra.mxu0 %v6273
      %9607 = vmatprep.subr.bf16.mxu0 0
      %9608 = vmatpush1.bf16.msra.mxu0 %v6276
      %9609 = vmatprep.subr.bf16.mxu0 0
      %9610 = vmatpush1.bf16.msra.mxu0 %v6279
      %9611 = vmatprep.subr.bf16.mxu0 0
      %9612 = vmatpush1.bf16.msra.mxu0 %v6282
      %9613 = vmatprep.subr.bf16.mxu0 0
      %9614 = vmatpush1.bf16.msra.mxu0 %v6285
      %9615 = vmatprep.mubr.bf16.mxu0 %v518
      %9616 = vmatmul.mubr.bf16.gmra.mrb[0].mxu0 %v517
      %v9617 = vpop.f32.mrb[0].mxu0
      %v9618 = vadd.f32 %v9578, %v9617
      %v9619 = vpop.f32.mrb[0].mxu0
      %v9620 = vpop.f32.mrb[0].mxu0
      %v9621 = vpop.f32.mrb[0].mxu0
      %9622 = vdwg.mxu0
      %9623 = vmatprep.subr.bf16.mxu0 0
      %9624 = vmatpush1.bf16.msra.mxu0 %v6288
      %9625 = vmatprep.subr.bf16.mxu0 0
      %9626 = vmatpush1.bf16.msra.mxu0 %v6291
      %9627 = vmatprep.subr.bf16.mxu0 0
      %9628 = vmatpush1.bf16.msra.mxu0 %v6294
      %9629 = vmatprep.subr.bf16.mxu0 0
      %9630 = vmatpush1.bf16.msra.mxu0 %v6297
      %9631 = vmatprep.subr.bf16.mxu0 0
      %9632 = vmatpush1.bf16.msra.mxu0 %v6300
      %9633 = vmatprep.subr.bf16.mxu0 0
      %9634 = vmatpush1.bf16.msra.mxu0 %v6303
      %9635 = vmatprep.subr.bf16.mxu0 0
      %9636 = vmatpush1.bf16.msra.mxu0 %v6306
      %9637 = vmatprep.subr.bf16.mxu0 0
      %9638 = vmatpush1.bf16.msra.mxu0 %v6309
      %9639 = vmatprep.subr.bf16.mxu0 0
      %9640 = vmatpush1.bf16.msra.mxu0 %v6312
      %9641 = vmatprep.subr.bf16.mxu0 0
      %9642 = vmatpush1.bf16.msra.mxu0 %v6315
      %9643 = vmatprep.subr.bf16.mxu0 0
      %9644 = vmatpush1.bf16.msra.mxu0 %v6318
      %9645 = vmatprep.subr.bf16.mxu0 0
      %9646 = vmatpush1.bf16.msra.mxu0 %v6321
      %9647 = vmatprep.subr.bf16.mxu0 0
      %9648 = vmatpush1.bf16.msra.mxu0 %v6324
      %9649 = vmatprep.subr.bf16.mxu0 0
      %9650 = vmatpush1.bf16.msra.mxu0 %v6327
      %9651 = vmatprep.subr.bf16.mxu0 0
      %9652 = vmatpush1.bf16.msra.mxu0 %v6330
      %9653 = vmatprep.subr.bf16.mxu0 0
      %9654 = vmatpush1.bf16.msra.mxu0 %v6333
      %9655 = vmatprep.mubr.bf16.mxu0 %v520
      %9656 = vmatmul.mubr.bf16.gmra.mrb[0].mxu0 %v519
      %v9657 = vpop.f32.mrb[0].mxu0
      %v9658 = vadd.f32 %v9618, %v9657
      %v9659 = vpop.f32.mrb[0].mxu0
      %v9660 = vpop.f32.mrb[0].mxu0
      %v9661 = vpop.f32.mrb[0].mxu0
      %9662 = vdwg.mxu0
      %9663 = vmatprep.subr.bf16.mxu0 0
      %9664 = vmatpush1.bf16.msra.mxu0 %v6336
      %9665 = vmatprep.subr.bf16.mxu0 0
      %9666 = vmatpush1.bf16.msra.mxu0 %v6339
      %9667 = vmatprep.subr.bf16.mxu0 0
      %9668 = vmatpush1.bf16.msra.mxu0 %v6342
      %9669 = vmatprep.subr.bf16.mxu0 0
      %9670 = vmatpush1.bf16.msra.mxu0 %v6345
      %9671 = vmatprep.subr.bf16.mxu0 0
      %9672 = vmatpush1.bf16.msra.mxu0 %v6348
      %9673 = vmatprep.subr.bf16.mxu0 0
      %9674 = vmatpush1.bf16.msra.mxu0 %v6351
      %9675 = vmatprep.subr.bf16.mxu0 0
      %9676 = vmatpush1.bf16.msra.mxu0 %v6354
      %9677 = vmatprep.subr.bf16.mxu0 0
      %9678 = vmatpush1.bf16.msra.mxu0 %v6357
      %9679 = vmatprep.subr.bf16.mxu0 0
      %9680 = vmatpush1.bf16.msra.mxu0 %v6360
      %9681 = vmatprep.subr.bf16.mxu0 0
      %9682 = vmatpush1.bf16.msra.mxu0 %v6363
      %9683 = vmatprep.subr.bf16.mxu0 0
      %9684 = vmatpush1.bf16.msra.mxu0 %v6366
      %9685 = vmatprep.subr.bf16.mxu0 0
      %9686 = vmatpush1.bf16.msra.mxu0 %v6369
      %9687 = vmatprep.subr.bf16.mxu0 0
      %9688 = vmatpush1.bf16.msra.mxu0 %v6372
      %9689 = vmatprep.subr.bf16.mxu0 0
      %9690 = vmatpush1.bf16.msra.mxu0 %v6375
      %9691 = vmatprep.subr.bf16.mxu0 0
      %9692 = vmatpush1.bf16.msra.mxu0 %v6378
      %9693 = vmatprep.subr.bf16.mxu0 0
      %9694 = vmatpush1.bf16.msra.mxu0 %v6381
      %9695 = vmatprep.mubr.bf16.mxu0 %v522
      %9696 = vmatmul.mubr.bf16.gmra.mrb[0].mxu0 %v521
      %v9697 = vpop.f32.mrb[0].mxu0
      %v9698 = vadd.f32 %v9658, %v9697
      %v9699 = vpop.f32.mrb[0].mxu0
      %v9700 = vpop.f32.mrb[0].mxu0
      %v9701 = vpop.f32.mrb[0].mxu0
      %9702 = vdwg.mxu0
      %9703 = vmatprep.subr.bf16.mxu0 0
      %9704 = vmatpush1.bf16.msra.mxu0 %v6384
      %9705 = vmatprep.subr.bf16.mxu0 0
      %9706 = vmatpush1.bf16.msra.mxu0 %v6387
      %9707 = vmatprep.subr.bf16.mxu0 0
      %9708 = vmatpush1.bf16.msra.mxu0 %v6390
      %9709 = vmatprep.subr.bf16.mxu0 0
      %9710 = vmatpush1.bf16.msra.mxu0 %v6393
      %9711 = vmatprep.subr.bf16.mxu0 0
      %9712 = vmatpush1.bf16.msra.mxu0 %v6396
      %9713 = vmatprep.subr.bf16.mxu0 0
      %9714 = vmatpush1.bf16.msra.mxu0 %v6399
      %9715 = vmatprep.subr.bf16.mxu0 0
      %9716 = vmatpush1.bf16.msra.mxu0 %v6402
      %9717 = vmatprep.subr.bf16.mxu0 0
      %9718 = vmatpush1.bf16.msra.mxu0 %v6405
      %9719 = vmatprep.subr.bf16.mxu0 0
      %9720 = vmatpush1.bf16.msra.mxu0 %v6408
      %9721 = vmatprep.subr.bf16.mxu0 0
      %9722 = vmatpush1.bf16.msra.mxu0 %v6411
      %9723 = vmatprep.subr.bf16.mxu0 0
      %9724 = vmatpush1.bf16.msra.mxu0 %v6414
      %9725 = vmatprep.subr.bf16.mxu0 0
      %9726 = vmatpush1.bf16.msra.mxu0 %v6417
      %9727 = vmatprep.subr.bf16.mxu0 0
      %9728 = vmatpush1.bf16.msra.mxu0 %v6420
      %9729 = vmatprep.subr.bf16.mxu0 0
      %9730 = vmatpush1.bf16.msra.mxu0 %v6423
      %9731 = vmatprep.subr.bf16.mxu0 0
      %9732 = vmatpush1.bf16.msra.mxu0 %v6426
      %9733 = vmatprep.subr.bf16.mxu0 0
      %9734 = vmatpush1.bf16.msra.mxu0 %v6429
      %9735 = vmatprep.mubr.bf16.mxu0 %v524
      %9736 = vmatmul.mubr.bf16.gmra.mrb[0].mxu0 %v523
      %v9737 = vpop.f32.mrb[0].mxu0
      %v9738 = vadd.f32 %v9698, %v9737
      %v9739 = vpop.f32.mrb[0].mxu0
      %v9740 = vpop.f32.mrb[0].mxu0
      %v9741 = vpop.f32.mrb[0].mxu0
      %9742 = vdwg.mxu0
      %9743 = vmatprep.subr.bf16.mxu0 0
      %9744 = vmatpush1.bf16.msra.mxu0 %v6432
      %9745 = vmatprep.subr.bf16.mxu0 0
      %9746 = vmatpush1.bf16.msra.mxu0 %v6435
      %9747 = vmatprep.subr.bf16.mxu0 0
      %9748 = vmatpush1.bf16.msra.mxu0 %v6438
      %9749 = vmatprep.subr.bf16.mxu0 0
      %9750 = vmatpush1.bf16.msra.mxu0 %v6441
      %9751 = vmatprep.subr.bf16.mxu0 0
      %9752 = vmatpush1.bf16.msra.mxu0 %v6444
      %9753 = vmatprep.subr.bf16.mxu0 0
      %9754 = vmatpush1.bf16.msra.mxu0 %v6447
      %9755 = vmatprep.subr.bf16.mxu0 0
      %9756 = vmatpush1.bf16.msra.mxu0 %v6450
      %9757 = vmatprep.subr.bf16.mxu0 0
      %9758 = vmatpush1.bf16.msra.mxu0 %v6453
      %9759 = vmatprep.subr.bf16.mxu0 0
      %9760 = vmatpush1.bf16.msra.mxu0 %v6456
      %9761 = vmatprep.subr.bf16.mxu0 0
      %9762 = vmatpush1.bf16.msra.mxu0 %v6459
      %9763 = vmatprep.subr.bf16.mxu0 0
      %9764 = vmatpush1.bf16.msra.mxu0 %v6462
      %9765 = vmatprep.subr.bf16.mxu0 0
      %9766 = vmatpush1.bf16.msra.mxu0 %v6465
      %9767 = vmatprep.subr.bf16.mxu0 0
      %9768 = vmatpush1.bf16.msra.mxu0 %v6468
      %9769 = vmatprep.subr.bf16.mxu0 0
      %9770 = vmatpush1.bf16.msra.mxu0 %v6471
      %9771 = vmatprep.subr.bf16.mxu0 0
      %9772 = vmatpush1.bf16.msra.mxu0 %v6474
      %9773 = vmatprep.subr.bf16.mxu0 0
      %9774 = vmatpush1.bf16.msra.mxu0 %v6477
      %9775 = vmatprep.mubr.bf16.mxu0 %v526
      %9776 = vmatmul.mubr.bf16.gmra.mrb[0].mxu0 %v525
      %v9777 = vpop.f32.mrb[0].mxu0
      %v9778 = vadd.f32 %v9738, %v9777
      %v9779 = vpop.f32.mrb[0].mxu0
      %v9780 = vpop.f32.mrb[0].mxu0
      %v9781 = vpop.f32.mrb[0].mxu0
      %9782 = vdwg.mxu0
      %9783 = vmatprep.subr.bf16.mxu0 0
      %9784 = vmatpush1.bf16.msra.mxu0 %v6480
      %9785 = vmatprep.subr.bf16.mxu0 0
      %9786 = vmatpush1.bf16.msra.mxu0 %v6483
      %9787 = vmatprep.subr.bf16.mxu0 0
      %9788 = vmatpush1.bf16.msra.mxu0 %v6486
      %9789 = vmatprep.subr.bf16.mxu0 0
      %9790 = vmatpush1.bf16.msra.mxu0 %v6489
      %9791 = vmatprep.subr.bf16.mxu0 0
      %9792 = vmatpush1.bf16.msra.mxu0 %v6492
      %9793 = vmatprep.subr.bf16.mxu0 0
      %9794 = vmatpush1.bf16.msra.mxu0 %v6495
      %9795 = vmatprep.subr.bf16.mxu0 0
      %9796 = vmatpush1.bf16.msra.mxu0 %v6498
      %9797 = vmatprep.subr.bf16.mxu0 0
      %9798 = vmatpush1.bf16.msra.mxu0 %v6501
      %9799 = vmatprep.subr.bf16.mxu0 0
      %9800 = vmatpush1.bf16.msra.mxu0 %v6504
      %9801 = vmatprep.subr.bf16.mxu0 0
      %9802 = vmatpush1.bf16.msra.mxu0 %v6507
      %9803 = vmatprep.subr.bf16.mxu0 0
      %9804 = vmatpush1.bf16.msra.mxu0 %v6510
      %9805 = vmatprep.subr.bf16.mxu0 0
      %9806 = vmatpush1.bf16.msra.mxu0 %v6513
      %9807 = vmatprep.subr.bf16.mxu0 0
      %9808 = vmatpush1.bf16.msra.mxu0 %v6516
      %9809 = vmatprep.subr.bf16.mxu0 0
      %9810 = vmatpush1.bf16.msra.mxu0 %v6519
      %9811 = vmatprep.subr.bf16.mxu0 0
      %9812 = vmatpush1.bf16.msra.mxu0 %v6522
      %9813 = vmatprep.subr.bf16.mxu0 0
      %9814 = vmatpush1.bf16.msra.mxu0 %v6525
      %9815 = vmatprep.mubr.bf16.mxu0 %v528
      %9816 = vmatmul.mubr.bf16.gmra.mrb[0].mxu0 %v527
      %v9817 = vpop.f32.mrb[0].mxu0
      %v9818 = vadd.f32 %v9778, %v9817
      %v9819 = vpop.f32.mrb[0].mxu0
      %v9820 = vpop.f32.mrb[0].mxu0
      %v9821 = vpop.f32.mrb[0].mxu0
      %9822 = vdwg.mxu0
      %9823 = vmatprep.subr.bf16.mxu0 0
      %9824 = vmatpush1.bf16.msra.mxu0 %v6528
      %9825 = vmatprep.subr.bf16.mxu0 0
      %9826 = vmatpush1.bf16.msra.mxu0 %v6531
      %9827 = vmatprep.subr.bf16.mxu0 0
      %9828 = vmatpush1.bf16.msra.mxu0 %v6534
      %9829 = vmatprep.subr.bf16.mxu0 0
      %9830 = vmatpush1.bf16.msra.mxu0 %v6537
      %9831 = vmatprep.subr.bf16.mxu0 0
      %9832 = vmatpush1.bf16.msra.mxu0 %v6540
      %9833 = vmatprep.subr.bf16.mxu0 0
      %9834 = vmatpush1.bf16.msra.mxu0 %v6543
      %9835 = vmatprep.subr.bf16.mxu0 0
      %9836 = vmatpush1.bf16.msra.mxu0 %v6546
      %9837 = vmatprep.subr.bf16.mxu0 0
      %9838 = vmatpush1.bf16.msra.mxu0 %v6549
      %9839 = vmatprep.subr.bf16.mxu0 0
      %9840 = vmatpush1.bf16.msra.mxu0 %v6552
      %9841 = vmatprep.subr.bf16.mxu0 0
      %9842 = vmatpush1.bf16.msra.mxu0 %v6555
      %9843 = vmatprep.subr.bf16.mxu0 0
      %9844 = vmatpush1.bf16.msra.mxu0 %v6558
      %9845 = vmatprep.subr.bf16.mxu0 0
      %9846 = vmatpush1.bf16.msra.mxu0 %v6561
      %9847 = vmatprep.subr.bf16.mxu0 0
      %9848 = vmatpush1.bf16.msra.mxu0 %v6564
      %9849 = vmatprep.subr.bf16.mxu0 0
      %9850 = vmatpush1.bf16.msra.mxu0 %v6567
      %9851 = vmatprep.subr.bf16.mxu0 0
      %9852 = vmatpush1.bf16.msra.mxu0 %v6570
      %9853 = vmatprep.subr.bf16.mxu0 0
      %9854 = vmatpush1.bf16.msra.mxu0 %v6573
      %9855 = vmatprep.mubr.bf16.mxu0 %v530
      %9856 = vmatmul.mubr.bf16.gmra.mrb[0].mxu0 %v529
      %v9857 = vpop.f32.mrb[0].mxu0
      %v9858 = vadd.f32 %v9818, %v9857
      %v9859 = vpop.f32.mrb[0].mxu0
      %v9860 = vpop.f32.mrb[0].mxu0
      %v9861 = vpop.f32.mrb[0].mxu0
      %9862 = vdwg.mxu0
      %9863 = vmatprep.subr.bf16.mxu0 0
      %9864 = vmatpush1.bf16.msra.mxu0 %v6576
      %9865 = vmatprep.subr.bf16.mxu0 0
      %9866 = vmatpush1.bf16.msra.mxu0 %v6579
      %9867 = vmatprep.subr.bf16.mxu0 0
      %9868 = vmatpush1.bf16.msra.mxu0 %v6582
      %9869 = vmatprep.subr.bf16.mxu0 0
      %9870 = vmatpush1.bf16.msra.mxu0 %v6585
      %9871 = vmatprep.subr.bf16.mxu0 0
      %9872 = vmatpush1.bf16.msra.mxu0 %v6588
      %9873 = vmatprep.subr.bf16.mxu0 0
      %9874 = vmatpush1.bf16.msra.mxu0 %v6591
      %9875 = vmatprep.subr.bf16.mxu0 0
      %9876 = vmatpush1.bf16.msra.mxu0 %v6594
      %9877 = vmatprep.subr.bf16.mxu0 0
      %9878 = vmatpush1.bf16.msra.mxu0 %v6597
      %9879 = vmatprep.subr.bf16.mxu0 0
      %9880 = vmatpush1.bf16.msra.mxu0 %v6600
      %9881 = vmatprep.subr.bf16.mxu0 0
      %9882 = vmatpush1.bf16.msra.mxu0 %v6603
      %9883 = vmatprep.subr.bf16.mxu0 0
      %9884 = vmatpush1.bf16.msra.mxu0 %v6606
      %9885 = vmatprep.subr.bf16.mxu0 0
      %9886 = vmatpush1.bf16.msra.mxu0 %v6609
      %9887 = vmatprep.subr.bf16.mxu0 0
      %9888 = vmatpush1.bf16.msra.mxu0 %v6612
      %9889 = vmatprep.subr.bf16.mxu0 0
      %9890 = vmatpush1.bf16.msra.mxu0 %v6615
      %9891 = vmatprep.subr.bf16.mxu0 0
      %9892 = vmatpush1.bf16.msra.mxu0 %v6618
      %9893 = vmatprep.subr.bf16.mxu0 0
      %9894 = vmatpush1.bf16.msra.mxu0 %v6621
      %9895 = vmatprep.mubr.bf16.mxu0 %v532
      %9896 = vmatmul.mubr.bf16.gmra.mrb[0].mxu0 %v531
      %v9897 = vpop.f32.mrb[0].mxu0
      %v9898 = vadd.f32 %v9858, %v9897
      %v9899 = vpop.f32.mrb[0].mxu0
      %v9900 = vpop.f32.mrb[0].mxu0
      %v9901 = vpop.f32.mrb[0].mxu0
      %9902 = vdwg.mxu0
      %9903 = vmatprep.subr.bf16.mxu0 0
      %9904 = vmatpush1.bf16.msra.mxu0 %v6624
      %9905 = vmatprep.subr.bf16.mxu0 0
      %9906 = vmatpush1.bf16.msra.mxu0 %v6627
      %9907 = vmatprep.subr.bf16.mxu0 0
      %9908 = vmatpush1.bf16.msra.mxu0 %v6630
      %9909 = vmatprep.subr.bf16.mxu0 0
      %9910 = vmatpush1.bf16.msra.mxu0 %v6633
      %9911 = vmatprep.subr.bf16.mxu0 0
      %9912 = vmatpush1.bf16.msra.mxu0 %v6636
      %9913 = vmatprep.subr.bf16.mxu0 0
      %9914 = vmatpush1.bf16.msra.mxu0 %v6639
      %9915 = vmatprep.subr.bf16.mxu0 0
      %9916 = vmatpush1.bf16.msra.mxu0 %v6642
      %9917 = vmatprep.subr.bf16.mxu0 0
      %9918 = vmatpush1.bf16.msra.mxu0 %v6645
      %9919 = vmatprep.subr.bf16.mxu0 0
      %9920 = vmatpush1.bf16.msra.mxu0 %v6648
      %9921 = vmatprep.subr.bf16.mxu0 0
      %9922 = vmatpush1.bf16.msra.mxu0 %v6651
      %9923 = vmatprep.subr.bf16.mxu0 0
      %9924 = vmatpush1.bf16.msra.mxu0 %v6654
      %9925 = vmatprep.subr.bf16.mxu0 0
      %9926 = vmatpush1.bf16.msra.mxu0 %v6657
      %9927 = vmatprep.subr.bf16.mxu0 0
      %9928 = vmatpush1.bf16.msra.mxu0 %v6660
      %9929 = vmatprep.subr.bf16.mxu0 0
      %9930 = vmatpush1.bf16.msra.mxu0 %v6663
      %9931 = vmatprep.subr.bf16.mxu0 0
      %9932 = vmatpush1.bf16.msra.mxu0 %v6666
      %9933 = vmatprep.subr.bf16.mxu0 0
      %9934 = vmatpush1.bf16.msra.mxu0 %v6669
      %9935 = vmatprep.mubr.bf16.mxu0 %v534
      %9936 = vmatmul.mubr.bf16.gmra.mrb[0].mxu0 %v533
      %v9937 = vpop.f32.mrb[0].mxu0
      %v9938 = vadd.f32 %v9898, %v9937
      %v9939 = vpop.f32.mrb[0].mxu0
      %v9940 = vpop.f32.mrb[0].mxu0
      %v9941 = vpop.f32.mrb[0].mxu0
      %9942 = vdwg.mxu0
      %9943 = vmatprep.subr.bf16.mxu0 0
      %9944 = vmatpush1.bf16.msra.mxu0 %v6672
      %9945 = vmatprep.subr.bf16.mxu0 0
      %9946 = vmatpush1.bf16.msra.mxu0 %v6675
      %9947 = vmatprep.subr.bf16.mxu0 0
      %9948 = vmatpush1.bf16.msra.mxu0 %v6678
      %9949 = vmatprep.subr.bf16.mxu0 0
      %9950 = vmatpush1.bf16.msra.mxu0 %v6681
      %9951 = vmatprep.subr.bf16.mxu0 0
      %9952 = vmatpush1.bf16.msra.mxu0 %v6684
      %9953 = vmatprep.subr.bf16.mxu0 0
      %9954 = vmatpush1.bf16.msra.mxu0 %v6687
      %9955 = vmatprep.subr.bf16.mxu0 0
      %9956 = vmatpush1.bf16.msra.mxu0 %v6690
      %9957 = vmatprep.subr.bf16.mxu0 0
      %9958 = vmatpush1.bf16.msra.mxu0 %v6693
      %9959 = vmatprep.subr.bf16.mxu0 0
      %9960 = vmatpush1.bf16.msra.mxu0 %v6696
      %9961 = vmatprep.subr.bf16.mxu0 0
      %9962 = vmatpush1.bf16.msra.mxu0 %v6699
      %9963 = vmatprep.subr.bf16.mxu0 0
      %9964 = vmatpush1.bf16.msra.mxu0 %v6702
      %9965 = vmatprep.subr.bf16.mxu0 0
      %9966 = vmatpush1.bf16.msra.mxu0 %v6705
      %9967 = vmatprep.subr.bf16.mxu0 0
      %9968 = vmatpush1.bf16.msra.mxu0 %v6708
      %9969 = vmatprep.subr.bf16.mxu0 0
      %9970 = vmatpush1.bf16.msra.mxu0 %v6711
      %9971 = vmatprep.subr.bf16.mxu0 0
      %9972 = vmatpush1.bf16.msra.mxu0 %v6714
      %9973 = vmatprep.subr.bf16.mxu0 0
      %9974 = vmatpush1.bf16.msra.mxu0 %v6717
      %9975 = vmatprep.mubr.bf16.mxu0 %v536
      %9976 = vmatmul.mubr.bf16.gmra.mrb[0].mxu0 %v535
      %v9977 = vpop.f32.mrb[0].mxu0
      %v9978 = vadd.f32 %v9938, %v9977
      %v9979 = vpop.f32.mrb[0].mxu0
      %v9980 = vpop.f32.mrb[0].mxu0
      %v9981 = vpop.f32.mrb[0].mxu0
      %9982 = vdwg.mxu0
      %9983 = vmatprep.subr.bf16.mxu0 0
      %9984 = vmatpush1.bf16.msra.mxu0 %v6720
      %9985 = vmatprep.subr.bf16.mxu0 0
      %9986 = vmatpush1.bf16.msra.mxu0 %v6723
      %9987 = vmatprep.subr.bf16.mxu0 0
      %9988 = vmatpush1.bf16.msra.mxu0 %v6726
      %9989 = vmatprep.subr.bf16.mxu0 0
      %9990 = vmatpush1.bf16.msra.mxu0 %v6729
      %9991 = vmatprep.subr.bf16.mxu0 0
      %9992 = vmatpush1.bf16.msra.mxu0 %v6732
      %9993 = vmatprep.subr.bf16.mxu0 0
      %9994 = vmatpush1.bf16.msra.mxu0 %v6735
      %9995 = vmatprep.subr.bf16.mxu0 0
      %9996 = vmatpush1.bf16.msra.mxu0 %v6738
      %9997 = vmatprep.subr.bf16.mxu0 0
      %9998 = vmatpush1.bf16.msra.mxu0 %v6741
      %9999 = vmatprep.subr.bf16.mxu0 0
      %10000 = vmatpush1.bf16.msra.mxu0 %v6744
      %10001 = vmatprep.subr.bf16.mxu0 0
      %10002 = vmatpush1.bf16.msra.mxu0 %v6747
      %10003 = vmatprep.subr.bf16.mxu0 0
      %10004 = vmatpush1.bf16.msra.mxu0 %v6750
      %10005 = vmatprep.subr.bf16.mxu0 0
      %10006 = vmatpush1.bf16.msra.mxu0 %v6753
      %10007 = vmatprep.subr.bf16.mxu0 0
      %10008 = vmatpush1.bf16.msra.mxu0 %v6756
      %10009 = vmatprep.subr.bf16.mxu0 0
      %10010 = vmatpush1.bf16.msra.mxu0 %v6759
      %10011 = vmatprep.subr.bf16.mxu0 0
      %10012 = vmatpush1.bf16.msra.mxu0 %v6762
      %10013 = vmatprep.subr.bf16.mxu0 0
      %10014 = vmatpush1.bf16.msra.mxu0 %v6765
      %10015 = vmatprep.mubr.bf16.mxu0 %v538
      %10016 = vmatmul.mubr.bf16.gmra.mrb[0].mxu0 %v537
      %v10017 = vpop.f32.mrb[0].mxu0
      %v10018 = vadd.f32 %v9978, %v10017
      %v10019 = vpop.f32.mrb[0].mxu0
      %v10020 = vpop.f32.mrb[0].mxu0
      %v10021 = vpop.f32.mrb[0].mxu0
      %10022 = vdwg.mxu0
      %10023 = vmatprep.subr.bf16.mxu0 0
      %10024 = vmatpush1.bf16.msra.mxu0 %v6768
      %10025 = vmatprep.subr.bf16.mxu0 0
      %10026 = vmatpush1.bf16.msra.mxu0 %v6771
      %10027 = vmatprep.subr.bf16.mxu0 0
      %10028 = vmatpush1.bf16.msra.mxu0 %v6774
      %10029 = vmatprep.subr.bf16.mxu0 0
      %10030 = vmatpush1.bf16.msra.mxu0 %v6777
      %10031 = vmatprep.subr.bf16.mxu0 0
      %10032 = vmatpush1.bf16.msra.mxu0 %v6780
      %10033 = vmatprep.subr.bf16.mxu0 0
      %10034 = vmatpush1.bf16.msra.mxu0 %v6783
      %10035 = vmatprep.subr.bf16.mxu0 0
      %10036 = vmatpush1.bf16.msra.mxu0 %v6786
      %10037 = vmatprep.subr.bf16.mxu0 0
      %10038 = vmatpush1.bf16.msra.mxu0 %v6789
      %10039 = vmatprep.subr.bf16.mxu0 0
      %10040 = vmatpush1.bf16.msra.mxu0 %v6792
      %10041 = vmatprep.subr.bf16.mxu0 0
      %10042 = vmatpush1.bf16.msra.mxu0 %v6795
      %10043 = vmatprep.subr.bf16.mxu0 0
      %10044 = vmatpush1.bf16.msra.mxu0 %v6798
      %10045 = vmatprep.subr.bf16.mxu0 0
      %10046 = vmatpush1.bf16.msra.mxu0 %v6801
      %10047 = vmatprep.subr.bf16.mxu0 0
      %10048 = vmatpush1.bf16.msra.mxu0 %v6804
      %10049 = vmatprep.subr.bf16.mxu0 0
      %10050 = vmatpush1.bf16.msra.mxu0 %v6807
      %10051 = vmatprep.subr.bf16.mxu0 0
      %10052 = vmatpush1.bf16.msra.mxu0 %v6810
      %10053 = vmatprep.subr.bf16.mxu0 0
      %10054 = vmatpush1.bf16.msra.mxu0 %v6813
      %10055 = vmatprep.mubr.bf16.mxu0 %v540
      %10056 = vmatmul.mubr.bf16.gmra.mrb[0].mxu0 %v539
      %v10057 = vpop.f32.mrb[0].mxu0
      %v10058 = vadd.f32 %v10018, %v10057
      %v10059 = vpop.f32.mrb[0].mxu0
      %v10060 = vpop.f32.mrb[0].mxu0
      %v10061 = vpop.f32.mrb[0].mxu0
      %10062 = vdwg.mxu0
      %10063 = vmatprep.subr.bf16.mxu0 0
      %10064 = vmatpush1.bf16.msra.mxu0 %v6816
      %10065 = vmatprep.subr.bf16.mxu0 0
      %10066 = vmatpush1.bf16.msra.mxu0 %v6819
      %10067 = vmatprep.subr.bf16.mxu0 0
      %10068 = vmatpush1.bf16.msra.mxu0 %v6822
      %10069 = vmatprep.subr.bf16.mxu0 0
      %10070 = vmatpush1.bf16.msra.mxu0 %v6825
      %10071 = vmatprep.subr.bf16.mxu0 0
      %10072 = vmatpush1.bf16.msra.mxu0 %v6828
      %10073 = vmatprep.subr.bf16.mxu0 0
      %10074 = vmatpush1.bf16.msra.mxu0 %v6831
      %10075 = vmatprep.subr.bf16.mxu0 0
      %10076 = vmatpush1.bf16.msra.mxu0 %v6834
      %10077 = vmatprep.subr.bf16.mxu0 0
      %10078 = vmatpush1.bf16.msra.mxu0 %v6837
      %10079 = vmatprep.subr.bf16.mxu0 0
      %10080 = vmatpush1.bf16.msra.mxu0 %v6840
      %10081 = vmatprep.subr.bf16.mxu0 0
      %10082 = vmatpush1.bf16.msra.mxu0 %v6843
      %10083 = vmatprep.subr.bf16.mxu0 0
      %10084 = vmatpush1.bf16.msra.mxu0 %v6846
      %10085 = vmatprep.subr.bf16.mxu0 0
      %10086 = vmatpush1.bf16.msra.mxu0 %v6849
      %10087 = vmatprep.subr.bf16.mxu0 0
      %10088 = vmatpush1.bf16.msra.mxu0 %v6852
      %10089 = vmatprep.subr.bf16.mxu0 0
      %10090 = vmatpush1.bf16.msra.mxu0 %v6855
      %10091 = vmatprep.subr.bf16.mxu0 0
      %10092 = vmatpush1.bf16.msra.mxu0 %v6858
      %10093 = vmatprep.subr.bf16.mxu0 0
      %10094 = vmatpush1.bf16.msra.mxu0 %v6861
      %10095 = vmatprep.mubr.bf16.mxu0 %v542
      %10096 = vmatmul.mubr.bf16.gmra.mrb[0].mxu0 %v541
      %v10097 = vpop.f32.mrb[0].mxu0
      %v10098 = vadd.f32 %v10058, %v10097
      %v10099 = vpop.f32.mrb[0].mxu0
      %v10100 = vpop.f32.mrb[0].mxu0
      %v10101 = vpop.f32.mrb[0].mxu0
      %10102 = vdwg.mxu0
      %10103 = vmatprep.subr.bf16.mxu0 0
      %10104 = vmatpush1.bf16.msra.mxu0 %v6864
      %10105 = vmatprep.subr.bf16.mxu0 0
      %10106 = vmatpush1.bf16.msra.mxu0 %v6867
      %10107 = vmatprep.subr.bf16.mxu0 0
      %10108 = vmatpush1.bf16.msra.mxu0 %v6870
      %10109 = vmatprep.subr.bf16.mxu0 0
      %10110 = vmatpush1.bf16.msra.mxu0 %v6873
      %10111 = vmatprep.subr.bf16.mxu0 0
      %10112 = vmatpush1.bf16.msra.mxu0 %v6876
      %10113 = vmatprep.subr.bf16.mxu0 0
      %10114 = vmatpush1.bf16.msra.mxu0 %v6879
      %10115 = vmatprep.subr.bf16.mxu0 0
      %10116 = vmatpush1.bf16.msra.mxu0 %v6882
      %10117 = vmatprep.subr.bf16.mxu0 0
      %10118 = vmatpush1.bf16.msra.mxu0 %v6885
      %10119 = vmatprep.subr.bf16.mxu0 0
      %10120 = vmatpush1.bf16.msra.mxu0 %v6888
      %10121 = vmatprep.subr.bf16.mxu0 0
      %10122 = vmatpush1.bf16.msra.mxu0 %v6891
      %10123 = vmatprep.subr.bf16.mxu0 0
      %10124 = vmatpush1.bf16.msra.mxu0 %v6894
      %10125 = vmatprep.subr.bf16.mxu0 0
      %10126 = vmatpush1.bf16.msra.mxu0 %v6897
      %10127 = vmatprep.subr.bf16.mxu0 0
      %10128 = vmatpush1.bf16.msra.mxu0 %v6900
      %10129 = vmatprep.subr.bf16.mxu0 0
      %10130 = vmatpush1.bf16.msra.mxu0 %v6903
      %10131 = vmatprep.subr.bf16.mxu0 0
      %10132 = vmatpush1.bf16.msra.mxu0 %v6906
      %10133 = vmatprep.subr.bf16.mxu0 0
      %10134 = vmatpush1.bf16.msra.mxu0 %v6909
      %10135 = vmatprep.mubr.bf16.mxu0 %v544
      %10136 = vmatmul.mubr.bf16.gmra.mrb[0].mxu0 %v543
      %v10137 = vpop.f32.mrb[0].mxu0
      %v10138 = vadd.f32 %v10098, %v10137
      %v10139 = vpop.f32.mrb[0].mxu0
      %v10140 = vpop.f32.mrb[0].mxu0
      %v10141 = vpop.f32.mrb[0].mxu0
      %10142 = vdwg.mxu0
      %10143 = vmatprep.subr.bf16.mxu0 0
      %10144 = vmatpush1.bf16.msra.mxu0 %v6912
      %10145 = vmatprep.subr.bf16.mxu0 0
      %10146 = vmatpush1.bf16.msra.mxu0 %v6915
      %10147 = vmatprep.subr.bf16.mxu0 0
      %10148 = vmatpush1.bf16.msra.mxu0 %v6918
      %10149 = vmatprep.subr.bf16.mxu0 0
      %10150 = vmatpush1.bf16.msra.mxu0 %v6921
      %10151 = vmatprep.subr.bf16.mxu0 0
      %10152 = vmatpush1.bf16.msra.mxu0 %v6924
      %10153 = vmatprep.subr.bf16.mxu0 0
      %10154 = vmatpush1.bf16.msra.mxu0 %v6927
      %10155 = vmatprep.subr.bf16.mxu0 0
      %10156 = vmatpush1.bf16.msra.mxu0 %v6930
      %10157 = vmatprep.subr.bf16.mxu0 0
      %10158 = vmatpush1.bf16.msra.mxu0 %v6933
      %10159 = vmatprep.subr.bf16.mxu0 0
      %10160 = vmatpush1.bf16.msra.mxu0 %v6936
      %10161 = vmatprep.subr.bf16.mxu0 0
      %10162 = vmatpush1.bf16.msra.mxu0 %v6939
      %10163 = vmatprep.subr.bf16.mxu0 0
      %10164 = vmatpush1.bf16.msra.mxu0 %v6942
      %10165 = vmatprep.subr.bf16.mxu0 0
      %10166 = vmatpush1.bf16.msra.mxu0 %v6945
      %10167 = vmatprep.subr.bf16.mxu0 0
      %10168 = vmatpush1.bf16.msra.mxu0 %v6948
      %10169 = vmatprep.subr.bf16.mxu0 0
      %10170 = vmatpush1.bf16.msra.mxu0 %v6951
      %10171 = vmatprep.subr.bf16.mxu0 0
      %10172 = vmatpush1.bf16.msra.mxu0 %v6954
      %10173 = vmatprep.subr.bf16.mxu0 0
      %10174 = vmatpush1.bf16.msra.mxu0 %v6957
      %10175 = vmatprep.mubr.bf16.mxu0 %v546
      %10176 = vmatmul.mubr.bf16.gmra.mrb[0].mxu0 %v545
      %v10177 = vpop.f32.mrb[0].mxu0
      %v10178 = vadd.f32 %v10138, %v10177
      %v10179 = vpop.f32.mrb[0].mxu0
      %v10180 = vpop.f32.mrb[0].mxu0
      %v10181 = vpop.f32.mrb[0].mxu0
      %10182 = vdwg.mxu0
      %10183 = vmatprep.subr.bf16.mxu0 0
      %10184 = vmatpush1.bf16.msra.mxu0 %v6960
      %10185 = vmatprep.subr.bf16.mxu0 0
      %10186 = vmatpush1.bf16.msra.mxu0 %v6963
      %10187 = vmatprep.subr.bf16.mxu0 0
      %10188 = vmatpush1.bf16.msra.mxu0 %v6966
      %10189 = vmatprep.subr.bf16.mxu0 0
      %10190 = vmatpush1.bf16.msra.mxu0 %v6969
      %10191 = vmatprep.subr.bf16.mxu0 0
      %10192 = vmatpush1.bf16.msra.mxu0 %v6972
      %10193 = vmatprep.subr.bf16.mxu0 0
      %10194 = vmatpush1.bf16.msra.mxu0 %v6975
      %10195 = vmatprep.subr.bf16.mxu0 0
      %10196 = vmatpush1.bf16.msra.mxu0 %v6978
      %10197 = vmatprep.subr.bf16.mxu0 0
      %10198 = vmatpush1.bf16.msra.mxu0 %v6981
      %10199 = vmatprep.subr.bf16.mxu0 0
      %10200 = vmatpush1.bf16.msra.mxu0 %v6984
      %10201 = vmatprep.subr.bf16.mxu0 0
      %10202 = vmatpush1.bf16.msra.mxu0 %v6987
      %10203 = vmatprep.subr.bf16.mxu0 0
      %10204 = vmatpush1.bf16.msra.mxu0 %v6990
      %10205 = vmatprep.subr.bf16.mxu0 0
      %10206 = vmatpush1.bf16.msra.mxu0 %v6993
      %10207 = vmatprep.subr.bf16.mxu0 0
      %10208 = vmatpush1.bf16.msra.mxu0 %v6996
      %10209 = vmatprep.subr.bf16.mxu0 0
      %10210 = vmatpush1.bf16.msra.mxu0 %v6999
      %10211 = vmatprep.subr.bf16.mxu0 0
      %10212 = vmatpush1.bf16.msra.mxu0 %v7002
      %10213 = vmatprep.subr.bf16.mxu0 0
      %10214 = vmatpush1.bf16.msra.mxu0 %v7005
      %10215 = vmatprep.mubr.bf16.mxu0 %v548
      %10216 = vmatmul.mubr.bf16.gmra.mrb[0].mxu0 %v547
      %v10217 = vpop.f32.mrb[0].mxu0
      %v10218 = vadd.f32 %v10178, %v10217
      %v10219 = vpop.f32.mrb[0].mxu0
      %v10220 = vpop.f32.mrb[0].mxu0
      %v10221 = vpop.f32.mrb[0].mxu0
      %10222 = vdwg.mxu0
      %10223 = vmatprep.subr.bf16.mxu0 0
      %10224 = vmatpush1.bf16.msra.mxu0 %v7008
      %10225 = vmatprep.subr.bf16.mxu0 0
      %10226 = vmatpush1.bf16.msra.mxu0 %v7011
      %10227 = vmatprep.subr.bf16.mxu0 0
      %10228 = vmatpush1.bf16.msra.mxu0 %v7014
      %10229 = vmatprep.subr.bf16.mxu0 0
      %10230 = vmatpush1.bf16.msra.mxu0 %v7017
      %10231 = vmatprep.subr.bf16.mxu0 0
      %10232 = vmatpush1.bf16.msra.mxu0 %v7020
      %10233 = vmatprep.subr.bf16.mxu0 0
      %10234 = vmatpush1.bf16.msra.mxu0 %v7023
      %10235 = vmatprep.subr.bf16.mxu0 0
      %10236 = vmatpush1.bf16.msra.mxu0 %v7026
      %10237 = vmatprep.subr.bf16.mxu0 0
      %10238 = vmatpush1.bf16.msra.mxu0 %v7029
      %10239 = vmatprep.subr.bf16.mxu0 0
      %10240 = vmatpush1.bf16.msra.mxu0 %v7032
      %10241 = vmatprep.subr.bf16.mxu0 0
      %10242 = vmatpush1.bf16.msra.mxu0 %v7035
      %10243 = vmatprep.subr.bf16.mxu0 0
      %10244 = vmatpush1.bf16.msra.mxu0 %v7038
      %10245 = vmatprep.subr.bf16.mxu0 0
      %10246 = vmatpush1.bf16.msra.mxu0 %v7041
      %10247 = vmatprep.subr.bf16.mxu0 0
      %10248 = vmatpush1.bf16.msra.mxu0 %v7044
      %10249 = vmatprep.subr.bf16.mxu0 0
      %10250 = vmatpush1.bf16.msra.mxu0 %v7047
      %10251 = vmatprep.subr.bf16.mxu0 0
      %10252 = vmatpush1.bf16.msra.mxu0 %v7050
      %10253 = vmatprep.subr.bf16.mxu0 0
      %10254 = vmatpush1.bf16.msra.mxu0 %v7053
      %10255 = vmatprep.mubr.bf16.mxu0 %v550
      %10256 = vmatmul.mubr.bf16.gmra.mrb[0].mxu0 %v549
      %v10257 = vpop.f32.mrb[0].mxu0
      %v10258 = vadd.f32 %v10218, %v10257
      %v10259 = vpop.f32.mrb[0].mxu0
      %v10260 = vpop.f32.mrb[0].mxu0
      %v10261 = vpop.f32.mrb[0].mxu0
      %10262 = vdwg.mxu0
      %10263 = vmatprep.subr.bf16.mxu0 0
      %10264 = vmatpush1.bf16.msra.mxu0 %v7056
      %10265 = vmatprep.subr.bf16.mxu0 0
      %10266 = vmatpush1.bf16.msra.mxu0 %v7059
      %10267 = vmatprep.subr.bf16.mxu0 0
      %10268 = vmatpush1.bf16.msra.mxu0 %v7062
      %10269 = vmatprep.subr.bf16.mxu0 0
      %10270 = vmatpush1.bf16.msra.mxu0 %v7065
      %10271 = vmatprep.subr.bf16.mxu0 0
      %10272 = vmatpush1.bf16.msra.mxu0 %v7068
      %10273 = vmatprep.subr.bf16.mxu0 0
      %10274 = vmatpush1.bf16.msra.mxu0 %v7071
      %10275 = vmatprep.subr.bf16.mxu0 0
      %10276 = vmatpush1.bf16.msra.mxu0 %v7074
      %10277 = vmatprep.subr.bf16.mxu0 0
      %10278 = vmatpush1.bf16.msra.mxu0 %v7077
      %10279 = vmatprep.subr.bf16.mxu0 0
      %10280 = vmatpush1.bf16.msra.mxu0 %v7080
      %10281 = vmatprep.subr.bf16.mxu0 0
      %10282 = vmatpush1.bf16.msra.mxu0 %v7083
      %10283 = vmatprep.subr.bf16.mxu0 0
      %10284 = vmatpush1.bf16.msra.mxu0 %v7086
      %10285 = vmatprep.subr.bf16.mxu0 0
      %10286 = vmatpush1.bf16.msra.mxu0 %v7089
      %10287 = vmatprep.subr.bf16.mxu0 0
      %10288 = vmatpush1.bf16.msra.mxu0 %v7092
      %10289 = vmatprep.subr.bf16.mxu0 0
      %10290 = vmatpush1.bf16.msra.mxu0 %v7095
      %10291 = vmatprep.subr.bf16.mxu0 0
      %10292 = vmatpush1.bf16.msra.mxu0 %v7098
      %10293 = vmatprep.subr.bf16.mxu0 0
      %10294 = vmatpush1.bf16.msra.mxu0 %v7101
      %10295 = vmatprep.mubr.bf16.mxu0 %v552
      %10296 = vmatmul.mubr.bf16.gmra.mrb[0].mxu0 %v551
      %v10297 = vpop.f32.mrb[0].mxu0
      %v10298 = vadd.f32 %v10258, %v10297
      %v10299 = vpop.f32.mrb[0].mxu0
      %v10300 = vpop.f32.mrb[0].mxu0
      %v10301 = vpop.f32.mrb[0].mxu0
      %10302 = vdwg.mxu0
      %10303 = vmatprep.subr.bf16.mxu0 0
      %10304 = vmatpush1.bf16.msra.mxu0 %v7104
      %10305 = vmatprep.subr.bf16.mxu0 0
      %10306 = vmatpush1.bf16.msra.mxu0 %v7107
      %10307 = vmatprep.subr.bf16.mxu0 0
      %10308 = vmatpush1.bf16.msra.mxu0 %v7110
      %10309 = vmatprep.subr.bf16.mxu0 0
      %10310 = vmatpush1.bf16.msra.mxu0 %v7113
      %10311 = vmatprep.subr.bf16.mxu0 0
      %10312 = vmatpush1.bf16.msra.mxu0 %v7116
      %10313 = vmatprep.subr.bf16.mxu0 0
      %10314 = vmatpush1.bf16.msra.mxu0 %v7119
      %10315 = vmatprep.subr.bf16.mxu0 0
      %10316 = vmatpush1.bf16.msra.mxu0 %v7122
      %10317 = vmatprep.subr.bf16.mxu0 0
      %10318 = vmatpush1.bf16.msra.mxu0 %v7125
      %10319 = vmatprep.subr.bf16.mxu0 0
      %10320 = vmatpush1.bf16.msra.mxu0 %v7128
      %10321 = vmatprep.subr.bf16.mxu0 0
      %10322 = vmatpush1.bf16.msra.mxu0 %v7131
      %10323 = vmatprep.subr.bf16.mxu0 0
      %10324 = vmatpush1.bf16.msra.mxu0 %v7134
      %10325 = vmatprep.subr.bf16.mxu0 0
      %10326 = vmatpush1.bf16.msra.mxu0 %v7137
      %10327 = vmatprep.subr.bf16.mxu0 0
      %10328 = vmatpush1.bf16.msra.mxu0 %v7140
      %10329 = vmatprep.subr.bf16.mxu0 0
      %10330 = vmatpush1.bf16.msra.mxu0 %v7143
      %10331 = vmatprep.subr.bf16.mxu0 0
      %10332 = vmatpush1.bf16.msra.mxu0 %v7146
      %10333 = vmatprep.subr.bf16.mxu0 0
      %10334 = vmatpush1.bf16.msra.mxu0 %v7149
      %10335 = vmatprep.mubr.bf16.mxu0 %v554
      %10336 = vmatmul.mubr.bf16.gmra.mrb[0].mxu0 %v553
      %v10337 = vpop.f32.mrb[0].mxu0
      %v10338 = vadd.f32 %v10298, %v10337
      %v10339 = vpop.f32.mrb[0].mxu0
      %v10340 = vpop.f32.mrb[0].mxu0
      %v10341 = vpop.f32.mrb[0].mxu0
      %10342 = vdwg.mxu0
      %10343 = vmatprep.subr.bf16.mxu0 0
      %10344 = vmatpush1.bf16.msra.mxu0 %v7152
      %10345 = vmatprep.subr.bf16.mxu0 0
      %10346 = vmatpush1.bf16.msra.mxu0 %v7155
      %10347 = vmatprep.subr.bf16.mxu0 0
      %10348 = vmatpush1.bf16.msra.mxu0 %v7158
      %10349 = vmatprep.subr.bf16.mxu0 0
      %10350 = vmatpush1.bf16.msra.mxu0 %v7161
      %10351 = vmatprep.subr.bf16.mxu0 0
      %10352 = vmatpush1.bf16.msra.mxu0 %v7164
      %10353 = vmatprep.subr.bf16.mxu0 0
      %10354 = vmatpush1.bf16.msra.mxu0 %v7167
      %10355 = vmatprep.subr.bf16.mxu0 0
      %10356 = vmatpush1.bf16.msra.mxu0 %v7170
      %10357 = vmatprep.subr.bf16.mxu0 0
      %10358 = vmatpush1.bf16.msra.mxu0 %v7173
      %10359 = vmatprep.subr.bf16.mxu0 0
      %10360 = vmatpush1.bf16.msra.mxu0 %v7176
      %10361 = vmatprep.subr.bf16.mxu0 0
      %10362 = vmatpush1.bf16.msra.mxu0 %v7179
      %10363 = vmatprep.subr.bf16.mxu0 0
      %10364 = vmatpush1.bf16.msra.mxu0 %v7182
      %10365 = vmatprep.subr.bf16.mxu0 0
      %10366 = vmatpush1.bf16.msra.mxu0 %v7185
      %10367 = vmatprep.subr.bf16.mxu0 0
      %10368 = vmatpush1.bf16.msra.mxu0 %v7188
      %10369 = vmatprep.subr.bf16.mxu0 0
      %10370 = vmatpush1.bf16.msra.mxu0 %v7191
      %10371 = vmatprep.subr.bf16.mxu0 0
      %10372 = vmatpush1.bf16.msra.mxu0 %v7194
      %10373 = vmatprep.subr.bf16.mxu0 0
      %10374 = vmatpush1.bf16.msra.mxu0 %v7197
      %10375 = vmatprep.mubr.bf16.mxu0 %v556
      %10376 = vmatmul.mubr.bf16.gmra.mrb[0].mxu0 %v555
      %v10377 = vpop.f32.mrb[0].mxu0
      %v10378 = vadd.f32 %v10338, %v10377
      %v10379 = vpop.f32.mrb[0].mxu0
      %v10380 = vpop.f32.mrb[0].mxu0
      %v10381 = vpop.f32.mrb[0].mxu0
      %10382 = vdwg.mxu0
      %10383 = vmatprep.subr.bf16.mxu0 0
      %10384 = vmatpush1.bf16.msra.mxu0 %v7200
      %10385 = vmatprep.subr.bf16.mxu0 0
      %10386 = vmatpush1.bf16.msra.mxu0 %v7203
      %10387 = vmatprep.subr.bf16.mxu0 0
      %10388 = vmatpush1.bf16.msra.mxu0 %v7206
      %10389 = vmatprep.subr.bf16.mxu0 0
      %10390 = vmatpush1.bf16.msra.mxu0 %v7209
      %10391 = vmatprep.subr.bf16.mxu0 0
      %10392 = vmatpush1.bf16.msra.mxu0 %v7212
      %10393 = vmatprep.subr.bf16.mxu0 0
      %10394 = vmatpush1.bf16.msra.mxu0 %v7215
      %10395 = vmatprep.subr.bf16.mxu0 0
      %10396 = vmatpush1.bf16.msra.mxu0 %v7218
      %10397 = vmatprep.subr.bf16.mxu0 0
      %10398 = vmatpush1.bf16.msra.mxu0 %v7221
      %10399 = vmatprep.subr.bf16.mxu0 0
      %10400 = vmatpush1.bf16.msra.mxu0 0
      %10401 = vmatprep.subr.bf16.mxu0 0
      %10402 = vmatpush1.bf16.msra.mxu0 0
      %10403 = vmatprep.subr.bf16.mxu0 0
      %10404 = vmatpush1.bf16.msra.mxu0 0
      %10405 = vmatprep.subr.bf16.mxu0 0
      %10406 = vmatpush1.bf16.msra.mxu0 0
      %10407 = vmatprep.subr.bf16.mxu0 0
      %10408 = vmatpush1.bf16.msra.mxu0 0
      %10409 = vmatprep.subr.bf16.mxu0 0
      %10410 = vmatpush1.bf16.msra.mxu0 0
      %10411 = vmatprep.subr.bf16.mxu0 0
      %10412 = vmatpush1.bf16.msra.mxu0 0
      %10413 = vmatprep.subr.bf16.mxu0 0
      %10414 = vmatpush1.bf16.msra.mxu0 0
      %10415 = vmatprep.mubr.bf16.mxu0 0
      %10416 = vmatmul.mubr.bf16.gmra.mrb[0].mxu0 %v557
      %v10417 = vpop.f32.mrb[0].mxu0
      %v10418 = vadd.f32 %v10378, %v10417
      %v10419 = vpop.f32.mrb[0].mxu0
      %v10420 = vpop.f32.mrb[0].mxu0
      %v10421 = vpop.f32.mrb[0].mxu0
      %10422 = vdwg.mxu0
      %v10426 = vcombine.low %v9417, %v9419
      %v10428 = vunpack.c.l.s4 1983009808
      %v10429 = vunpack.c.0.s8 %v10428
      %v10430 = vlaneseq
      %v10431 = vshrl.u32 %v10430, 7
      %v10432 = vsub.s32 %v10429, %v10431
      %v10433 = vrot.slane %v10426, %v10432
      %v10435 = vunpack.c.l.s4 1983009808
      %v10436 = vunpack.c.0.s8 %v10435
      %v10437 = vlaneseq
      %v10438 = vshrl.u32 %v10437, 7
      %v10439 = vsub.s32 %v10436, %v10438
      %v10440 = vrot.slane %v10418, %v10439
      %v10441 = vcombine.low %v10433, %v10440
      %v10443 = vadd.f32 %v222, %v10441
      %vm10444 = vcmask 1041408
      %vm10445 = vcmask 1043458
      %vm10446 = vmor %vm10445, %vm10444
      %vm10447 = vcmask 357380
      %vm10448 = vmor %vm10447, %vm10446
      %10449 = vst.msk [vmem:[#allocation2] sm:$0x3f] %vm10448, %v10443
      %p10450 = scmp.eq.s32.totalorder %s18, 1
      // Predicated region
      $region33: #{fc1_forward.4} parent=27 // pred_check
        %p10451 = pneg %p10450
      $region34: #{fc1_forward.4} parent=27 // pred_check_branch
        %10453 = sbr.rel (%p10451) target = $region36
      $region35: #{fc1_forward.4} parent=27 // pred_region
        %v10454 = vld [vmem:[#allocation2] sm:$0x3f]
        %10455 = vst.msk [vmem:[%s210] sm:$0x3f] %vm10448, %v10454
      $region36: #{fc1_forward.4} parent=27 // pred_fallthru
        _
      %p10456 = scmp.lt.s32.totalorder %s17, 1
      %s10457 = scalar_select %p10456, %s17, 1
      %s10458 = smul.addr %s10457, 3
      %s10459 = smul.addr %s10458, 2
      %s10460 = scalar_lea.vmem %s2, %s10459
      // Predicated region
      $region37: #{fc1_forward.4} parent=27 // pred_check
        %p10461 = pneg %p103
      $region38: #{fc1_forward.4} parent=27 // pred_check_branch
        %10463 = sbr.rel (%p10461) target = $region40
      $region39: #{fc1_forward.4} parent=27 // pred_region
        _
      $region40: #{fc1_forward.4} parent=27 // pred_fallthru
        _
    $region28: #{fc1_forward.4} parent=5 // pred_fallthru
      _
    %p10464 = scmp.le.s32.totalorder 2, %s8
    // Predicated region
    $region41: #{fc1_forward.4} parent=5 // pred_check
      %p10465 = pneg %p10464
    $region42: #{fc1_forward.4} parent=5 // pred_check_branch
      %10467 = sbr.rel (%p10465) target = $region44
    $region43: #{fc1_forward.4} parent=5 // pred_region
      %s10468 = ssub.s32 %s8, 2
      // Predicated region
      $region45: #{fc1_forward.4} parent=43 // pred_check
        %p10469 = pneg %p109
      $region46: #{fc1_forward.4} parent=43 // pred_check_branch
        %10471 = sbr.rel (%p10469) target = $region48
      $region47: #{fc1_forward.4} parent=43 // pred_region
        %p10472 = scmp.lt.s32.totalorder %s19, 1
        %s10473 = scalar_select %p10472, %s19, 1
        %s10474 = smul.addr %s10473, 3
        %s10475 = smul.addr %s10474, 2
        %s10476 = scalar_lea.vmem %s2, %s10475
      $region48: #{fc1_forward.4} parent=43 // pred_fallthru
        _
    $region44: #{fc1_forward.4} parent=5 // pred_fallthru
      _
  $region6: #{fc1_forward.4} parent=0 // loop_footer
    %s12 = sadd.s32 1, %s8
  $region7: #{fc1_forward.4} parent=0 // loop_footer_branch
    %7 = sbr.rel target = $region3
  $region8: #{fc1_forward.4} parent=0 // loop_exit
    _

</llo_original>
